<compile_context>
chip_gen: v5e
topology: v5e:2x2
jax: 0.10.0
libtpu: 0.0.40
codegen_flags: <defaults>
</compile_context>

<pallas_src>
import functools

import jax
import jax.numpy as jnp
from jax.experimental import pallas as pl
from jax.experimental.pallas import tpu as pltpu

LATENT_DIMS = 8
IN_DIM = 3 * 28 * 28        # 2352
H1 = 512
H2 = 256


def _round_up(x, m):
    return (x + m - 1) // m * m


def _pick_batch_tile(B):
    """Batch tile: multiple of 16 (bf16 sublane packing), capped at 512 rows.

    For B > 16 we guarantee at least two grid steps so v7x's two TensorCores both
    get work from the "parallel" batch axis (on v5e/v6e the extra step costs only
    ~0.35us)."""
    if B <= 16:
        return _round_up(B, 16)
    half = _round_up((B + 1) // 2, 16)
    return min(512, half)


def _vae_kernel(x_ref, eps_ref,
                w1e_ref, b1e_ref, w2e_ref, b2e_ref,
                wmu_ref, bmu_ref, wlv_ref, blv_ref,
                w1d_ref, b1d_ref, w2d_ref, b2d_ref, w3d_ref, b3d_ref,
                out_ref, kl_ref, *, batch, tile_b):
    # ---------------- Encoder ----------------
    # x arrives f32; cast to bf16 in-kernel (rides VPU slack under the MXU instead
    # of a separate wrapper-side XLA pad/cast pass).  K = 2352: only the last
    # K-vreg of the first matmul is masked.
    x = x_ref[...].astype(jnp.bfloat16)                                # (TB, 2352)
    h = jnp.dot(x, w1e_ref[...], preferred_element_type=jnp.float32) + b1e_ref[...]
    h = jnp.maximum(h, 0.0)                                            # relu, f32 (TB, 512)
    h = jnp.dot(h.astype(jnp.bfloat16), w2e_ref[...],
                preferred_element_type=jnp.float32) + b2e_ref[...]
    h = jnp.maximum(h, 0.0)                                            # relu, f32 (TB, 256)

    # Split head: mu / log_var from their own tiny f32 matmuls (preserves the
    # reference numerics of the KL / reparametrization step).
    mu = jnp.dot(h, wmu_ref[...], preferred_element_type=jnp.float32) + bmu_ref[...]
    log_var = jnp.dot(h, wlv_ref[...], preferred_element_type=jnp.float32) + blv_ref[...]

    # KL partial for this batch tile -> single f32 element per tile.
    kl_terms = 1.0 + log_var - mu * mu - jnp.exp(log_var)
    if batch % tile_b:  # batch padding exists: mask zero-padded rows (static branch)
        row = (jax.lax.broadcasted_iota(jnp.int32, (tile_b, 1), 0)
               + pl.program_id(0) * tile_b)
        kl_terms = jnp.where(row < batch, kl_terms, 0.0)
    kl_ref[...] = jnp.reshape(-0.5 * jnp.sum(kl_terms), (1, 1, 1))

    # Reparametrization trick: mu + exp(log_var / 2) * eps  (f32)
    z = mu + jnp.exp(log_var * 0.5) * eps_ref[...]                     # (TB, 8)

    # ---------------- Decoder ----------------
    d = jnp.dot(z, w1d_ref[...], preferred_element_type=jnp.float32) + b1d_ref[...]
    d = jnp.maximum(d, 0.0)                                            # (TB, 256)
    d = jnp.dot(d.astype(jnp.bfloat16), w2d_ref[...],
                preferred_element_type=jnp.float32) + b2d_ref[...]
    d = jnp.maximum(d, 0.0)                                            # (TB, 512)
    d = jnp.dot(d.astype(jnp.bfloat16), w3d_ref[...],
                preferred_element_type=jnp.float32) + b3d_ref[...]     # (TB, 2352) f32
    # bf16 sigmoid: single transcendental, bf16 EUP on v6e/v7x; store f32 output
    # to keep the module's reference dtype.
    out_ref[...] = jax.nn.sigmoid(d.astype(jnp.bfloat16)).astype(out_ref.dtype)


def vae_forward(x_nchw, eps, params):
    """x_nchw: (B, 3, 28, 28) f32; eps: (B, LATENT_DIMS) f32 ~ N(0,1).

    Returns (reconstruction (B,3,28,28) f32, kl scalar f32)."""
    B = x_nchw.shape[0]
    TB = _pick_batch_tile(B)
    B_pad = _round_up(B, TB)
    n_tiles = B_pad // TB

    # Flatten exactly like torch.flatten(x, start_dim=1); row-major reshape is free.
    x_flat = x_nchw.reshape(B, IN_DIM)
    eps_p = eps.astype(jnp.float32)
    if B_pad != B:
        # Only the batch remainder is padded (typical batches hit B % TB == 0 and
        # skip this copy entirely). Feature axis stays unpadded.
        x_flat = jnp.pad(x_flat, ((0, B_pad - B), (0, 0)))
        eps_p = jnp.pad(eps_p, ((0, B_pad - B), (0, 0)))

    (w1e, b1e, w2e, b2e, w3e, b3e,
     w1d, b1d, w2d, b2d, w3d, b3d) = params

    # Weight prep (tiny, one-time): big-matmul weights to bf16; encoder head split
    # into mu / log_var halves kept f32.
    w1e_b = w1e.astype(jnp.bfloat16)
    w2e_b = w2e.astype(jnp.bfloat16)
    wmu, wlv = w3e[:, :LATENT_DIMS], w3e[:, LATENT_DIMS:]
    bmu, blv = b3e[:, :LATENT_DIMS], b3e[:, LATENT_DIMS:]
    w2d_b = w2d.astype(jnp.bfloat16)
    w3d_b = w3d.astype(jnp.bfloat16)

    resident = (w1e_b, b1e, w2e_b, b2e, wmu, bmu, wlv, blv,
                w1d, b1d, w2d_b, b2d, w3d_b, b3d)

    # Weights/biases: constant index_map -> VMEM-resident across grid steps;
    # single-buffered (never revisited with a new block) to save ~5.5 MiB VMEM.
    resident_specs = [
        pl.BlockSpec(w.shape, lambda i: (0, 0), pipeline_mode=pl.Buffered(1))
        for w in resident
    ]
    in_specs = [
        pl.BlockSpec((TB, IN_DIM), lambda i: (i, 0)),        # x tile, f32, full feature extent
        pl.BlockSpec((TB, LATENT_DIMS), lambda i: (i, 0)),   # eps tile
    ] + resident_specs

    out_specs = (
        pl.BlockSpec((TB, IN_DIM), lambda i: (i, 0)),        # reconstruction tile (unpadded N)
        pl.BlockSpec((1, 1, 1), lambda i: (i, 0, 0)),        # per-tile KL partial (1 element)
    )
    out_shape = (
        jax.ShapeDtypeStruct((B_pad, IN_DIM), jnp.float32),
        jax.ShapeDtypeStruct((n_tiles, 1, 1), jnp.float32),
    )

    matmul_flops = 2 * B_pad * (IN_DIM * H1 + H1 * H2 + H2 * 2 * LATENT_DIMS
                                + LATENT_DIMS * H2 + H2 * H1 + H1 * IN_DIM)
    weight_bytes = sum(int(a.size) * a.dtype.itemsize for a in resident)
    bytes_accessed = (weight_bytes
                      + B_pad * IN_DIM * 4           # x in (f32, unpadded features)
                      + B_pad * LATENT_DIMS * 4      # eps in
                      + B_pad * IN_DIM * 4           # reconstruction out (f32, unpadded)
                      + n_tiles * 4)                 # KL partials
    cost = pl.CostEstimate(flops=int(matmul_flops),
                           transcendentals=int(B_pad * (IN_DIM + 2 * LATENT_DIMS)),
                           bytes_accessed=int(bytes_accessed))

    out_flat, kl_tiles = pl.pallas_call(
        functools.partial(_vae_kernel, batch=B, tile_b=TB),
        grid=(n_tiles,),
        in_specs=in_specs,
        out_specs=out_specs,
        out_shape=out_shape,
        compiler_params=pltpu.CompilerParams(
            dimension_semantics=("parallel",),
            vmem_limit_bytes=48 << 20,
        ),
        cost_estimate=cost,
    )(x_flat, eps_p, *resident)

    recon = out_flat[:B].reshape(B, 3, 28, 28)
    kl = jnp.sum(kl_tiles)
    return recon, kl


def init_params(key, latent_dims=LATENT_DIMS):
    """PyTorch-style uniform(-1/sqrt(fan_in), 1/sqrt(fan_in)) init.
    Weights stored as (in, out) so the kernel computes x @ W + b."""
    def linear(k, fan_in, fan_out):
        kw, kb = jax.random.split(k)
        bound = 1.0 / jnp.sqrt(fan_in)
        w = jax.random.uniform(kw, (fan_in, fan_out), jnp.float32, -bound, bound)
        b = jax.random.uniform(kb, (1, fan_out), jnp.float32, -bound, bound)
        return w, b

    keys = jax.random.split(key, 6)
    # Encoder
    w1e, b1e = linear(keys[0], IN_DIM, H1)
    w2e, b2e = linear(keys[1], H1, H2)
    w3e, b3e = linear(keys[2], H2, 2 * latent_dims)
    # Decoder
    w1d, b1d = linear(keys[3], latent_dims, H2)
    w2d, b2d = linear(keys[4], H2, H1)
    w3d, b3d = linear(keys[5], H1, IN_DIM)
    return (w1e, b1e, w2e, b2e, w3e, b3e,
            w1d, b1d, w2d, b2d, w3d, b3d)


def _vae_reference(x_nchw, eps, params):
    """Pure-JAX f32 reference matching the PyTorch module."""
    (w1e, b1e, w2e, b2e, w3e, b3e,
     w1d, b1d, w2d, b2d, w3d, b3d) = params
    x = x_nchw.reshape(x_nchw.shape[0], IN_DIM)
    h = jax.nn.relu(x @ w1e + b1e)
    h = jax.nn.relu(h @ w2e + b2e)
    ml = h @ w3e + b3e
    mu, log_var = ml[:, :LATENT_DIMS], ml[:, LATENT_DIMS:]
    kl = -0.5 * jnp.sum(1.0 + log_var - mu * mu - jnp.exp(log_var))
    z = mu + jnp.exp(log_var * 0.5) * eps
    d = jax.nn.relu(z @ w1d + b1d)
    d = jax.nn.relu(d @ w2d + b2d)
    d = jax.nn.sigmoid(d @ w3d + b3d)
    return d.reshape(-1, 3, 28, 28), kl


if __name__ == "__main__":
    key = jax.random.PRNGKey(0)
    k_params, k_x, k_eps = jax.random.split(key, 3)

    B = 2
    params = init_params(k_params)
    x = jax.random.uniform(k_x, (B, 3, 28, 28), jnp.float32)        # image-like input
    eps = jax.random.normal(k_eps, (B, LATENT_DIMS), jnp.float32)   # torch.randn_like(log_var)

    fwd = jax.jit(vae_forward)
    recon, kl = fwd(x, eps, params)
    jax.block_until_ready(recon)
    jax.block_until_ready(kl)

    assert recon.shape == (B, 3, 28, 28)
    assert recon.dtype == jnp.float32
    assert bool(jnp.isfinite(kl))

    # Loose correctness check vs pure-JAX f32 reference (kernel uses bf16 matmuls
    # and a bf16 sigmoid).
    recon_ref, kl_ref = _vae_reference(x, eps, params)
    assert bool(jnp.max(jnp.abs(recon - recon_ref)) < 5e-2)
    assert bool(jnp.abs(kl - kl_ref) < 0.1 + 0.05 * jnp.abs(kl_ref))

    print("KERNEL_OK")
</pallas_src>

<mosaic_0001>
module attributes {stable_mosaic.version = 11 : i64} {
  func.func @_vae_kernel(%arg0: i32, %arg1: memref<16x2352xf32, #tpu.memory_space<vmem>>, %arg2: memref<16x8xf32, #tpu.memory_space<vmem>>, %arg3: memref<2352x512xbf16, #tpu.memory_space<vmem>>, %arg4: memref<1x512xf32, #tpu.memory_space<vmem>>, %arg5: memref<512x256xbf16, #tpu.memory_space<vmem>>, %arg6: memref<1x256xf32, #tpu.memory_space<vmem>>, %arg7: memref<256x8xf32, #tpu.memory_space<vmem>>, %arg8: memref<1x8xf32, #tpu.memory_space<vmem>>, %arg9: memref<256x8xf32, #tpu.memory_space<vmem>>, %arg10: memref<1x8xf32, #tpu.memory_space<vmem>>, %arg11: memref<8x256xf32, #tpu.memory_space<vmem>>, %arg12: memref<1x256xf32, #tpu.memory_space<vmem>>, %arg13: memref<256x512xbf16, #tpu.memory_space<vmem>>, %arg14: memref<1x512xf32, #tpu.memory_space<vmem>>, %arg15: memref<512x2352xbf16, #tpu.memory_space<vmem>>, %arg16: memref<1x2352xf32, #tpu.memory_space<vmem>>, %arg17: memref<16x2352xf32, #tpu.memory_space<vmem>>, %arg18: memref<1x1x1xf32, #tpu.memory_space<vmem>>) attributes {dimension_semantics = [#tpu.dimension_semantics<parallel>], iteration_bounds = array<i64: 1>, scalar_prefetch = 0 : i64, scratch_operands = 0 : i64, tpu.core_type = #tpu.core_type<tc>, window_params = [{transform_indices = @transform_0, window_bounds = array<i64: 16, 2352>}, {transform_indices = @transform_1, window_bounds = array<i64: 16, 8>}, {pipeline_mode = #tpu.pipeline_mode<synchronous>, transform_indices = @transform_2, window_bounds = array<i64: 2352, 512>}, {pipeline_mode = #tpu.pipeline_mode<synchronous>, transform_indices = @transform_3, window_bounds = array<i64: 1, 512>}, {pipeline_mode = #tpu.pipeline_mode<synchronous>, transform_indices = @transform_4, window_bounds = array<i64: 512, 256>}, {pipeline_mode = #tpu.pipeline_mode<synchronous>, transform_indices = @transform_5, window_bounds = array<i64: 1, 256>}, {pipeline_mode = #tpu.pipeline_mode<synchronous>, transform_indices = @transform_6, window_bounds = array<i64: 256, 8>}, {pipeline_mode = #tpu.pipeline_mode<synchronous>, transform_indices = @transform_7, window_bounds = array<i64: 1, 8>}, {pipeline_mode = #tpu.pipeline_mode<synchronous>, transform_indices = @transform_8, window_bounds = array<i64: 256, 8>}, {pipeline_mode = #tpu.pipeline_mode<synchronous>, transform_indices = @transform_9, window_bounds = array<i64: 1, 8>}, {pipeline_mode = #tpu.pipeline_mode<synchronous>, transform_indices = @transform_10, window_bounds = array<i64: 8, 256>}, {pipeline_mode = #tpu.pipeline_mode<synchronous>, transform_indices = @transform_11, window_bounds = array<i64: 1, 256>}, {pipeline_mode = #tpu.pipeline_mode<synchronous>, transform_indices = @transform_12, window_bounds = array<i64: 256, 512>}, {pipeline_mode = #tpu.pipeline_mode<synchronous>, transform_indices = @transform_13, window_bounds = array<i64: 1, 512>}, {pipeline_mode = #tpu.pipeline_mode<synchronous>, transform_indices = @transform_14, window_bounds = array<i64: 512, 2352>}, {pipeline_mode = #tpu.pipeline_mode<synchronous>, transform_indices = @transform_15, window_bounds = array<i64: 1, 2352>}, {transform_indices = @transform_16, window_bounds = array<i64: 16, 2352>}, {transform_indices = @transform_17, window_bounds = array<i64: 1, 1, 1>}]} {
    %c0 = arith.constant 0 : index
    %c0_0 = arith.constant 0 : index
    %0 = vector.load %arg1[%c0, %c0_0] : memref<16x2352xf32, #tpu.memory_space<vmem>>, vector<16x2352xf32>
    %1 = arith.truncf %0 : vector<16x2352xf32> to vector<16x2352xbf16>
    %c0_1 = arith.constant 0 : index
    %c0_2 = arith.constant 0 : index
    %2 = vector.load %arg3[%c0_1, %c0_2] : memref<2352x512xbf16, #tpu.memory_space<vmem>>, vector<2352x512xbf16>
    %cst = arith.constant dense<0.000000e+00> : vector<16x512xf32>
    %3 = tpu.matmul %1, %2, %cst {dimension_numbers = #tpu.dot_dimension_numbers<[1], [0], [0], [1], [0, 0, 1, 1], [], []>} : vector<16x2352xbf16>, vector<2352x512xbf16>, vector<16x512xf32> -> vector<16x512xf32>
    %c0_3 = arith.constant 0 : index
    %c0_4 = arith.constant 0 : index
    %4 = vector.load %arg4[%c0_3, %c0_4] : memref<1x512xf32, #tpu.memory_space<vmem>>, vector<1x512xf32>
    %5 = vector.broadcast %4 : vector<1x512xf32> to vector<16x512xf32>
    %6 = arith.addf %3, %5 : vector<16x512xf32>
    %cst_5 = arith.constant 0.000000e+00 : f32
    %7 = vector.broadcast %cst_5 : f32 to vector<16x512xf32>
    %8 = arith.maximumf %6, %7 : vector<16x512xf32>
    %9 = arith.truncf %8 : vector<16x512xf32> to vector<16x512xbf16>
    %c0_6 = arith.constant 0 : index
    %c0_7 = arith.constant 0 : index
    %10 = vector.load %arg5[%c0_6, %c0_7] : memref<512x256xbf16, #tpu.memory_space<vmem>>, vector<512x256xbf16>
    %cst_8 = arith.constant dense<0.000000e+00> : vector<16x256xf32>
    %11 = tpu.matmul %9, %10, %cst_8 {dimension_numbers = #tpu.dot_dimension_numbers<[1], [0], [0], [1], [0, 0, 1, 1], [], []>} : vector<16x512xbf16>, vector<512x256xbf16>, vector<16x256xf32> -> vector<16x256xf32>
    %c0_9 = arith.constant 0 : index
    %c0_10 = arith.constant 0 : index
    %12 = vector.load %arg6[%c0_9, %c0_10] : memref<1x256xf32, #tpu.memory_space<vmem>>, vector<1x256xf32>
    %13 = vector.broadcast %12 : vector<1x256xf32> to vector<16x256xf32>
    %14 = arith.addf %11, %13 : vector<16x256xf32>
    %cst_11 = arith.constant 0.000000e+00 : f32
    %15 = vector.broadcast %cst_11 : f32 to vector<16x256xf32>
    %16 = arith.maximumf %14, %15 : vector<16x256xf32>
    %c0_12 = arith.constant 0 : index
    %c0_13 = arith.constant 0 : index
    %17 = vector.load %arg7[%c0_12, %c0_13] : memref<256x8xf32, #tpu.memory_space<vmem>>, vector<256x8xf32>
    %cst_14 = arith.constant dense<0.000000e+00> : vector<16x8xf32>
    %18 = tpu.matmul %16, %17, %cst_14 {dimension_numbers = #tpu.dot_dimension_numbers<[1], [0], [0], [1], [0, 0, 1, 1], [], []>} : vector<16x256xf32>, vector<256x8xf32>, vector<16x8xf32> -> vector<16x8xf32>
    %c0_15 = arith.constant 0 : index
    %c0_16 = arith.constant 0 : index
    %19 = vector.load %arg8[%c0_15, %c0_16] : memref<1x8xf32, #tpu.memory_space<vmem>>, vector<1x8xf32>
    %20 = vector.broadcast %19 : vector<1x8xf32> to vector<16x8xf32>
    %21 = arith.addf %18, %20 : vector<16x8xf32>
    %c0_17 = arith.constant 0 : index
    %c0_18 = arith.constant 0 : index
    %22 = vector.load %arg9[%c0_17, %c0_18] : memref<256x8xf32, #tpu.memory_space<vmem>>, vector<256x8xf32>
    %cst_19 = arith.constant dense<0.000000e+00> : vector<16x8xf32>
    %23 = tpu.matmul %16, %22, %cst_19 {dimension_numbers = #tpu.dot_dimension_numbers<[1], [0], [0], [1], [0, 0, 1, 1], [], []>} : vector<16x256xf32>, vector<256x8xf32>, vector<16x8xf32> -> vector<16x8xf32>
    %c0_20 = arith.constant 0 : index
    %c0_21 = arith.constant 0 : index
    %24 = vector.load %arg10[%c0_20, %c0_21] : memref<1x8xf32, #tpu.memory_space<vmem>>, vector<1x8xf32>
    %25 = vector.broadcast %24 : vector<1x8xf32> to vector<16x8xf32>
    %26 = arith.addf %23, %25 : vector<16x8xf32>
    %cst_22 = arith.constant 1.000000e+00 : f32
    %27 = vector.broadcast %cst_22 : f32 to vector<16x8xf32>
    %28 = arith.addf %27, %26 : vector<16x8xf32>
    %29 = arith.mulf %21, %21 : vector<16x8xf32>
    %30 = arith.subf %28, %29 : vector<16x8xf32>
    %31 = math.exp %26 : vector<16x8xf32>
    %32 = arith.subf %30, %31 : vector<16x8xf32>
    %33 = tpu.iota {dimensions = array<i32: 0>} : vector<16x1xi32>
    %c16_i32 = arith.constant 16 : i32
    %34 = arith.muli %arg0, %c16_i32 : i32
    %35 = vector.broadcast %34 : i32 to vector<16x1xi32>
    %36 = arith.addi %33, %35 : vector<16x1xi32>
    %c2_i32 = arith.constant 2 : i32
    %37 = vector.broadcast %c2_i32 : i32 to vector<16x1xi32>
    %38 = arith.cmpi slt, %36, %37 : vector<16x1xi32>
    %cst_23 = arith.constant 0.000000e+00 : f32
    %39 = vector.shape_cast %38 : vector<16x1xi1> to vector<16x1xi1>
    %40 = vector.broadcast %39 : vector<16x1xi1> to vector<16x8xi1>
    %41 = vector.broadcast %cst_23 : f32 to vector<16x8xf32>
    %42 = arith.select %40, %32, %41 : vector<16x8xi1>, vector<16x8xf32>
    %43 = vector.shape_cast %42 : vector<16x8xf32> to vector<1x16x8xf32>
    %cst_24 = arith.constant dense<0.000000e+00> : vector<1xf32>
    %44 = vector.multi_reduction <add>, %43, %cst_24 [1, 2] : vector<1x16x8xf32> to vector<1xf32>
    %45 = vector.shape_cast %44 : vector<1xf32> to vector<1x1x1xf32>
    %46 = vector.extract %45[0, 0, 0] : f32 from vector<1x1x1xf32>
    %cst_25 = arith.constant -5.000000e-01 : f32
    %47 = arith.mulf %cst_25, %46 : f32
    %48 = vector.broadcast %47 : f32 to vector<1x1x1xf32>
    %c0_26 = arith.constant 0 : index
    %c0_27 = arith.constant 0 : index
    %c0_28 = arith.constant 0 : index
    %49 = vector.load %arg18[%c0_26, %c0_27, %c0_28] : memref<1x1x1xf32, #tpu.memory_space<vmem>>, vector<1x1x1xf32>
    tpu.vector_store %arg18[%c0_26, %c0_27, %c0_28], %48 {strides = array<i32>} : memref<1x1x1xf32, #tpu.memory_space<vmem>>, vector<1x1x1xf32>,
    %cst_29 = arith.constant 5.000000e-01 : f32
    %50 = vector.broadcast %cst_29 : f32 to vector<16x8xf32>
    %51 = arith.mulf %26, %50 : vector<16x8xf32>
    %52 = math.exp %51 : vector<16x8xf32>
    %c0_30 = arith.constant 0 : index
    %c0_31 = arith.constant 0 : index
    %53 = vector.load %arg2[%c0_30, %c0_31] : memref<16x8xf32, #tpu.memory_space<vmem>>, vector<16x8xf32>
    %54 = arith.mulf %52, %53 : vector<16x8xf32>
    %55 = arith.addf %21, %54 : vector<16x8xf32>
    %c0_32 = arith.constant 0 : index
    %c0_33 = arith.constant 0 : index
    %56 = vector.load %arg11[%c0_32, %c0_33] : memref<8x256xf32, #tpu.memory_space<vmem>>, vector<8x256xf32>
    %cst_34 = arith.constant dense<0.000000e+00> : vector<16x256xf32>
    %57 = tpu.matmul %55, %56, %cst_34 {dimension_numbers = #tpu.dot_dimension_numbers<[1], [0], [0], [1], [0, 0, 1, 1], [], []>} : vector<16x8xf32>, vector<8x256xf32>, vector<16x256xf32> -> vector<16x256xf32>
    %c0_35 = arith.constant 0 : index
    %c0_36 = arith.constant 0 : index
    %58 = vector.load %arg12[%c0_35, %c0_36] : memref<1x256xf32, #tpu.memory_space<vmem>>, vector<1x256xf32>
    %59 = vector.broadcast %58 : vector<1x256xf32> to vector<16x256xf32>
    %60 = arith.addf %57, %59 : vector<16x256xf32>
    %cst_37 = arith.constant 0.000000e+00 : f32
    %61 = vector.broadcast %cst_37 : f32 to vector<16x256xf32>
    %62 = arith.maximumf %60, %61 : vector<16x256xf32>
    %63 = arith.truncf %62 : vector<16x256xf32> to vector<16x256xbf16>
    %c0_38 = arith.constant 0 : index
    %c0_39 = arith.constant 0 : index
    %64 = vector.load %arg13[%c0_38, %c0_39] : memref<256x512xbf16, #tpu.memory_space<vmem>>, vector<256x512xbf16>
    %cst_40 = arith.constant dense<0.000000e+00> : vector<16x512xf32>
    %65 = tpu.matmul %63, %64, %cst_40 {dimension_numbers = #tpu.dot_dimension_numbers<[1], [0], [0], [1], [0, 0, 1, 1], [], []>} : vector<16x256xbf16>, vector<256x512xbf16>, vector<16x512xf32> -> vector<16x512xf32>
    %c0_41 = arith.constant 0 : index
    %c0_42 = arith.constant 0 : index
    %66 = vector.load %arg14[%c0_41, %c0_42] : memref<1x512xf32, #tpu.memory_space<vmem>>, vector<1x512xf32>
    %67 = vector.broadcast %66 : vector<1x512xf32> to vector<16x512xf32>
    %68 = arith.addf %65, %67 : vector<16x512xf32>
    %cst_43 = arith.constant 0.000000e+00 : f32
    %69 = vector.broadcast %cst_43 : f32 to vector<16x512xf32>
    %70 = arith.maximumf %68, %69 : vector<16x512xf32>
    %71 = arith.truncf %70 : vector<16x512xf32> to vector<16x512xbf16>
    %c0_44 = arith.constant 0 : index
    %c0_45 = arith.constant 0 : index
    %72 = vector.load %arg15[%c0_44, %c0_45] : memref<512x2352xbf16, #tpu.memory_space<vmem>>, vector<512x2352xbf16>
    %cst_46 = arith.constant dense<0.000000e+00> : vector<16x2352xf32>
    %73 = tpu.matmul %71, %72, %cst_46 {dimension_numbers = #tpu.dot_dimension_numbers<[1], [0], [0], [1], [0, 0, 1, 1], [], []>} : vector<16x512xbf16>, vector<512x2352xbf16>, vector<16x2352xf32> -> vector<16x2352xf32>
    %c0_47 = arith.constant 0 : index
    %c0_48 = arith.constant 0 : index
    %74 = vector.load %arg16[%c0_47, %c0_48] : memref<1x2352xf32, #tpu.memory_space<vmem>>, vector<1x2352xf32>
    %75 = vector.broadcast %74 : vector<1x2352xf32> to vector<16x2352xf32>
    %76 = arith.addf %73, %75 : vector<16x2352xf32>
    %77 = arith.truncf %76 : vector<16x2352xf32> to vector<16x2352xbf16>
    %78 = arith.negf %77 : vector<16x2352xbf16>
    %79 = math.exp %78 : vector<16x2352xbf16>
    %cst_49 = arith.constant 1.000000e+00 : bf16
    %80 = vector.broadcast %cst_49 : bf16 to vector<16x2352xbf16>
    %81 = arith.addf %80, %79 : vector<16x2352xbf16>
    %82 = arith.divf %80, %81 : vector<16x2352xbf16>
    %83 = arith.extf %82 : vector<16x2352xbf16> to vector<16x2352xf32>
    %c0_50 = arith.constant 0 : index
    %c0_51 = arith.constant 0 : index
    %84 = vector.load %arg17[%c0_50, %c0_51] : memref<16x2352xf32, #tpu.memory_space<vmem>>, vector<16x2352xf32>
    tpu.vector_store %arg17[%c0_50, %c0_51], %83 {strides = array<i32>} : memref<16x2352xf32, #tpu.memory_space<vmem>>, vector<16x2352xf32>,
    return
  }
  func.func @transform_0(%arg0: i32) -> (i32, i32) {
    %c0_i32 = arith.constant 0 : i32
    %c0_i32_0 = arith.constant 0 : i32
    return %arg0, %c0_i32 : i32, i32
  }
  func.func @transform_1(%arg0: i32) -> (i32, i32) {
    %c0_i32 = arith.constant 0 : i32
    %c0_i32_0 = arith.constant 0 : i32
    return %arg0, %c0_i32 : i32, i32
  }
  func.func @transform_2(%arg0: i32) -> (i32, i32) {
    %c0_i32 = arith.constant 0 : i32
    %c0_i32_0 = arith.constant 0 : i32
    %c0_i32_1 = arith.constant 0 : i32
    return %c0_i32, %c0_i32_0 : i32, i32
  }
  func.func @transform_3(%arg0: i32) -> (i32, i32) {
    %c0_i32 = arith.constant 0 : i32
    %c0_i32_0 = arith.constant 0 : i32
    %c0_i32_1 = arith.constant 0 : i32
    return %c0_i32, %c0_i32_0 : i32, i32
  }
  func.func @transform_4(%arg0: i32) -> (i32, i32) {
    %c0_i32 = arith.constant 0 : i32
    %c0_i32_0 = arith.constant 0 : i32
    %c0_i32_1 = arith.constant 0 : i32
    return %c0_i32, %c0_i32_0 : i32, i32
  }
  func.func @transform_5(%arg0: i32) -> (i32, i32) {
    %c0_i32 = arith.constant 0 : i32
    %c0_i32_0 = arith.constant 0 : i32
    %c0_i32_1 = arith.constant 0 : i32
    return %c0_i32, %c0_i32_0 : i32, i32
  }
  func.func @transform_6(%arg0: i32) -> (i32, i32) {
    %c0_i32 = arith.constant 0 : i32
    %c0_i32_0 = arith.constant 0 : i32
    %c0_i32_1 = arith.constant 0 : i32
    return %c0_i32, %c0_i32_0 : i32, i32
  }
  func.func @transform_7(%arg0: i32) -> (i32, i32) {
    %c0_i32 = arith.constant 0 : i32
    %c0_i32_0 = arith.constant 0 : i32
    %c0_i32_1 = arith.constant 0 : i32
    return %c0_i32, %c0_i32_0 : i32, i32
  }
  func.func @transform_8(%arg0: i32) -> (i32, i32) {
    %c0_i32 = arith.constant 0 : i32
    %c0_i32_0 = arith.constant 0 : i32
    %c0_i32_1 = arith.constant 0 : i32
    return %c0_i32, %c0_i32_0 : i32, i32
  }
  func.func @transform_9(%arg0: i32) -> (i32, i32) {
    %c0_i32 = arith.constant 0 : i32
    %c0_i32_0 = arith.constant 0 : i32
    %c0_i32_1 = arith.constant 0 : i32
    return %c0_i32, %c0_i32_0 : i32, i32
  }
  func.func @transform_10(%arg0: i32) -> (i32, i32) {
    %c0_i32 = arith.constant 0 : i32
    %c0_i32_0 = arith.constant 0 : i32
    %c0_i32_1 = arith.constant 0 : i32
    return %c0_i32, %c0_i32_0 : i32, i32
  }
  func.func @transform_11(%arg0: i32) -> (i32, i32) {
    %c0_i32 = arith.constant 0 : i32
    %c0_i32_0 = arith.constant 0 : i32
    %c0_i32_1 = arith.constant 0 : i32
    return %c0_i32, %c0_i32_0 : i32, i32
  }
  func.func @transform_12(%arg0: i32) -> (i32, i32) {
    %c0_i32 = arith.constant 0 : i32
    %c0_i32_0 = arith.constant 0 : i32
    %c0_i32_1 = arith.constant 0 : i32
    return %c0_i32, %c0_i32_0 : i32, i32
  }
  func.func @transform_13(%arg0: i32) -> (i32, i32) {
    %c0_i32 = arith.constant 0 : i32
    %c0_i32_0 = arith.constant 0 : i32
    %c0_i32_1 = arith.constant 0 : i32
    return %c0_i32, %c0_i32_0 : i32, i32
  }
  func.func @transform_14(%arg0: i32) -> (i32, i32) {
    %c0_i32 = arith.constant 0 : i32
    %c0_i32_0 = arith.constant 0 : i32
    %c0_i32_1 = arith.constant 0 : i32
    return %c0_i32, %c0_i32_0 : i32, i32
  }
  func.func @transform_15(%arg0: i32) -> (i32, i32) {
    %c0_i32 = arith.constant 0 : i32
    %c0_i32_0 = arith.constant 0 : i32
    %c0_i32_1 = arith.constant 0 : i32
    return %c0_i32, %c0_i32_0 : i32, i32
  }
  func.func @transform_16(%arg0: i32) -> (i32, i32) {
    %c0_i32 = arith.constant 0 : i32
    %c0_i32_0 = arith.constant 0 : i32
    return %arg0, %c0_i32 : i32, i32
  }
  func.func @transform_17(%arg0: i32) -> (i32, i32, i32) {
    %c0_i32 = arith.constant 0 : i32
    %c0_i32_0 = arith.constant 0 : i32
    %c0_i32_1 = arith.constant 0 : i32
    return %arg0, %c0_i32, %c0_i32_0 : i32, i32, i32
  }
}

</mosaic_0001>

<llo_original>
// kernel: vae_forward.1
$region0: #{vae_forward.1}
  #allocation0 [shape = 'u32[]', space=smem, size = 0x4, offset = 0x4, fixed_abs, tag = 'smem constant byte address 0x4 - core index']
  #allocation1 [shape = 'u32[72,128]{1,0:T(1,128)}', space=vmem, size = 0x9000, scoped, tag = 'internal scratch']
  %s0 = inlined_call_operand.vmem [shape: f32[16,2352], index: 0, kind: input, shape index: {}]
  %s1 = inlined_call_operand.vmem [shape: f32[16,8], index: 1, kind: input, shape index: {}]
  %s2 = inlined_call_operand.vmem [shape: bf16[2352,512], index: 2, kind: input, shape index: {}]
  %s3 = inlined_call_operand.vmem [shape: f32[1,512], index: 3, kind: input, shape index: {}]
  %s4 = inlined_call_operand.vmem [shape: bf16[512,256], index: 4, kind: input, shape index: {}]
  %s5 = inlined_call_operand.vmem [shape: f32[1,256], index: 5, kind: input, shape index: {}]
  %s6 = inlined_call_operand.vmem [shape: f32[256,8], index: 6, kind: input, shape index: {}]
  %s7 = inlined_call_operand.vmem [shape: f32[1,8], index: 7, kind: input, shape index: {}]
  %s8 = inlined_call_operand.vmem [shape: f32[256,8], index: 8, kind: input, shape index: {}]
  %s9 = inlined_call_operand.vmem [shape: f32[1,8], index: 9, kind: input, shape index: {}]
  %s10 = inlined_call_operand.vmem [shape: f32[8,256], index: 10, kind: input, shape index: {}]
  %s11 = inlined_call_operand.vmem [shape: f32[1,256], index: 11, kind: input, shape index: {}]
  %s12 = inlined_call_operand.vmem [shape: bf16[256,512], index: 12, kind: input, shape index: {}]
  %s13 = inlined_call_operand.vmem [shape: f32[1,512], index: 13, kind: input, shape index: {}]
  %s14 = inlined_call_operand.vmem [shape: bf16[512,2352], index: 14, kind: input, shape index: {}]
  %s15 = inlined_call_operand.vmem [shape: f32[1,2352], index: 15, kind: input, shape index: {}]
  %s16 = inlined_call_operand.vmem [shape: f32[16,2352], index: 16, kind: output, shape index: {0}]
  %s17 = inlined_call_operand.hbm [shape: f32[1,1,1], index: 17, kind: output, shape index: {1}]
  %18 = xla_tuple %s16, %s17
  %s19 = sld [smem:[#allocation0]]
  $region82: #{vae_forward.1} parent=0
    _
  %s21 = ssub.s32 1, %s19
  %s22 = scalar_select 0, %s21, %s19
  $region1: #{vae_forward.1} parent=0
    #allocation2 [shape = 'u8[512]{0}', space=vmem, size = 0x400, scoped, tag = 'output window, operand 1, single buffered']
    #allocation3 [shape = 's32[1]{0}', space=sflag, size = 0x4, scoped, tag = 'scoped memory for vae_forward.1']
    %23 = vsyncpa [#allocation3], 0
    // Predicated region
    $region2: #{vae_forward.1} parent=1 // pred_check
      _
    $region3: #{vae_forward.1} parent=1 // pred_check_branch
      %25 = sbr.rel (0) target = $region5
    $region4: #{vae_forward.1} parent=1 // pred_region
      _
    $region5: #{vae_forward.1} parent=1 // pred_fallthru
      _
    // Predicated region
    $region6: #{vae_forward.1} parent=1 // pred_check
      _
    $region7: #{vae_forward.1} parent=1 // pred_check_branch
      %27 = sbr.rel (0) target = $region9
    $region8: #{vae_forward.1} parent=1 // pred_region
      _
    $region9: #{vae_forward.1} parent=1 // pred_fallthru
      _
    // Predicated region
    $region10: #{vae_forward.1} parent=1 // pred_check
      _
    $region11: #{vae_forward.1} parent=1 // pred_check_branch
      %29 = sbr.rel (0) target = $region13
    $region12: #{vae_forward.1} parent=1 // pred_region
      _
    $region13: #{vae_forward.1} parent=1 // pred_fallthru
      _
    // Predicated region
    $region14: #{vae_forward.1} parent=1 // pred_check
      _
    $region15: #{vae_forward.1} parent=1 // pred_check_branch
      %31 = sbr.rel (0) target = $region17
    $region16: #{vae_forward.1} parent=1 // pred_region
      _
    $region17: #{vae_forward.1} parent=1 // pred_fallthru
      _
    // Predicated region
    $region18: #{vae_forward.1} parent=1 // pred_check
      _
    $region19: #{vae_forward.1} parent=1 // pred_check_branch
      %33 = sbr.rel (0) target = $region21
    $region20: #{vae_forward.1} parent=1 // pred_region
      _
    $region21: #{vae_forward.1} parent=1 // pred_fallthru
      _
    // Predicated region
    $region22: #{vae_forward.1} parent=1 // pred_check
      _
    $region23: #{vae_forward.1} parent=1 // pred_check_branch
      %35 = sbr.rel (0) target = $region25
    $region24: #{vae_forward.1} parent=1 // pred_region
      _
    $region25: #{vae_forward.1} parent=1 // pred_fallthru
      _
    // Predicated region
    $region26: #{vae_forward.1} parent=1 // pred_check
      _
    $region27: #{vae_forward.1} parent=1 // pred_check_branch
      %37 = sbr.rel (0) target = $region29
    $region28: #{vae_forward.1} parent=1 // pred_region
      _
    $region29: #{vae_forward.1} parent=1 // pred_fallthru
      _
    // Predicated region
    $region30: #{vae_forward.1} parent=1 // pred_check
      _
    $region31: #{vae_forward.1} parent=1 // pred_check_branch
      %39 = sbr.rel (0) target = $region33
    $region32: #{vae_forward.1} parent=1 // pred_region
      _
    $region33: #{vae_forward.1} parent=1 // pred_fallthru
      _
    // Predicated region
    $region34: #{vae_forward.1} parent=1 // pred_check
      _
    $region35: #{vae_forward.1} parent=1 // pred_check_branch
      %41 = sbr.rel (0) target = $region37
    $region36: #{vae_forward.1} parent=1 // pred_region
      _
    $region37: #{vae_forward.1} parent=1 // pred_fallthru
      _
    // Predicated region
    $region38: #{vae_forward.1} parent=1 // pred_check
      _
    $region39: #{vae_forward.1} parent=1 // pred_check_branch
      %43 = sbr.rel (0) target = $region41
    $region40: #{vae_forward.1} parent=1 // pred_region
      _
    $region41: #{vae_forward.1} parent=1 // pred_fallthru
      _
    // Predicated region
    $region42: #{vae_forward.1} parent=1 // pred_check
      _
    $region43: #{vae_forward.1} parent=1 // pred_check_branch
      %45 = sbr.rel (0) target = $region45
    $region44: #{vae_forward.1} parent=1 // pred_region
      _
    $region45: #{vae_forward.1} parent=1 // pred_fallthru
      _
    // Predicated region
    $region46: #{vae_forward.1} parent=1 // pred_check
      _
    $region47: #{vae_forward.1} parent=1 // pred_check_branch
      %47 = sbr.rel (0) target = $region49
    $region48: #{vae_forward.1} parent=1 // pred_region
      _
    $region49: #{vae_forward.1} parent=1 // pred_fallthru
      _
    // Predicated region
    $region50: #{vae_forward.1} parent=1 // pred_check
      _
    $region51: #{vae_forward.1} parent=1 // pred_check_branch
      %49 = sbr.rel (0) target = $region53
    $region52: #{vae_forward.1} parent=1 // pred_region
      _
    $region53: #{vae_forward.1} parent=1 // pred_fallthru
      _
    // Predicated region
    $region54: #{vae_forward.1} parent=1 // pred_check
      _
    $region55: #{vae_forward.1} parent=1 // pred_check_branch
      %51 = sbr.rel (0) target = $region57
    $region56: #{vae_forward.1} parent=1 // pred_region
      _
    $region57: #{vae_forward.1} parent=1 // pred_fallthru
      _
    // Predicated region
    $region58: #{vae_forward.1} parent=1 // pred_check
      _
    $region59: #{vae_forward.1} parent=1 // pred_check_branch
      %53 = sbr.rel (0) target = $region61
    $region60: #{vae_forward.1} parent=1 // pred_region
      _
    $region61: #{vae_forward.1} parent=1 // pred_fallthru
      _
    // Predicated region
    $region62: #{vae_forward.1} parent=1 // pred_check
      _
    $region63: #{vae_forward.1} parent=1 // pred_check_branch
      %55 = sbr.rel (0) target = $region65
    $region64: #{vae_forward.1} parent=1 // pred_region
      _
    $region65: #{vae_forward.1} parent=1 // pred_fallthru
      _
    %v58 = vld [vmem:[%s0] sm:$0xff]
    %v59 = vld [vmem:[%s0 + $0x8] sm:$0xff]
    %v60 = vld [vmem:[%s0 + $0x10] sm:$0xff]
    %v61 = vld [vmem:[%s0 + $0x18] sm:$0xff]
    %v62 = vld [vmem:[%s0 + $0x20] sm:$0xff]
    %v63 = vld [vmem:[%s0 + $0x28] sm:$0xff]
    %v64 = vld [vmem:[%s0 + $0x30] sm:$0xff]
    %v65 = vld [vmem:[%s0 + $0x38] sm:$0xff]
    %v66 = vld [vmem:[%s0 + $0x40] sm:$0xff]
    %v67 = vld [vmem:[%s0 + $0x48] sm:$0xff]
    %v68 = vld [vmem:[%s0 + $0x50] sm:$0xff]
    %v69 = vld [vmem:[%s0 + $0x58] sm:$0xff]
    %v70 = vld [vmem:[%s0 + $0x60] sm:$0xff]
    %v71 = vld [vmem:[%s0 + $0x68] sm:$0xff]
    %v72 = vld [vmem:[%s0 + $0x70] sm:$0xff]
    %v73 = vld [vmem:[%s0 + $0x78] sm:$0xff]
    %v74 = vld [vmem:[%s0 + $0x80] sm:$0xff]
    %v75 = vld [vmem:[%s0 + $0x88] sm:$0xff]
    %v76 = vld [vmem:[%s0 + $0x90] sm:$0xff]
    %v77 = vld [vmem:[%s0 + $0x98] sm:$0xff]
    %v78 = vld [vmem:[%s0 + $0xa0] sm:$0xff]
    %v79 = vld [vmem:[%s0 + $0xa8] sm:$0xff]
    %v80 = vld [vmem:[%s0 + $0xb0] sm:$0xff]
    %v81 = vld [vmem:[%s0 + $0xb8] sm:$0xff]
    %v82 = vld [vmem:[%s0 + $0xc0] sm:$0xff]
    %v83 = vld [vmem:[%s0 + $0xc8] sm:$0xff]
    %v84 = vld [vmem:[%s0 + $0xd0] sm:$0xff]
    %v85 = vld [vmem:[%s0 + $0xd8] sm:$0xff]
    %v86 = vld [vmem:[%s0 + $0xe0] sm:$0xff]
    %v87 = vld [vmem:[%s0 + $0xe8] sm:$0xff]
    %v88 = vld [vmem:[%s0 + $0xf0] sm:$0xff]
    %v89 = vld [vmem:[%s0 + $0xf8] sm:$0xff]
    %v90 = vld [vmem:[%s0 + $0x100] sm:$0xff]
    %v91 = vld [vmem:[%s0 + $0x108] sm:$0xff]
    %v92 = vld [vmem:[%s0 + $0x110] sm:$0xff]
    %v93 = vld [vmem:[%s0 + $0x118] sm:$0xff]
    %v94 = vld [vmem:[%s0 + $0x120] sm:$0xff]
    %v95 = vld [vmem:[%s0 + $0x128] sm:$0xff]
    %v96 = vpack.c.bf16 %v77, %v58
    %v97 = vpack.c.bf16 %v78, %v59
    %v98 = vpack.c.bf16 %v79, %v60
    %v99 = vpack.c.bf16 %v80, %v61
    %v100 = vpack.c.bf16 %v81, %v62
    %v101 = vpack.c.bf16 %v82, %v63
    %v102 = vpack.c.bf16 %v83, %v64
    %v103 = vpack.c.bf16 %v84, %v65
    %v104 = vpack.c.bf16 %v85, %v66
    %v105 = vpack.c.bf16 %v86, %v67
    %v106 = vpack.c.bf16 %v87, %v68
    %v107 = vpack.c.bf16 %v88, %v69
    %v108 = vpack.c.bf16 %v89, %v70
    %v109 = vpack.c.bf16 %v90, %v71
    %v110 = vpack.c.bf16 %v91, %v72
    %v111 = vpack.c.bf16 %v92, %v73
    %v112 = vpack.c.bf16 %v93, %v74
    %v113 = vpack.c.bf16 %v94, %v75
    %v114 = vpack.c.bf16 %v95, %v76
    %v115 = vld [vmem:[%s2] sm:$0xff]
    %v116 = vld [vmem:[%s2 + $0x8] sm:$0xff]
    %v117 = vld [vmem:[%s2 + $0x10] sm:$0xff]
    %v118 = vld [vmem:[%s2 + $0x18] sm:$0xff]
    %v119 = vld [vmem:[%s2 + $0x20] sm:$0xff]
    %v120 = vld [vmem:[%s2 + $0x28] sm:$0xff]
    %v121 = vld [vmem:[%s2 + $0x30] sm:$0xff]
    %v122 = vld [vmem:[%s2 + $0x38] sm:$0xff]
    %v123 = vld [vmem:[%s2 + $0x40] sm:$0xff]
    %v124 = vld [vmem:[%s2 + $0x48] sm:$0xff]
    %v125 = vld [vmem:[%s2 + $0x50] sm:$0xff]
    %v126 = vld [vmem:[%s2 + $0x58] sm:$0xff]
    %v127 = vld [vmem:[%s2 + $0x60] sm:$0xff]
    %v128 = vld [vmem:[%s2 + $0x68] sm:$0xff]
    %v129 = vld [vmem:[%s2 + $0x70] sm:$0xff]
    %v130 = vld [vmem:[%s2 + $0x78] sm:$0xff]
    %v131 = vld [vmem:[%s2 + $0x80] sm:$0xff]
    %v132 = vld [vmem:[%s2 + $0x88] sm:$0xff]
    %v133 = vld [vmem:[%s2 + $0x90] sm:$0xff]
    %v134 = vld [vmem:[%s2 + $0x98] sm:$0xff]
    %v135 = vld [vmem:[%s2 + $0xa0] sm:$0xff]
    %v136 = vld [vmem:[%s2 + $0xa8] sm:$0xff]
    %v137 = vld [vmem:[%s2 + $0xb0] sm:$0xff]
    %v138 = vld [vmem:[%s2 + $0xb8] sm:$0xff]
    %v139 = vld [vmem:[%s2 + $0xc0] sm:$0xff]
    %v140 = vld [vmem:[%s2 + $0xc8] sm:$0xff]
    %v141 = vld [vmem:[%s2 + $0xd0] sm:$0xff]
    %v142 = vld [vmem:[%s2 + $0xd8] sm:$0xff]
    %v143 = vld [vmem:[%s2 + $0xe0] sm:$0xff]
    %v144 = vld [vmem:[%s2 + $0xe8] sm:$0xff]
    %v145 = vld [vmem:[%s2 + $0xf0] sm:$0xff]
    %v146 = vld [vmem:[%s2 + $0xf8] sm:$0xff]
    %v147 = vld [vmem:[%s2 + $0x100] sm:$0xff]
    %v148 = vld [vmem:[%s2 + $0x108] sm:$0xff]
    %v149 = vld [vmem:[%s2 + $0x110] sm:$0xff]
    %v150 = vld [vmem:[%s2 + $0x118] sm:$0xff]
    %v151 = vld [vmem:[%s2 + $0x120] sm:$0xff]
    %v152 = vld [vmem:[%s2 + $0x128] sm:$0xff]
    %v153 = vld [vmem:[%s2 + $0x130] sm:$0xff]
    %v154 = vld [vmem:[%s2 + $0x138] sm:$0xff]
    %v155 = vld [vmem:[%s2 + $0x140] sm:$0xff]
    %v156 = vld [vmem:[%s2 + $0x148] sm:$0xff]
    %v157 = vld [vmem:[%s2 + $0x150] sm:$0xff]
    %v158 = vld [vmem:[%s2 + $0x158] sm:$0xff]
    %v159 = vld [vmem:[%s2 + $0x160] sm:$0xff]
    %v160 = vld [vmem:[%s2 + $0x168] sm:$0xff]
    %v161 = vld [vmem:[%s2 + $0x170] sm:$0xff]
    %v162 = vld [vmem:[%s2 + $0x178] sm:$0xff]
    %v163 = vld [vmem:[%s2 + $0x180] sm:$0xff]
    %v164 = vld [vmem:[%s2 + $0x188] sm:$0xff]
    %v165 = vld [vmem:[%s2 + $0x190] sm:$0xff]
    %v166 = vld [vmem:[%s2 + $0x198] sm:$0xff]
    %v167 = vld [vmem:[%s2 + $0x1a0] sm:$0xff]
    %v168 = vld [vmem:[%s2 + $0x1a8] sm:$0xff]
    %v169 = vld [vmem:[%s2 + $0x1b0] sm:$0xff]
    %v170 = vld [vmem:[%s2 + $0x1b8] sm:$0xff]
    %v171 = vld [vmem:[%s2 + $0x1c0] sm:$0xff]
    %v172 = vld [vmem:[%s2 + $0x1c8] sm:$0xff]
    %v173 = vld [vmem:[%s2 + $0x1d0] sm:$0xff]
    %v174 = vld [vmem:[%s2 + $0x1d8] sm:$0xff]
    %v175 = vld [vmem:[%s2 + $0x1e0] sm:$0xff]
    %v176 = vld [vmem:[%s2 + $0x1e8] sm:$0xff]
    %v177 = vld [vmem:[%s2 + $0x1f0] sm:$0xff]
    %v178 = vld [vmem:[%s2 + $0x1f8] sm:$0xff]
    %v179 = vld [vmem:[%s2 + $0x200] sm:$0xff]
    %v180 = vld [vmem:[%s2 + $0x208] sm:$0xff]
    %v181 = vld [vmem:[%s2 + $0x210] sm:$0xff]
    %v182 = vld [vmem:[%s2 + $0x218] sm:$0xff]
    %v183 = vld [vmem:[%s2 + $0x220] sm:$0xff]
    %v184 = vld [vmem:[%s2 + $0x228] sm:$0xff]
    %v185 = vld [vmem:[%s2 + $0x230] sm:$0xff]
    %v186 = vld [vmem:[%s2 + $0x238] sm:$0xff]
    %v187 = vld [vmem:[%s2 + $0x240] sm:$0xff]
    %v188 = vld [vmem:[%s2 + $0x248] sm:$0xff]
    %v189 = vld [vmem:[%s2 + $0x250] sm:$0xff]
    %v190 = vld [vmem:[%s2 + $0x258] sm:$0xff]
    %v191 = vld [vmem:[%s2 + $0x260] sm:$0xff]
    %v192 = vld [vmem:[%s2 + $0x268] sm:$0xff]
    %v193 = vld [vmem:[%s2 + $0x270] sm:$0xff]
    %v194 = vld [vmem:[%s2 + $0x278] sm:$0xff]
    %v195 = vld [vmem:[%s2 + $0x280] sm:$0xff]
    %v196 = vld [vmem:[%s2 + $0x288] sm:$0xff]
    %v197 = vld [vmem:[%s2 + $0x290] sm:$0xff]
    %v198 = vld [vmem:[%s2 + $0x298] sm:$0xff]
    %v199 = vld [vmem:[%s2 + $0x2a0] sm:$0xff]
    %v200 = vld [vmem:[%s2 + $0x2a8] sm:$0xff]
    %v201 = vld [vmem:[%s2 + $0x2b0] sm:$0xff]
    %v202 = vld [vmem:[%s2 + $0x2b8] sm:$0xff]
    %v203 = vld [vmem:[%s2 + $0x2c0] sm:$0xff]
    %v204 = vld [vmem:[%s2 + $0x2c8] sm:$0xff]
    %v205 = vld [vmem:[%s2 + $0x2d0] sm:$0xff]
    %v206 = vld [vmem:[%s2 + $0x2d8] sm:$0xff]
    %v207 = vld [vmem:[%s2 + $0x2e0] sm:$0xff]
    %v208 = vld [vmem:[%s2 + $0x2e8] sm:$0xff]
    %v209 = vld [vmem:[%s2 + $0x2f0] sm:$0xff]
    %v210 = vld [vmem:[%s2 + $0x2f8] sm:$0xff]
    %v211 = vld [vmem:[%s2 + $0x300] sm:$0xff]
    %v212 = vld [vmem:[%s2 + $0x308] sm:$0xff]
    %v213 = vld [vmem:[%s2 + $0x310] sm:$0xff]
    %v214 = vld [vmem:[%s2 + $0x318] sm:$0xff]
    %v215 = vld [vmem:[%s2 + $0x320] sm:$0xff]
    %v216 = vld [vmem:[%s2 + $0x328] sm:$0xff]
    %v217 = vld [vmem:[%s2 + $0x330] sm:$0xff]
    %v218 = vld [vmem:[%s2 + $0x338] sm:$0xff]
    %v219 = vld [vmem:[%s2 + $0x340] sm:$0xff]
    %v220 = vld [vmem:[%s2 + $0x348] sm:$0xff]
    %v221 = vld [vmem:[%s2 + $0x350] sm:$0xff]
    %v222 = vld [vmem:[%s2 + $0x358] sm:$0xff]
    %v223 = vld [vmem:[%s2 + $0x360] sm:$0xff]
    %v224 = vld [vmem:[%s2 + $0x368] sm:$0xff]
    %v225 = vld [vmem:[%s2 + $0x370] sm:$0xff]
    %v226 = vld [vmem:[%s2 + $0x378] sm:$0xff]
    %v227 = vld [vmem:[%s2 + $0x380] sm:$0xff]
    %v228 = vld [vmem:[%s2 + $0x388] sm:$0xff]
    %v229 = vld [vmem:[%s2 + $0x390] sm:$0xff]
    %v230 = vld [vmem:[%s2 + $0x398] sm:$0xff]
    %v231 = vld [vmem:[%s2 + $0x3a0] sm:$0xff]
    %v232 = vld [vmem:[%s2 + $0x3a8] sm:$0xff]
    %v233 = vld [vmem:[%s2 + $0x3b0] sm:$0xff]
    %v234 = vld [vmem:[%s2 + $0x3b8] sm:$0xff]
    %v235 = vld [vmem:[%s2 + $0x3c0] sm:$0xff]
    %v236 = vld [vmem:[%s2 + $0x3c8] sm:$0xff]
    %v237 = vld [vmem:[%s2 + $0x3d0] sm:$0xff]
    %v238 = vld [vmem:[%s2 + $0x3d8] sm:$0xff]
    %v239 = vld [vmem:[%s2 + $0x3e0] sm:$0xff]
    %v240 = vld [vmem:[%s2 + $0x3e8] sm:$0xff]
    %v241 = vld [vmem:[%s2 + $0x3f0] sm:$0xff]
    %v242 = vld [vmem:[%s2 + $0x3f8] sm:$0xff]
    %v243 = vld [vmem:[%s2 + $0x400] sm:$0xff]
    %v244 = vld [vmem:[%s2 + $0x408] sm:$0xff]
    %v245 = vld [vmem:[%s2 + $0x410] sm:$0xff]
    %v246 = vld [vmem:[%s2 + $0x418] sm:$0xff]
    %v247 = vld [vmem:[%s2 + $0x420] sm:$0xff]
    %v248 = vld [vmem:[%s2 + $0x428] sm:$0xff]
    %v249 = vld [vmem:[%s2 + $0x430] sm:$0xff]
    %v250 = vld [vmem:[%s2 + $0x438] sm:$0xff]
    %v251 = vld [vmem:[%s2 + $0x440] sm:$0xff]
    %v252 = vld [vmem:[%s2 + $0x448] sm:$0xff]
    %v253 = vld [vmem:[%s2 + $0x450] sm:$0xff]
    %v254 = vld [vmem:[%s2 + $0x458] sm:$0xff]
    %v255 = vld [vmem:[%s2 + $0x460] sm:$0xff]
    %v256 = vld [vmem:[%s2 + $0x468] sm:$0xff]
    %v257 = vld [vmem:[%s2 + $0x470] sm:$0xff]
    %v258 = vld [vmem:[%s2 + $0x478] sm:$0xff]
    %v259 = vld [vmem:[%s2 + $0x480] sm:$0xff]
    %v260 = vld [vmem:[%s2 + $0x488] sm:$0xff]
    %v261 = vld [vmem:[%s2 + $0x490] sm:$0xff]
    %v262 = vld [vmem:[%s2 + $0x498] sm:$0xff]
    %v263 = vld [vmem:[%s2 + $0x4a0] sm:$0xff]
    %v264 = vld [vmem:[%s2 + $0x4a8] sm:$0xff]
    %v265 = vld [vmem:[%s2 + $0x4b0] sm:$0xff]
    %v266 = vld [vmem:[%s2 + $0x4b8] sm:$0xff]
    %v267 = vld [vmem:[%s2 + $0x4c0] sm:$0xff]
    %v268 = vld [vmem:[%s2 + $0x4c8] sm:$0xff]
    %v269 = vld [vmem:[%s2 + $0x4d0] sm:$0xff]
    %v270 = vld [vmem:[%s2 + $0x4d8] sm:$0xff]
    %v271 = vld [vmem:[%s2 + $0x4e0] sm:$0xff]
    %v272 = vld [vmem:[%s2 + $0x4e8] sm:$0xff]
    %v273 = vld [vmem:[%s2 + $0x4f0] sm:$0xff]
    %v274 = vld [vmem:[%s2 + $0x4f8] sm:$0xff]
    %v275 = vld [vmem:[%s2 + $0x500] sm:$0xff]
    %v276 = vld [vmem:[%s2 + $0x508] sm:$0xff]
    %v277 = vld [vmem:[%s2 + $0x510] sm:$0xff]
    %v278 = vld [vmem:[%s2 + $0x518] sm:$0xff]
    %v279 = vld [vmem:[%s2 + $0x520] sm:$0xff]
    %v280 = vld [vmem:[%s2 + $0x528] sm:$0xff]
    %v281 = vld [vmem:[%s2 + $0x530] sm:$0xff]
    %v282 = vld [vmem:[%s2 + $0x538] sm:$0xff]
    %v283 = vld [vmem:[%s2 + $0x540] sm:$0xff]
    %v284 = vld [vmem:[%s2 + $0x548] sm:$0xff]
    %v285 = vld [vmem:[%s2 + $0x550] sm:$0xff]
    %v286 = vld [vmem:[%s2 + $0x558] sm:$0xff]
    %v287 = vld [vmem:[%s2 + $0x560] sm:$0xff]
    %v288 = vld [vmem:[%s2 + $0x568] sm:$0xff]
    %v289 = vld [vmem:[%s2 + $0x570] sm:$0xff]
    %v290 = vld [vmem:[%s2 + $0x578] sm:$0xff]
    %v291 = vld [vmem:[%s2 + $0x580] sm:$0xff]
    %v292 = vld [vmem:[%s2 + $0x588] sm:$0xff]
    %v293 = vld [vmem:[%s2 + $0x590] sm:$0xff]
    %v294 = vld [vmem:[%s2 + $0x598] sm:$0xff]
    %v295 = vld [vmem:[%s2 + $0x5a0] sm:$0xff]
    %v296 = vld [vmem:[%s2 + $0x5a8] sm:$0xff]
    %v297 = vld [vmem:[%s2 + $0x5b0] sm:$0xff]
    %v298 = vld [vmem:[%s2 + $0x5b8] sm:$0xff]
    %v299 = vld [vmem:[%s2 + $0x5c0] sm:$0xff]
    %v300 = vld [vmem:[%s2 + $0x5c8] sm:$0xff]
    %v301 = vld [vmem:[%s2 + $0x5d0] sm:$0xff]
    %v302 = vld [vmem:[%s2 + $0x5d8] sm:$0xff]
    %v303 = vld [vmem:[%s2 + $0x5e0] sm:$0xff]
    %v304 = vld [vmem:[%s2 + $0x5e8] sm:$0xff]
    %v305 = vld [vmem:[%s2 + $0x5f0] sm:$0xff]
    %v306 = vld [vmem:[%s2 + $0x5f8] sm:$0xff]
    %v307 = vld [vmem:[%s2 + $0x600] sm:$0xff]
    %v308 = vld [vmem:[%s2 + $0x608] sm:$0xff]
    %v309 = vld [vmem:[%s2 + $0x610] sm:$0xff]
    %v310 = vld [vmem:[%s2 + $0x618] sm:$0xff]
    %v311 = vld [vmem:[%s2 + $0x620] sm:$0xff]
    %v312 = vld [vmem:[%s2 + $0x628] sm:$0xff]
    %v313 = vld [vmem:[%s2 + $0x630] sm:$0xff]
    %v314 = vld [vmem:[%s2 + $0x638] sm:$0xff]
    %v315 = vld [vmem:[%s2 + $0x640] sm:$0xff]
    %v316 = vld [vmem:[%s2 + $0x648] sm:$0xff]
    %v317 = vld [vmem:[%s2 + $0x650] sm:$0xff]
    %v318 = vld [vmem:[%s2 + $0x658] sm:$0xff]
    %v319 = vld [vmem:[%s2 + $0x660] sm:$0xff]
    %v320 = vld [vmem:[%s2 + $0x668] sm:$0xff]
    %v321 = vld [vmem:[%s2 + $0x670] sm:$0xff]
    %v322 = vld [vmem:[%s2 + $0x678] sm:$0xff]
    %v323 = vld [vmem:[%s2 + $0x680] sm:$0xff]
    %v324 = vld [vmem:[%s2 + $0x688] sm:$0xff]
    %v325 = vld [vmem:[%s2 + $0x690] sm:$0xff]
    %v326 = vld [vmem:[%s2 + $0x698] sm:$0xff]
    %v327 = vld [vmem:[%s2 + $0x6a0] sm:$0xff]
    %v328 = vld [vmem:[%s2 + $0x6a8] sm:$0xff]
    %v329 = vld [vmem:[%s2 + $0x6b0] sm:$0xff]
    %v330 = vld [vmem:[%s2 + $0x6b8] sm:$0xff]
    %v331 = vld [vmem:[%s2 + $0x6c0] sm:$0xff]
    %v332 = vld [vmem:[%s2 + $0x6c8] sm:$0xff]
    %v333 = vld [vmem:[%s2 + $0x6d0] sm:$0xff]
    %v334 = vld [vmem:[%s2 + $0x6d8] sm:$0xff]
    %v335 = vld [vmem:[%s2 + $0x6e0] sm:$0xff]
    %v336 = vld [vmem:[%s2 + $0x6e8] sm:$0xff]
    %v337 = vld [vmem:[%s2 + $0x6f0] sm:$0xff]
    %v338 = vld [vmem:[%s2 + $0x6f8] sm:$0xff]
    %v339 = vld [vmem:[%s2 + $0x700] sm:$0xff]
    %v340 = vld [vmem:[%s2 + $0x708] sm:$0xff]
    %v341 = vld [vmem:[%s2 + $0x710] sm:$0xff]
    %v342 = vld [vmem:[%s2 + $0x718] sm:$0xff]
    %v343 = vld [vmem:[%s2 + $0x720] sm:$0xff]
    %v344 = vld [vmem:[%s2 + $0x728] sm:$0xff]
    %v345 = vld [vmem:[%s2 + $0x730] sm:$0xff]
    %v346 = vld [vmem:[%s2 + $0x738] sm:$0xff]
    %v347 = vld [vmem:[%s2 + $0x740] sm:$0xff]
    %v348 = vld [vmem:[%s2 + $0x748] sm:$0xff]
    %v349 = vld [vmem:[%s2 + $0x750] sm:$0xff]
    %v350 = vld [vmem:[%s2 + $0x758] sm:$0xff]
    %v351 = vld [vmem:[%s2 + $0x760] sm:$0xff]
    %v352 = vld [vmem:[%s2 + $0x768] sm:$0xff]
    %v353 = vld [vmem:[%s2 + $0x770] sm:$0xff]
    %v354 = vld [vmem:[%s2 + $0x778] sm:$0xff]
    %v355 = vld [vmem:[%s2 + $0x780] sm:$0xff]
    %v356 = vld [vmem:[%s2 + $0x788] sm:$0xff]
    %v357 = vld [vmem:[%s2 + $0x790] sm:$0xff]
    %v358 = vld [vmem:[%s2 + $0x798] sm:$0xff]
    %v359 = vld [vmem:[%s2 + $0x7a0] sm:$0xff]
    %v360 = vld [vmem:[%s2 + $0x7a8] sm:$0xff]
    %v361 = vld [vmem:[%s2 + $0x7b0] sm:$0xff]
    %v362 = vld [vmem:[%s2 + $0x7b8] sm:$0xff]
    %v363 = vld [vmem:[%s2 + $0x7c0] sm:$0xff]
    %v364 = vld [vmem:[%s2 + $0x7c8] sm:$0xff]
    %v365 = vld [vmem:[%s2 + $0x7d0] sm:$0xff]
    %v366 = vld [vmem:[%s2 + $0x7d8] sm:$0xff]
    %v367 = vld [vmem:[%s2 + $0x7e0] sm:$0xff]
    %v368 = vld [vmem:[%s2 + $0x7e8] sm:$0xff]
    %v369 = vld [vmem:[%s2 + $0x7f0] sm:$0xff]
    %v370 = vld [vmem:[%s2 + $0x7f8] sm:$0xff]
    %v371 = vld [vmem:[%s2 + $0x800] sm:$0xff]
    %v372 = vld [vmem:[%s2 + $0x808] sm:$0xff]
    %v373 = vld [vmem:[%s2 + $0x810] sm:$0xff]
    %v374 = vld [vmem:[%s2 + $0x818] sm:$0xff]
    %v375 = vld [vmem:[%s2 + $0x820] sm:$0xff]
    %v376 = vld [vmem:[%s2 + $0x828] sm:$0xff]
    %v377 = vld [vmem:[%s2 + $0x830] sm:$0xff]
    %v378 = vld [vmem:[%s2 + $0x838] sm:$0xff]
    %v379 = vld [vmem:[%s2 + $0x840] sm:$0xff]
    %v380 = vld [vmem:[%s2 + $0x848] sm:$0xff]
    %v381 = vld [vmem:[%s2 + $0x850] sm:$0xff]
    %v382 = vld [vmem:[%s2 + $0x858] sm:$0xff]
    %v383 = vld [vmem:[%s2 + $0x860] sm:$0xff]
    %v384 = vld [vmem:[%s2 + $0x868] sm:$0xff]
    %v385 = vld [vmem:[%s2 + $0x870] sm:$0xff]
    %v386 = vld [vmem:[%s2 + $0x878] sm:$0xff]
    %v387 = vld [vmem:[%s2 + $0x880] sm:$0xff]
    %v388 = vld [vmem:[%s2 + $0x888] sm:$0xff]
    %v389 = vld [vmem:[%s2 + $0x890] sm:$0xff]
    %v390 = vld [vmem:[%s2 + $0x898] sm:$0xff]
    %v391 = vld [vmem:[%s2 + $0x8a0] sm:$0xff]
    %v392 = vld [vmem:[%s2 + $0x8a8] sm:$0xff]
    %v393 = vld [vmem:[%s2 + $0x8b0] sm:$0xff]
    %v394 = vld [vmem:[%s2 + $0x8b8] sm:$0xff]
    %v395 = vld [vmem:[%s2 + $0x8c0] sm:$0xff]
    %v396 = vld [vmem:[%s2 + $0x8c8] sm:$0xff]
    %v397 = vld [vmem:[%s2 + $0x8d0] sm:$0xff]
    %v398 = vld [vmem:[%s2 + $0x8d8] sm:$0xff]
    %v399 = vld [vmem:[%s2 + $0x8e0] sm:$0xff]
    %v400 = vld [vmem:[%s2 + $0x8e8] sm:$0xff]
    %v401 = vld [vmem:[%s2 + $0x8f0] sm:$0xff]
    %v402 = vld [vmem:[%s2 + $0x8f8] sm:$0xff]
    %v403 = vld [vmem:[%s2 + $0x900] sm:$0xff]
    %v404 = vld [vmem:[%s2 + $0x908] sm:$0xff]
    %v405 = vld [vmem:[%s2 + $0x910] sm:$0xff]
    %v406 = vld [vmem:[%s2 + $0x918] sm:$0xff]
    %v407 = vld [vmem:[%s2 + $0x920] sm:$0xff]
    %v408 = vld [vmem:[%s2 + $0x928] sm:$0xff]
    %v409 = vld [vmem:[%s2 + $0x930] sm:$0xff]
    %v410 = vld [vmem:[%s2 + $0x938] sm:$0xff]
    %v411 = vld [vmem:[%s2 + $0x940] sm:$0xff]
    %v412 = vld [vmem:[%s2 + $0x948] sm:$0xff]
    %v413 = vld [vmem:[%s2 + $0x950] sm:$0xff]
    %v414 = vld [vmem:[%s2 + $0x958] sm:$0xff]
    %v415 = vld [vmem:[%s2 + $0x960] sm:$0xff]
    %v416 = vld [vmem:[%s2 + $0x968] sm:$0xff]
    %v417 = vld [vmem:[%s2 + $0x970] sm:$0xff]
    %v418 = vld [vmem:[%s2 + $0x978] sm:$0xff]
    %v419 = vld [vmem:[%s2 + $0x980] sm:$0xff]
    %v420 = vld [vmem:[%s2 + $0x988] sm:$0xff]
    %v421 = vld [vmem:[%s2 + $0x990] sm:$0xff]
    %v422 = vld [vmem:[%s2 + $0x998] sm:$0xff]
    %v423 = vld [vmem:[%s2 + $0x9a0] sm:$0xff]
    %v424 = vld [vmem:[%s2 + $0x9a8] sm:$0xff]
    %v425 = vld [vmem:[%s2 + $0x9b0] sm:$0xff]
    %v426 = vld [vmem:[%s2 + $0x9b8] sm:$0xff]
    %v427 = vld [vmem:[%s2 + $0x9c0] sm:$0xff]
    %v428 = vld [vmem:[%s2 + $0x9c8] sm:$0xff]
    %v429 = vld [vmem:[%s2 + $0x9d0] sm:$0xff]
    %v430 = vld [vmem:[%s2 + $0x9d8] sm:$0xff]
    %v431 = vld [vmem:[%s2 + $0x9e0] sm:$0xff]
    %v432 = vld [vmem:[%s2 + $0x9e8] sm:$0xff]
    %v433 = vld [vmem:[%s2 + $0x9f0] sm:$0xff]
    %v434 = vld [vmem:[%s2 + $0x9f8] sm:$0xff]
    %v435 = vld [vmem:[%s2 + $0xa00] sm:$0xff]
    %v436 = vld [vmem:[%s2 + $0xa08] sm:$0xff]
    %v437 = vld [vmem:[%s2 + $0xa10] sm:$0xff]
    %v438 = vld [vmem:[%s2 + $0xa18] sm:$0xff]
    %v439 = vld [vmem:[%s2 + $0xa20] sm:$0xff]
    %v440 = vld [vmem:[%s2 + $0xa28] sm:$0xff]
    %v441 = vld [vmem:[%s2 + $0xa30] sm:$0xff]
    %v442 = vld [vmem:[%s2 + $0xa38] sm:$0xff]
    %v443 = vld [vmem:[%s2 + $0xa40] sm:$0xff]
    %v444 = vld [vmem:[%s2 + $0xa48] sm:$0xff]
    %v445 = vld [vmem:[%s2 + $0xa50] sm:$0xff]
    %v446 = vld [vmem:[%s2 + $0xa58] sm:$0xff]
    %v447 = vld [vmem:[%s2 + $0xa60] sm:$0xff]
    %v448 = vld [vmem:[%s2 + $0xa68] sm:$0xff]
    %v449 = vld [vmem:[%s2 + $0xa70] sm:$0xff]
    %v450 = vld [vmem:[%s2 + $0xa78] sm:$0xff]
    %v451 = vld [vmem:[%s2 + $0xa80] sm:$0xff]
    %v452 = vld [vmem:[%s2 + $0xa88] sm:$0xff]
    %v453 = vld [vmem:[%s2 + $0xa90] sm:$0xff]
    %v454 = vld [vmem:[%s2 + $0xa98] sm:$0xff]
    %v455 = vld [vmem:[%s2 + $0xaa0] sm:$0xff]
    %v456 = vld [vmem:[%s2 + $0xaa8] sm:$0xff]
    %v457 = vld [vmem:[%s2 + $0xab0] sm:$0xff]
    %v458 = vld [vmem:[%s2 + $0xab8] sm:$0xff]
    %v459 = vld [vmem:[%s2 + $0xac0] sm:$0xff]
    %v460 = vld [vmem:[%s2 + $0xac8] sm:$0xff]
    %v461 = vld [vmem:[%s2 + $0xad0] sm:$0xff]
    %v462 = vld [vmem:[%s2 + $0xad8] sm:$0xff]
    %v463 = vld [vmem:[%s2 + $0xae0] sm:$0xff]
    %v464 = vld [vmem:[%s2 + $0xae8] sm:$0xff]
    %v465 = vld [vmem:[%s2 + $0xaf0] sm:$0xff]
    %v466 = vld [vmem:[%s2 + $0xaf8] sm:$0xff]
    %v467 = vld [vmem:[%s2 + $0xb00] sm:$0xff]
    %v468 = vld [vmem:[%s2 + $0xb08] sm:$0xff]
    %v469 = vld [vmem:[%s2 + $0xb10] sm:$0xff]
    %v470 = vld [vmem:[%s2 + $0xb18] sm:$0xff]
    %v471 = vld [vmem:[%s2 + $0xb20] sm:$0xff]
    %v472 = vld [vmem:[%s2 + $0xb28] sm:$0xff]
    %v473 = vld [vmem:[%s2 + $0xb30] sm:$0xff]
    %v474 = vld [vmem:[%s2 + $0xb38] sm:$0xff]
    %v475 = vld [vmem:[%s2 + $0xb40] sm:$0xff]
    %v476 = vld [vmem:[%s2 + $0xb48] sm:$0xff]
    %v477 = vld [vmem:[%s2 + $0xb50] sm:$0xff]
    %v478 = vld [vmem:[%s2 + $0xb58] sm:$0xff]
    %v479 = vld [vmem:[%s2 + $0xb60] sm:$0xff]
    %v480 = vld [vmem:[%s2 + $0xb68] sm:$0xff]
    %v481 = vld [vmem:[%s2 + $0xb70] sm:$0xff]
    %v482 = vld [vmem:[%s2 + $0xb78] sm:$0xff]
    %v483 = vld [vmem:[%s2 + $0xb80] sm:$0xff]
    %v484 = vld [vmem:[%s2 + $0xb88] sm:$0xff]
    %v485 = vld [vmem:[%s2 + $0xb90] sm:$0xff]
    %v486 = vld [vmem:[%s2 + $0xb98] sm:$0xff]
    %v487 = vld [vmem:[%s2 + $0xba0] sm:$0xff]
    %v488 = vld [vmem:[%s2 + $0xba8] sm:$0xff]
    %v489 = vld [vmem:[%s2 + $0xbb0] sm:$0xff]
    %v490 = vld [vmem:[%s2 + $0xbb8] sm:$0xff]
    %v491 = vld [vmem:[%s2 + $0xbc0] sm:$0xff]
    %v492 = vld [vmem:[%s2 + $0xbc8] sm:$0xff]
    %v493 = vld [vmem:[%s2 + $0xbd0] sm:$0xff]
    %v494 = vld [vmem:[%s2 + $0xbd8] sm:$0xff]
    %v495 = vld [vmem:[%s2 + $0xbe0] sm:$0xff]
    %v496 = vld [vmem:[%s2 + $0xbe8] sm:$0xff]
    %v497 = vld [vmem:[%s2 + $0xbf0] sm:$0xff]
    %v498 = vld [vmem:[%s2 + $0xbf8] sm:$0xff]
    %v499 = vld [vmem:[%s2 + $0xc00] sm:$0xff]
    %v500 = vld [vmem:[%s2 + $0xc08] sm:$0xff]
    %v501 = vld [vmem:[%s2 + $0xc10] sm:$0xff]
    %v502 = vld [vmem:[%s2 + $0xc18] sm:$0xff]
    %v503 = vld [vmem:[%s2 + $0xc20] sm:$0xff]
    %v504 = vld [vmem:[%s2 + $0xc28] sm:$0xff]
    %v505 = vld [vmem:[%s2 + $0xc30] sm:$0xff]
    %v506 = vld [vmem:[%s2 + $0xc38] sm:$0xff]
    %v507 = vld [vmem:[%s2 + $0xc40] sm:$0xff]
    %v508 = vld [vmem:[%s2 + $0xc48] sm:$0xff]
    %v509 = vld [vmem:[%s2 + $0xc50] sm:$0xff]
    %v510 = vld [vmem:[%s2 + $0xc58] sm:$0xff]
    %v511 = vld [vmem:[%s2 + $0xc60] sm:$0xff]
    %v512 = vld [vmem:[%s2 + $0xc68] sm:$0xff]
    %v513 = vld [vmem:[%s2 + $0xc70] sm:$0xff]
    %v514 = vld [vmem:[%s2 + $0xc78] sm:$0xff]
    %v515 = vld [vmem:[%s2 + $0xc80] sm:$0xff]
    %v516 = vld [vmem:[%s2 + $0xc88] sm:$0xff]
    %v517 = vld [vmem:[%s2 + $0xc90] sm:$0xff]
    %v518 = vld [vmem:[%s2 + $0xc98] sm:$0xff]
    %v519 = vld [vmem:[%s2 + $0xca0] sm:$0xff]
    %v520 = vld [vmem:[%s2 + $0xca8] sm:$0xff]
    %v521 = vld [vmem:[%s2 + $0xcb0] sm:$0xff]
    %v522 = vld [vmem:[%s2 + $0xcb8] sm:$0xff]
    %v523 = vld [vmem:[%s2 + $0xcc0] sm:$0xff]
    %v524 = vld [vmem:[%s2 + $0xcc8] sm:$0xff]
    %v525 = vld [vmem:[%s2 + $0xcd0] sm:$0xff]
    %v526 = vld [vmem:[%s2 + $0xcd8] sm:$0xff]
    %v527 = vld [vmem:[%s2 + $0xce0] sm:$0xff]
    %v528 = vld [vmem:[%s2 + $0xce8] sm:$0xff]
    %v529 = vld [vmem:[%s2 + $0xcf0] sm:$0xff]
    %v530 = vld [vmem:[%s2 + $0xcf8] sm:$0xff]
    %v531 = vld [vmem:[%s2 + $0xd00] sm:$0xff]
    %v532 = vld [vmem:[%s2 + $0xd08] sm:$0xff]
    %v533 = vld [vmem:[%s2 + $0xd10] sm:$0xff]
    %v534 = vld [vmem:[%s2 + $0xd18] sm:$0xff]
    %v535 = vld [vmem:[%s2 + $0xd20] sm:$0xff]
    %v536 = vld [vmem:[%s2 + $0xd28] sm:$0xff]
    %v537 = vld [vmem:[%s2 + $0xd30] sm:$0xff]
    %v538 = vld [vmem:[%s2 + $0xd38] sm:$0xff]
    %v539 = vld [vmem:[%s2 + $0xd40] sm:$0xff]
    %v540 = vld [vmem:[%s2 + $0xd48] sm:$0xff]
    %v541 = vld [vmem:[%s2 + $0xd50] sm:$0xff]
    %v542 = vld [vmem:[%s2 + $0xd58] sm:$0xff]
    %v543 = vld [vmem:[%s2 + $0xd60] sm:$0xff]
    %v544 = vld [vmem:[%s2 + $0xd68] sm:$0xff]
    %v545 = vld [vmem:[%s2 + $0xd70] sm:$0xff]
    %v546 = vld [vmem:[%s2 + $0xd78] sm:$0xff]
    %v547 = vld [vmem:[%s2 + $0xd80] sm:$0xff]
    %v548 = vld [vmem:[%s2 + $0xd88] sm:$0xff]
    %v549 = vld [vmem:[%s2 + $0xd90] sm:$0xff]
    %v550 = vld [vmem:[%s2 + $0xd98] sm:$0xff]
    %v551 = vld [vmem:[%s2 + $0xda0] sm:$0xff]
    %v552 = vld [vmem:[%s2 + $0xda8] sm:$0xff]
    %v553 = vld [vmem:[%s2 + $0xdb0] sm:$0xff]
    %v554 = vld [vmem:[%s2 + $0xdb8] sm:$0xff]
    %v555 = vld [vmem:[%s2 + $0xdc0] sm:$0xff]
    %v556 = vld [vmem:[%s2 + $0xdc8] sm:$0xff]
    %v557 = vld [vmem:[%s2 + $0xdd0] sm:$0xff]
    %v558 = vld [vmem:[%s2 + $0xdd8] sm:$0xff]
    %v559 = vld [vmem:[%s2 + $0xde0] sm:$0xff]
    %v560 = vld [vmem:[%s2 + $0xde8] sm:$0xff]
    %v561 = vld [vmem:[%s2 + $0xdf0] sm:$0xff]
    %v562 = vld [vmem:[%s2 + $0xdf8] sm:$0xff]
    %v563 = vld [vmem:[%s2 + $0xe00] sm:$0xff]
    %v564 = vld [vmem:[%s2 + $0xe08] sm:$0xff]
    %v565 = vld [vmem:[%s2 + $0xe10] sm:$0xff]
    %v566 = vld [vmem:[%s2 + $0xe18] sm:$0xff]
    %v567 = vld [vmem:[%s2 + $0xe20] sm:$0xff]
    %v568 = vld [vmem:[%s2 + $0xe28] sm:$0xff]
    %v569 = vld [vmem:[%s2 + $0xe30] sm:$0xff]
    %v570 = vld [vmem:[%s2 + $0xe38] sm:$0xff]
    %v571 = vld [vmem:[%s2 + $0xe40] sm:$0xff]
    %v572 = vld [vmem:[%s2 + $0xe48] sm:$0xff]
    %v573 = vld [vmem:[%s2 + $0xe50] sm:$0xff]
    %v574 = vld [vmem:[%s2 + $0xe58] sm:$0xff]
    %v575 = vld [vmem:[%s2 + $0xe60] sm:$0xff]
    %v576 = vld [vmem:[%s2 + $0xe68] sm:$0xff]
    %v577 = vld [vmem:[%s2 + $0xe70] sm:$0xff]
    %v578 = vld [vmem:[%s2 + $0xe78] sm:$0xff]
    %v579 = vld [vmem:[%s2 + $0xe80] sm:$0xff]
    %v580 = vld [vmem:[%s2 + $0xe88] sm:$0xff]
    %v581 = vld [vmem:[%s2 + $0xe90] sm:$0xff]
    %v582 = vld [vmem:[%s2 + $0xe98] sm:$0xff]
    %v583 = vld [vmem:[%s2 + $0xea0] sm:$0xff]
    %v584 = vld [vmem:[%s2 + $0xea8] sm:$0xff]
    %v585 = vld [vmem:[%s2 + $0xeb0] sm:$0xff]
    %v586 = vld [vmem:[%s2 + $0xeb8] sm:$0xff]
    %v587 = vld [vmem:[%s2 + $0xec0] sm:$0xff]
    %v588 = vld [vmem:[%s2 + $0xec8] sm:$0xff]
    %v589 = vld [vmem:[%s2 + $0xed0] sm:$0xff]
    %v590 = vld [vmem:[%s2 + $0xed8] sm:$0xff]
    %v591 = vld [vmem:[%s2 + $0xee0] sm:$0xff]
    %v592 = vld [vmem:[%s2 + $0xee8] sm:$0xff]
    %v593 = vld [vmem:[%s2 + $0xef0] sm:$0xff]
    %v594 = vld [vmem:[%s2 + $0xef8] sm:$0xff]
    %v595 = vld [vmem:[%s2 + $0xf00] sm:$0xff]
    %v596 = vld [vmem:[%s2 + $0xf08] sm:$0xff]
    %v597 = vld [vmem:[%s2 + $0xf10] sm:$0xff]
    %v598 = vld [vmem:[%s2 + $0xf18] sm:$0xff]
    %v599 = vld [vmem:[%s2 + $0xf20] sm:$0xff]
    %v600 = vld [vmem:[%s2 + $0xf28] sm:$0xff]
    %v601 = vld [vmem:[%s2 + $0xf30] sm:$0xff]
    %v602 = vld [vmem:[%s2 + $0xf38] sm:$0xff]
    %v603 = vld [vmem:[%s2 + $0xf40] sm:$0xff]
    %v604 = vld [vmem:[%s2 + $0xf48] sm:$0xff]
    %v605 = vld [vmem:[%s2 + $0xf50] sm:$0xff]
    %v606 = vld [vmem:[%s2 + $0xf58] sm:$0xff]
    %v607 = vld [vmem:[%s2 + $0xf60] sm:$0xff]
    %v608 = vld [vmem:[%s2 + $0xf68] sm:$0xff]
    %v609 = vld [vmem:[%s2 + $0xf70] sm:$0xff]
    %v610 = vld [vmem:[%s2 + $0xf78] sm:$0xff]
    %v611 = vld [vmem:[%s2 + $0xf80] sm:$0xff]
    %v612 = vld [vmem:[%s2 + $0xf88] sm:$0xff]
    %v613 = vld [vmem:[%s2 + $0xf90] sm:$0xff]
    %v614 = vld [vmem:[%s2 + $0xf98] sm:$0xff]
    %v615 = vld [vmem:[%s2 + $0xfa0] sm:$0xff]
    %v616 = vld [vmem:[%s2 + $0xfa8] sm:$0xff]
    %v617 = vld [vmem:[%s2 + $0xfb0] sm:$0xff]
    %v618 = vld [vmem:[%s2 + $0xfb8] sm:$0xff]
    %v619 = vld [vmem:[%s2 + $0xfc0] sm:$0xff]
    %v620 = vld [vmem:[%s2 + $0xfc8] sm:$0xff]
    %v621 = vld [vmem:[%s2 + $0xfd0] sm:$0xff]
    %v622 = vld [vmem:[%s2 + $0xfd8] sm:$0xff]
    %v623 = vld [vmem:[%s2 + $0xfe0] sm:$0xff]
    %v624 = vld [vmem:[%s2 + $0xfe8] sm:$0xff]
    %v625 = vld [vmem:[%s2 + $0xff0] sm:$0xff]
    %v626 = vld [vmem:[%s2 + $0xff8] sm:$0xff]
    %v627 = vld [vmem:[%s2 + $0x1000] sm:$0xff]
    %v628 = vld [vmem:[%s2 + $0x1008] sm:$0xff]
    %v629 = vld [vmem:[%s2 + $0x1010] sm:$0xff]
    %v630 = vld [vmem:[%s2 + $0x1018] sm:$0xff]
    %v631 = vld [vmem:[%s2 + $0x1020] sm:$0xff]
    %v632 = vld [vmem:[%s2 + $0x1028] sm:$0xff]
    %v633 = vld [vmem:[%s2 + $0x1030] sm:$0xff]
    %v634 = vld [vmem:[%s2 + $0x1038] sm:$0xff]
    %v635 = vld [vmem:[%s2 + $0x1040] sm:$0xff]
    %v636 = vld [vmem:[%s2 + $0x1048] sm:$0xff]
    %v637 = vld [vmem:[%s2 + $0x1050] sm:$0xff]
    %v638 = vld [vmem:[%s2 + $0x1058] sm:$0xff]
    %v639 = vld [vmem:[%s2 + $0x1060] sm:$0xff]
    %v640 = vld [vmem:[%s2 + $0x1068] sm:$0xff]
    %v641 = vld [vmem:[%s2 + $0x1070] sm:$0xff]
    %v642 = vld [vmem:[%s2 + $0x1078] sm:$0xff]
    %v643 = vld [vmem:[%s2 + $0x1080] sm:$0xff]
    %v644 = vld [vmem:[%s2 + $0x1088] sm:$0xff]
    %v645 = vld [vmem:[%s2 + $0x1090] sm:$0xff]
    %v646 = vld [vmem:[%s2 + $0x1098] sm:$0xff]
    %v647 = vld [vmem:[%s2 + $0x10a0] sm:$0xff]
    %v648 = vld [vmem:[%s2 + $0x10a8] sm:$0xff]
    %v649 = vld [vmem:[%s2 + $0x10b0] sm:$0xff]
    %v650 = vld [vmem:[%s2 + $0x10b8] sm:$0xff]
    %v651 = vld [vmem:[%s2 + $0x10c0] sm:$0xff]
    %v652 = vld [vmem:[%s2 + $0x10c8] sm:$0xff]
    %v653 = vld [vmem:[%s2 + $0x10d0] sm:$0xff]
    %v654 = vld [vmem:[%s2 + $0x10d8] sm:$0xff]
    %v655 = vld [vmem:[%s2 + $0x10e0] sm:$0xff]
    %v656 = vld [vmem:[%s2 + $0x10e8] sm:$0xff]
    %v657 = vld [vmem:[%s2 + $0x10f0] sm:$0xff]
    %v658 = vld [vmem:[%s2 + $0x10f8] sm:$0xff]
    %v659 = vld [vmem:[%s2 + $0x1100] sm:$0xff]
    %v660 = vld [vmem:[%s2 + $0x1108] sm:$0xff]
    %v661 = vld [vmem:[%s2 + $0x1110] sm:$0xff]
    %v662 = vld [vmem:[%s2 + $0x1118] sm:$0xff]
    %v663 = vld [vmem:[%s2 + $0x1120] sm:$0xff]
    %v664 = vld [vmem:[%s2 + $0x1128] sm:$0xff]
    %v665 = vld [vmem:[%s2 + $0x1130] sm:$0xff]
    %v666 = vld [vmem:[%s2 + $0x1138] sm:$0xff]
    %v667 = vld [vmem:[%s2 + $0x1140] sm:$0xff]
    %v668 = vld [vmem:[%s2 + $0x1148] sm:$0xff]
    %v669 = vld [vmem:[%s2 + $0x1150] sm:$0xff]
    %v670 = vld [vmem:[%s2 + $0x1158] sm:$0xff]
    %v671 = vld [vmem:[%s2 + $0x1160] sm:$0xff]
    %v672 = vld [vmem:[%s2 + $0x1168] sm:$0xff]
    %v673 = vld [vmem:[%s2 + $0x1170] sm:$0xff]
    %v674 = vld [vmem:[%s2 + $0x1178] sm:$0xff]
    %v675 = vld [vmem:[%s2 + $0x1180] sm:$0xff]
    %v676 = vld [vmem:[%s2 + $0x1188] sm:$0xff]
    %v677 = vld [vmem:[%s2 + $0x1190] sm:$0xff]
    %v678 = vld [vmem:[%s2 + $0x1198] sm:$0xff]
    %v679 = vld [vmem:[%s2 + $0x11a0] sm:$0xff]
    %v680 = vld [vmem:[%s2 + $0x11a8] sm:$0xff]
    %v681 = vld [vmem:[%s2 + $0x11b0] sm:$0xff]
    %v682 = vld [vmem:[%s2 + $0x11b8] sm:$0xff]
    %v683 = vld [vmem:[%s2 + $0x11c0] sm:$0xff]
    %v684 = vld [vmem:[%s2 + $0x11c8] sm:$0xff]
    %v685 = vld [vmem:[%s2 + $0x11d0] sm:$0xff]
    %v686 = vld [vmem:[%s2 + $0x11d8] sm:$0xff]
    %v687 = vld [vmem:[%s2 + $0x11e0] sm:$0xff]
    %v688 = vld [vmem:[%s2 + $0x11e8] sm:$0xff]
    %v689 = vld [vmem:[%s2 + $0x11f0] sm:$0xff]
    %v690 = vld [vmem:[%s2 + $0x11f8] sm:$0xff]
    %v691 = vld [vmem:[%s2 + $0x1200] sm:$0xff]
    %v692 = vld [vmem:[%s2 + $0x1208] sm:$0xff]
    %v693 = vld [vmem:[%s2 + $0x1210] sm:$0xff]
    %v694 = vld [vmem:[%s2 + $0x1218] sm:$0xff]
    %v695 = vld [vmem:[%s2 + $0x1220] sm:$0xff]
    %v696 = vld [vmem:[%s2 + $0x1228] sm:$0xff]
    %v697 = vld [vmem:[%s2 + $0x1230] sm:$0xff]
    %v698 = vld [vmem:[%s2 + $0x1238] sm:$0xff]
    %v699 = vld [vmem:[%s2 + $0x1240] sm:$0xff]
    %v700 = vld [vmem:[%s2 + $0x1248] sm:$0xff]
    %v701 = vld [vmem:[%s2 + $0x1250] sm:$0xff]
    %v702 = vld [vmem:[%s2 + $0x1258] sm:$0xff]
    %v703 = vld [vmem:[%s3] sm:$0xf]
    %v705 = vperm.slane %v703, 0
    %v706 = vperm.slane %v703, 1
    %v707 = vperm.slane %v703, 2
    %v708 = vperm.slane %v703, 3
    %v1301 = vunpack.c.l.b16 %v115
    %v1302 = vunpack.c.h.b16 %v115
    %v1303 = vunpack.c.l.b16 %v116
    %v1304 = vunpack.c.h.b16 %v116
    %v1305 = vunpack.c.l.b16 %v117
    %v1306 = vunpack.c.h.b16 %v117
    %v1307 = vunpack.c.l.b16 %v118
    %v1308 = vunpack.c.h.b16 %v118
    %v1309 = vunpack.c.l.b16 %v119
    %v1310 = vunpack.c.h.b16 %v119
    %v1311 = vunpack.c.l.b16 %v120
    %v1312 = vunpack.c.h.b16 %v120
    %v1313 = vunpack.c.l.b16 %v121
    %v1314 = vunpack.c.h.b16 %v121
    %v1315 = vunpack.c.l.b16 %v122
    %v1316 = vunpack.c.h.b16 %v122
    %v1317 = vunpack.c.l.b16 %v123
    %v1318 = vunpack.c.h.b16 %v123
    %v1319 = vunpack.c.l.b16 %v124
    %v1320 = vunpack.c.h.b16 %v124
    %v1321 = vunpack.c.l.b16 %v125
    %v1322 = vunpack.c.h.b16 %v125
    %v1323 = vunpack.c.l.b16 %v126
    %v1324 = vunpack.c.h.b16 %v126
    %v1325 = vunpack.c.l.b16 %v127
    %v1326 = vunpack.c.h.b16 %v127
    %v1327 = vunpack.c.l.b16 %v128
    %v1328 = vunpack.c.h.b16 %v128
    %v1329 = vunpack.c.l.b16 %v129
    %v1330 = vunpack.c.h.b16 %v129
    %v1331 = vunpack.c.l.b16 %v130
    %v1332 = vunpack.c.h.b16 %v130
    %v1333 = vunpack.c.l.b16 %v131
    %v1334 = vunpack.c.h.b16 %v131
    %v1335 = vunpack.c.l.b16 %v132
    %v1336 = vunpack.c.h.b16 %v132
    %v1337 = vunpack.c.l.b16 %v133
    %v1338 = vunpack.c.h.b16 %v133
    %v1339 = vunpack.c.l.b16 %v134
    %v1340 = vunpack.c.h.b16 %v134
    %v1341 = vunpack.c.l.b16 %v135
    %v1342 = vunpack.c.h.b16 %v135
    %v1343 = vunpack.c.l.b16 %v136
    %v1344 = vunpack.c.h.b16 %v136
    %v1345 = vunpack.c.l.b16 %v137
    %v1346 = vunpack.c.h.b16 %v137
    %v1347 = vunpack.c.l.b16 %v138
    %v1348 = vunpack.c.h.b16 %v138
    %v1349 = vunpack.c.l.b16 %v139
    %v1350 = vunpack.c.h.b16 %v139
    %v1351 = vunpack.c.l.b16 %v140
    %v1352 = vunpack.c.h.b16 %v140
    %v1353 = vunpack.c.l.b16 %v141
    %v1354 = vunpack.c.h.b16 %v141
    %v1355 = vunpack.c.l.b16 %v142
    %v1356 = vunpack.c.h.b16 %v142
    %v1357 = vunpack.c.l.b16 %v143
    %v1358 = vunpack.c.h.b16 %v143
    %v1359 = vunpack.c.l.b16 %v144
    %v1360 = vunpack.c.h.b16 %v144
    %v1361 = vunpack.c.l.b16 %v145
    %v1362 = vunpack.c.h.b16 %v145
    %v1363 = vunpack.c.l.b16 %v146
    %v1364 = vunpack.c.h.b16 %v146
    %v1365 = vunpack.c.l.b16 %v147
    %v1366 = vunpack.c.h.b16 %v147
    %v1367 = vunpack.c.l.b16 %v148
    %v1368 = vunpack.c.h.b16 %v148
    %v1369 = vunpack.c.l.b16 %v149
    %v1370 = vunpack.c.h.b16 %v149
    %v1371 = vunpack.c.l.b16 %v150
    %v1372 = vunpack.c.h.b16 %v150
    %v1373 = vunpack.c.l.b16 %v151
    %v1374 = vunpack.c.h.b16 %v151
    %v1375 = vunpack.c.l.b16 %v152
    %v1376 = vunpack.c.h.b16 %v152
    %v1377 = vunpack.c.l.b16 %v153
    %v1378 = vunpack.c.h.b16 %v153
    %v1379 = vunpack.c.l.b16 %v154
    %v1380 = vunpack.c.h.b16 %v154
    %v1381 = vunpack.c.l.b16 %v155
    %v1382 = vunpack.c.h.b16 %v155
    %v1383 = vunpack.c.l.b16 %v156
    %v1384 = vunpack.c.h.b16 %v156
    %v1385 = vunpack.c.l.b16 %v157
    %v1386 = vunpack.c.h.b16 %v157
    %v1387 = vunpack.c.l.b16 %v158
    %v1388 = vunpack.c.h.b16 %v158
    %v1389 = vunpack.c.l.b16 %v159
    %v1390 = vunpack.c.h.b16 %v159
    %v1391 = vunpack.c.l.b16 %v160
    %v1392 = vunpack.c.h.b16 %v160
    %v1393 = vunpack.c.l.b16 %v161
    %v1394 = vunpack.c.h.b16 %v161
    %v1395 = vunpack.c.l.b16 %v162
    %v1396 = vunpack.c.h.b16 %v162
    %v1397 = vunpack.c.l.b16 %v163
    %v1398 = vunpack.c.h.b16 %v163
    %v1399 = vunpack.c.l.b16 %v164
    %v1400 = vunpack.c.h.b16 %v164
    %v1401 = vunpack.c.l.b16 %v165
    %v1402 = vunpack.c.h.b16 %v165
    %v1403 = vunpack.c.l.b16 %v166
    %v1404 = vunpack.c.h.b16 %v166
    %v1405 = vunpack.c.l.b16 %v167
    %v1406 = vunpack.c.h.b16 %v167
    %v1407 = vunpack.c.l.b16 %v168
    %v1408 = vunpack.c.h.b16 %v168
    %v1409 = vunpack.c.l.b16 %v169
    %v1410 = vunpack.c.h.b16 %v169
    %v1411 = vunpack.c.l.b16 %v170
    %v1412 = vunpack.c.h.b16 %v170
    %v1413 = vunpack.c.l.b16 %v171
    %v1414 = vunpack.c.h.b16 %v171
    %v1415 = vunpack.c.l.b16 %v172
    %v1416 = vunpack.c.h.b16 %v172
    %v1417 = vunpack.c.l.b16 %v173
    %v1418 = vunpack.c.h.b16 %v173
    %v1419 = vunpack.c.l.b16 %v174
    %v1420 = vunpack.c.h.b16 %v174
    %v1421 = vunpack.c.l.b16 %v175
    %v1422 = vunpack.c.h.b16 %v175
    %v1423 = vunpack.c.l.b16 %v176
    %v1424 = vunpack.c.h.b16 %v176
    %v1425 = vunpack.c.l.b16 %v177
    %v1426 = vunpack.c.h.b16 %v177
    %v1427 = vunpack.c.l.b16 %v178
    %v1428 = vunpack.c.h.b16 %v178
    %v1429 = vunpack.c.l.b16 %v179
    %v1430 = vunpack.c.h.b16 %v179
    %v1431 = vunpack.c.l.b16 %v180
    %v1432 = vunpack.c.h.b16 %v180
    %v1433 = vunpack.c.l.b16 %v181
    %v1434 = vunpack.c.h.b16 %v181
    %v1435 = vunpack.c.l.b16 %v182
    %v1436 = vunpack.c.h.b16 %v182
    %v1437 = vunpack.c.l.b16 %v183
    %v1438 = vunpack.c.h.b16 %v183
    %v1439 = vunpack.c.l.b16 %v184
    %v1440 = vunpack.c.h.b16 %v184
    %v1441 = vunpack.c.l.b16 %v185
    %v1442 = vunpack.c.h.b16 %v185
    %v1443 = vunpack.c.l.b16 %v186
    %v1444 = vunpack.c.h.b16 %v186
    %v1445 = vunpack.c.l.b16 %v187
    %v1446 = vunpack.c.h.b16 %v187
    %v1447 = vunpack.c.l.b16 %v188
    %v1448 = vunpack.c.h.b16 %v188
    %v1449 = vunpack.c.l.b16 %v189
    %v1450 = vunpack.c.h.b16 %v189
    %v1451 = vunpack.c.l.b16 %v190
    %v1452 = vunpack.c.h.b16 %v190
    %v1453 = vunpack.c.l.b16 %v191
    %v1454 = vunpack.c.h.b16 %v191
    %v1455 = vunpack.c.l.b16 %v192
    %v1456 = vunpack.c.h.b16 %v192
    %v1457 = vunpack.c.l.b16 %v193
    %v1458 = vunpack.c.h.b16 %v193
    %v1459 = vunpack.c.l.b16 %v194
    %v1460 = vunpack.c.h.b16 %v194
    %v1461 = vunpack.c.l.b16 %v195
    %v1462 = vunpack.c.h.b16 %v195
    %v1463 = vunpack.c.l.b16 %v196
    %v1464 = vunpack.c.h.b16 %v196
    %v1465 = vunpack.c.l.b16 %v197
    %v1466 = vunpack.c.h.b16 %v197
    %v1467 = vunpack.c.l.b16 %v198
    %v1468 = vunpack.c.h.b16 %v198
    %v1469 = vunpack.c.l.b16 %v199
    %v1470 = vunpack.c.h.b16 %v199
    %v1471 = vunpack.c.l.b16 %v200
    %v1472 = vunpack.c.h.b16 %v200
    %v1473 = vunpack.c.l.b16 %v201
    %v1474 = vunpack.c.h.b16 %v201
    %v1475 = vunpack.c.l.b16 %v202
    %v1476 = vunpack.c.h.b16 %v202
    %v1477 = vunpack.c.l.b16 %v203
    %v1478 = vunpack.c.h.b16 %v203
    %v1479 = vunpack.c.l.b16 %v204
    %v1480 = vunpack.c.h.b16 %v204
    %v1481 = vunpack.c.l.b16 %v205
    %v1482 = vunpack.c.h.b16 %v205
    %v1483 = vunpack.c.l.b16 %v206
    %v1484 = vunpack.c.h.b16 %v206
    %v1485 = vunpack.c.l.b16 %v207
    %v1486 = vunpack.c.h.b16 %v207
    %v1487 = vunpack.c.l.b16 %v208
    %v1488 = vunpack.c.h.b16 %v208
    %v1489 = vunpack.c.l.b16 %v209
    %v1490 = vunpack.c.h.b16 %v209
    %v1491 = vunpack.c.l.b16 %v210
    %v1492 = vunpack.c.h.b16 %v210
    %v1493 = vunpack.c.l.b16 %v211
    %v1494 = vunpack.c.h.b16 %v211
    %v1495 = vunpack.c.l.b16 %v212
    %v1496 = vunpack.c.h.b16 %v212
    %v1497 = vunpack.c.l.b16 %v213
    %v1498 = vunpack.c.h.b16 %v213
    %v1499 = vunpack.c.l.b16 %v214
    %v1500 = vunpack.c.h.b16 %v214
    %v1501 = vunpack.c.l.b16 %v215
    %v1502 = vunpack.c.h.b16 %v215
    %v1503 = vunpack.c.l.b16 %v216
    %v1504 = vunpack.c.h.b16 %v216
    %v1505 = vunpack.c.l.b16 %v217
    %v1506 = vunpack.c.h.b16 %v217
    %v1507 = vunpack.c.l.b16 %v218
    %v1508 = vunpack.c.h.b16 %v218
    %v1509 = vunpack.c.l.b16 %v219
    %v1510 = vunpack.c.h.b16 %v219
    %v1511 = vunpack.c.l.b16 %v220
    %v1512 = vunpack.c.h.b16 %v220
    %v1513 = vunpack.c.l.b16 %v221
    %v1514 = vunpack.c.h.b16 %v221
    %v1515 = vunpack.c.l.b16 %v222
    %v1516 = vunpack.c.h.b16 %v222
    %v1517 = vunpack.c.l.b16 %v223
    %v1518 = vunpack.c.h.b16 %v223
    %v1519 = vunpack.c.l.b16 %v224
    %v1520 = vunpack.c.h.b16 %v224
    %v1521 = vunpack.c.l.b16 %v225
    %v1522 = vunpack.c.h.b16 %v225
    %v1523 = vunpack.c.l.b16 %v226
    %v1524 = vunpack.c.h.b16 %v226
    %v1525 = vunpack.c.l.b16 %v227
    %v1526 = vunpack.c.h.b16 %v227
    %v1527 = vunpack.c.l.b16 %v228
    %v1528 = vunpack.c.h.b16 %v228
    %v1529 = vunpack.c.l.b16 %v229
    %v1530 = vunpack.c.h.b16 %v229
    %v1531 = vunpack.c.l.b16 %v230
    %v1532 = vunpack.c.h.b16 %v230
    %v1533 = vunpack.c.l.b16 %v231
    %v1534 = vunpack.c.h.b16 %v231
    %v1535 = vunpack.c.l.b16 %v232
    %v1536 = vunpack.c.h.b16 %v232
    %v1537 = vunpack.c.l.b16 %v233
    %v1538 = vunpack.c.h.b16 %v233
    %v1539 = vunpack.c.l.b16 %v234
    %v1540 = vunpack.c.h.b16 %v234
    %v1541 = vunpack.c.l.b16 %v235
    %v1542 = vunpack.c.h.b16 %v235
    %v1543 = vunpack.c.l.b16 %v236
    %v1544 = vunpack.c.h.b16 %v236
    %v1545 = vunpack.c.l.b16 %v237
    %v1546 = vunpack.c.h.b16 %v237
    %v1547 = vunpack.c.l.b16 %v238
    %v1548 = vunpack.c.h.b16 %v238
    %v1549 = vunpack.c.l.b16 %v239
    %v1550 = vunpack.c.h.b16 %v239
    %v1551 = vunpack.c.l.b16 %v240
    %v1552 = vunpack.c.h.b16 %v240
    %v1553 = vunpack.c.l.b16 %v241
    %v1554 = vunpack.c.h.b16 %v241
    %v1555 = vunpack.c.l.b16 %v242
    %v1556 = vunpack.c.h.b16 %v242
    %v1557 = vunpack.c.l.b16 %v243
    %v1558 = vunpack.c.h.b16 %v243
    %v1559 = vunpack.c.l.b16 %v244
    %v1560 = vunpack.c.h.b16 %v244
    %v1561 = vunpack.c.l.b16 %v245
    %v1562 = vunpack.c.h.b16 %v245
    %v1563 = vunpack.c.l.b16 %v246
    %v1564 = vunpack.c.h.b16 %v246
    %v1565 = vunpack.c.l.b16 %v247
    %v1566 = vunpack.c.h.b16 %v247
    %v1567 = vunpack.c.l.b16 %v248
    %v1568 = vunpack.c.h.b16 %v248
    %v1569 = vunpack.c.l.b16 %v249
    %v1570 = vunpack.c.h.b16 %v249
    %v1571 = vunpack.c.l.b16 %v250
    %v1572 = vunpack.c.h.b16 %v250
    %v1573 = vunpack.c.l.b16 %v251
    %v1574 = vunpack.c.h.b16 %v251
    %v1575 = vunpack.c.l.b16 %v252
    %v1576 = vunpack.c.h.b16 %v252
    %v1577 = vunpack.c.l.b16 %v253
    %v1578 = vunpack.c.h.b16 %v253
    %v1579 = vunpack.c.l.b16 %v254
    %v1580 = vunpack.c.h.b16 %v254
    %v1581 = vunpack.c.l.b16 %v255
    %v1582 = vunpack.c.h.b16 %v255
    %v1583 = vunpack.c.l.b16 %v256
    %v1584 = vunpack.c.h.b16 %v256
    %v1585 = vunpack.c.l.b16 %v257
    %v1586 = vunpack.c.h.b16 %v257
    %v1587 = vunpack.c.l.b16 %v258
    %v1588 = vunpack.c.h.b16 %v258
    %v1589 = vunpack.c.l.b16 %v259
    %v1590 = vunpack.c.h.b16 %v259
    %v1591 = vunpack.c.l.b16 %v260
    %v1592 = vunpack.c.h.b16 %v260
    %v1593 = vunpack.c.l.b16 %v261
    %v1594 = vunpack.c.h.b16 %v261
    %v1595 = vunpack.c.l.b16 %v262
    %v1596 = vunpack.c.h.b16 %v262
    %v1597 = vunpack.c.l.b16 %v263
    %v1598 = vunpack.c.h.b16 %v263
    %v1599 = vunpack.c.l.b16 %v264
    %v1600 = vunpack.c.h.b16 %v264
    %v1601 = vunpack.c.l.b16 %v265
    %v1602 = vunpack.c.h.b16 %v265
    %v1603 = vunpack.c.l.b16 %v266
    %v1604 = vunpack.c.h.b16 %v266
    %v1605 = vunpack.c.l.b16 %v267
    %v1606 = vunpack.c.h.b16 %v267
    %v1607 = vunpack.c.l.b16 %v268
    %v1608 = vunpack.c.h.b16 %v268
    %v1609 = vunpack.c.l.b16 %v269
    %v1610 = vunpack.c.h.b16 %v269
    %v1611 = vunpack.c.l.b16 %v270
    %v1612 = vunpack.c.h.b16 %v270
    %v1613 = vunpack.c.l.b16 %v271
    %v1614 = vunpack.c.h.b16 %v271
    %v1615 = vunpack.c.l.b16 %v272
    %v1616 = vunpack.c.h.b16 %v272
    %v1617 = vunpack.c.l.b16 %v273
    %v1618 = vunpack.c.h.b16 %v273
    %v1619 = vunpack.c.l.b16 %v274
    %v1620 = vunpack.c.h.b16 %v274
    %v1621 = vunpack.c.l.b16 %v275
    %v1622 = vunpack.c.h.b16 %v275
    %v1623 = vunpack.c.l.b16 %v276
    %v1624 = vunpack.c.h.b16 %v276
    %v1625 = vunpack.c.l.b16 %v277
    %v1626 = vunpack.c.h.b16 %v277
    %v1627 = vunpack.c.l.b16 %v278
    %v1628 = vunpack.c.h.b16 %v278
    %v1629 = vunpack.c.l.b16 %v279
    %v1630 = vunpack.c.h.b16 %v279
    %v1631 = vunpack.c.l.b16 %v280
    %v1632 = vunpack.c.h.b16 %v280
    %v1633 = vunpack.c.l.b16 %v281
    %v1634 = vunpack.c.h.b16 %v281
    %v1635 = vunpack.c.l.b16 %v282
    %v1636 = vunpack.c.h.b16 %v282
    %v1637 = vunpack.c.l.b16 %v283
    %v1638 = vunpack.c.h.b16 %v283
    %v1639 = vunpack.c.l.b16 %v284
    %v1640 = vunpack.c.h.b16 %v284
    %v1641 = vunpack.c.l.b16 %v285
    %v1642 = vunpack.c.h.b16 %v285
    %v1643 = vunpack.c.l.b16 %v286
    %v1644 = vunpack.c.h.b16 %v286
    %v1645 = vunpack.c.l.b16 %v287
    %v1646 = vunpack.c.h.b16 %v287
    %v1647 = vunpack.c.l.b16 %v288
    %v1648 = vunpack.c.h.b16 %v288
    %v1649 = vunpack.c.l.b16 %v289
    %v1650 = vunpack.c.h.b16 %v289
    %v1651 = vunpack.c.l.b16 %v290
    %v1652 = vunpack.c.h.b16 %v290
    %v1653 = vunpack.c.l.b16 %v291
    %v1654 = vunpack.c.h.b16 %v291
    %v1655 = vunpack.c.l.b16 %v292
    %v1656 = vunpack.c.h.b16 %v292
    %v1657 = vunpack.c.l.b16 %v293
    %v1658 = vunpack.c.h.b16 %v293
    %v1659 = vunpack.c.l.b16 %v294
    %v1660 = vunpack.c.h.b16 %v294
    %v1661 = vunpack.c.l.b16 %v295
    %v1662 = vunpack.c.h.b16 %v295
    %v1663 = vunpack.c.l.b16 %v296
    %v1664 = vunpack.c.h.b16 %v296
    %v1665 = vunpack.c.l.b16 %v297
    %v1666 = vunpack.c.h.b16 %v297
    %v1667 = vunpack.c.l.b16 %v298
    %v1668 = vunpack.c.h.b16 %v298
    %v1669 = vunpack.c.l.b16 %v299
    %v1670 = vunpack.c.h.b16 %v299
    %v1671 = vunpack.c.l.b16 %v300
    %v1672 = vunpack.c.h.b16 %v300
    %v1673 = vunpack.c.l.b16 %v301
    %v1674 = vunpack.c.h.b16 %v301
    %v1675 = vunpack.c.l.b16 %v302
    %v1676 = vunpack.c.h.b16 %v302
    %v1677 = vunpack.c.l.b16 %v303
    %v1678 = vunpack.c.h.b16 %v303
    %v1679 = vunpack.c.l.b16 %v304
    %v1680 = vunpack.c.h.b16 %v304
    %v1681 = vunpack.c.l.b16 %v305
    %v1682 = vunpack.c.h.b16 %v305
    %v1683 = vunpack.c.l.b16 %v306
    %v1684 = vunpack.c.h.b16 %v306
    %v1685 = vunpack.c.l.b16 %v307
    %v1686 = vunpack.c.h.b16 %v307
    %v1687 = vunpack.c.l.b16 %v308
    %v1688 = vunpack.c.h.b16 %v308
    %v1689 = vunpack.c.l.b16 %v309
    %v1690 = vunpack.c.h.b16 %v309
    %v1691 = vunpack.c.l.b16 %v310
    %v1692 = vunpack.c.h.b16 %v310
    %v1693 = vunpack.c.l.b16 %v311
    %v1694 = vunpack.c.h.b16 %v311
    %v1695 = vunpack.c.l.b16 %v312
    %v1696 = vunpack.c.h.b16 %v312
    %v1697 = vunpack.c.l.b16 %v313
    %v1698 = vunpack.c.h.b16 %v313
    %v1699 = vunpack.c.l.b16 %v314
    %v1700 = vunpack.c.h.b16 %v314
    %v1701 = vunpack.c.l.b16 %v315
    %v1702 = vunpack.c.h.b16 %v315
    %v1703 = vunpack.c.l.b16 %v316
    %v1704 = vunpack.c.h.b16 %v316
    %v1705 = vunpack.c.l.b16 %v317
    %v1706 = vunpack.c.h.b16 %v317
    %v1707 = vunpack.c.l.b16 %v318
    %v1708 = vunpack.c.h.b16 %v318
    %v1709 = vunpack.c.l.b16 %v319
    %v1710 = vunpack.c.h.b16 %v319
    %v1711 = vunpack.c.l.b16 %v320
    %v1712 = vunpack.c.h.b16 %v320
    %v1713 = vunpack.c.l.b16 %v321
    %v1714 = vunpack.c.h.b16 %v321
    %v1715 = vunpack.c.l.b16 %v322
    %v1716 = vunpack.c.h.b16 %v322
    %v1717 = vunpack.c.l.b16 %v323
    %v1718 = vunpack.c.h.b16 %v323
    %v1719 = vunpack.c.l.b16 %v324
    %v1720 = vunpack.c.h.b16 %v324
    %v1721 = vunpack.c.l.b16 %v325
    %v1722 = vunpack.c.h.b16 %v325
    %v1723 = vunpack.c.l.b16 %v326
    %v1724 = vunpack.c.h.b16 %v326
    %v1725 = vunpack.c.l.b16 %v327
    %v1726 = vunpack.c.h.b16 %v327
    %v1727 = vunpack.c.l.b16 %v328
    %v1728 = vunpack.c.h.b16 %v328
    %v1729 = vunpack.c.l.b16 %v329
    %v1730 = vunpack.c.h.b16 %v329
    %v1731 = vunpack.c.l.b16 %v330
    %v1732 = vunpack.c.h.b16 %v330
    %v1733 = vunpack.c.l.b16 %v331
    %v1734 = vunpack.c.h.b16 %v331
    %v1735 = vunpack.c.l.b16 %v332
    %v1736 = vunpack.c.h.b16 %v332
    %v1737 = vunpack.c.l.b16 %v333
    %v1738 = vunpack.c.h.b16 %v333
    %v1739 = vunpack.c.l.b16 %v334
    %v1740 = vunpack.c.h.b16 %v334
    %v1741 = vunpack.c.l.b16 %v335
    %v1742 = vunpack.c.h.b16 %v335
    %v1743 = vunpack.c.l.b16 %v336
    %v1744 = vunpack.c.h.b16 %v336
    %v1745 = vunpack.c.l.b16 %v337
    %v1746 = vunpack.c.h.b16 %v337
    %v1747 = vunpack.c.l.b16 %v338
    %v1748 = vunpack.c.h.b16 %v338
    %v1749 = vunpack.c.l.b16 %v339
    %v1750 = vunpack.c.h.b16 %v339
    %v1751 = vunpack.c.l.b16 %v340
    %v1752 = vunpack.c.h.b16 %v340
    %v1753 = vunpack.c.l.b16 %v341
    %v1754 = vunpack.c.h.b16 %v341
    %v1755 = vunpack.c.l.b16 %v342
    %v1756 = vunpack.c.h.b16 %v342
    %v1757 = vunpack.c.l.b16 %v343
    %v1758 = vunpack.c.h.b16 %v343
    %v1759 = vunpack.c.l.b16 %v344
    %v1760 = vunpack.c.h.b16 %v344
    %v1761 = vunpack.c.l.b16 %v345
    %v1762 = vunpack.c.h.b16 %v345
    %v1763 = vunpack.c.l.b16 %v346
    %v1764 = vunpack.c.h.b16 %v346
    %v1765 = vunpack.c.l.b16 %v347
    %v1766 = vunpack.c.h.b16 %v347
    %v1767 = vunpack.c.l.b16 %v348
    %v1768 = vunpack.c.h.b16 %v348
    %v1769 = vunpack.c.l.b16 %v349
    %v1770 = vunpack.c.h.b16 %v349
    %v1771 = vunpack.c.l.b16 %v350
    %v1772 = vunpack.c.h.b16 %v350
    %v1773 = vunpack.c.l.b16 %v351
    %v1774 = vunpack.c.h.b16 %v351
    %v1775 = vunpack.c.l.b16 %v352
    %v1776 = vunpack.c.h.b16 %v352
    %v1777 = vunpack.c.l.b16 %v353
    %v1778 = vunpack.c.h.b16 %v353
    %v1779 = vunpack.c.l.b16 %v354
    %v1780 = vunpack.c.h.b16 %v354
    %v1781 = vunpack.c.l.b16 %v355
    %v1782 = vunpack.c.h.b16 %v355
    %v1783 = vunpack.c.l.b16 %v356
    %v1784 = vunpack.c.h.b16 %v356
    %v1785 = vunpack.c.l.b16 %v357
    %v1786 = vunpack.c.h.b16 %v357
    %v1787 = vunpack.c.l.b16 %v358
    %v1788 = vunpack.c.h.b16 %v358
    %v1789 = vunpack.c.l.b16 %v359
    %v1790 = vunpack.c.h.b16 %v359
    %v1791 = vunpack.c.l.b16 %v360
    %v1792 = vunpack.c.h.b16 %v360
    %v1793 = vunpack.c.l.b16 %v361
    %v1794 = vunpack.c.h.b16 %v361
    %v1795 = vunpack.c.l.b16 %v362
    %v1796 = vunpack.c.h.b16 %v362
    %v1797 = vunpack.c.l.b16 %v363
    %v1798 = vunpack.c.h.b16 %v363
    %v1799 = vunpack.c.l.b16 %v364
    %v1800 = vunpack.c.h.b16 %v364
    %v1801 = vunpack.c.l.b16 %v365
    %v1802 = vunpack.c.h.b16 %v365
    %v1803 = vunpack.c.l.b16 %v366
    %v1804 = vunpack.c.h.b16 %v366
    %v1805 = vunpack.c.l.b16 %v367
    %v1806 = vunpack.c.h.b16 %v367
    %v1807 = vunpack.c.l.b16 %v368
    %v1808 = vunpack.c.h.b16 %v368
    %v1809 = vunpack.c.l.b16 %v369
    %v1810 = vunpack.c.h.b16 %v369
    %v1811 = vunpack.c.l.b16 %v370
    %v1812 = vunpack.c.h.b16 %v370
    %v1813 = vunpack.c.l.b16 %v371
    %v1814 = vunpack.c.h.b16 %v371
    %v1815 = vunpack.c.l.b16 %v372
    %v1816 = vunpack.c.h.b16 %v372
    %v1817 = vunpack.c.l.b16 %v373
    %v1818 = vunpack.c.h.b16 %v373
    %v1819 = vunpack.c.l.b16 %v374
    %v1820 = vunpack.c.h.b16 %v374
    %v1821 = vunpack.c.l.b16 %v375
    %v1822 = vunpack.c.h.b16 %v375
    %v1823 = vunpack.c.l.b16 %v376
    %v1824 = vunpack.c.h.b16 %v376
    %v1825 = vunpack.c.l.b16 %v377
    %v1826 = vunpack.c.h.b16 %v377
    %v1827 = vunpack.c.l.b16 %v378
    %v1828 = vunpack.c.h.b16 %v378
    %v1829 = vunpack.c.l.b16 %v379
    %v1830 = vunpack.c.h.b16 %v379
    %v1831 = vunpack.c.l.b16 %v380
    %v1832 = vunpack.c.h.b16 %v380
    %v1833 = vunpack.c.l.b16 %v381
    %v1834 = vunpack.c.h.b16 %v381
    %v1835 = vunpack.c.l.b16 %v382
    %v1836 = vunpack.c.h.b16 %v382
    %v1837 = vunpack.c.l.b16 %v383
    %v1838 = vunpack.c.h.b16 %v383
    %v1839 = vunpack.c.l.b16 %v384
    %v1840 = vunpack.c.h.b16 %v384
    %v1841 = vunpack.c.l.b16 %v385
    %v1842 = vunpack.c.h.b16 %v385
    %v1843 = vunpack.c.l.b16 %v386
    %v1844 = vunpack.c.h.b16 %v386
    %v1845 = vunpack.c.l.b16 %v387
    %v1846 = vunpack.c.h.b16 %v387
    %v1847 = vunpack.c.l.b16 %v388
    %v1848 = vunpack.c.h.b16 %v388
    %v1849 = vunpack.c.l.b16 %v389
    %v1850 = vunpack.c.h.b16 %v389
    %v1851 = vunpack.c.l.b16 %v390
    %v1852 = vunpack.c.h.b16 %v390
    %v1853 = vunpack.c.l.b16 %v391
    %v1854 = vunpack.c.h.b16 %v391
    %v1855 = vunpack.c.l.b16 %v392
    %v1856 = vunpack.c.h.b16 %v392
    %v1857 = vunpack.c.l.b16 %v393
    %v1858 = vunpack.c.h.b16 %v393
    %v1859 = vunpack.c.l.b16 %v394
    %v1860 = vunpack.c.h.b16 %v394
    %v1861 = vunpack.c.l.b16 %v395
    %v1862 = vunpack.c.h.b16 %v395
    %v1863 = vunpack.c.l.b16 %v396
    %v1864 = vunpack.c.h.b16 %v396
    %v1865 = vunpack.c.l.b16 %v397
    %v1866 = vunpack.c.h.b16 %v397
    %v1867 = vunpack.c.l.b16 %v398
    %v1868 = vunpack.c.h.b16 %v398
    %v1869 = vunpack.c.l.b16 %v399
    %v1870 = vunpack.c.h.b16 %v399
    %v1871 = vunpack.c.l.b16 %v400
    %v1872 = vunpack.c.h.b16 %v400
    %v1873 = vunpack.c.l.b16 %v401
    %v1874 = vunpack.c.h.b16 %v401
    %v1875 = vunpack.c.l.b16 %v402
    %v1876 = vunpack.c.h.b16 %v402
    %v1877 = vunpack.c.l.b16 %v403
    %v1878 = vunpack.c.h.b16 %v403
    %v1879 = vunpack.c.l.b16 %v404
    %v1880 = vunpack.c.h.b16 %v404
    %v1881 = vunpack.c.l.b16 %v405
    %v1882 = vunpack.c.h.b16 %v405
    %v1883 = vunpack.c.l.b16 %v406
    %v1884 = vunpack.c.h.b16 %v406
    %v1885 = vunpack.c.l.b16 %v407
    %v1886 = vunpack.c.h.b16 %v407
    %v1887 = vunpack.c.l.b16 %v408
    %v1888 = vunpack.c.h.b16 %v408
    %v1889 = vunpack.c.l.b16 %v409
    %v1890 = vunpack.c.h.b16 %v409
    %v1891 = vunpack.c.l.b16 %v410
    %v1892 = vunpack.c.h.b16 %v410
    %v1893 = vunpack.c.l.b16 %v411
    %v1894 = vunpack.c.h.b16 %v411
    %v1895 = vunpack.c.l.b16 %v412
    %v1896 = vunpack.c.h.b16 %v412
    %v1897 = vunpack.c.l.b16 %v413
    %v1898 = vunpack.c.h.b16 %v413
    %v1899 = vunpack.c.l.b16 %v414
    %v1900 = vunpack.c.h.b16 %v414
    %v1901 = vunpack.c.l.b16 %v415
    %v1902 = vunpack.c.h.b16 %v415
    %v1903 = vunpack.c.l.b16 %v416
    %v1904 = vunpack.c.h.b16 %v416
    %v1905 = vunpack.c.l.b16 %v417
    %v1906 = vunpack.c.h.b16 %v417
    %v1907 = vunpack.c.l.b16 %v418
    %v1908 = vunpack.c.h.b16 %v418
    %v1909 = vunpack.c.l.b16 %v419
    %v1910 = vunpack.c.h.b16 %v419
    %v1911 = vunpack.c.l.b16 %v420
    %v1912 = vunpack.c.h.b16 %v420
    %v1913 = vunpack.c.l.b16 %v421
    %v1914 = vunpack.c.h.b16 %v421
    %v1915 = vunpack.c.l.b16 %v422
    %v1916 = vunpack.c.h.b16 %v422
    %v1917 = vunpack.c.l.b16 %v423
    %v1918 = vunpack.c.h.b16 %v423
    %v1919 = vunpack.c.l.b16 %v424
    %v1920 = vunpack.c.h.b16 %v424
    %v1921 = vunpack.c.l.b16 %v425
    %v1922 = vunpack.c.h.b16 %v425
    %v1923 = vunpack.c.l.b16 %v426
    %v1924 = vunpack.c.h.b16 %v426
    %v1925 = vunpack.c.l.b16 %v427
    %v1926 = vunpack.c.h.b16 %v427
    %v1927 = vunpack.c.l.b16 %v428
    %v1928 = vunpack.c.h.b16 %v428
    %v1929 = vunpack.c.l.b16 %v429
    %v1930 = vunpack.c.h.b16 %v429
    %v1931 = vunpack.c.l.b16 %v430
    %v1932 = vunpack.c.h.b16 %v430
    %v1933 = vunpack.c.l.b16 %v431
    %v1934 = vunpack.c.h.b16 %v431
    %v1935 = vunpack.c.l.b16 %v432
    %v1936 = vunpack.c.h.b16 %v432
    %v1937 = vunpack.c.l.b16 %v433
    %v1938 = vunpack.c.h.b16 %v433
    %v1939 = vunpack.c.l.b16 %v434
    %v1940 = vunpack.c.h.b16 %v434
    %v1941 = vunpack.c.l.b16 %v435
    %v1942 = vunpack.c.h.b16 %v435
    %v1943 = vunpack.c.l.b16 %v436
    %v1944 = vunpack.c.h.b16 %v436
    %v1945 = vunpack.c.l.b16 %v437
    %v1946 = vunpack.c.h.b16 %v437
    %v1947 = vunpack.c.l.b16 %v438
    %v1948 = vunpack.c.h.b16 %v438
    %v1949 = vunpack.c.l.b16 %v439
    %v1950 = vunpack.c.h.b16 %v439
    %v1951 = vunpack.c.l.b16 %v440
    %v1952 = vunpack.c.h.b16 %v440
    %v1953 = vunpack.c.l.b16 %v441
    %v1954 = vunpack.c.h.b16 %v441
    %v1955 = vunpack.c.l.b16 %v442
    %v1956 = vunpack.c.h.b16 %v442
    %v1957 = vunpack.c.l.b16 %v443
    %v1958 = vunpack.c.h.b16 %v443
    %v1959 = vunpack.c.l.b16 %v444
    %v1960 = vunpack.c.h.b16 %v444
    %v1961 = vunpack.c.l.b16 %v445
    %v1962 = vunpack.c.h.b16 %v445
    %v1963 = vunpack.c.l.b16 %v446
    %v1964 = vunpack.c.h.b16 %v446
    %v1965 = vunpack.c.l.b16 %v447
    %v1966 = vunpack.c.h.b16 %v447
    %v1967 = vunpack.c.l.b16 %v448
    %v1968 = vunpack.c.h.b16 %v448
    %v1969 = vunpack.c.l.b16 %v449
    %v1970 = vunpack.c.h.b16 %v449
    %v1971 = vunpack.c.l.b16 %v450
    %v1972 = vunpack.c.h.b16 %v450
    %v1973 = vunpack.c.l.b16 %v451
    %v1974 = vunpack.c.h.b16 %v451
    %v1975 = vunpack.c.l.b16 %v452
    %v1976 = vunpack.c.h.b16 %v452
    %v1977 = vunpack.c.l.b16 %v453
    %v1978 = vunpack.c.h.b16 %v453
    %v1979 = vunpack.c.l.b16 %v454
    %v1980 = vunpack.c.h.b16 %v454
    %v1981 = vunpack.c.l.b16 %v455
    %v1982 = vunpack.c.h.b16 %v455
    %v1983 = vunpack.c.l.b16 %v456
    %v1984 = vunpack.c.h.b16 %v456
    %v1985 = vunpack.c.l.b16 %v457
    %v1986 = vunpack.c.h.b16 %v457
    %v1987 = vunpack.c.l.b16 %v458
    %v1988 = vunpack.c.h.b16 %v458
    %v1989 = vunpack.c.l.b16 %v459
    %v1990 = vunpack.c.h.b16 %v459
    %v1991 = vunpack.c.l.b16 %v460
    %v1992 = vunpack.c.h.b16 %v460
    %v1993 = vunpack.c.l.b16 %v461
    %v1994 = vunpack.c.h.b16 %v461
    %v1995 = vunpack.c.l.b16 %v462
    %v1996 = vunpack.c.h.b16 %v462
    %v1997 = vunpack.c.l.b16 %v463
    %v1998 = vunpack.c.h.b16 %v463
    %v1999 = vunpack.c.l.b16 %v464
    %v2000 = vunpack.c.h.b16 %v464
    %v2001 = vunpack.c.l.b16 %v465
    %v2002 = vunpack.c.h.b16 %v465
    %v2003 = vunpack.c.l.b16 %v466
    %v2004 = vunpack.c.h.b16 %v466
    %v2005 = vunpack.c.l.b16 %v467
    %v2006 = vunpack.c.h.b16 %v467
    %v2007 = vunpack.c.l.b16 %v468
    %v2008 = vunpack.c.h.b16 %v468
    %v2009 = vunpack.c.l.b16 %v469
    %v2010 = vunpack.c.h.b16 %v469
    %v2011 = vunpack.c.l.b16 %v470
    %v2012 = vunpack.c.h.b16 %v470
    %v2013 = vunpack.c.l.b16 %v471
    %v2014 = vunpack.c.h.b16 %v471
    %v2015 = vunpack.c.l.b16 %v472
    %v2016 = vunpack.c.h.b16 %v472
    %v2017 = vunpack.c.l.b16 %v473
    %v2018 = vunpack.c.h.b16 %v473
    %v2019 = vunpack.c.l.b16 %v474
    %v2020 = vunpack.c.h.b16 %v474
    %v2021 = vunpack.c.l.b16 %v475
    %v2022 = vunpack.c.h.b16 %v475
    %v2023 = vunpack.c.l.b16 %v476
    %v2024 = vunpack.c.h.b16 %v476
    %v2025 = vunpack.c.l.b16 %v477
    %v2026 = vunpack.c.h.b16 %v477
    %v2027 = vunpack.c.l.b16 %v478
    %v2028 = vunpack.c.h.b16 %v478
    %v2029 = vunpack.c.l.b16 %v479
    %v2030 = vunpack.c.h.b16 %v479
    %v2031 = vunpack.c.l.b16 %v480
    %v2032 = vunpack.c.h.b16 %v480
    %v2033 = vunpack.c.l.b16 %v481
    %v2034 = vunpack.c.h.b16 %v481
    %v2035 = vunpack.c.l.b16 %v482
    %v2036 = vunpack.c.h.b16 %v482
    %v2037 = vunpack.c.l.b16 %v483
    %v2038 = vunpack.c.h.b16 %v483
    %v2039 = vunpack.c.l.b16 %v484
    %v2040 = vunpack.c.h.b16 %v484
    %v2041 = vunpack.c.l.b16 %v485
    %v2042 = vunpack.c.h.b16 %v485
    %v2043 = vunpack.c.l.b16 %v486
    %v2044 = vunpack.c.h.b16 %v486
    %v2045 = vunpack.c.l.b16 %v487
    %v2046 = vunpack.c.h.b16 %v487
    %v2047 = vunpack.c.l.b16 %v488
    %v2048 = vunpack.c.h.b16 %v488
    %v2049 = vunpack.c.l.b16 %v489
    %v2050 = vunpack.c.h.b16 %v489
    %v2051 = vunpack.c.l.b16 %v490
    %v2052 = vunpack.c.h.b16 %v490
    %v2053 = vunpack.c.l.b16 %v491
    %v2054 = vunpack.c.h.b16 %v491
    %v2055 = vunpack.c.l.b16 %v492
    %v2056 = vunpack.c.h.b16 %v492
    %v2057 = vunpack.c.l.b16 %v493
    %v2058 = vunpack.c.h.b16 %v493
    %v2059 = vunpack.c.l.b16 %v494
    %v2060 = vunpack.c.h.b16 %v494
    %v2061 = vunpack.c.l.b16 %v495
    %v2062 = vunpack.c.h.b16 %v495
    %v2063 = vunpack.c.l.b16 %v496
    %v2064 = vunpack.c.h.b16 %v496
    %v2065 = vunpack.c.l.b16 %v497
    %v2066 = vunpack.c.h.b16 %v497
    %v2067 = vunpack.c.l.b16 %v498
    %v2068 = vunpack.c.h.b16 %v498
    %v2069 = vunpack.c.l.b16 %v499
    %v2070 = vunpack.c.h.b16 %v499
    %v2071 = vunpack.c.l.b16 %v500
    %v2072 = vunpack.c.h.b16 %v500
    %v2073 = vunpack.c.l.b16 %v501
    %v2074 = vunpack.c.h.b16 %v501
    %v2075 = vunpack.c.l.b16 %v502
    %v2076 = vunpack.c.h.b16 %v502
    %v2077 = vunpack.c.l.b16 %v503
    %v2078 = vunpack.c.h.b16 %v503
    %v2079 = vunpack.c.l.b16 %v504
    %v2080 = vunpack.c.h.b16 %v504
    %v2081 = vunpack.c.l.b16 %v505
    %v2082 = vunpack.c.h.b16 %v505
    %v2083 = vunpack.c.l.b16 %v506
    %v2084 = vunpack.c.h.b16 %v506
    %v2085 = vunpack.c.l.b16 %v507
    %v2086 = vunpack.c.h.b16 %v507
    %v2087 = vunpack.c.l.b16 %v508
    %v2088 = vunpack.c.h.b16 %v508
    %v2089 = vunpack.c.l.b16 %v509
    %v2090 = vunpack.c.h.b16 %v509
    %v2091 = vunpack.c.l.b16 %v510
    %v2092 = vunpack.c.h.b16 %v510
    %v2093 = vunpack.c.l.b16 %v511
    %v2094 = vunpack.c.h.b16 %v511
    %v2095 = vunpack.c.l.b16 %v512
    %v2096 = vunpack.c.h.b16 %v512
    %v2097 = vunpack.c.l.b16 %v513
    %v2098 = vunpack.c.h.b16 %v513
    %v2099 = vunpack.c.l.b16 %v514
    %v2100 = vunpack.c.h.b16 %v514
    %v2101 = vunpack.c.l.b16 %v515
    %v2102 = vunpack.c.h.b16 %v515
    %v2103 = vunpack.c.l.b16 %v516
    %v2104 = vunpack.c.h.b16 %v516
    %v2105 = vunpack.c.l.b16 %v517
    %v2106 = vunpack.c.h.b16 %v517
    %v2107 = vunpack.c.l.b16 %v518
    %v2108 = vunpack.c.h.b16 %v518
    %v2109 = vunpack.c.l.b16 %v519
    %v2110 = vunpack.c.h.b16 %v519
    %v2111 = vunpack.c.l.b16 %v520
    %v2112 = vunpack.c.h.b16 %v520
    %v2113 = vunpack.c.l.b16 %v521
    %v2114 = vunpack.c.h.b16 %v521
    %v2115 = vunpack.c.l.b16 %v522
    %v2116 = vunpack.c.h.b16 %v522
    %v2117 = vunpack.c.l.b16 %v523
    %v2118 = vunpack.c.h.b16 %v523
    %v2119 = vunpack.c.l.b16 %v524
    %v2120 = vunpack.c.h.b16 %v524
    %v2121 = vunpack.c.l.b16 %v525
    %v2122 = vunpack.c.h.b16 %v525
    %v2123 = vunpack.c.l.b16 %v526
    %v2124 = vunpack.c.h.b16 %v526
    %v2125 = vunpack.c.l.b16 %v527
    %v2126 = vunpack.c.h.b16 %v527
    %v2127 = vunpack.c.l.b16 %v528
    %v2128 = vunpack.c.h.b16 %v528
    %v2129 = vunpack.c.l.b16 %v529
    %v2130 = vunpack.c.h.b16 %v529
    %v2131 = vunpack.c.l.b16 %v530
    %v2132 = vunpack.c.h.b16 %v530
    %v2133 = vunpack.c.l.b16 %v531
    %v2134 = vunpack.c.h.b16 %v531
    %v2135 = vunpack.c.l.b16 %v532
    %v2136 = vunpack.c.h.b16 %v532
    %v2137 = vunpack.c.l.b16 %v533
    %v2138 = vunpack.c.h.b16 %v533
    %v2139 = vunpack.c.l.b16 %v534
    %v2140 = vunpack.c.h.b16 %v534
    %v2141 = vunpack.c.l.b16 %v535
    %v2142 = vunpack.c.h.b16 %v535
    %v2143 = vunpack.c.l.b16 %v536
    %v2144 = vunpack.c.h.b16 %v536
    %v2145 = vunpack.c.l.b16 %v537
    %v2146 = vunpack.c.h.b16 %v537
    %v2147 = vunpack.c.l.b16 %v538
    %v2148 = vunpack.c.h.b16 %v538
    %v2149 = vunpack.c.l.b16 %v539
    %v2150 = vunpack.c.h.b16 %v539
    %v2151 = vunpack.c.l.b16 %v540
    %v2152 = vunpack.c.h.b16 %v540
    %v2153 = vunpack.c.l.b16 %v541
    %v2154 = vunpack.c.h.b16 %v541
    %v2155 = vunpack.c.l.b16 %v542
    %v2156 = vunpack.c.h.b16 %v542
    %v2157 = vunpack.c.l.b16 %v543
    %v2158 = vunpack.c.h.b16 %v543
    %v2159 = vunpack.c.l.b16 %v544
    %v2160 = vunpack.c.h.b16 %v544
    %v2161 = vunpack.c.l.b16 %v545
    %v2162 = vunpack.c.h.b16 %v545
    %v2163 = vunpack.c.l.b16 %v546
    %v2164 = vunpack.c.h.b16 %v546
    %v2165 = vunpack.c.l.b16 %v547
    %v2166 = vunpack.c.h.b16 %v547
    %v2167 = vunpack.c.l.b16 %v548
    %v2168 = vunpack.c.h.b16 %v548
    %v2169 = vunpack.c.l.b16 %v549
    %v2170 = vunpack.c.h.b16 %v549
    %v2171 = vunpack.c.l.b16 %v550
    %v2172 = vunpack.c.h.b16 %v550
    %v2173 = vunpack.c.l.b16 %v551
    %v2174 = vunpack.c.h.b16 %v551
    %v2175 = vunpack.c.l.b16 %v552
    %v2176 = vunpack.c.h.b16 %v552
    %v2177 = vunpack.c.l.b16 %v553
    %v2178 = vunpack.c.h.b16 %v553
    %v2179 = vunpack.c.l.b16 %v554
    %v2180 = vunpack.c.h.b16 %v554
    %v2181 = vunpack.c.l.b16 %v555
    %v2182 = vunpack.c.h.b16 %v555
    %v2183 = vunpack.c.l.b16 %v556
    %v2184 = vunpack.c.h.b16 %v556
    %v2185 = vunpack.c.l.b16 %v557
    %v2186 = vunpack.c.h.b16 %v557
    %v2187 = vunpack.c.l.b16 %v558
    %v2188 = vunpack.c.h.b16 %v558
    %v2189 = vunpack.c.l.b16 %v559
    %v2190 = vunpack.c.h.b16 %v559
    %v2191 = vunpack.c.l.b16 %v560
    %v2192 = vunpack.c.h.b16 %v560
    %v2193 = vunpack.c.l.b16 %v561
    %v2194 = vunpack.c.h.b16 %v561
    %v2195 = vunpack.c.l.b16 %v562
    %v2196 = vunpack.c.h.b16 %v562
    %v2197 = vunpack.c.l.b16 %v563
    %v2198 = vunpack.c.h.b16 %v563
    %v2199 = vunpack.c.l.b16 %v564
    %v2200 = vunpack.c.h.b16 %v564
    %v2201 = vunpack.c.l.b16 %v565
    %v2202 = vunpack.c.h.b16 %v565
    %v2203 = vunpack.c.l.b16 %v566
    %v2204 = vunpack.c.h.b16 %v566
    %v2205 = vunpack.c.l.b16 %v567
    %v2206 = vunpack.c.h.b16 %v567
    %v2207 = vunpack.c.l.b16 %v568
    %v2208 = vunpack.c.h.b16 %v568
    %v2209 = vunpack.c.l.b16 %v569
    %v2210 = vunpack.c.h.b16 %v569
    %v2211 = vunpack.c.l.b16 %v570
    %v2212 = vunpack.c.h.b16 %v570
    %v2213 = vunpack.c.l.b16 %v571
    %v2214 = vunpack.c.h.b16 %v571
    %v2215 = vunpack.c.l.b16 %v572
    %v2216 = vunpack.c.h.b16 %v572
    %v2217 = vunpack.c.l.b16 %v573
    %v2218 = vunpack.c.h.b16 %v573
    %v2219 = vunpack.c.l.b16 %v574
    %v2220 = vunpack.c.h.b16 %v574
    %v2221 = vunpack.c.l.b16 %v575
    %v2222 = vunpack.c.h.b16 %v575
    %v2223 = vunpack.c.l.b16 %v576
    %v2224 = vunpack.c.h.b16 %v576
    %v2225 = vunpack.c.l.b16 %v577
    %v2226 = vunpack.c.h.b16 %v577
    %v2227 = vunpack.c.l.b16 %v578
    %v2228 = vunpack.c.h.b16 %v578
    %v2229 = vunpack.c.l.b16 %v579
    %v2230 = vunpack.c.h.b16 %v579
    %v2231 = vunpack.c.l.b16 %v580
    %v2232 = vunpack.c.h.b16 %v580
    %v2233 = vunpack.c.l.b16 %v581
    %v2234 = vunpack.c.h.b16 %v581
    %v2235 = vunpack.c.l.b16 %v582
    %v2236 = vunpack.c.h.b16 %v582
    %v2237 = vunpack.c.l.b16 %v583
    %v2238 = vunpack.c.h.b16 %v583
    %v2239 = vunpack.c.l.b16 %v584
    %v2240 = vunpack.c.h.b16 %v584
    %v2241 = vunpack.c.l.b16 %v585
    %v2242 = vunpack.c.h.b16 %v585
    %v2243 = vunpack.c.l.b16 %v586
    %v2244 = vunpack.c.h.b16 %v586
    %v2245 = vunpack.c.l.b16 %v587
    %v2246 = vunpack.c.h.b16 %v587
    %v2247 = vunpack.c.l.b16 %v588
    %v2248 = vunpack.c.h.b16 %v588
    %v2249 = vunpack.c.l.b16 %v589
    %v2250 = vunpack.c.h.b16 %v589
    %v2251 = vunpack.c.l.b16 %v590
    %v2252 = vunpack.c.h.b16 %v590
    %v2253 = vunpack.c.l.b16 %v591
    %v2254 = vunpack.c.h.b16 %v591
    %v2255 = vunpack.c.l.b16 %v592
    %v2256 = vunpack.c.h.b16 %v592
    %v2257 = vunpack.c.l.b16 %v593
    %v2258 = vunpack.c.h.b16 %v593
    %v2259 = vunpack.c.l.b16 %v594
    %v2260 = vunpack.c.h.b16 %v594
    %v2261 = vunpack.c.l.b16 %v595
    %v2262 = vunpack.c.h.b16 %v595
    %v2263 = vunpack.c.l.b16 %v596
    %v2264 = vunpack.c.h.b16 %v596
    %v2265 = vunpack.c.l.b16 %v597
    %v2266 = vunpack.c.h.b16 %v597
    %v2267 = vunpack.c.l.b16 %v598
    %v2268 = vunpack.c.h.b16 %v598
    %v2269 = vunpack.c.l.b16 %v599
    %v2270 = vunpack.c.h.b16 %v599
    %v2271 = vunpack.c.l.b16 %v600
    %v2272 = vunpack.c.h.b16 %v600
    %v2273 = vunpack.c.l.b16 %v601
    %v2274 = vunpack.c.h.b16 %v601
    %v2275 = vunpack.c.l.b16 %v602
    %v2276 = vunpack.c.h.b16 %v602
    %v2277 = vunpack.c.l.b16 %v603
    %v2278 = vunpack.c.h.b16 %v603
    %v2279 = vunpack.c.l.b16 %v604
    %v2280 = vunpack.c.h.b16 %v604
    %v2281 = vunpack.c.l.b16 %v605
    %v2282 = vunpack.c.h.b16 %v605
    %v2283 = vunpack.c.l.b16 %v606
    %v2284 = vunpack.c.h.b16 %v606
    %v2285 = vunpack.c.l.b16 %v607
    %v2286 = vunpack.c.h.b16 %v607
    %v2287 = vunpack.c.l.b16 %v608
    %v2288 = vunpack.c.h.b16 %v608
    %v2289 = vunpack.c.l.b16 %v609
    %v2290 = vunpack.c.h.b16 %v609
    %v2291 = vunpack.c.l.b16 %v610
    %v2292 = vunpack.c.h.b16 %v610
    %v2293 = vunpack.c.l.b16 %v611
    %v2294 = vunpack.c.h.b16 %v611
    %v2295 = vunpack.c.l.b16 %v612
    %v2296 = vunpack.c.h.b16 %v612
    %v2297 = vunpack.c.l.b16 %v613
    %v2298 = vunpack.c.h.b16 %v613
    %v2299 = vunpack.c.l.b16 %v614
    %v2300 = vunpack.c.h.b16 %v614
    %v2301 = vunpack.c.l.b16 %v615
    %v2302 = vunpack.c.h.b16 %v615
    %v2303 = vunpack.c.l.b16 %v616
    %v2304 = vunpack.c.h.b16 %v616
    %v2305 = vunpack.c.l.b16 %v617
    %v2306 = vunpack.c.h.b16 %v617
    %v2307 = vunpack.c.l.b16 %v618
    %v2308 = vunpack.c.h.b16 %v618
    %v2309 = vunpack.c.l.b16 %v619
    %v2310 = vunpack.c.h.b16 %v619
    %v2311 = vunpack.c.l.b16 %v620
    %v2312 = vunpack.c.h.b16 %v620
    %v2313 = vunpack.c.l.b16 %v621
    %v2314 = vunpack.c.h.b16 %v621
    %v2315 = vunpack.c.l.b16 %v622
    %v2316 = vunpack.c.h.b16 %v622
    %v2317 = vunpack.c.l.b16 %v623
    %v2318 = vunpack.c.h.b16 %v623
    %v2319 = vunpack.c.l.b16 %v624
    %v2320 = vunpack.c.h.b16 %v624
    %v2321 = vunpack.c.l.b16 %v625
    %v2322 = vunpack.c.h.b16 %v625
    %v2323 = vunpack.c.l.b16 %v626
    %v2324 = vunpack.c.h.b16 %v626
    %v2325 = vunpack.c.l.b16 %v627
    %v2326 = vunpack.c.h.b16 %v627
    %v2327 = vunpack.c.l.b16 %v628
    %v2328 = vunpack.c.h.b16 %v628
    %v2329 = vunpack.c.l.b16 %v629
    %v2330 = vunpack.c.h.b16 %v629
    %v2331 = vunpack.c.l.b16 %v630
    %v2332 = vunpack.c.h.b16 %v630
    %v2333 = vunpack.c.l.b16 %v631
    %v2334 = vunpack.c.h.b16 %v631
    %v2335 = vunpack.c.l.b16 %v632
    %v2336 = vunpack.c.h.b16 %v632
    %v2337 = vunpack.c.l.b16 %v633
    %v2338 = vunpack.c.h.b16 %v633
    %v2339 = vunpack.c.l.b16 %v634
    %v2340 = vunpack.c.h.b16 %v634
    %v2341 = vunpack.c.l.b16 %v635
    %v2342 = vunpack.c.h.b16 %v635
    %v2343 = vunpack.c.l.b16 %v636
    %v2344 = vunpack.c.h.b16 %v636
    %v2345 = vunpack.c.l.b16 %v637
    %v2346 = vunpack.c.h.b16 %v637
    %v2347 = vunpack.c.l.b16 %v638
    %v2348 = vunpack.c.h.b16 %v638
    %v2349 = vunpack.c.l.b16 %v639
    %v2350 = vunpack.c.h.b16 %v639
    %v2351 = vunpack.c.l.b16 %v640
    %v2352 = vunpack.c.h.b16 %v640
    %v2353 = vunpack.c.l.b16 %v641
    %v2354 = vunpack.c.h.b16 %v641
    %v2355 = vunpack.c.l.b16 %v642
    %v2356 = vunpack.c.h.b16 %v642
    %v2357 = vunpack.c.l.b16 %v643
    %v2358 = vunpack.c.h.b16 %v643
    %v2359 = vunpack.c.l.b16 %v644
    %v2360 = vunpack.c.h.b16 %v644
    %v2361 = vunpack.c.l.b16 %v645
    %v2362 = vunpack.c.h.b16 %v645
    %v2363 = vunpack.c.l.b16 %v646
    %v2364 = vunpack.c.h.b16 %v646
    %v2365 = vunpack.c.l.b16 %v647
    %v2366 = vunpack.c.h.b16 %v647
    %v2367 = vunpack.c.l.b16 %v648
    %v2368 = vunpack.c.h.b16 %v648
    %v2369 = vunpack.c.l.b16 %v649
    %v2370 = vunpack.c.h.b16 %v649
    %v2371 = vunpack.c.l.b16 %v650
    %v2372 = vunpack.c.h.b16 %v650
    %v2373 = vunpack.c.l.b16 %v651
    %v2374 = vunpack.c.h.b16 %v651
    %v2375 = vunpack.c.l.b16 %v652
    %v2376 = vunpack.c.h.b16 %v652
    %v2377 = vunpack.c.l.b16 %v653
    %v2378 = vunpack.c.h.b16 %v653
    %v2379 = vunpack.c.l.b16 %v654
    %v2380 = vunpack.c.h.b16 %v654
    %v2381 = vunpack.c.l.b16 %v655
    %v2382 = vunpack.c.h.b16 %v655
    %v2383 = vunpack.c.l.b16 %v656
    %v2384 = vunpack.c.h.b16 %v656
    %v2385 = vunpack.c.l.b16 %v657
    %v2386 = vunpack.c.h.b16 %v657
    %v2387 = vunpack.c.l.b16 %v658
    %v2388 = vunpack.c.h.b16 %v658
    %v2389 = vunpack.c.l.b16 %v659
    %v2390 = vunpack.c.h.b16 %v659
    %v2391 = vunpack.c.l.b16 %v660
    %v2392 = vunpack.c.h.b16 %v660
    %v2393 = vunpack.c.l.b16 %v661
    %v2394 = vunpack.c.h.b16 %v661
    %v2395 = vunpack.c.l.b16 %v662
    %v2396 = vunpack.c.h.b16 %v662
    %v2397 = vunpack.c.l.b16 %v663
    %v2398 = vunpack.c.h.b16 %v663
    %v2399 = vunpack.c.l.b16 %v664
    %v2400 = vunpack.c.h.b16 %v664
    %v2401 = vunpack.c.l.b16 %v665
    %v2402 = vunpack.c.h.b16 %v665
    %v2403 = vunpack.c.l.b16 %v666
    %v2404 = vunpack.c.h.b16 %v666
    %v2405 = vunpack.c.l.b16 %v667
    %v2406 = vunpack.c.h.b16 %v667
    %v2407 = vunpack.c.l.b16 %v668
    %v2408 = vunpack.c.h.b16 %v668
    %v2409 = vunpack.c.l.b16 %v669
    %v2410 = vunpack.c.h.b16 %v669
    %v2411 = vunpack.c.l.b16 %v670
    %v2412 = vunpack.c.h.b16 %v670
    %v2413 = vunpack.c.l.b16 %v671
    %v2414 = vunpack.c.h.b16 %v671
    %v2415 = vunpack.c.l.b16 %v672
    %v2416 = vunpack.c.h.b16 %v672
    %v2417 = vunpack.c.l.b16 %v673
    %v2418 = vunpack.c.h.b16 %v673
    %v2419 = vunpack.c.l.b16 %v674
    %v2420 = vunpack.c.h.b16 %v674
    %v2421 = vunpack.c.l.b16 %v675
    %v2422 = vunpack.c.h.b16 %v675
    %v2423 = vunpack.c.l.b16 %v676
    %v2424 = vunpack.c.h.b16 %v676
    %v2425 = vunpack.c.l.b16 %v677
    %v2426 = vunpack.c.h.b16 %v677
    %v2427 = vunpack.c.l.b16 %v678
    %v2428 = vunpack.c.h.b16 %v678
    %v2429 = vunpack.c.l.b16 %v679
    %v2430 = vunpack.c.h.b16 %v679
    %v2431 = vunpack.c.l.b16 %v680
    %v2432 = vunpack.c.h.b16 %v680
    %v2433 = vunpack.c.l.b16 %v681
    %v2434 = vunpack.c.h.b16 %v681
    %v2435 = vunpack.c.l.b16 %v682
    %v2436 = vunpack.c.h.b16 %v682
    %v2437 = vunpack.c.l.b16 %v683
    %v2438 = vunpack.c.h.b16 %v683
    %v2439 = vunpack.c.l.b16 %v684
    %v2440 = vunpack.c.h.b16 %v684
    %v2441 = vunpack.c.l.b16 %v685
    %v2442 = vunpack.c.h.b16 %v685
    %v2443 = vunpack.c.l.b16 %v686
    %v2444 = vunpack.c.h.b16 %v686
    %v2445 = vunpack.c.l.b16 %v687
    %v2446 = vunpack.c.h.b16 %v687
    %v2447 = vunpack.c.l.b16 %v688
    %v2448 = vunpack.c.h.b16 %v688
    %v2449 = vunpack.c.l.b16 %v689
    %v2450 = vunpack.c.h.b16 %v689
    %v2451 = vunpack.c.l.b16 %v690
    %v2452 = vunpack.c.h.b16 %v690
    %v2453 = vunpack.c.l.b16 %v691
    %v2454 = vunpack.c.h.b16 %v691
    %v2455 = vunpack.c.l.b16 %v692
    %v2456 = vunpack.c.h.b16 %v692
    %v2457 = vunpack.c.l.b16 %v693
    %v2458 = vunpack.c.h.b16 %v693
    %v2459 = vunpack.c.l.b16 %v694
    %v2460 = vunpack.c.h.b16 %v694
    %v2461 = vunpack.c.l.b16 %v695
    %v2462 = vunpack.c.h.b16 %v695
    %v2463 = vunpack.c.l.b16 %v696
    %v2464 = vunpack.c.h.b16 %v696
    %v2465 = vunpack.c.l.b16 %v697
    %v2466 = vunpack.c.h.b16 %v697
    %v2467 = vunpack.c.l.b16 %v698
    %v2468 = vunpack.c.h.b16 %v698
    %v2469 = vunpack.c.l.b16 %v699
    %v2470 = vunpack.c.h.b16 %v699
    %v2471 = vunpack.c.l.b16 %v700
    %v2472 = vunpack.c.h.b16 %v700
    %v2473 = vunpack.c.l.b16 %v701
    %v2474 = vunpack.c.h.b16 %v701
    %v2475 = vunpack.c.l.b16 %v702
    %v2476 = vunpack.c.h.b16 %v702
    %v2477 = vpack.c.b16 %v1305, %v1301
    %v2478 = vpack.c.b16 %v1306, %v1302
    %v2479 = vpack.c.b16 %v1307, %v1303
    %v2480 = vpack.c.b16 %v1308, %v1304
    %v2481 = vpack.c.b16 %v1313, %v1309
    %v2482 = vpack.c.b16 %v1314, %v1310
    %v2483 = vpack.c.b16 %v1315, %v1311
    %v2484 = vpack.c.b16 %v1316, %v1312
    %v2485 = vpack.c.b16 %v1321, %v1317
    %v2486 = vpack.c.b16 %v1322, %v1318
    %v2487 = vpack.c.b16 %v1323, %v1319
    %v2488 = vpack.c.b16 %v1324, %v1320
    %v2489 = vpack.c.b16 %v1329, %v1325
    %v2490 = vpack.c.b16 %v1330, %v1326
    %v2491 = vpack.c.b16 %v1331, %v1327
    %v2492 = vpack.c.b16 %v1332, %v1328
    %v2493 = vpack.c.b16 %v1337, %v1333
    %v2494 = vpack.c.b16 %v1338, %v1334
    %v2495 = vpack.c.b16 %v1339, %v1335
    %v2496 = vpack.c.b16 %v1340, %v1336
    %v2497 = vpack.c.b16 %v1345, %v1341
    %v2498 = vpack.c.b16 %v1346, %v1342
    %v2499 = vpack.c.b16 %v1347, %v1343
    %v2500 = vpack.c.b16 %v1348, %v1344
    %v2501 = vpack.c.b16 %v1353, %v1349
    %v2502 = vpack.c.b16 %v1354, %v1350
    %v2503 = vpack.c.b16 %v1355, %v1351
    %v2504 = vpack.c.b16 %v1356, %v1352
    %v2505 = vpack.c.b16 %v1361, %v1357
    %v2506 = vpack.c.b16 %v1362, %v1358
    %v2507 = vpack.c.b16 %v1363, %v1359
    %v2508 = vpack.c.b16 %v1364, %v1360
    %v2509 = vpack.c.b16 %v1369, %v1365
    %v2510 = vpack.c.b16 %v1370, %v1366
    %v2511 = vpack.c.b16 %v1371, %v1367
    %v2512 = vpack.c.b16 %v1372, %v1368
    %v2513 = vpack.c.b16 %v1377, %v1373
    %v2514 = vpack.c.b16 %v1378, %v1374
    %v2515 = vpack.c.b16 %v1379, %v1375
    %v2516 = vpack.c.b16 %v1380, %v1376
    %v2517 = vpack.c.b16 %v1385, %v1381
    %v2518 = vpack.c.b16 %v1386, %v1382
    %v2519 = vpack.c.b16 %v1387, %v1383
    %v2520 = vpack.c.b16 %v1388, %v1384
    %v2521 = vpack.c.b16 %v1393, %v1389
    %v2522 = vpack.c.b16 %v1394, %v1390
    %v2523 = vpack.c.b16 %v1395, %v1391
    %v2524 = vpack.c.b16 %v1396, %v1392
    %v2525 = vpack.c.b16 %v1401, %v1397
    %v2526 = vpack.c.b16 %v1402, %v1398
    %v2527 = vpack.c.b16 %v1403, %v1399
    %v2528 = vpack.c.b16 %v1404, %v1400
    %v2529 = vpack.c.b16 %v1409, %v1405
    %v2530 = vpack.c.b16 %v1410, %v1406
    %v2531 = vpack.c.b16 %v1411, %v1407
    %v2532 = vpack.c.b16 %v1412, %v1408
    %v2533 = vpack.c.b16 %v1417, %v1413
    %v2534 = vpack.c.b16 %v1418, %v1414
    %v2535 = vpack.c.b16 %v1419, %v1415
    %v2536 = vpack.c.b16 %v1420, %v1416
    %v2537 = vpack.c.b16 %v1425, %v1421
    %v2538 = vpack.c.b16 %v1426, %v1422
    %v2539 = vpack.c.b16 %v1427, %v1423
    %v2540 = vpack.c.b16 %v1428, %v1424
    %v2541 = vpack.c.b16 %v1433, %v1429
    %v2542 = vpack.c.b16 %v1434, %v1430
    %v2543 = vpack.c.b16 %v1435, %v1431
    %v2544 = vpack.c.b16 %v1436, %v1432
    %v2545 = vpack.c.b16 %v1441, %v1437
    %v2546 = vpack.c.b16 %v1442, %v1438
    %v2547 = vpack.c.b16 %v1443, %v1439
    %v2548 = vpack.c.b16 %v1444, %v1440
    %v2549 = vpack.c.b16 %v1449, %v1445
    %v2550 = vpack.c.b16 %v1450, %v1446
    %v2551 = vpack.c.b16 %v1451, %v1447
    %v2552 = vpack.c.b16 %v1452, %v1448
    %v2553 = vpack.c.b16 %v1457, %v1453
    %v2554 = vpack.c.b16 %v1458, %v1454
    %v2555 = vpack.c.b16 %v1459, %v1455
    %v2556 = vpack.c.b16 %v1460, %v1456
    %v2557 = vpack.c.b16 %v1465, %v1461
    %v2558 = vpack.c.b16 %v1466, %v1462
    %v2559 = vpack.c.b16 %v1467, %v1463
    %v2560 = vpack.c.b16 %v1468, %v1464
    %v2561 = vpack.c.b16 %v1473, %v1469
    %v2562 = vpack.c.b16 %v1474, %v1470
    %v2563 = vpack.c.b16 %v1475, %v1471
    %v2564 = vpack.c.b16 %v1476, %v1472
    %v2565 = vpack.c.b16 %v1481, %v1477
    %v2566 = vpack.c.b16 %v1482, %v1478
    %v2567 = vpack.c.b16 %v1483, %v1479
    %v2568 = vpack.c.b16 %v1484, %v1480
    %v2569 = vpack.c.b16 %v1489, %v1485
    %v2570 = vpack.c.b16 %v1490, %v1486
    %v2571 = vpack.c.b16 %v1491, %v1487
    %v2572 = vpack.c.b16 %v1492, %v1488
    %v2573 = vpack.c.b16 %v1497, %v1493
    %v2574 = vpack.c.b16 %v1498, %v1494
    %v2575 = vpack.c.b16 %v1499, %v1495
    %v2576 = vpack.c.b16 %v1500, %v1496
    %v2577 = vpack.c.b16 %v1505, %v1501
    %v2578 = vpack.c.b16 %v1506, %v1502
    %v2579 = vpack.c.b16 %v1507, %v1503
    %v2580 = vpack.c.b16 %v1508, %v1504
    %v2581 = vpack.c.b16 %v1513, %v1509
    %v2582 = vpack.c.b16 %v1514, %v1510
    %v2583 = vpack.c.b16 %v1515, %v1511
    %v2584 = vpack.c.b16 %v1516, %v1512
    %v2585 = vpack.c.b16 %v1521, %v1517
    %v2586 = vpack.c.b16 %v1522, %v1518
    %v2587 = vpack.c.b16 %v1523, %v1519
    %v2588 = vpack.c.b16 %v1524, %v1520
    %v2589 = vpack.c.b16 %v1529, %v1525
    %v2590 = vpack.c.b16 %v1530, %v1526
    %v2591 = vpack.c.b16 %v1531, %v1527
    %v2592 = vpack.c.b16 %v1532, %v1528
    %v2593 = vpack.c.b16 %v1537, %v1533
    %v2594 = vpack.c.b16 %v1538, %v1534
    %v2595 = vpack.c.b16 %v1539, %v1535
    %v2596 = vpack.c.b16 %v1540, %v1536
    %v2597 = vpack.c.b16 %v1545, %v1541
    %v2598 = vpack.c.b16 %v1546, %v1542
    %v2599 = vpack.c.b16 %v1547, %v1543
    %v2600 = vpack.c.b16 %v1548, %v1544
    %v2601 = vpack.c.b16 %v1553, %v1549
    %v2602 = vpack.c.b16 %v1554, %v1550
    %v2603 = vpack.c.b16 %v1555, %v1551
    %v2604 = vpack.c.b16 %v1556, %v1552
    %v2605 = vpack.c.b16 %v1561, %v1557
    %v2606 = vpack.c.b16 %v1562, %v1558
    %v2607 = vpack.c.b16 %v1563, %v1559
    %v2608 = vpack.c.b16 %v1564, %v1560
    %v2609 = vpack.c.b16 %v1569, %v1565
    %v2610 = vpack.c.b16 %v1570, %v1566
    %v2611 = vpack.c.b16 %v1571, %v1567
    %v2612 = vpack.c.b16 %v1572, %v1568
    %v2613 = vpack.c.b16 %v1577, %v1573
    %v2614 = vpack.c.b16 %v1578, %v1574
    %v2615 = vpack.c.b16 %v1579, %v1575
    %v2616 = vpack.c.b16 %v1580, %v1576
    %v2617 = vpack.c.b16 %v1585, %v1581
    %v2618 = vpack.c.b16 %v1586, %v1582
    %v2619 = vpack.c.b16 %v1587, %v1583
    %v2620 = vpack.c.b16 %v1588, %v1584
    %v2621 = vpack.c.b16 %v1593, %v1589
    %v2622 = vpack.c.b16 %v1594, %v1590
    %v2623 = vpack.c.b16 %v1595, %v1591
    %v2624 = vpack.c.b16 %v1596, %v1592
    %v2625 = vpack.c.b16 %v1601, %v1597
    %v2626 = vpack.c.b16 %v1602, %v1598
    %v2627 = vpack.c.b16 %v1603, %v1599
    %v2628 = vpack.c.b16 %v1604, %v1600
    %v2629 = vpack.c.b16 %v1609, %v1605
    %v2630 = vpack.c.b16 %v1610, %v1606
    %v2631 = vpack.c.b16 %v1611, %v1607
    %v2632 = vpack.c.b16 %v1612, %v1608
    %v2633 = vpack.c.b16 %v1617, %v1613
    %v2634 = vpack.c.b16 %v1618, %v1614
    %v2635 = vpack.c.b16 %v1619, %v1615
    %v2636 = vpack.c.b16 %v1620, %v1616
    %v2637 = vpack.c.b16 %v1625, %v1621
    %v2638 = vpack.c.b16 %v1626, %v1622
    %v2639 = vpack.c.b16 %v1627, %v1623
    %v2640 = vpack.c.b16 %v1628, %v1624
    %v2641 = vpack.c.b16 %v1633, %v1629
    %v2642 = vpack.c.b16 %v1634, %v1630
    %v2643 = vpack.c.b16 %v1635, %v1631
    %v2644 = vpack.c.b16 %v1636, %v1632
    %v2645 = vpack.c.b16 %v1641, %v1637
    %v2646 = vpack.c.b16 %v1642, %v1638
    %v2647 = vpack.c.b16 %v1643, %v1639
    %v2648 = vpack.c.b16 %v1644, %v1640
    %v2649 = vpack.c.b16 %v1649, %v1645
    %v2650 = vpack.c.b16 %v1650, %v1646
    %v2651 = vpack.c.b16 %v1651, %v1647
    %v2652 = vpack.c.b16 %v1652, %v1648
    %v2653 = vpack.c.b16 %v1657, %v1653
    %v2654 = vpack.c.b16 %v1658, %v1654
    %v2655 = vpack.c.b16 %v1659, %v1655
    %v2656 = vpack.c.b16 %v1660, %v1656
    %v2657 = vpack.c.b16 %v1665, %v1661
    %v2658 = vpack.c.b16 %v1666, %v1662
    %v2659 = vpack.c.b16 %v1667, %v1663
    %v2660 = vpack.c.b16 %v1668, %v1664
    %v2661 = vpack.c.b16 %v1673, %v1669
    %v2662 = vpack.c.b16 %v1674, %v1670
    %v2663 = vpack.c.b16 %v1675, %v1671
    %v2664 = vpack.c.b16 %v1676, %v1672
    %v2665 = vpack.c.b16 %v1681, %v1677
    %v2666 = vpack.c.b16 %v1682, %v1678
    %v2667 = vpack.c.b16 %v1683, %v1679
    %v2668 = vpack.c.b16 %v1684, %v1680
    %v2669 = vpack.c.b16 %v1689, %v1685
    %v2670 = vpack.c.b16 %v1690, %v1686
    %v2671 = vpack.c.b16 %v1691, %v1687
    %v2672 = vpack.c.b16 %v1692, %v1688
    %v2673 = vpack.c.b16 %v1697, %v1693
    %v2674 = vpack.c.b16 %v1698, %v1694
    %v2675 = vpack.c.b16 %v1699, %v1695
    %v2676 = vpack.c.b16 %v1700, %v1696
    %v2677 = vpack.c.b16 %v1705, %v1701
    %v2678 = vpack.c.b16 %v1706, %v1702
    %v2679 = vpack.c.b16 %v1707, %v1703
    %v2680 = vpack.c.b16 %v1708, %v1704
    %v2681 = vpack.c.b16 %v1713, %v1709
    %v2682 = vpack.c.b16 %v1714, %v1710
    %v2683 = vpack.c.b16 %v1715, %v1711
    %v2684 = vpack.c.b16 %v1716, %v1712
    %v2685 = vpack.c.b16 %v1721, %v1717
    %v2686 = vpack.c.b16 %v1722, %v1718
    %v2687 = vpack.c.b16 %v1723, %v1719
    %v2688 = vpack.c.b16 %v1724, %v1720
    %v2689 = vpack.c.b16 %v1729, %v1725
    %v2690 = vpack.c.b16 %v1730, %v1726
    %v2691 = vpack.c.b16 %v1731, %v1727
    %v2692 = vpack.c.b16 %v1732, %v1728
    %v2693 = vpack.c.b16 %v1737, %v1733
    %v2694 = vpack.c.b16 %v1738, %v1734
    %v2695 = vpack.c.b16 %v1739, %v1735
    %v2696 = vpack.c.b16 %v1740, %v1736
    %v2697 = vpack.c.b16 %v1745, %v1741
    %v2698 = vpack.c.b16 %v1746, %v1742
    %v2699 = vpack.c.b16 %v1747, %v1743
    %v2700 = vpack.c.b16 %v1748, %v1744
    %v2701 = vpack.c.b16 %v1753, %v1749
    %v2702 = vpack.c.b16 %v1754, %v1750
    %v2703 = vpack.c.b16 %v1755, %v1751
    %v2704 = vpack.c.b16 %v1756, %v1752
    %v2705 = vpack.c.b16 %v1761, %v1757
    %v2706 = vpack.c.b16 %v1762, %v1758
    %v2707 = vpack.c.b16 %v1763, %v1759
    %v2708 = vpack.c.b16 %v1764, %v1760
    %v2709 = vpack.c.b16 %v1769, %v1765
    %v2710 = vpack.c.b16 %v1770, %v1766
    %v2711 = vpack.c.b16 %v1771, %v1767
    %v2712 = vpack.c.b16 %v1772, %v1768
    %v2713 = vpack.c.b16 %v1777, %v1773
    %v2714 = vpack.c.b16 %v1778, %v1774
    %v2715 = vpack.c.b16 %v1779, %v1775
    %v2716 = vpack.c.b16 %v1780, %v1776
    %v2717 = vpack.c.b16 %v1785, %v1781
    %v2718 = vpack.c.b16 %v1786, %v1782
    %v2719 = vpack.c.b16 %v1787, %v1783
    %v2720 = vpack.c.b16 %v1788, %v1784
    %v2721 = vpack.c.b16 %v1793, %v1789
    %v2722 = vpack.c.b16 %v1794, %v1790
    %v2723 = vpack.c.b16 %v1795, %v1791
    %v2724 = vpack.c.b16 %v1796, %v1792
    %v2725 = vpack.c.b16 %v1801, %v1797
    %v2726 = vpack.c.b16 %v1802, %v1798
    %v2727 = vpack.c.b16 %v1803, %v1799
    %v2728 = vpack.c.b16 %v1804, %v1800
    %v2729 = vpack.c.b16 %v1809, %v1805
    %v2730 = vpack.c.b16 %v1810, %v1806
    %v2731 = vpack.c.b16 %v1811, %v1807
    %v2732 = vpack.c.b16 %v1812, %v1808
    %v2733 = vpack.c.b16 %v1817, %v1813
    %v2734 = vpack.c.b16 %v1818, %v1814
    %v2735 = vpack.c.b16 %v1819, %v1815
    %v2736 = vpack.c.b16 %v1820, %v1816
    %v2737 = vpack.c.b16 %v1825, %v1821
    %v2738 = vpack.c.b16 %v1826, %v1822
    %v2739 = vpack.c.b16 %v1827, %v1823
    %v2740 = vpack.c.b16 %v1828, %v1824
    %v2741 = vpack.c.b16 %v1833, %v1829
    %v2742 = vpack.c.b16 %v1834, %v1830
    %v2743 = vpack.c.b16 %v1835, %v1831
    %v2744 = vpack.c.b16 %v1836, %v1832
    %v2745 = vpack.c.b16 %v1841, %v1837
    %v2746 = vpack.c.b16 %v1842, %v1838
    %v2747 = vpack.c.b16 %v1843, %v1839
    %v2748 = vpack.c.b16 %v1844, %v1840
    %v2749 = vpack.c.b16 %v1849, %v1845
    %v2750 = vpack.c.b16 %v1850, %v1846
    %v2751 = vpack.c.b16 %v1851, %v1847
    %v2752 = vpack.c.b16 %v1852, %v1848
    %v2753 = vpack.c.b16 %v1857, %v1853
    %v2754 = vpack.c.b16 %v1858, %v1854
    %v2755 = vpack.c.b16 %v1859, %v1855
    %v2756 = vpack.c.b16 %v1860, %v1856
    %v2757 = vpack.c.b16 %v1865, %v1861
    %v2758 = vpack.c.b16 %v1866, %v1862
    %v2759 = vpack.c.b16 %v1867, %v1863
    %v2760 = vpack.c.b16 %v1868, %v1864
    %v2761 = vpack.c.b16 %v1873, %v1869
    %v2762 = vpack.c.b16 %v1874, %v1870
    %v2763 = vpack.c.b16 %v1875, %v1871
    %v2764 = vpack.c.b16 %v1876, %v1872
    %v2765 = vpack.c.b16 %v1881, %v1877
    %v2766 = vpack.c.b16 %v1882, %v1878
    %v2767 = vpack.c.b16 %v1883, %v1879
    %v2768 = vpack.c.b16 %v1884, %v1880
    %v2769 = vpack.c.b16 %v1889, %v1885
    %v2770 = vpack.c.b16 %v1890, %v1886
    %v2771 = vpack.c.b16 %v1891, %v1887
    %v2772 = vpack.c.b16 %v1892, %v1888
    %v2773 = vpack.c.b16 %v1897, %v1893
    %v2774 = vpack.c.b16 %v1898, %v1894
    %v2775 = vpack.c.b16 %v1899, %v1895
    %v2776 = vpack.c.b16 %v1900, %v1896
    %v2777 = vpack.c.b16 %v1905, %v1901
    %v2778 = vpack.c.b16 %v1906, %v1902
    %v2779 = vpack.c.b16 %v1907, %v1903
    %v2780 = vpack.c.b16 %v1908, %v1904
    %v2781 = vpack.c.b16 %v1913, %v1909
    %v2782 = vpack.c.b16 %v1914, %v1910
    %v2783 = vpack.c.b16 %v1915, %v1911
    %v2784 = vpack.c.b16 %v1916, %v1912
    %v2785 = vpack.c.b16 %v1921, %v1917
    %v2786 = vpack.c.b16 %v1922, %v1918
    %v2787 = vpack.c.b16 %v1923, %v1919
    %v2788 = vpack.c.b16 %v1924, %v1920
    %v2789 = vpack.c.b16 %v1929, %v1925
    %v2790 = vpack.c.b16 %v1930, %v1926
    %v2791 = vpack.c.b16 %v1931, %v1927
    %v2792 = vpack.c.b16 %v1932, %v1928
    %v2793 = vpack.c.b16 %v1937, %v1933
    %v2794 = vpack.c.b16 %v1938, %v1934
    %v2795 = vpack.c.b16 %v1939, %v1935
    %v2796 = vpack.c.b16 %v1940, %v1936
    %v2797 = vpack.c.b16 %v1945, %v1941
    %v2798 = vpack.c.b16 %v1946, %v1942
    %v2799 = vpack.c.b16 %v1947, %v1943
    %v2800 = vpack.c.b16 %v1948, %v1944
    %v2801 = vpack.c.b16 %v1953, %v1949
    %v2802 = vpack.c.b16 %v1954, %v1950
    %v2803 = vpack.c.b16 %v1955, %v1951
    %v2804 = vpack.c.b16 %v1956, %v1952
    %v2805 = vpack.c.b16 %v1961, %v1957
    %v2806 = vpack.c.b16 %v1962, %v1958
    %v2807 = vpack.c.b16 %v1963, %v1959
    %v2808 = vpack.c.b16 %v1964, %v1960
    %v2809 = vpack.c.b16 %v1969, %v1965
    %v2810 = vpack.c.b16 %v1970, %v1966
    %v2811 = vpack.c.b16 %v1971, %v1967
    %v2812 = vpack.c.b16 %v1972, %v1968
    %v2813 = vpack.c.b16 %v1977, %v1973
    %v2814 = vpack.c.b16 %v1978, %v1974
    %v2815 = vpack.c.b16 %v1979, %v1975
    %v2816 = vpack.c.b16 %v1980, %v1976
    %v2817 = vpack.c.b16 %v1985, %v1981
    %v2818 = vpack.c.b16 %v1986, %v1982
    %v2819 = vpack.c.b16 %v1987, %v1983
    %v2820 = vpack.c.b16 %v1988, %v1984
    %v2821 = vpack.c.b16 %v1993, %v1989
    %v2822 = vpack.c.b16 %v1994, %v1990
    %v2823 = vpack.c.b16 %v1995, %v1991
    %v2824 = vpack.c.b16 %v1996, %v1992
    %v2825 = vpack.c.b16 %v2001, %v1997
    %v2826 = vpack.c.b16 %v2002, %v1998
    %v2827 = vpack.c.b16 %v2003, %v1999
    %v2828 = vpack.c.b16 %v2004, %v2000
    %v2829 = vpack.c.b16 %v2009, %v2005
    %v2830 = vpack.c.b16 %v2010, %v2006
    %v2831 = vpack.c.b16 %v2011, %v2007
    %v2832 = vpack.c.b16 %v2012, %v2008
    %v2833 = vpack.c.b16 %v2017, %v2013
    %v2834 = vpack.c.b16 %v2018, %v2014
    %v2835 = vpack.c.b16 %v2019, %v2015
    %v2836 = vpack.c.b16 %v2020, %v2016
    %v2837 = vpack.c.b16 %v2025, %v2021
    %v2838 = vpack.c.b16 %v2026, %v2022
    %v2839 = vpack.c.b16 %v2027, %v2023
    %v2840 = vpack.c.b16 %v2028, %v2024
    %v2841 = vpack.c.b16 %v2033, %v2029
    %v2842 = vpack.c.b16 %v2034, %v2030
    %v2843 = vpack.c.b16 %v2035, %v2031
    %v2844 = vpack.c.b16 %v2036, %v2032
    %v2845 = vpack.c.b16 %v2041, %v2037
    %v2846 = vpack.c.b16 %v2042, %v2038
    %v2847 = vpack.c.b16 %v2043, %v2039
    %v2848 = vpack.c.b16 %v2044, %v2040
    %v2849 = vpack.c.b16 %v2049, %v2045
    %v2850 = vpack.c.b16 %v2050, %v2046
    %v2851 = vpack.c.b16 %v2051, %v2047
    %v2852 = vpack.c.b16 %v2052, %v2048
    %v2853 = vpack.c.b16 %v2057, %v2053
    %v2854 = vpack.c.b16 %v2058, %v2054
    %v2855 = vpack.c.b16 %v2059, %v2055
    %v2856 = vpack.c.b16 %v2060, %v2056
    %v2857 = vpack.c.b16 %v2065, %v2061
    %v2858 = vpack.c.b16 %v2066, %v2062
    %v2859 = vpack.c.b16 %v2067, %v2063
    %v2860 = vpack.c.b16 %v2068, %v2064
    %v2861 = vpack.c.b16 %v2073, %v2069
    %v2862 = vpack.c.b16 %v2074, %v2070
    %v2863 = vpack.c.b16 %v2075, %v2071
    %v2864 = vpack.c.b16 %v2076, %v2072
    %v2865 = vpack.c.b16 %v2081, %v2077
    %v2866 = vpack.c.b16 %v2082, %v2078
    %v2867 = vpack.c.b16 %v2083, %v2079
    %v2868 = vpack.c.b16 %v2084, %v2080
    %v2869 = vpack.c.b16 %v2089, %v2085
    %v2870 = vpack.c.b16 %v2090, %v2086
    %v2871 = vpack.c.b16 %v2091, %v2087
    %v2872 = vpack.c.b16 %v2092, %v2088
    %v2873 = vpack.c.b16 %v2097, %v2093
    %v2874 = vpack.c.b16 %v2098, %v2094
    %v2875 = vpack.c.b16 %v2099, %v2095
    %v2876 = vpack.c.b16 %v2100, %v2096
    %v2877 = vpack.c.b16 %v2105, %v2101
    %v2878 = vpack.c.b16 %v2106, %v2102
    %v2879 = vpack.c.b16 %v2107, %v2103
    %v2880 = vpack.c.b16 %v2108, %v2104
    %v2881 = vpack.c.b16 %v2113, %v2109
    %v2882 = vpack.c.b16 %v2114, %v2110
    %v2883 = vpack.c.b16 %v2115, %v2111
    %v2884 = vpack.c.b16 %v2116, %v2112
    %v2885 = vpack.c.b16 %v2121, %v2117
    %v2886 = vpack.c.b16 %v2122, %v2118
    %v2887 = vpack.c.b16 %v2123, %v2119
    %v2888 = vpack.c.b16 %v2124, %v2120
    %v2889 = vpack.c.b16 %v2129, %v2125
    %v2890 = vpack.c.b16 %v2130, %v2126
    %v2891 = vpack.c.b16 %v2131, %v2127
    %v2892 = vpack.c.b16 %v2132, %v2128
    %v2893 = vpack.c.b16 %v2137, %v2133
    %v2894 = vpack.c.b16 %v2138, %v2134
    %v2895 = vpack.c.b16 %v2139, %v2135
    %v2896 = vpack.c.b16 %v2140, %v2136
    %v2897 = vpack.c.b16 %v2145, %v2141
    %v2898 = vpack.c.b16 %v2146, %v2142
    %v2899 = vpack.c.b16 %v2147, %v2143
    %v2900 = vpack.c.b16 %v2148, %v2144
    %v2901 = vpack.c.b16 %v2153, %v2149
    %v2902 = vpack.c.b16 %v2154, %v2150
    %v2903 = vpack.c.b16 %v2155, %v2151
    %v2904 = vpack.c.b16 %v2156, %v2152
    %v2905 = vpack.c.b16 %v2161, %v2157
    %v2906 = vpack.c.b16 %v2162, %v2158
    %v2907 = vpack.c.b16 %v2163, %v2159
    %v2908 = vpack.c.b16 %v2164, %v2160
    %v2909 = vpack.c.b16 %v2169, %v2165
    %v2910 = vpack.c.b16 %v2170, %v2166
    %v2911 = vpack.c.b16 %v2171, %v2167
    %v2912 = vpack.c.b16 %v2172, %v2168
    %v2913 = vpack.c.b16 %v2177, %v2173
    %v2914 = vpack.c.b16 %v2178, %v2174
    %v2915 = vpack.c.b16 %v2179, %v2175
    %v2916 = vpack.c.b16 %v2180, %v2176
    %v2917 = vpack.c.b16 %v2185, %v2181
    %v2918 = vpack.c.b16 %v2186, %v2182
    %v2919 = vpack.c.b16 %v2187, %v2183
    %v2920 = vpack.c.b16 %v2188, %v2184
    %v2921 = vpack.c.b16 %v2193, %v2189
    %v2922 = vpack.c.b16 %v2194, %v2190
    %v2923 = vpack.c.b16 %v2195, %v2191
    %v2924 = vpack.c.b16 %v2196, %v2192
    %v2925 = vpack.c.b16 %v2201, %v2197
    %v2926 = vpack.c.b16 %v2202, %v2198
    %v2927 = vpack.c.b16 %v2203, %v2199
    %v2928 = vpack.c.b16 %v2204, %v2200
    %v2929 = vpack.c.b16 %v2209, %v2205
    %v2930 = vpack.c.b16 %v2210, %v2206
    %v2931 = vpack.c.b16 %v2211, %v2207
    %v2932 = vpack.c.b16 %v2212, %v2208
    %v2933 = vpack.c.b16 %v2217, %v2213
    %v2934 = vpack.c.b16 %v2218, %v2214
    %v2935 = vpack.c.b16 %v2219, %v2215
    %v2936 = vpack.c.b16 %v2220, %v2216
    %v2937 = vpack.c.b16 %v2225, %v2221
    %v2938 = vpack.c.b16 %v2226, %v2222
    %v2939 = vpack.c.b16 %v2227, %v2223
    %v2940 = vpack.c.b16 %v2228, %v2224
    %v2941 = vpack.c.b16 %v2233, %v2229
    %v2942 = vpack.c.b16 %v2234, %v2230
    %v2943 = vpack.c.b16 %v2235, %v2231
    %v2944 = vpack.c.b16 %v2236, %v2232
    %v2945 = vpack.c.b16 %v2241, %v2237
    %v2946 = vpack.c.b16 %v2242, %v2238
    %v2947 = vpack.c.b16 %v2243, %v2239
    %v2948 = vpack.c.b16 %v2244, %v2240
    %v2949 = vpack.c.b16 %v2249, %v2245
    %v2950 = vpack.c.b16 %v2250, %v2246
    %v2951 = vpack.c.b16 %v2251, %v2247
    %v2952 = vpack.c.b16 %v2252, %v2248
    %v2953 = vpack.c.b16 %v2257, %v2253
    %v2954 = vpack.c.b16 %v2258, %v2254
    %v2955 = vpack.c.b16 %v2259, %v2255
    %v2956 = vpack.c.b16 %v2260, %v2256
    %v2957 = vpack.c.b16 %v2265, %v2261
    %v2958 = vpack.c.b16 %v2266, %v2262
    %v2959 = vpack.c.b16 %v2267, %v2263
    %v2960 = vpack.c.b16 %v2268, %v2264
    %v2961 = vpack.c.b16 %v2273, %v2269
    %v2962 = vpack.c.b16 %v2274, %v2270
    %v2963 = vpack.c.b16 %v2275, %v2271
    %v2964 = vpack.c.b16 %v2276, %v2272
    %v2965 = vpack.c.b16 %v2281, %v2277
    %v2966 = vpack.c.b16 %v2282, %v2278
    %v2967 = vpack.c.b16 %v2283, %v2279
    %v2968 = vpack.c.b16 %v2284, %v2280
    %v2969 = vpack.c.b16 %v2289, %v2285
    %v2970 = vpack.c.b16 %v2290, %v2286
    %v2971 = vpack.c.b16 %v2291, %v2287
    %v2972 = vpack.c.b16 %v2292, %v2288
    %v2973 = vpack.c.b16 %v2297, %v2293
    %v2974 = vpack.c.b16 %v2298, %v2294
    %v2975 = vpack.c.b16 %v2299, %v2295
    %v2976 = vpack.c.b16 %v2300, %v2296
    %v2977 = vpack.c.b16 %v2305, %v2301
    %v2978 = vpack.c.b16 %v2306, %v2302
    %v2979 = vpack.c.b16 %v2307, %v2303
    %v2980 = vpack.c.b16 %v2308, %v2304
    %v2981 = vpack.c.b16 %v2313, %v2309
    %v2982 = vpack.c.b16 %v2314, %v2310
    %v2983 = vpack.c.b16 %v2315, %v2311
    %v2984 = vpack.c.b16 %v2316, %v2312
    %v2985 = vpack.c.b16 %v2321, %v2317
    %v2986 = vpack.c.b16 %v2322, %v2318
    %v2987 = vpack.c.b16 %v2323, %v2319
    %v2988 = vpack.c.b16 %v2324, %v2320
    %v2989 = vpack.c.b16 %v2329, %v2325
    %v2990 = vpack.c.b16 %v2330, %v2326
    %v2991 = vpack.c.b16 %v2331, %v2327
    %v2992 = vpack.c.b16 %v2332, %v2328
    %v2993 = vpack.c.b16 %v2337, %v2333
    %v2994 = vpack.c.b16 %v2338, %v2334
    %v2995 = vpack.c.b16 %v2339, %v2335
    %v2996 = vpack.c.b16 %v2340, %v2336
    %v2997 = vpack.c.b16 %v2345, %v2341
    %v2998 = vpack.c.b16 %v2346, %v2342
    %v2999 = vpack.c.b16 %v2347, %v2343
    %v3000 = vpack.c.b16 %v2348, %v2344
    %v3001 = vpack.c.b16 %v2353, %v2349
    %v3002 = vpack.c.b16 %v2354, %v2350
    %v3003 = vpack.c.b16 %v2355, %v2351
    %v3004 = vpack.c.b16 %v2356, %v2352
    %v3005 = vpack.c.b16 %v2361, %v2357
    %v3006 = vpack.c.b16 %v2362, %v2358
    %v3007 = vpack.c.b16 %v2363, %v2359
    %v3008 = vpack.c.b16 %v2364, %v2360
    %v3009 = vpack.c.b16 %v2369, %v2365
    %v3010 = vpack.c.b16 %v2370, %v2366
    %v3011 = vpack.c.b16 %v2371, %v2367
    %v3012 = vpack.c.b16 %v2372, %v2368
    %v3013 = vpack.c.b16 %v2377, %v2373
    %v3014 = vpack.c.b16 %v2378, %v2374
    %v3015 = vpack.c.b16 %v2379, %v2375
    %v3016 = vpack.c.b16 %v2380, %v2376
    %v3017 = vpack.c.b16 %v2385, %v2381
    %v3018 = vpack.c.b16 %v2386, %v2382
    %v3019 = vpack.c.b16 %v2387, %v2383
    %v3020 = vpack.c.b16 %v2388, %v2384
    %v3021 = vpack.c.b16 %v2393, %v2389
    %v3022 = vpack.c.b16 %v2394, %v2390
    %v3023 = vpack.c.b16 %v2395, %v2391
    %v3024 = vpack.c.b16 %v2396, %v2392
    %v3025 = vpack.c.b16 %v2401, %v2397
    %v3026 = vpack.c.b16 %v2402, %v2398
    %v3027 = vpack.c.b16 %v2403, %v2399
    %v3028 = vpack.c.b16 %v2404, %v2400
    %v3029 = vpack.c.b16 %v2409, %v2405
    %v3030 = vpack.c.b16 %v2410, %v2406
    %v3031 = vpack.c.b16 %v2411, %v2407
    %v3032 = vpack.c.b16 %v2412, %v2408
    %v3033 = vpack.c.b16 %v2417, %v2413
    %v3034 = vpack.c.b16 %v2418, %v2414
    %v3035 = vpack.c.b16 %v2419, %v2415
    %v3036 = vpack.c.b16 %v2420, %v2416
    %v3037 = vpack.c.b16 %v2425, %v2421
    %v3038 = vpack.c.b16 %v2426, %v2422
    %v3039 = vpack.c.b16 %v2427, %v2423
    %v3040 = vpack.c.b16 %v2428, %v2424
    %v3041 = vpack.c.b16 %v2433, %v2429
    %v3042 = vpack.c.b16 %v2434, %v2430
    %v3043 = vpack.c.b16 %v2435, %v2431
    %v3044 = vpack.c.b16 %v2436, %v2432
    %v3045 = vpack.c.b16 %v2441, %v2437
    %v3046 = vpack.c.b16 %v2442, %v2438
    %v3047 = vpack.c.b16 %v2443, %v2439
    %v3048 = vpack.c.b16 %v2444, %v2440
    %v3049 = vpack.c.b16 %v2449, %v2445
    %v3050 = vpack.c.b16 %v2450, %v2446
    %v3051 = vpack.c.b16 %v2451, %v2447
    %v3052 = vpack.c.b16 %v2452, %v2448
    %v3053 = vpack.c.b16 %v2457, %v2453
    %v3054 = vpack.c.b16 %v2458, %v2454
    %v3055 = vpack.c.b16 %v2459, %v2455
    %v3056 = vpack.c.b16 %v2460, %v2456
    %v3057 = vpack.c.b16 %v2465, %v2461
    %v3058 = vpack.c.b16 %v2466, %v2462
    %v3059 = vpack.c.b16 %v2467, %v2463
    %v3060 = vpack.c.b16 %v2468, %v2464
    %v3061 = vpack.c.b16 %v2473, %v2469
    %v3062 = vpack.c.b16 %v2474, %v2470
    %v3063 = vpack.c.b16 %v2475, %v2471
    %v3064 = vpack.c.b16 %v2476, %v2472
    %vm3653 = vcmask 392192
    %v3655 = vsel %vm3653, %v114, 0
    %3657 = vmatpush.bf16.msra.mxu0 %v2505
    %3658 = vmatpush.bf16.msra.mxu0 %v2501
    %3659 = vmatpush.bf16.msra.mxu0 %v2497
    %3660 = vmatpush.bf16.msra.mxu0 %v2493
    %3661 = vmatpush.bf16.msra.mxu0 %v2489
    %3662 = vmatpush.bf16.msra.mxu0 %v2485
    %3663 = vmatpush.bf16.msra.mxu0 %v2481
    %3664 = vmatpush.bf16.msra.mxu0 %v2477
    %3665 = vmatmul.bf16.gmra.mxu0 %v96
    %v3666 = vpop.f32.mrf.mxu0
    %v3667 = vadd.f32 %v705, %v3666
    %v3668 = vpop.f32.mrf.mxu0
    %v3669 = vadd.f32 %v705, %v3668
    %3670 = vdwg.mxu0
    %3671 = vmatpush.bf16.msra.mxu0 %v2537
    %3672 = vmatpush.bf16.msra.mxu0 %v2533
    %3673 = vmatpush.bf16.msra.mxu0 %v2529
    %3674 = vmatpush.bf16.msra.mxu0 %v2525
    %3675 = vmatpush.bf16.msra.mxu0 %v2521
    %3676 = vmatpush.bf16.msra.mxu0 %v2517
    %3677 = vmatpush.bf16.msra.mxu0 %v2513
    %3678 = vmatpush.bf16.msra.mxu0 %v2509
    %3679 = vmatmul.bf16.gmra.mxu0 %v97
    %v3680 = vpop.f32.mrf.mxu0
    %v3681 = vadd.f32 %v3667, %v3680
    %v3682 = vpop.f32.mrf.mxu0
    %v3683 = vadd.f32 %v3669, %v3682
    %3684 = vdwg.mxu0
    %3685 = vmatpush.bf16.msra.mxu0 %v2569
    %3686 = vmatpush.bf16.msra.mxu0 %v2565
    %3687 = vmatpush.bf16.msra.mxu0 %v2561
    %3688 = vmatpush.bf16.msra.mxu0 %v2557
    %3689 = vmatpush.bf16.msra.mxu0 %v2553
    %3690 = vmatpush.bf16.msra.mxu0 %v2549
    %3691 = vmatpush.bf16.msra.mxu0 %v2545
    %3692 = vmatpush.bf16.msra.mxu0 %v2541
    %3693 = vmatmul.bf16.gmra.mxu0 %v98
    %v3694 = vpop.f32.mrf.mxu0
    %v3695 = vadd.f32 %v3681, %v3694
    %v3696 = vpop.f32.mrf.mxu0
    %v3697 = vadd.f32 %v3683, %v3696
    %3698 = vdwg.mxu0
    %3699 = vmatpush.bf16.msra.mxu0 %v2601
    %3700 = vmatpush.bf16.msra.mxu0 %v2597
    %3701 = vmatpush.bf16.msra.mxu0 %v2593
    %3702 = vmatpush.bf16.msra.mxu0 %v2589
    %3703 = vmatpush.bf16.msra.mxu0 %v2585
    %3704 = vmatpush.bf16.msra.mxu0 %v2581
    %3705 = vmatpush.bf16.msra.mxu0 %v2577
    %3706 = vmatpush.bf16.msra.mxu0 %v2573
    %3707 = vmatmul.bf16.gmra.mxu0 %v99
    %v3708 = vpop.f32.mrf.mxu0
    %v3709 = vadd.f32 %v3695, %v3708
    %v3710 = vpop.f32.mrf.mxu0
    %v3711 = vadd.f32 %v3697, %v3710
    %3712 = vdwg.mxu0
    %3713 = vmatpush.bf16.msra.mxu0 %v2633
    %3714 = vmatpush.bf16.msra.mxu0 %v2629
    %3715 = vmatpush.bf16.msra.mxu0 %v2625
    %3716 = vmatpush.bf16.msra.mxu0 %v2621
    %3717 = vmatpush.bf16.msra.mxu0 %v2617
    %3718 = vmatpush.bf16.msra.mxu0 %v2613
    %3719 = vmatpush.bf16.msra.mxu0 %v2609
    %3720 = vmatpush.bf16.msra.mxu0 %v2605
    %3721 = vmatmul.bf16.gmra.mxu0 %v100
    %v3722 = vpop.f32.mrf.mxu0
    %v3723 = vadd.f32 %v3709, %v3722
    %v3724 = vpop.f32.mrf.mxu0
    %v3725 = vadd.f32 %v3711, %v3724
    %3726 = vdwg.mxu0
    %3727 = vmatpush.bf16.msra.mxu0 %v2665
    %3728 = vmatpush.bf16.msra.mxu0 %v2661
    %3729 = vmatpush.bf16.msra.mxu0 %v2657
    %3730 = vmatpush.bf16.msra.mxu0 %v2653
    %3731 = vmatpush.bf16.msra.mxu0 %v2649
    %3732 = vmatpush.bf16.msra.mxu0 %v2645
    %3733 = vmatpush.bf16.msra.mxu0 %v2641
    %3734 = vmatpush.bf16.msra.mxu0 %v2637
    %3735 = vmatmul.bf16.gmra.mxu0 %v101
    %v3736 = vpop.f32.mrf.mxu0
    %v3737 = vadd.f32 %v3723, %v3736
    %v3738 = vpop.f32.mrf.mxu0
    %v3739 = vadd.f32 %v3725, %v3738
    %3740 = vdwg.mxu0
    %3741 = vmatpush.bf16.msra.mxu0 %v2697
    %3742 = vmatpush.bf16.msra.mxu0 %v2693
    %3743 = vmatpush.bf16.msra.mxu0 %v2689
    %3744 = vmatpush.bf16.msra.mxu0 %v2685
    %3745 = vmatpush.bf16.msra.mxu0 %v2681
    %3746 = vmatpush.bf16.msra.mxu0 %v2677
    %3747 = vmatpush.bf16.msra.mxu0 %v2673
    %3748 = vmatpush.bf16.msra.mxu0 %v2669
    %3749 = vmatmul.bf16.gmra.mxu0 %v102
    %v3750 = vpop.f32.mrf.mxu0
    %v3751 = vadd.f32 %v3737, %v3750
    %v3752 = vpop.f32.mrf.mxu0
    %v3753 = vadd.f32 %v3739, %v3752
    %3754 = vdwg.mxu0
    %3755 = vmatpush.bf16.msra.mxu0 %v2729
    %3756 = vmatpush.bf16.msra.mxu0 %v2725
    %3757 = vmatpush.bf16.msra.mxu0 %v2721
    %3758 = vmatpush.bf16.msra.mxu0 %v2717
    %3759 = vmatpush.bf16.msra.mxu0 %v2713
    %3760 = vmatpush.bf16.msra.mxu0 %v2709
    %3761 = vmatpush.bf16.msra.mxu0 %v2705
    %3762 = vmatpush.bf16.msra.mxu0 %v2701
    %3763 = vmatmul.bf16.gmra.mxu0 %v103
    %v3764 = vpop.f32.mrf.mxu0
    %v3765 = vadd.f32 %v3751, %v3764
    %v3766 = vpop.f32.mrf.mxu0
    %v3767 = vadd.f32 %v3753, %v3766
    %3768 = vdwg.mxu0
    %3769 = vmatpush.bf16.msra.mxu0 %v2761
    %3770 = vmatpush.bf16.msra.mxu0 %v2757
    %3771 = vmatpush.bf16.msra.mxu0 %v2753
    %3772 = vmatpush.bf16.msra.mxu0 %v2749
    %3773 = vmatpush.bf16.msra.mxu0 %v2745
    %3774 = vmatpush.bf16.msra.mxu0 %v2741
    %3775 = vmatpush.bf16.msra.mxu0 %v2737
    %3776 = vmatpush.bf16.msra.mxu0 %v2733
    %3777 = vmatmul.bf16.gmra.mxu0 %v104
    %v3778 = vpop.f32.mrf.mxu0
    %v3779 = vadd.f32 %v3765, %v3778
    %v3780 = vpop.f32.mrf.mxu0
    %v3781 = vadd.f32 %v3767, %v3780
    %3782 = vdwg.mxu0
    %3783 = vmatpush.bf16.msra.mxu0 %v2793
    %3784 = vmatpush.bf16.msra.mxu0 %v2789
    %3785 = vmatpush.bf16.msra.mxu0 %v2785
    %3786 = vmatpush.bf16.msra.mxu0 %v2781
    %3787 = vmatpush.bf16.msra.mxu0 %v2777
    %3788 = vmatpush.bf16.msra.mxu0 %v2773
    %3789 = vmatpush.bf16.msra.mxu0 %v2769
    %3790 = vmatpush.bf16.msra.mxu0 %v2765
    %3791 = vmatmul.bf16.gmra.mxu0 %v105
    %v3792 = vpop.f32.mrf.mxu0
    %v3793 = vadd.f32 %v3779, %v3792
    %v3794 = vpop.f32.mrf.mxu0
    %v3795 = vadd.f32 %v3781, %v3794
    %3796 = vdwg.mxu0
    %3797 = vmatpush.bf16.msra.mxu0 %v2825
    %3798 = vmatpush.bf16.msra.mxu0 %v2821
    %3799 = vmatpush.bf16.msra.mxu0 %v2817
    %3800 = vmatpush.bf16.msra.mxu0 %v2813
    %3801 = vmatpush.bf16.msra.mxu0 %v2809
    %3802 = vmatpush.bf16.msra.mxu0 %v2805
    %3803 = vmatpush.bf16.msra.mxu0 %v2801
    %3804 = vmatpush.bf16.msra.mxu0 %v2797
    %3805 = vmatmul.bf16.gmra.mxu0 %v106
    %v3806 = vpop.f32.mrf.mxu0
    %v3807 = vadd.f32 %v3793, %v3806
    %v3808 = vpop.f32.mrf.mxu0
    %v3809 = vadd.f32 %v3795, %v3808
    %3810 = vdwg.mxu0
    %3811 = vmatpush.bf16.msra.mxu0 %v2857
    %3812 = vmatpush.bf16.msra.mxu0 %v2853
    %3813 = vmatpush.bf16.msra.mxu0 %v2849
    %3814 = vmatpush.bf16.msra.mxu0 %v2845
    %3815 = vmatpush.bf16.msra.mxu0 %v2841
    %3816 = vmatpush.bf16.msra.mxu0 %v2837
    %3817 = vmatpush.bf16.msra.mxu0 %v2833
    %3818 = vmatpush.bf16.msra.mxu0 %v2829
    %3819 = vmatmul.bf16.gmra.mxu0 %v107
    %v3820 = vpop.f32.mrf.mxu0
    %v3821 = vadd.f32 %v3807, %v3820
    %v3822 = vpop.f32.mrf.mxu0
    %v3823 = vadd.f32 %v3809, %v3822
    %3824 = vdwg.mxu0
    %3825 = vmatpush.bf16.msra.mxu0 %v2889
    %3826 = vmatpush.bf16.msra.mxu0 %v2885
    %3827 = vmatpush.bf16.msra.mxu0 %v2881
    %3828 = vmatpush.bf16.msra.mxu0 %v2877
    %3829 = vmatpush.bf16.msra.mxu0 %v2873
    %3830 = vmatpush.bf16.msra.mxu0 %v2869
    %3831 = vmatpush.bf16.msra.mxu0 %v2865
    %3832 = vmatpush.bf16.msra.mxu0 %v2861
    %3833 = vmatmul.bf16.gmra.mxu0 %v108
    %v3834 = vpop.f32.mrf.mxu0
    %v3835 = vadd.f32 %v3821, %v3834
    %v3836 = vpop.f32.mrf.mxu0
    %v3837 = vadd.f32 %v3823, %v3836
    %3838 = vdwg.mxu0
    %3839 = vmatpush.bf16.msra.mxu0 %v2921
    %3840 = vmatpush.bf16.msra.mxu0 %v2917
    %3841 = vmatpush.bf16.msra.mxu0 %v2913
    %3842 = vmatpush.bf16.msra.mxu0 %v2909
    %3843 = vmatpush.bf16.msra.mxu0 %v2905
    %3844 = vmatpush.bf16.msra.mxu0 %v2901
    %3845 = vmatpush.bf16.msra.mxu0 %v2897
    %3846 = vmatpush.bf16.msra.mxu0 %v2893
    %3847 = vmatmul.bf16.gmra.mxu0 %v109
    %v3848 = vpop.f32.mrf.mxu0
    %v3849 = vadd.f32 %v3835, %v3848
    %v3850 = vpop.f32.mrf.mxu0
    %v3851 = vadd.f32 %v3837, %v3850
    %3852 = vdwg.mxu0
    %3853 = vmatpush.bf16.msra.mxu0 %v2953
    %3854 = vmatpush.bf16.msra.mxu0 %v2949
    %3855 = vmatpush.bf16.msra.mxu0 %v2945
    %3856 = vmatpush.bf16.msra.mxu0 %v2941
    %3857 = vmatpush.bf16.msra.mxu0 %v2937
    %3858 = vmatpush.bf16.msra.mxu0 %v2933
    %3859 = vmatpush.bf16.msra.mxu0 %v2929
    %3860 = vmatpush.bf16.msra.mxu0 %v2925
    %3861 = vmatmul.bf16.gmra.mxu0 %v110
    %v3862 = vpop.f32.mrf.mxu0
    %v3863 = vadd.f32 %v3849, %v3862
    %v3864 = vpop.f32.mrf.mxu0
    %v3865 = vadd.f32 %v3851, %v3864
    %3866 = vdwg.mxu0
    %3867 = vmatpush.bf16.msra.mxu0 %v2985
    %3868 = vmatpush.bf16.msra.mxu0 %v2981
    %3869 = vmatpush.bf16.msra.mxu0 %v2977
    %3870 = vmatpush.bf16.msra.mxu0 %v2973
    %3871 = vmatpush.bf16.msra.mxu0 %v2969
    %3872 = vmatpush.bf16.msra.mxu0 %v2965
    %3873 = vmatpush.bf16.msra.mxu0 %v2961
    %3874 = vmatpush.bf16.msra.mxu0 %v2957
    %3875 = vmatmul.bf16.gmra.mxu0 %v111
    %v3876 = vpop.f32.mrf.mxu0
    %v3877 = vadd.f32 %v3863, %v3876
    %v3878 = vpop.f32.mrf.mxu0
    %v3879 = vadd.f32 %v3865, %v3878
    %3880 = vdwg.mxu0
    %3881 = vmatpush.bf16.msra.mxu0 %v3017
    %3882 = vmatpush.bf16.msra.mxu0 %v3013
    %3883 = vmatpush.bf16.msra.mxu0 %v3009
    %3884 = vmatpush.bf16.msra.mxu0 %v3005
    %3885 = vmatpush.bf16.msra.mxu0 %v3001
    %3886 = vmatpush.bf16.msra.mxu0 %v2997
    %3887 = vmatpush.bf16.msra.mxu0 %v2993
    %3888 = vmatpush.bf16.msra.mxu0 %v2989
    %3889 = vmatmul.bf16.gmra.mxu0 %v112
    %v3890 = vpop.f32.mrf.mxu0
    %v3891 = vadd.f32 %v3877, %v3890
    %v3892 = vpop.f32.mrf.mxu0
    %v3893 = vadd.f32 %v3879, %v3892
    %3894 = vdwg.mxu0
    %3895 = vmatpush.bf16.msra.mxu0 %v3049
    %3896 = vmatpush.bf16.msra.mxu0 %v3045
    %3897 = vmatpush.bf16.msra.mxu0 %v3041
    %3898 = vmatpush.bf16.msra.mxu0 %v3037
    %3899 = vmatpush.bf16.msra.mxu0 %v3033
    %3900 = vmatpush.bf16.msra.mxu0 %v3029
    %3901 = vmatpush.bf16.msra.mxu0 %v3025
    %3902 = vmatpush.bf16.msra.mxu0 %v3021
    %3903 = vmatmul.bf16.gmra.mxu0 %v113
    %v3904 = vpop.f32.mrf.mxu0
    %v3905 = vadd.f32 %v3891, %v3904
    %v3906 = vpop.f32.mrf.mxu0
    %v3907 = vadd.f32 %v3893, %v3906
    %3908 = vdwg.mxu0
    %3909 = vmatpush.bf16.msra.mxu0 0
    %3910 = vmatpush.bf16.msra.mxu0 0
    %3911 = vmatpush.bf16.msra.mxu0 0
    %3912 = vmatpush.bf16.msra.mxu0 0
    %3913 = vmatpush.bf16.msra.mxu0 0
    %3914 = vmatpush.bf16.msra.mxu0 %v3061
    %3915 = vmatpush.bf16.msra.mxu0 %v3057
    %3916 = vmatpush.bf16.msra.mxu0 %v3053
    %3917 = vmatmul.bf16.gmra.mxu0 %v3655
    %v3918 = vpop.f32.mrf.mxu0
    %v3919 = vadd.f32 %v3905, %v3918
    %v3920 = vpop.f32.mrf.mxu0
    %v3921 = vadd.f32 %v3907, %v3920
    %3922 = vdwg.mxu0
    %3923 = vmatpush.bf16.msra.mxu0 %v2506
    %3924 = vmatpush.bf16.msra.mxu0 %v2502
    %3925 = vmatpush.bf16.msra.mxu0 %v2498
    %3926 = vmatpush.bf16.msra.mxu0 %v2494
    %3927 = vmatpush.bf16.msra.mxu0 %v2490
    %3928 = vmatpush.bf16.msra.mxu0 %v2486
    %3929 = vmatpush.bf16.msra.mxu0 %v2482
    %3930 = vmatpush.bf16.msra.mxu0 %v2478
    %3931 = vmatmul.bf16.gmra.mxu0 %v96
    %v3932 = vpop.f32.mrf.mxu0
    %v3933 = vadd.f32 %v706, %v3932
    %v3934 = vpop.f32.mrf.mxu0
    %v3935 = vadd.f32 %v706, %v3934
    %3936 = vdwg.mxu0
    %3937 = vmatpush.bf16.msra.mxu0 %v2538
    %3938 = vmatpush.bf16.msra.mxu0 %v2534
    %3939 = vmatpush.bf16.msra.mxu0 %v2530
    %3940 = vmatpush.bf16.msra.mxu0 %v2526
    %3941 = vmatpush.bf16.msra.mxu0 %v2522
    %3942 = vmatpush.bf16.msra.mxu0 %v2518
    %3943 = vmatpush.bf16.msra.mxu0 %v2514
    %3944 = vmatpush.bf16.msra.mxu0 %v2510
    %3945 = vmatmul.bf16.gmra.mxu0 %v97
    %v3946 = vpop.f32.mrf.mxu0
    %v3947 = vadd.f32 %v3933, %v3946
    %v3948 = vpop.f32.mrf.mxu0
    %v3949 = vadd.f32 %v3935, %v3948
    %3950 = vdwg.mxu0
    %3951 = vmatpush.bf16.msra.mxu0 %v2570
    %3952 = vmatpush.bf16.msra.mxu0 %v2566
    %3953 = vmatpush.bf16.msra.mxu0 %v2562
    %3954 = vmatpush.bf16.msra.mxu0 %v2558
    %3955 = vmatpush.bf16.msra.mxu0 %v2554
    %3956 = vmatpush.bf16.msra.mxu0 %v2550
    %3957 = vmatpush.bf16.msra.mxu0 %v2546
    %3958 = vmatpush.bf16.msra.mxu0 %v2542
    %3959 = vmatmul.bf16.gmra.mxu0 %v98
    %v3960 = vpop.f32.mrf.mxu0
    %v3961 = vadd.f32 %v3947, %v3960
    %v3962 = vpop.f32.mrf.mxu0
    %v3963 = vadd.f32 %v3949, %v3962
    %3964 = vdwg.mxu0
    %3965 = vmatpush.bf16.msra.mxu0 %v2602
    %3966 = vmatpush.bf16.msra.mxu0 %v2598
    %3967 = vmatpush.bf16.msra.mxu0 %v2594
    %3968 = vmatpush.bf16.msra.mxu0 %v2590
    %3969 = vmatpush.bf16.msra.mxu0 %v2586
    %3970 = vmatpush.bf16.msra.mxu0 %v2582
    %3971 = vmatpush.bf16.msra.mxu0 %v2578
    %3972 = vmatpush.bf16.msra.mxu0 %v2574
    %3973 = vmatmul.bf16.gmra.mxu0 %v99
    %v3974 = vpop.f32.mrf.mxu0
    %v3975 = vadd.f32 %v3961, %v3974
    %v3976 = vpop.f32.mrf.mxu0
    %v3977 = vadd.f32 %v3963, %v3976
    %3978 = vdwg.mxu0
    %3979 = vmatpush.bf16.msra.mxu0 %v2634
    %3980 = vmatpush.bf16.msra.mxu0 %v2630
    %3981 = vmatpush.bf16.msra.mxu0 %v2626
    %3982 = vmatpush.bf16.msra.mxu0 %v2622
    %3983 = vmatpush.bf16.msra.mxu0 %v2618
    %3984 = vmatpush.bf16.msra.mxu0 %v2614
    %3985 = vmatpush.bf16.msra.mxu0 %v2610
    %3986 = vmatpush.bf16.msra.mxu0 %v2606
    %3987 = vmatmul.bf16.gmra.mxu0 %v100
    %v3988 = vpop.f32.mrf.mxu0
    %v3989 = vadd.f32 %v3975, %v3988
    %v3990 = vpop.f32.mrf.mxu0
    %v3991 = vadd.f32 %v3977, %v3990
    %3992 = vdwg.mxu0
    %3993 = vmatpush.bf16.msra.mxu0 %v2666
    %3994 = vmatpush.bf16.msra.mxu0 %v2662
    %3995 = vmatpush.bf16.msra.mxu0 %v2658
    %3996 = vmatpush.bf16.msra.mxu0 %v2654
    %3997 = vmatpush.bf16.msra.mxu0 %v2650
    %3998 = vmatpush.bf16.msra.mxu0 %v2646
    %3999 = vmatpush.bf16.msra.mxu0 %v2642
    %4000 = vmatpush.bf16.msra.mxu0 %v2638
    %4001 = vmatmul.bf16.gmra.mxu0 %v101
    %v4002 = vpop.f32.mrf.mxu0
    %v4003 = vadd.f32 %v3989, %v4002
    %v4004 = vpop.f32.mrf.mxu0
    %v4005 = vadd.f32 %v3991, %v4004
    %4006 = vdwg.mxu0
    %4007 = vmatpush.bf16.msra.mxu0 %v2698
    %4008 = vmatpush.bf16.msra.mxu0 %v2694
    %4009 = vmatpush.bf16.msra.mxu0 %v2690
    %4010 = vmatpush.bf16.msra.mxu0 %v2686
    %4011 = vmatpush.bf16.msra.mxu0 %v2682
    %4012 = vmatpush.bf16.msra.mxu0 %v2678
    %4013 = vmatpush.bf16.msra.mxu0 %v2674
    %4014 = vmatpush.bf16.msra.mxu0 %v2670
    %4015 = vmatmul.bf16.gmra.mxu0 %v102
    %v4016 = vpop.f32.mrf.mxu0
    %v4017 = vadd.f32 %v4003, %v4016
    %v4018 = vpop.f32.mrf.mxu0
    %v4019 = vadd.f32 %v4005, %v4018
    %4020 = vdwg.mxu0
    %4021 = vmatpush.bf16.msra.mxu0 %v2730
    %4022 = vmatpush.bf16.msra.mxu0 %v2726
    %4023 = vmatpush.bf16.msra.mxu0 %v2722
    %4024 = vmatpush.bf16.msra.mxu0 %v2718
    %4025 = vmatpush.bf16.msra.mxu0 %v2714
    %4026 = vmatpush.bf16.msra.mxu0 %v2710
    %4027 = vmatpush.bf16.msra.mxu0 %v2706
    %4028 = vmatpush.bf16.msra.mxu0 %v2702
    %4029 = vmatmul.bf16.gmra.mxu0 %v103
    %v4030 = vpop.f32.mrf.mxu0
    %v4031 = vadd.f32 %v4017, %v4030
    %v4032 = vpop.f32.mrf.mxu0
    %v4033 = vadd.f32 %v4019, %v4032
    %4034 = vdwg.mxu0
    %4035 = vmatpush.bf16.msra.mxu0 %v2762
    %4036 = vmatpush.bf16.msra.mxu0 %v2758
    %4037 = vmatpush.bf16.msra.mxu0 %v2754
    %4038 = vmatpush.bf16.msra.mxu0 %v2750
    %4039 = vmatpush.bf16.msra.mxu0 %v2746
    %4040 = vmatpush.bf16.msra.mxu0 %v2742
    %4041 = vmatpush.bf16.msra.mxu0 %v2738
    %4042 = vmatpush.bf16.msra.mxu0 %v2734
    %4043 = vmatmul.bf16.gmra.mxu0 %v104
    %v4044 = vpop.f32.mrf.mxu0
    %v4045 = vadd.f32 %v4031, %v4044
    %v4046 = vpop.f32.mrf.mxu0
    %v4047 = vadd.f32 %v4033, %v4046
    %4048 = vdwg.mxu0
    %4049 = vmatpush.bf16.msra.mxu0 %v2794
    %4050 = vmatpush.bf16.msra.mxu0 %v2790
    %4051 = vmatpush.bf16.msra.mxu0 %v2786
    %4052 = vmatpush.bf16.msra.mxu0 %v2782
    %4053 = vmatpush.bf16.msra.mxu0 %v2778
    %4054 = vmatpush.bf16.msra.mxu0 %v2774
    %4055 = vmatpush.bf16.msra.mxu0 %v2770
    %4056 = vmatpush.bf16.msra.mxu0 %v2766
    %4057 = vmatmul.bf16.gmra.mxu0 %v105
    %v4058 = vpop.f32.mrf.mxu0
    %v4059 = vadd.f32 %v4045, %v4058
    %v4060 = vpop.f32.mrf.mxu0
    %v4061 = vadd.f32 %v4047, %v4060
    %4062 = vdwg.mxu0
    %4063 = vmatpush.bf16.msra.mxu0 %v2826
    %4064 = vmatpush.bf16.msra.mxu0 %v2822
    %4065 = vmatpush.bf16.msra.mxu0 %v2818
    %4066 = vmatpush.bf16.msra.mxu0 %v2814
    %4067 = vmatpush.bf16.msra.mxu0 %v2810
    %4068 = vmatpush.bf16.msra.mxu0 %v2806
    %4069 = vmatpush.bf16.msra.mxu0 %v2802
    %4070 = vmatpush.bf16.msra.mxu0 %v2798
    %4071 = vmatmul.bf16.gmra.mxu0 %v106
    %v4072 = vpop.f32.mrf.mxu0
    %v4073 = vadd.f32 %v4059, %v4072
    %v4074 = vpop.f32.mrf.mxu0
    %v4075 = vadd.f32 %v4061, %v4074
    %4076 = vdwg.mxu0
    %4077 = vmatpush.bf16.msra.mxu0 %v2858
    %4078 = vmatpush.bf16.msra.mxu0 %v2854
    %4079 = vmatpush.bf16.msra.mxu0 %v2850
    %4080 = vmatpush.bf16.msra.mxu0 %v2846
    %4081 = vmatpush.bf16.msra.mxu0 %v2842
    %4082 = vmatpush.bf16.msra.mxu0 %v2838
    %4083 = vmatpush.bf16.msra.mxu0 %v2834
    %4084 = vmatpush.bf16.msra.mxu0 %v2830
    %4085 = vmatmul.bf16.gmra.mxu0 %v107
    %v4086 = vpop.f32.mrf.mxu0
    %v4087 = vadd.f32 %v4073, %v4086
    %v4088 = vpop.f32.mrf.mxu0
    %v4089 = vadd.f32 %v4075, %v4088
    %4090 = vdwg.mxu0
    %4091 = vmatpush.bf16.msra.mxu0 %v2890
    %4092 = vmatpush.bf16.msra.mxu0 %v2886
    %4093 = vmatpush.bf16.msra.mxu0 %v2882
    %4094 = vmatpush.bf16.msra.mxu0 %v2878
    %4095 = vmatpush.bf16.msra.mxu0 %v2874
    %4096 = vmatpush.bf16.msra.mxu0 %v2870
    %4097 = vmatpush.bf16.msra.mxu0 %v2866
    %4098 = vmatpush.bf16.msra.mxu0 %v2862
    %4099 = vmatmul.bf16.gmra.mxu0 %v108
    %v4100 = vpop.f32.mrf.mxu0
    %v4101 = vadd.f32 %v4087, %v4100
    %v4102 = vpop.f32.mrf.mxu0
    %v4103 = vadd.f32 %v4089, %v4102
    %4104 = vdwg.mxu0
    %4105 = vmatpush.bf16.msra.mxu0 %v2922
    %4106 = vmatpush.bf16.msra.mxu0 %v2918
    %4107 = vmatpush.bf16.msra.mxu0 %v2914
    %4108 = vmatpush.bf16.msra.mxu0 %v2910
    %4109 = vmatpush.bf16.msra.mxu0 %v2906
    %4110 = vmatpush.bf16.msra.mxu0 %v2902
    %4111 = vmatpush.bf16.msra.mxu0 %v2898
    %4112 = vmatpush.bf16.msra.mxu0 %v2894
    %4113 = vmatmul.bf16.gmra.mxu0 %v109
    %v4114 = vpop.f32.mrf.mxu0
    %v4115 = vadd.f32 %v4101, %v4114
    %v4116 = vpop.f32.mrf.mxu0
    %v4117 = vadd.f32 %v4103, %v4116
    %4118 = vdwg.mxu0
    %4119 = vmatpush.bf16.msra.mxu0 %v2954
    %4120 = vmatpush.bf16.msra.mxu0 %v2950
    %4121 = vmatpush.bf16.msra.mxu0 %v2946
    %4122 = vmatpush.bf16.msra.mxu0 %v2942
    %4123 = vmatpush.bf16.msra.mxu0 %v2938
    %4124 = vmatpush.bf16.msra.mxu0 %v2934
    %4125 = vmatpush.bf16.msra.mxu0 %v2930
    %4126 = vmatpush.bf16.msra.mxu0 %v2926
    %4127 = vmatmul.bf16.gmra.mxu0 %v110
    %v4128 = vpop.f32.mrf.mxu0
    %v4129 = vadd.f32 %v4115, %v4128
    %v4130 = vpop.f32.mrf.mxu0
    %v4131 = vadd.f32 %v4117, %v4130
    %4132 = vdwg.mxu0
    %4133 = vmatpush.bf16.msra.mxu0 %v2986
    %4134 = vmatpush.bf16.msra.mxu0 %v2982
    %4135 = vmatpush.bf16.msra.mxu0 %v2978
    %4136 = vmatpush.bf16.msra.mxu0 %v2974
    %4137 = vmatpush.bf16.msra.mxu0 %v2970
    %4138 = vmatpush.bf16.msra.mxu0 %v2966
    %4139 = vmatpush.bf16.msra.mxu0 %v2962
    %4140 = vmatpush.bf16.msra.mxu0 %v2958
    %4141 = vmatmul.bf16.gmra.mxu0 %v111
    %v4142 = vpop.f32.mrf.mxu0
    %v4143 = vadd.f32 %v4129, %v4142
    %v4144 = vpop.f32.mrf.mxu0
    %v4145 = vadd.f32 %v4131, %v4144
    %4146 = vdwg.mxu0
    %4147 = vmatpush.bf16.msra.mxu0 %v3018
    %4148 = vmatpush.bf16.msra.mxu0 %v3014
    %4149 = vmatpush.bf16.msra.mxu0 %v3010
    %4150 = vmatpush.bf16.msra.mxu0 %v3006
    %4151 = vmatpush.bf16.msra.mxu0 %v3002
    %4152 = vmatpush.bf16.msra.mxu0 %v2998
    %4153 = vmatpush.bf16.msra.mxu0 %v2994
    %4154 = vmatpush.bf16.msra.mxu0 %v2990
    %4155 = vmatmul.bf16.gmra.mxu0 %v112
    %v4156 = vpop.f32.mrf.mxu0
    %v4157 = vadd.f32 %v4143, %v4156
    %v4158 = vpop.f32.mrf.mxu0
    %v4159 = vadd.f32 %v4145, %v4158
    %4160 = vdwg.mxu0
    %4161 = vmatpush.bf16.msra.mxu0 %v3050
    %4162 = vmatpush.bf16.msra.mxu0 %v3046
    %4163 = vmatpush.bf16.msra.mxu0 %v3042
    %4164 = vmatpush.bf16.msra.mxu0 %v3038
    %4165 = vmatpush.bf16.msra.mxu0 %v3034
    %4166 = vmatpush.bf16.msra.mxu0 %v3030
    %4167 = vmatpush.bf16.msra.mxu0 %v3026
    %4168 = vmatpush.bf16.msra.mxu0 %v3022
    %4169 = vmatmul.bf16.gmra.mxu0 %v113
    %v4170 = vpop.f32.mrf.mxu0
    %v4171 = vadd.f32 %v4157, %v4170
    %v4172 = vpop.f32.mrf.mxu0
    %v4173 = vadd.f32 %v4159, %v4172
    %4174 = vdwg.mxu0
    %4175 = vmatpush.bf16.msra.mxu0 0
    %4176 = vmatpush.bf16.msra.mxu0 0
    %4177 = vmatpush.bf16.msra.mxu0 0
    %4178 = vmatpush.bf16.msra.mxu0 0
    %4179 = vmatpush.bf16.msra.mxu0 0
    %4180 = vmatpush.bf16.msra.mxu0 %v3062
    %4181 = vmatpush.bf16.msra.mxu0 %v3058
    %4182 = vmatpush.bf16.msra.mxu0 %v3054
    %4183 = vmatmul.bf16.gmra.mxu0 %v3655
    %v4184 = vpop.f32.mrf.mxu0
    %v4185 = vadd.f32 %v4171, %v4184
    %v4186 = vpop.f32.mrf.mxu0
    %v4187 = vadd.f32 %v4173, %v4186
    %4188 = vdwg.mxu0
    %4189 = vmatpush.bf16.msra.mxu0 %v2507
    %4190 = vmatpush.bf16.msra.mxu0 %v2503
    %4191 = vmatpush.bf16.msra.mxu0 %v2499
    %4192 = vmatpush.bf16.msra.mxu0 %v2495
    %4193 = vmatpush.bf16.msra.mxu0 %v2491
    %4194 = vmatpush.bf16.msra.mxu0 %v2487
    %4195 = vmatpush.bf16.msra.mxu0 %v2483
    %4196 = vmatpush.bf16.msra.mxu0 %v2479
    %4197 = vmatmul.bf16.gmra.mxu0 %v96
    %v4198 = vpop.f32.mrf.mxu0
    %v4199 = vadd.f32 %v707, %v4198
    %v4200 = vpop.f32.mrf.mxu0
    %v4201 = vadd.f32 %v707, %v4200
    %4202 = vdwg.mxu0
    %4203 = vmatpush.bf16.msra.mxu0 %v2539
    %4204 = vmatpush.bf16.msra.mxu0 %v2535
    %4205 = vmatpush.bf16.msra.mxu0 %v2531
    %4206 = vmatpush.bf16.msra.mxu0 %v2527
    %4207 = vmatpush.bf16.msra.mxu0 %v2523
    %4208 = vmatpush.bf16.msra.mxu0 %v2519
    %4209 = vmatpush.bf16.msra.mxu0 %v2515
    %4210 = vmatpush.bf16.msra.mxu0 %v2511
    %4211 = vmatmul.bf16.gmra.mxu0 %v97
    %v4212 = vpop.f32.mrf.mxu0
    %v4213 = vadd.f32 %v4199, %v4212
    %v4214 = vpop.f32.mrf.mxu0
    %v4215 = vadd.f32 %v4201, %v4214
    %4216 = vdwg.mxu0
    %4217 = vmatpush.bf16.msra.mxu0 %v2571
    %4218 = vmatpush.bf16.msra.mxu0 %v2567
    %4219 = vmatpush.bf16.msra.mxu0 %v2563
    %4220 = vmatpush.bf16.msra.mxu0 %v2559
    %4221 = vmatpush.bf16.msra.mxu0 %v2555
    %4222 = vmatpush.bf16.msra.mxu0 %v2551
    %4223 = vmatpush.bf16.msra.mxu0 %v2547
    %4224 = vmatpush.bf16.msra.mxu0 %v2543
    %4225 = vmatmul.bf16.gmra.mxu0 %v98
    %v4226 = vpop.f32.mrf.mxu0
    %v4227 = vadd.f32 %v4213, %v4226
    %v4228 = vpop.f32.mrf.mxu0
    %v4229 = vadd.f32 %v4215, %v4228
    %4230 = vdwg.mxu0
    %4231 = vmatpush.bf16.msra.mxu0 %v2603
    %4232 = vmatpush.bf16.msra.mxu0 %v2599
    %4233 = vmatpush.bf16.msra.mxu0 %v2595
    %4234 = vmatpush.bf16.msra.mxu0 %v2591
    %4235 = vmatpush.bf16.msra.mxu0 %v2587
    %4236 = vmatpush.bf16.msra.mxu0 %v2583
    %4237 = vmatpush.bf16.msra.mxu0 %v2579
    %4238 = vmatpush.bf16.msra.mxu0 %v2575
    %4239 = vmatmul.bf16.gmra.mxu0 %v99
    %v4240 = vpop.f32.mrf.mxu0
    %v4241 = vadd.f32 %v4227, %v4240
    %v4242 = vpop.f32.mrf.mxu0
    %v4243 = vadd.f32 %v4229, %v4242
    %4244 = vdwg.mxu0
    %4245 = vmatpush.bf16.msra.mxu0 %v2635
    %4246 = vmatpush.bf16.msra.mxu0 %v2631
    %4247 = vmatpush.bf16.msra.mxu0 %v2627
    %4248 = vmatpush.bf16.msra.mxu0 %v2623
    %4249 = vmatpush.bf16.msra.mxu0 %v2619
    %4250 = vmatpush.bf16.msra.mxu0 %v2615
    %4251 = vmatpush.bf16.msra.mxu0 %v2611
    %4252 = vmatpush.bf16.msra.mxu0 %v2607
    %4253 = vmatmul.bf16.gmra.mxu0 %v100
    %v4254 = vpop.f32.mrf.mxu0
    %v4255 = vadd.f32 %v4241, %v4254
    %v4256 = vpop.f32.mrf.mxu0
    %v4257 = vadd.f32 %v4243, %v4256
    %4258 = vdwg.mxu0
    %4259 = vmatpush.bf16.msra.mxu0 %v2667
    %4260 = vmatpush.bf16.msra.mxu0 %v2663
    %4261 = vmatpush.bf16.msra.mxu0 %v2659
    %4262 = vmatpush.bf16.msra.mxu0 %v2655
    %4263 = vmatpush.bf16.msra.mxu0 %v2651
    %4264 = vmatpush.bf16.msra.mxu0 %v2647
    %4265 = vmatpush.bf16.msra.mxu0 %v2643
    %4266 = vmatpush.bf16.msra.mxu0 %v2639
    %4267 = vmatmul.bf16.gmra.mxu0 %v101
    %v4268 = vpop.f32.mrf.mxu0
    %v4269 = vadd.f32 %v4255, %v4268
    %v4270 = vpop.f32.mrf.mxu0
    %v4271 = vadd.f32 %v4257, %v4270
    %4272 = vdwg.mxu0
    %4273 = vmatpush.bf16.msra.mxu0 %v2699
    %4274 = vmatpush.bf16.msra.mxu0 %v2695
    %4275 = vmatpush.bf16.msra.mxu0 %v2691
    %4276 = vmatpush.bf16.msra.mxu0 %v2687
    %4277 = vmatpush.bf16.msra.mxu0 %v2683
    %4278 = vmatpush.bf16.msra.mxu0 %v2679
    %4279 = vmatpush.bf16.msra.mxu0 %v2675
    %4280 = vmatpush.bf16.msra.mxu0 %v2671
    %4281 = vmatmul.bf16.gmra.mxu0 %v102
    %v4282 = vpop.f32.mrf.mxu0
    %v4283 = vadd.f32 %v4269, %v4282
    %v4284 = vpop.f32.mrf.mxu0
    %v4285 = vadd.f32 %v4271, %v4284
    %4286 = vdwg.mxu0
    %4287 = vmatpush.bf16.msra.mxu0 %v2731
    %4288 = vmatpush.bf16.msra.mxu0 %v2727
    %4289 = vmatpush.bf16.msra.mxu0 %v2723
    %4290 = vmatpush.bf16.msra.mxu0 %v2719
    %4291 = vmatpush.bf16.msra.mxu0 %v2715
    %4292 = vmatpush.bf16.msra.mxu0 %v2711
    %4293 = vmatpush.bf16.msra.mxu0 %v2707
    %4294 = vmatpush.bf16.msra.mxu0 %v2703
    %4295 = vmatmul.bf16.gmra.mxu0 %v103
    %v4296 = vpop.f32.mrf.mxu0
    %v4297 = vadd.f32 %v4283, %v4296
    %v4298 = vpop.f32.mrf.mxu0
    %v4299 = vadd.f32 %v4285, %v4298
    %4300 = vdwg.mxu0
    %4301 = vmatpush.bf16.msra.mxu0 %v2763
    %4302 = vmatpush.bf16.msra.mxu0 %v2759
    %4303 = vmatpush.bf16.msra.mxu0 %v2755
    %4304 = vmatpush.bf16.msra.mxu0 %v2751
    %4305 = vmatpush.bf16.msra.mxu0 %v2747
    %4306 = vmatpush.bf16.msra.mxu0 %v2743
    %4307 = vmatpush.bf16.msra.mxu0 %v2739
    %4308 = vmatpush.bf16.msra.mxu0 %v2735
    %4309 = vmatmul.bf16.gmra.mxu0 %v104
    %v4310 = vpop.f32.mrf.mxu0
    %v4311 = vadd.f32 %v4297, %v4310
    %v4312 = vpop.f32.mrf.mxu0
    %v4313 = vadd.f32 %v4299, %v4312
    %4314 = vdwg.mxu0
    %4315 = vmatpush.bf16.msra.mxu0 %v2795
    %4316 = vmatpush.bf16.msra.mxu0 %v2791
    %4317 = vmatpush.bf16.msra.mxu0 %v2787
    %4318 = vmatpush.bf16.msra.mxu0 %v2783
    %4319 = vmatpush.bf16.msra.mxu0 %v2779
    %4320 = vmatpush.bf16.msra.mxu0 %v2775
    %4321 = vmatpush.bf16.msra.mxu0 %v2771
    %4322 = vmatpush.bf16.msra.mxu0 %v2767
    %4323 = vmatmul.bf16.gmra.mxu0 %v105
    %v4324 = vpop.f32.mrf.mxu0
    %v4325 = vadd.f32 %v4311, %v4324
    %v4326 = vpop.f32.mrf.mxu0
    %v4327 = vadd.f32 %v4313, %v4326
    %4328 = vdwg.mxu0
    %4329 = vmatpush.bf16.msra.mxu0 %v2827
    %4330 = vmatpush.bf16.msra.mxu0 %v2823
    %4331 = vmatpush.bf16.msra.mxu0 %v2819
    %4332 = vmatpush.bf16.msra.mxu0 %v2815
    %4333 = vmatpush.bf16.msra.mxu0 %v2811
    %4334 = vmatpush.bf16.msra.mxu0 %v2807
    %4335 = vmatpush.bf16.msra.mxu0 %v2803
    %4336 = vmatpush.bf16.msra.mxu0 %v2799
    %4337 = vmatmul.bf16.gmra.mxu0 %v106
    %v4338 = vpop.f32.mrf.mxu0
    %v4339 = vadd.f32 %v4325, %v4338
    %v4340 = vpop.f32.mrf.mxu0
    %v4341 = vadd.f32 %v4327, %v4340
    %4342 = vdwg.mxu0
    %4343 = vmatpush.bf16.msra.mxu0 %v2859
    %4344 = vmatpush.bf16.msra.mxu0 %v2855
    %4345 = vmatpush.bf16.msra.mxu0 %v2851
    %4346 = vmatpush.bf16.msra.mxu0 %v2847
    %4347 = vmatpush.bf16.msra.mxu0 %v2843
    %4348 = vmatpush.bf16.msra.mxu0 %v2839
    %4349 = vmatpush.bf16.msra.mxu0 %v2835
    %4350 = vmatpush.bf16.msra.mxu0 %v2831
    %4351 = vmatmul.bf16.gmra.mxu0 %v107
    %v4352 = vpop.f32.mrf.mxu0
    %v4353 = vadd.f32 %v4339, %v4352
    %v4354 = vpop.f32.mrf.mxu0
    %v4355 = vadd.f32 %v4341, %v4354
    %4356 = vdwg.mxu0
    %4357 = vmatpush.bf16.msra.mxu0 %v2891
    %4358 = vmatpush.bf16.msra.mxu0 %v2887
    %4359 = vmatpush.bf16.msra.mxu0 %v2883
    %4360 = vmatpush.bf16.msra.mxu0 %v2879
    %4361 = vmatpush.bf16.msra.mxu0 %v2875
    %4362 = vmatpush.bf16.msra.mxu0 %v2871
    %4363 = vmatpush.bf16.msra.mxu0 %v2867
    %4364 = vmatpush.bf16.msra.mxu0 %v2863
    %4365 = vmatmul.bf16.gmra.mxu0 %v108
    %v4366 = vpop.f32.mrf.mxu0
    %v4367 = vadd.f32 %v4353, %v4366
    %v4368 = vpop.f32.mrf.mxu0
    %v4369 = vadd.f32 %v4355, %v4368
    %4370 = vdwg.mxu0
    %4371 = vmatpush.bf16.msra.mxu0 %v2923
    %4372 = vmatpush.bf16.msra.mxu0 %v2919
    %4373 = vmatpush.bf16.msra.mxu0 %v2915
    %4374 = vmatpush.bf16.msra.mxu0 %v2911
    %4375 = vmatpush.bf16.msra.mxu0 %v2907
    %4376 = vmatpush.bf16.msra.mxu0 %v2903
    %4377 = vmatpush.bf16.msra.mxu0 %v2899
    %4378 = vmatpush.bf16.msra.mxu0 %v2895
    %4379 = vmatmul.bf16.gmra.mxu0 %v109
    %v4380 = vpop.f32.mrf.mxu0
    %v4381 = vadd.f32 %v4367, %v4380
    %v4382 = vpop.f32.mrf.mxu0
    %v4383 = vadd.f32 %v4369, %v4382
    %4384 = vdwg.mxu0
    %4385 = vmatpush.bf16.msra.mxu0 %v2955
    %4386 = vmatpush.bf16.msra.mxu0 %v2951
    %4387 = vmatpush.bf16.msra.mxu0 %v2947
    %4388 = vmatpush.bf16.msra.mxu0 %v2943
    %4389 = vmatpush.bf16.msra.mxu0 %v2939
    %4390 = vmatpush.bf16.msra.mxu0 %v2935
    %4391 = vmatpush.bf16.msra.mxu0 %v2931
    %4392 = vmatpush.bf16.msra.mxu0 %v2927
    %4393 = vmatmul.bf16.gmra.mxu0 %v110
    %v4394 = vpop.f32.mrf.mxu0
    %v4395 = vadd.f32 %v4381, %v4394
    %v4396 = vpop.f32.mrf.mxu0
    %v4397 = vadd.f32 %v4383, %v4396
    %4398 = vdwg.mxu0
    %4399 = vmatpush.bf16.msra.mxu0 %v2987
    %4400 = vmatpush.bf16.msra.mxu0 %v2983
    %4401 = vmatpush.bf16.msra.mxu0 %v2979
    %4402 = vmatpush.bf16.msra.mxu0 %v2975
    %4403 = vmatpush.bf16.msra.mxu0 %v2971
    %4404 = vmatpush.bf16.msra.mxu0 %v2967
    %4405 = vmatpush.bf16.msra.mxu0 %v2963
    %4406 = vmatpush.bf16.msra.mxu0 %v2959
    %4407 = vmatmul.bf16.gmra.mxu0 %v111
    %v4408 = vpop.f32.mrf.mxu0
    %v4409 = vadd.f32 %v4395, %v4408
    %v4410 = vpop.f32.mrf.mxu0
    %v4411 = vadd.f32 %v4397, %v4410
    %4412 = vdwg.mxu0
    %4413 = vmatpush.bf16.msra.mxu0 %v3019
    %4414 = vmatpush.bf16.msra.mxu0 %v3015
    %4415 = vmatpush.bf16.msra.mxu0 %v3011
    %4416 = vmatpush.bf16.msra.mxu0 %v3007
    %4417 = vmatpush.bf16.msra.mxu0 %v3003
    %4418 = vmatpush.bf16.msra.mxu0 %v2999
    %4419 = vmatpush.bf16.msra.mxu0 %v2995
    %4420 = vmatpush.bf16.msra.mxu0 %v2991
    %4421 = vmatmul.bf16.gmra.mxu0 %v112
    %v4422 = vpop.f32.mrf.mxu0
    %v4423 = vadd.f32 %v4409, %v4422
    %v4424 = vpop.f32.mrf.mxu0
    %v4425 = vadd.f32 %v4411, %v4424
    %4426 = vdwg.mxu0
    %4427 = vmatpush.bf16.msra.mxu0 %v3051
    %4428 = vmatpush.bf16.msra.mxu0 %v3047
    %4429 = vmatpush.bf16.msra.mxu0 %v3043
    %4430 = vmatpush.bf16.msra.mxu0 %v3039
    %4431 = vmatpush.bf16.msra.mxu0 %v3035
    %4432 = vmatpush.bf16.msra.mxu0 %v3031
    %4433 = vmatpush.bf16.msra.mxu0 %v3027
    %4434 = vmatpush.bf16.msra.mxu0 %v3023
    %4435 = vmatmul.bf16.gmra.mxu0 %v113
    %v4436 = vpop.f32.mrf.mxu0
    %v4437 = vadd.f32 %v4423, %v4436
    %v4438 = vpop.f32.mrf.mxu0
    %v4439 = vadd.f32 %v4425, %v4438
    %4440 = vdwg.mxu0
    %4441 = vmatpush.bf16.msra.mxu0 0
    %4442 = vmatpush.bf16.msra.mxu0 0
    %4443 = vmatpush.bf16.msra.mxu0 0
    %4444 = vmatpush.bf16.msra.mxu0 0
    %4445 = vmatpush.bf16.msra.mxu0 0
    %4446 = vmatpush.bf16.msra.mxu0 %v3063
    %4447 = vmatpush.bf16.msra.mxu0 %v3059
    %4448 = vmatpush.bf16.msra.mxu0 %v3055
    %4449 = vmatmul.bf16.gmra.mxu0 %v3655
    %v4450 = vpop.f32.mrf.mxu0
    %v4451 = vadd.f32 %v4437, %v4450
    %v4452 = vpop.f32.mrf.mxu0
    %v4453 = vadd.f32 %v4439, %v4452
    %4454 = vdwg.mxu0
    %4455 = vmatpush.bf16.msra.mxu0 %v2508
    %4456 = vmatpush.bf16.msra.mxu0 %v2504
    %4457 = vmatpush.bf16.msra.mxu0 %v2500
    %4458 = vmatpush.bf16.msra.mxu0 %v2496
    %4459 = vmatpush.bf16.msra.mxu0 %v2492
    %4460 = vmatpush.bf16.msra.mxu0 %v2488
    %4461 = vmatpush.bf16.msra.mxu0 %v2484
    %4462 = vmatpush.bf16.msra.mxu0 %v2480
    %4463 = vmatmul.bf16.gmra.mxu0 %v96
    %v4464 = vpop.f32.mrf.mxu0
    %v4465 = vadd.f32 %v708, %v4464
    %v4466 = vpop.f32.mrf.mxu0
    %v4467 = vadd.f32 %v708, %v4466
    %4468 = vdwg.mxu0
    %4469 = vmatpush.bf16.msra.mxu0 %v2540
    %4470 = vmatpush.bf16.msra.mxu0 %v2536
    %4471 = vmatpush.bf16.msra.mxu0 %v2532
    %4472 = vmatpush.bf16.msra.mxu0 %v2528
    %4473 = vmatpush.bf16.msra.mxu0 %v2524
    %4474 = vmatpush.bf16.msra.mxu0 %v2520
    %4475 = vmatpush.bf16.msra.mxu0 %v2516
    %4476 = vmatpush.bf16.msra.mxu0 %v2512
    %4477 = vmatmul.bf16.gmra.mxu0 %v97
    %v4478 = vpop.f32.mrf.mxu0
    %v4479 = vadd.f32 %v4465, %v4478
    %v4480 = vpop.f32.mrf.mxu0
    %v4481 = vadd.f32 %v4467, %v4480
    %4482 = vdwg.mxu0
    %4483 = vmatpush.bf16.msra.mxu0 %v2572
    %4484 = vmatpush.bf16.msra.mxu0 %v2568
    %4485 = vmatpush.bf16.msra.mxu0 %v2564
    %4486 = vmatpush.bf16.msra.mxu0 %v2560
    %4487 = vmatpush.bf16.msra.mxu0 %v2556
    %4488 = vmatpush.bf16.msra.mxu0 %v2552
    %4489 = vmatpush.bf16.msra.mxu0 %v2548
    %4490 = vmatpush.bf16.msra.mxu0 %v2544
    %4491 = vmatmul.bf16.gmra.mxu0 %v98
    %v4492 = vpop.f32.mrf.mxu0
    %v4493 = vadd.f32 %v4479, %v4492
    %v4494 = vpop.f32.mrf.mxu0
    %v4495 = vadd.f32 %v4481, %v4494
    %4496 = vdwg.mxu0
    %4497 = vmatpush.bf16.msra.mxu0 %v2604
    %4498 = vmatpush.bf16.msra.mxu0 %v2600
    %4499 = vmatpush.bf16.msra.mxu0 %v2596
    %4500 = vmatpush.bf16.msra.mxu0 %v2592
    %4501 = vmatpush.bf16.msra.mxu0 %v2588
    %4502 = vmatpush.bf16.msra.mxu0 %v2584
    %4503 = vmatpush.bf16.msra.mxu0 %v2580
    %4504 = vmatpush.bf16.msra.mxu0 %v2576
    %4505 = vmatmul.bf16.gmra.mxu0 %v99
    %v4506 = vpop.f32.mrf.mxu0
    %v4507 = vadd.f32 %v4493, %v4506
    %v4508 = vpop.f32.mrf.mxu0
    %v4509 = vadd.f32 %v4495, %v4508
    %4510 = vdwg.mxu0
    %4511 = vmatpush.bf16.msra.mxu0 %v2636
    %4512 = vmatpush.bf16.msra.mxu0 %v2632
    %4513 = vmatpush.bf16.msra.mxu0 %v2628
    %4514 = vmatpush.bf16.msra.mxu0 %v2624
    %4515 = vmatpush.bf16.msra.mxu0 %v2620
    %4516 = vmatpush.bf16.msra.mxu0 %v2616
    %4517 = vmatpush.bf16.msra.mxu0 %v2612
    %4518 = vmatpush.bf16.msra.mxu0 %v2608
    %4519 = vmatmul.bf16.gmra.mxu0 %v100
    %v4520 = vpop.f32.mrf.mxu0
    %v4521 = vadd.f32 %v4507, %v4520
    %v4522 = vpop.f32.mrf.mxu0
    %v4523 = vadd.f32 %v4509, %v4522
    %4524 = vdwg.mxu0
    %4525 = vmatpush.bf16.msra.mxu0 %v2668
    %4526 = vmatpush.bf16.msra.mxu0 %v2664
    %4527 = vmatpush.bf16.msra.mxu0 %v2660
    %4528 = vmatpush.bf16.msra.mxu0 %v2656
    %4529 = vmatpush.bf16.msra.mxu0 %v2652
    %4530 = vmatpush.bf16.msra.mxu0 %v2648
    %4531 = vmatpush.bf16.msra.mxu0 %v2644
    %4532 = vmatpush.bf16.msra.mxu0 %v2640
    %4533 = vmatmul.bf16.gmra.mxu0 %v101
    %v4534 = vpop.f32.mrf.mxu0
    %v4535 = vadd.f32 %v4521, %v4534
    %v4536 = vpop.f32.mrf.mxu0
    %v4537 = vadd.f32 %v4523, %v4536
    %4538 = vdwg.mxu0
    %4539 = vmatpush.bf16.msra.mxu0 %v2700
    %4540 = vmatpush.bf16.msra.mxu0 %v2696
    %4541 = vmatpush.bf16.msra.mxu0 %v2692
    %4542 = vmatpush.bf16.msra.mxu0 %v2688
    %4543 = vmatpush.bf16.msra.mxu0 %v2684
    %4544 = vmatpush.bf16.msra.mxu0 %v2680
    %4545 = vmatpush.bf16.msra.mxu0 %v2676
    %4546 = vmatpush.bf16.msra.mxu0 %v2672
    %4547 = vmatmul.bf16.gmra.mxu0 %v102
    %v4548 = vpop.f32.mrf.mxu0
    %v4549 = vadd.f32 %v4535, %v4548
    %v4550 = vpop.f32.mrf.mxu0
    %v4551 = vadd.f32 %v4537, %v4550
    %4552 = vdwg.mxu0
    %4553 = vmatpush.bf16.msra.mxu0 %v2732
    %4554 = vmatpush.bf16.msra.mxu0 %v2728
    %4555 = vmatpush.bf16.msra.mxu0 %v2724
    %4556 = vmatpush.bf16.msra.mxu0 %v2720
    %4557 = vmatpush.bf16.msra.mxu0 %v2716
    %4558 = vmatpush.bf16.msra.mxu0 %v2712
    %4559 = vmatpush.bf16.msra.mxu0 %v2708
    %4560 = vmatpush.bf16.msra.mxu0 %v2704
    %4561 = vmatmul.bf16.gmra.mxu0 %v103
    %v4562 = vpop.f32.mrf.mxu0
    %v4563 = vadd.f32 %v4549, %v4562
    %v4564 = vpop.f32.mrf.mxu0
    %v4565 = vadd.f32 %v4551, %v4564
    %4566 = vdwg.mxu0
    %4567 = vmatpush.bf16.msra.mxu0 %v2764
    %4568 = vmatpush.bf16.msra.mxu0 %v2760
    %4569 = vmatpush.bf16.msra.mxu0 %v2756
    %4570 = vmatpush.bf16.msra.mxu0 %v2752
    %4571 = vmatpush.bf16.msra.mxu0 %v2748
    %4572 = vmatpush.bf16.msra.mxu0 %v2744
    %4573 = vmatpush.bf16.msra.mxu0 %v2740
    %4574 = vmatpush.bf16.msra.mxu0 %v2736
    %4575 = vmatmul.bf16.gmra.mxu0 %v104
    %v4576 = vpop.f32.mrf.mxu0
    %v4577 = vadd.f32 %v4563, %v4576
    %v4578 = vpop.f32.mrf.mxu0
    %v4579 = vadd.f32 %v4565, %v4578
    %4580 = vdwg.mxu0
    %4581 = vmatpush.bf16.msra.mxu0 %v2796
    %4582 = vmatpush.bf16.msra.mxu0 %v2792
    %4583 = vmatpush.bf16.msra.mxu0 %v2788
    %4584 = vmatpush.bf16.msra.mxu0 %v2784
    %4585 = vmatpush.bf16.msra.mxu0 %v2780
    %4586 = vmatpush.bf16.msra.mxu0 %v2776
    %4587 = vmatpush.bf16.msra.mxu0 %v2772
    %4588 = vmatpush.bf16.msra.mxu0 %v2768
    %4589 = vmatmul.bf16.gmra.mxu0 %v105
    %v4590 = vpop.f32.mrf.mxu0
    %v4591 = vadd.f32 %v4577, %v4590
    %v4592 = vpop.f32.mrf.mxu0
    %v4593 = vadd.f32 %v4579, %v4592
    %4594 = vdwg.mxu0
    %4595 = vmatpush.bf16.msra.mxu0 %v2828
    %4596 = vmatpush.bf16.msra.mxu0 %v2824
    %4597 = vmatpush.bf16.msra.mxu0 %v2820
    %4598 = vmatpush.bf16.msra.mxu0 %v2816
    %4599 = vmatpush.bf16.msra.mxu0 %v2812
    %4600 = vmatpush.bf16.msra.mxu0 %v2808
    %4601 = vmatpush.bf16.msra.mxu0 %v2804
    %4602 = vmatpush.bf16.msra.mxu0 %v2800
    %4603 = vmatmul.bf16.gmra.mxu0 %v106
    %v4604 = vpop.f32.mrf.mxu0
    %v4605 = vadd.f32 %v4591, %v4604
    %v4606 = vpop.f32.mrf.mxu0
    %v4607 = vadd.f32 %v4593, %v4606
    %4608 = vdwg.mxu0
    %4609 = vmatpush.bf16.msra.mxu0 %v2860
    %4610 = vmatpush.bf16.msra.mxu0 %v2856
    %4611 = vmatpush.bf16.msra.mxu0 %v2852
    %4612 = vmatpush.bf16.msra.mxu0 %v2848
    %4613 = vmatpush.bf16.msra.mxu0 %v2844
    %4614 = vmatpush.bf16.msra.mxu0 %v2840
    %4615 = vmatpush.bf16.msra.mxu0 %v2836
    %4616 = vmatpush.bf16.msra.mxu0 %v2832
    %4617 = vmatmul.bf16.gmra.mxu0 %v107
    %v4618 = vpop.f32.mrf.mxu0
    %v4619 = vadd.f32 %v4605, %v4618
    %v4620 = vpop.f32.mrf.mxu0
    %v4621 = vadd.f32 %v4607, %v4620
    %4622 = vdwg.mxu0
    %4623 = vmatpush.bf16.msra.mxu0 %v2892
    %4624 = vmatpush.bf16.msra.mxu0 %v2888
    %4625 = vmatpush.bf16.msra.mxu0 %v2884
    %4626 = vmatpush.bf16.msra.mxu0 %v2880
    %4627 = vmatpush.bf16.msra.mxu0 %v2876
    %4628 = vmatpush.bf16.msra.mxu0 %v2872
    %4629 = vmatpush.bf16.msra.mxu0 %v2868
    %4630 = vmatpush.bf16.msra.mxu0 %v2864
    %4631 = vmatmul.bf16.gmra.mxu0 %v108
    %v4632 = vpop.f32.mrf.mxu0
    %v4633 = vadd.f32 %v4619, %v4632
    %v4634 = vpop.f32.mrf.mxu0
    %v4635 = vadd.f32 %v4621, %v4634
    %4636 = vdwg.mxu0
    %4637 = vmatpush.bf16.msra.mxu0 %v2924
    %4638 = vmatpush.bf16.msra.mxu0 %v2920
    %4639 = vmatpush.bf16.msra.mxu0 %v2916
    %4640 = vmatpush.bf16.msra.mxu0 %v2912
    %4641 = vmatpush.bf16.msra.mxu0 %v2908
    %4642 = vmatpush.bf16.msra.mxu0 %v2904
    %4643 = vmatpush.bf16.msra.mxu0 %v2900
    %4644 = vmatpush.bf16.msra.mxu0 %v2896
    %4645 = vmatmul.bf16.gmra.mxu0 %v109
    %v4646 = vpop.f32.mrf.mxu0
    %v4647 = vadd.f32 %v4633, %v4646
    %v4648 = vpop.f32.mrf.mxu0
    %v4649 = vadd.f32 %v4635, %v4648
    %4650 = vdwg.mxu0
    %4651 = vmatpush.bf16.msra.mxu0 %v2956
    %4652 = vmatpush.bf16.msra.mxu0 %v2952
    %4653 = vmatpush.bf16.msra.mxu0 %v2948
    %4654 = vmatpush.bf16.msra.mxu0 %v2944
    %4655 = vmatpush.bf16.msra.mxu0 %v2940
    %4656 = vmatpush.bf16.msra.mxu0 %v2936
    %4657 = vmatpush.bf16.msra.mxu0 %v2932
    %4658 = vmatpush.bf16.msra.mxu0 %v2928
    %4659 = vmatmul.bf16.gmra.mxu0 %v110
    %v4660 = vpop.f32.mrf.mxu0
    %v4661 = vadd.f32 %v4647, %v4660
    %v4662 = vpop.f32.mrf.mxu0
    %v4663 = vadd.f32 %v4649, %v4662
    %4664 = vdwg.mxu0
    %4665 = vmatpush.bf16.msra.mxu0 %v2988
    %4666 = vmatpush.bf16.msra.mxu0 %v2984
    %4667 = vmatpush.bf16.msra.mxu0 %v2980
    %4668 = vmatpush.bf16.msra.mxu0 %v2976
    %4669 = vmatpush.bf16.msra.mxu0 %v2972
    %4670 = vmatpush.bf16.msra.mxu0 %v2968
    %4671 = vmatpush.bf16.msra.mxu0 %v2964
    %4672 = vmatpush.bf16.msra.mxu0 %v2960
    %4673 = vmatmul.bf16.gmra.mxu0 %v111
    %v4674 = vpop.f32.mrf.mxu0
    %v4675 = vadd.f32 %v4661, %v4674
    %v4676 = vpop.f32.mrf.mxu0
    %v4677 = vadd.f32 %v4663, %v4676
    %4678 = vdwg.mxu0
    %4679 = vmatpush.bf16.msra.mxu0 %v3020
    %4680 = vmatpush.bf16.msra.mxu0 %v3016
    %4681 = vmatpush.bf16.msra.mxu0 %v3012
    %4682 = vmatpush.bf16.msra.mxu0 %v3008
    %4683 = vmatpush.bf16.msra.mxu0 %v3004
    %4684 = vmatpush.bf16.msra.mxu0 %v3000
    %4685 = vmatpush.bf16.msra.mxu0 %v2996
    %4686 = vmatpush.bf16.msra.mxu0 %v2992
    %4687 = vmatmul.bf16.gmra.mxu0 %v112
    %v4688 = vpop.f32.mrf.mxu0
    %v4689 = vadd.f32 %v4675, %v4688
    %v4690 = vpop.f32.mrf.mxu0
    %v4691 = vadd.f32 %v4677, %v4690
    %4692 = vdwg.mxu0
    %4693 = vmatpush.bf16.msra.mxu0 %v3052
    %4694 = vmatpush.bf16.msra.mxu0 %v3048
    %4695 = vmatpush.bf16.msra.mxu0 %v3044
    %4696 = vmatpush.bf16.msra.mxu0 %v3040
    %4697 = vmatpush.bf16.msra.mxu0 %v3036
    %4698 = vmatpush.bf16.msra.mxu0 %v3032
    %4699 = vmatpush.bf16.msra.mxu0 %v3028
    %4700 = vmatpush.bf16.msra.mxu0 %v3024
    %4701 = vmatmul.bf16.gmra.mxu0 %v113
    %v4702 = vpop.f32.mrf.mxu0
    %v4703 = vadd.f32 %v4689, %v4702
    %v4704 = vpop.f32.mrf.mxu0
    %v4705 = vadd.f32 %v4691, %v4704
    %4706 = vdwg.mxu0
    %4707 = vmatpush.bf16.msra.mxu0 0
    %4708 = vmatpush.bf16.msra.mxu0 0
    %4709 = vmatpush.bf16.msra.mxu0 0
    %4710 = vmatpush.bf16.msra.mxu0 0
    %4711 = vmatpush.bf16.msra.mxu0 0
    %4712 = vmatpush.bf16.msra.mxu0 %v3064
    %4713 = vmatpush.bf16.msra.mxu0 %v3060
    %4714 = vmatpush.bf16.msra.mxu0 %v3056
    %4715 = vmatmul.bf16.gmra.mxu0 %v3655
    %v4716 = vpop.f32.mrf.mxu0
    %v4717 = vadd.f32 %v4703, %v4716
    %v4718 = vpop.f32.mrf.mxu0
    %v4719 = vadd.f32 %v4705, %v4718
    %4720 = vdwg.mxu0
    %v4721 = vmax.f32 %v3919, 0.0
    %v4722 = vmax.f32 %v4185, 0.0
    %v4723 = vmax.f32 %v4451, 0.0
    %v4724 = vmax.f32 %v4717, 0.0
    %v4725 = vmax.f32 %v3921, 0.0
    %v4726 = vmax.f32 %v4187, 0.0
    %v4727 = vmax.f32 %v4453, 0.0
    %v4728 = vmax.f32 %v4719, 0.0
    %v4729 = vpack.c.bf16 %v4725, %v4721
    %v4730 = vpack.c.bf16 %v4726, %v4722
    %v4731 = vpack.c.bf16 %v4727, %v4723
    %v4732 = vpack.c.bf16 %v4728, %v4724
    %v4733 = vld [vmem:[%s4] sm:$0xff]
    %v4734 = vld [vmem:[%s4 + $0x8] sm:$0xff]
    %v4735 = vld [vmem:[%s4 + $0x10] sm:$0xff]
    %v4736 = vld [vmem:[%s4 + $0x18] sm:$0xff]
    %v4737 = vld [vmem:[%s4 + $0x20] sm:$0xff]
    %v4738 = vld [vmem:[%s4 + $0x28] sm:$0xff]
    %v4739 = vld [vmem:[%s4 + $0x30] sm:$0xff]
    %v4740 = vld [vmem:[%s4 + $0x38] sm:$0xff]
    %v4741 = vld [vmem:[%s4 + $0x40] sm:$0xff]
    %v4742 = vld [vmem:[%s4 + $0x48] sm:$0xff]
    %v4743 = vld [vmem:[%s4 + $0x50] sm:$0xff]
    %v4744 = vld [vmem:[%s4 + $0x58] sm:$0xff]
    %v4745 = vld [vmem:[%s4 + $0x60] sm:$0xff]
    %v4746 = vld [vmem:[%s4 + $0x68] sm:$0xff]
    %v4747 = vld [vmem:[%s4 + $0x70] sm:$0xff]
    %v4748 = vld [vmem:[%s4 + $0x78] sm:$0xff]
    %v4749 = vld [vmem:[%s4 + $0x80] sm:$0xff]
    %v4750 = vld [vmem:[%s4 + $0x88] sm:$0xff]
    %v4751 = vld [vmem:[%s4 + $0x90] sm:$0xff]
    %v4752 = vld [vmem:[%s4 + $0x98] sm:$0xff]
    %v4753 = vld [vmem:[%s4 + $0xa0] sm:$0xff]
    %v4754 = vld [vmem:[%s4 + $0xa8] sm:$0xff]
    %v4755 = vld [vmem:[%s4 + $0xb0] sm:$0xff]
    %v4756 = vld [vmem:[%s4 + $0xb8] sm:$0xff]
    %v4757 = vld [vmem:[%s4 + $0xc0] sm:$0xff]
    %v4758 = vld [vmem:[%s4 + $0xc8] sm:$0xff]
    %v4759 = vld [vmem:[%s4 + $0xd0] sm:$0xff]
    %v4760 = vld [vmem:[%s4 + $0xd8] sm:$0xff]
    %v4761 = vld [vmem:[%s4 + $0xe0] sm:$0xff]
    %v4762 = vld [vmem:[%s4 + $0xe8] sm:$0xff]
    %v4763 = vld [vmem:[%s4 + $0xf0] sm:$0xff]
    %v4764 = vld [vmem:[%s4 + $0xf8] sm:$0xff]
    %v4765 = vld [vmem:[%s4 + $0x100] sm:$0xff]
    %v4766 = vld [vmem:[%s4 + $0x108] sm:$0xff]
    %v4767 = vld [vmem:[%s4 + $0x110] sm:$0xff]
    %v4768 = vld [vmem:[%s4 + $0x118] sm:$0xff]
    %v4769 = vld [vmem:[%s4 + $0x120] sm:$0xff]
    %v4770 = vld [vmem:[%s4 + $0x128] sm:$0xff]
    %v4771 = vld [vmem:[%s4 + $0x130] sm:$0xff]
    %v4772 = vld [vmem:[%s4 + $0x138] sm:$0xff]
    %v4773 = vld [vmem:[%s4 + $0x140] sm:$0xff]
    %v4774 = vld [vmem:[%s4 + $0x148] sm:$0xff]
    %v4775 = vld [vmem:[%s4 + $0x150] sm:$0xff]
    %v4776 = vld [vmem:[%s4 + $0x158] sm:$0xff]
    %v4777 = vld [vmem:[%s4 + $0x160] sm:$0xff]
    %v4778 = vld [vmem:[%s4 + $0x168] sm:$0xff]
    %v4779 = vld [vmem:[%s4 + $0x170] sm:$0xff]
    %v4780 = vld [vmem:[%s4 + $0x178] sm:$0xff]
    %v4781 = vld [vmem:[%s4 + $0x180] sm:$0xff]
    %v4782 = vld [vmem:[%s4 + $0x188] sm:$0xff]
    %v4783 = vld [vmem:[%s4 + $0x190] sm:$0xff]
    %v4784 = vld [vmem:[%s4 + $0x198] sm:$0xff]
    %v4785 = vld [vmem:[%s4 + $0x1a0] sm:$0xff]
    %v4786 = vld [vmem:[%s4 + $0x1a8] sm:$0xff]
    %v4787 = vld [vmem:[%s4 + $0x1b0] sm:$0xff]
    %v4788 = vld [vmem:[%s4 + $0x1b8] sm:$0xff]
    %v4789 = vld [vmem:[%s4 + $0x1c0] sm:$0xff]
    %v4790 = vld [vmem:[%s4 + $0x1c8] sm:$0xff]
    %v4791 = vld [vmem:[%s4 + $0x1d0] sm:$0xff]
    %v4792 = vld [vmem:[%s4 + $0x1d8] sm:$0xff]
    %v4793 = vld [vmem:[%s4 + $0x1e0] sm:$0xff]
    %v4794 = vld [vmem:[%s4 + $0x1e8] sm:$0xff]
    %v4795 = vld [vmem:[%s4 + $0x1f0] sm:$0xff]
    %v4796 = vld [vmem:[%s4 + $0x1f8] sm:$0xff]
    %v4797 = vld [vmem:[%s5] sm:$0x3]
    %v4799 = vperm.slane %v4797, 0
    %v4800 = vperm.slane %v4797, 1
    %v4867 = vunpack.c.l.b16 %v4733
    %v4868 = vunpack.c.h.b16 %v4733
    %v4869 = vunpack.c.l.b16 %v4734
    %v4870 = vunpack.c.h.b16 %v4734
    %v4871 = vunpack.c.l.b16 %v4735
    %v4872 = vunpack.c.h.b16 %v4735
    %v4873 = vunpack.c.l.b16 %v4736
    %v4874 = vunpack.c.h.b16 %v4736
    %v4875 = vunpack.c.l.b16 %v4737
    %v4876 = vunpack.c.h.b16 %v4737
    %v4877 = vunpack.c.l.b16 %v4738
    %v4878 = vunpack.c.h.b16 %v4738
    %v4879 = vunpack.c.l.b16 %v4739
    %v4880 = vunpack.c.h.b16 %v4739
    %v4881 = vunpack.c.l.b16 %v4740
    %v4882 = vunpack.c.h.b16 %v4740
    %v4883 = vunpack.c.l.b16 %v4741
    %v4884 = vunpack.c.h.b16 %v4741
    %v4885 = vunpack.c.l.b16 %v4742
    %v4886 = vunpack.c.h.b16 %v4742
    %v4887 = vunpack.c.l.b16 %v4743
    %v4888 = vunpack.c.h.b16 %v4743
    %v4889 = vunpack.c.l.b16 %v4744
    %v4890 = vunpack.c.h.b16 %v4744
    %v4891 = vunpack.c.l.b16 %v4745
    %v4892 = vunpack.c.h.b16 %v4745
    %v4893 = vunpack.c.l.b16 %v4746
    %v4894 = vunpack.c.h.b16 %v4746
    %v4895 = vunpack.c.l.b16 %v4747
    %v4896 = vunpack.c.h.b16 %v4747
    %v4897 = vunpack.c.l.b16 %v4748
    %v4898 = vunpack.c.h.b16 %v4748
    %v4899 = vunpack.c.l.b16 %v4749
    %v4900 = vunpack.c.h.b16 %v4749
    %v4901 = vunpack.c.l.b16 %v4750
    %v4902 = vunpack.c.h.b16 %v4750
    %v4903 = vunpack.c.l.b16 %v4751
    %v4904 = vunpack.c.h.b16 %v4751
    %v4905 = vunpack.c.l.b16 %v4752
    %v4906 = vunpack.c.h.b16 %v4752
    %v4907 = vunpack.c.l.b16 %v4753
    %v4908 = vunpack.c.h.b16 %v4753
    %v4909 = vunpack.c.l.b16 %v4754
    %v4910 = vunpack.c.h.b16 %v4754
    %v4911 = vunpack.c.l.b16 %v4755
    %v4912 = vunpack.c.h.b16 %v4755
    %v4913 = vunpack.c.l.b16 %v4756
    %v4914 = vunpack.c.h.b16 %v4756
    %v4915 = vunpack.c.l.b16 %v4757
    %v4916 = vunpack.c.h.b16 %v4757
    %v4917 = vunpack.c.l.b16 %v4758
    %v4918 = vunpack.c.h.b16 %v4758
    %v4919 = vunpack.c.l.b16 %v4759
    %v4920 = vunpack.c.h.b16 %v4759
    %v4921 = vunpack.c.l.b16 %v4760
    %v4922 = vunpack.c.h.b16 %v4760
    %v4923 = vunpack.c.l.b16 %v4761
    %v4924 = vunpack.c.h.b16 %v4761
    %v4925 = vunpack.c.l.b16 %v4762
    %v4926 = vunpack.c.h.b16 %v4762
    %v4927 = vunpack.c.l.b16 %v4763
    %v4928 = vunpack.c.h.b16 %v4763
    %v4929 = vunpack.c.l.b16 %v4764
    %v4930 = vunpack.c.h.b16 %v4764
    %v4931 = vunpack.c.l.b16 %v4765
    %v4932 = vunpack.c.h.b16 %v4765
    %v4933 = vunpack.c.l.b16 %v4766
    %v4934 = vunpack.c.h.b16 %v4766
    %v4935 = vunpack.c.l.b16 %v4767
    %v4936 = vunpack.c.h.b16 %v4767
    %v4937 = vunpack.c.l.b16 %v4768
    %v4938 = vunpack.c.h.b16 %v4768
    %v4939 = vunpack.c.l.b16 %v4769
    %v4940 = vunpack.c.h.b16 %v4769
    %v4941 = vunpack.c.l.b16 %v4770
    %v4942 = vunpack.c.h.b16 %v4770
    %v4943 = vunpack.c.l.b16 %v4771
    %v4944 = vunpack.c.h.b16 %v4771
    %v4945 = vunpack.c.l.b16 %v4772
    %v4946 = vunpack.c.h.b16 %v4772
    %v4947 = vunpack.c.l.b16 %v4773
    %v4948 = vunpack.c.h.b16 %v4773
    %v4949 = vunpack.c.l.b16 %v4774
    %v4950 = vunpack.c.h.b16 %v4774
    %v4951 = vunpack.c.l.b16 %v4775
    %v4952 = vunpack.c.h.b16 %v4775
    %v4953 = vunpack.c.l.b16 %v4776
    %v4954 = vunpack.c.h.b16 %v4776
    %v4955 = vunpack.c.l.b16 %v4777
    %v4956 = vunpack.c.h.b16 %v4777
    %v4957 = vunpack.c.l.b16 %v4778
    %v4958 = vunpack.c.h.b16 %v4778
    %v4959 = vunpack.c.l.b16 %v4779
    %v4960 = vunpack.c.h.b16 %v4779
    %v4961 = vunpack.c.l.b16 %v4780
    %v4962 = vunpack.c.h.b16 %v4780
    %v4963 = vunpack.c.l.b16 %v4781
    %v4964 = vunpack.c.h.b16 %v4781
    %v4965 = vunpack.c.l.b16 %v4782
    %v4966 = vunpack.c.h.b16 %v4782
    %v4967 = vunpack.c.l.b16 %v4783
    %v4968 = vunpack.c.h.b16 %v4783
    %v4969 = vunpack.c.l.b16 %v4784
    %v4970 = vunpack.c.h.b16 %v4784
    %v4971 = vunpack.c.l.b16 %v4785
    %v4972 = vunpack.c.h.b16 %v4785
    %v4973 = vunpack.c.l.b16 %v4786
    %v4974 = vunpack.c.h.b16 %v4786
    %v4975 = vunpack.c.l.b16 %v4787
    %v4976 = vunpack.c.h.b16 %v4787
    %v4977 = vunpack.c.l.b16 %v4788
    %v4978 = vunpack.c.h.b16 %v4788
    %v4979 = vunpack.c.l.b16 %v4789
    %v4980 = vunpack.c.h.b16 %v4789
    %v4981 = vunpack.c.l.b16 %v4790
    %v4982 = vunpack.c.h.b16 %v4790
    %v4983 = vunpack.c.l.b16 %v4791
    %v4984 = vunpack.c.h.b16 %v4791
    %v4985 = vunpack.c.l.b16 %v4792
    %v4986 = vunpack.c.h.b16 %v4792
    %v4987 = vunpack.c.l.b16 %v4793
    %v4988 = vunpack.c.h.b16 %v4793
    %v4989 = vunpack.c.l.b16 %v4794
    %v4990 = vunpack.c.h.b16 %v4794
    %v4991 = vunpack.c.l.b16 %v4795
    %v4992 = vunpack.c.h.b16 %v4795
    %v4993 = vunpack.c.l.b16 %v4796
    %v4994 = vunpack.c.h.b16 %v4796
    %v4995 = vpack.c.b16 %v4869, %v4867
    %v4996 = vpack.c.b16 %v4870, %v4868
    %v4997 = vpack.c.b16 %v4873, %v4871
    %v4998 = vpack.c.b16 %v4874, %v4872
    %v4999 = vpack.c.b16 %v4877, %v4875
    %v5000 = vpack.c.b16 %v4878, %v4876
    %v5001 = vpack.c.b16 %v4881, %v4879
    %v5002 = vpack.c.b16 %v4882, %v4880
    %v5003 = vpack.c.b16 %v4885, %v4883
    %v5004 = vpack.c.b16 %v4886, %v4884
    %v5005 = vpack.c.b16 %v4889, %v4887
    %v5006 = vpack.c.b16 %v4890, %v4888
    %v5007 = vpack.c.b16 %v4893, %v4891
    %v5008 = vpack.c.b16 %v4894, %v4892
    %v5009 = vpack.c.b16 %v4897, %v4895
    %v5010 = vpack.c.b16 %v4898, %v4896
    %v5011 = vpack.c.b16 %v4901, %v4899
    %v5012 = vpack.c.b16 %v4902, %v4900
    %v5013 = vpack.c.b16 %v4905, %v4903
    %v5014 = vpack.c.b16 %v4906, %v4904
    %v5015 = vpack.c.b16 %v4909, %v4907
    %v5016 = vpack.c.b16 %v4910, %v4908
    %v5017 = vpack.c.b16 %v4913, %v4911
    %v5018 = vpack.c.b16 %v4914, %v4912
    %v5019 = vpack.c.b16 %v4917, %v4915
    %v5020 = vpack.c.b16 %v4918, %v4916
    %v5021 = vpack.c.b16 %v4921, %v4919
    %v5022 = vpack.c.b16 %v4922, %v4920
    %v5023 = vpack.c.b16 %v4925, %v4923
    %v5024 = vpack.c.b16 %v4926, %v4924
    %v5025 = vpack.c.b16 %v4929, %v4927
    %v5026 = vpack.c.b16 %v4930, %v4928
    %v5027 = vpack.c.b16 %v4933, %v4931
    %v5028 = vpack.c.b16 %v4934, %v4932
    %v5029 = vpack.c.b16 %v4937, %v4935
    %v5030 = vpack.c.b16 %v4938, %v4936
    %v5031 = vpack.c.b16 %v4941, %v4939
    %v5032 = vpack.c.b16 %v4942, %v4940
    %v5033 = vpack.c.b16 %v4945, %v4943
    %v5034 = vpack.c.b16 %v4946, %v4944
    %v5035 = vpack.c.b16 %v4949, %v4947
    %v5036 = vpack.c.b16 %v4950, %v4948
    %v5037 = vpack.c.b16 %v4953, %v4951
    %v5038 = vpack.c.b16 %v4954, %v4952
    %v5039 = vpack.c.b16 %v4957, %v4955
    %v5040 = vpack.c.b16 %v4958, %v4956
    %v5041 = vpack.c.b16 %v4961, %v4959
    %v5042 = vpack.c.b16 %v4962, %v4960
    %v5043 = vpack.c.b16 %v4965, %v4963
    %v5044 = vpack.c.b16 %v4966, %v4964
    %v5045 = vpack.c.b16 %v4969, %v4967
    %v5046 = vpack.c.b16 %v4970, %v4968
    %v5047 = vpack.c.b16 %v4973, %v4971
    %v5048 = vpack.c.b16 %v4974, %v4972
    %v5049 = vpack.c.b16 %v4977, %v4975
    %v5050 = vpack.c.b16 %v4978, %v4976
    %v5051 = vpack.c.b16 %v4981, %v4979
    %v5052 = vpack.c.b16 %v4982, %v4980
    %v5053 = vpack.c.b16 %v4985, %v4983
    %v5054 = vpack.c.b16 %v4986, %v4984
    %v5055 = vpack.c.b16 %v4989, %v4987
    %v5056 = vpack.c.b16 %v4990, %v4988
    %v5057 = vpack.c.b16 %v4993, %v4991
    %v5058 = vpack.c.b16 %v4994, %v4992
    %5123 = vmatpush.bf16.msra.mxu0 %v5009
    %5124 = vmatpush.bf16.msra.mxu0 %v5007
    %5125 = vmatpush.bf16.msra.mxu0 %v5005
    %5126 = vmatpush.bf16.msra.mxu0 %v5003
    %5127 = vmatpush.bf16.msra.mxu0 %v5001
    %5128 = vmatpush.bf16.msra.mxu0 %v4999
    %5129 = vmatpush.bf16.msra.mxu0 %v4997
    %5130 = vmatpush.bf16.msra.mxu0 %v4995
    %5131 = vmatmul.bf16.gmra.mxu0 %v4729
    %v5132 = vpop.f32.mrf.mxu0
    %v5133 = vadd.f32 %v4799, %v5132
    %v5134 = vpop.f32.mrf.mxu0
    %v5135 = vadd.f32 %v4799, %v5134
    %5136 = vdwg.mxu0
    %5137 = vmatpush.bf16.msra.mxu0 %v5025
    %5138 = vmatpush.bf16.msra.mxu0 %v5023
    %5139 = vmatpush.bf16.msra.mxu0 %v5021
    %5140 = vmatpush.bf16.msra.mxu0 %v5019
    %5141 = vmatpush.bf16.msra.mxu0 %v5017
    %5142 = vmatpush.bf16.msra.mxu0 %v5015
    %5143 = vmatpush.bf16.msra.mxu0 %v5013
    %5144 = vmatpush.bf16.msra.mxu0 %v5011
    %5145 = vmatmul.bf16.gmra.mxu0 %v4730
    %v5146 = vpop.f32.mrf.mxu0
    %v5147 = vadd.f32 %v5133, %v5146
    %v5148 = vpop.f32.mrf.mxu0
    %v5149 = vadd.f32 %v5135, %v5148
    %5150 = vdwg.mxu0
    %5151 = vmatpush.bf16.msra.mxu0 %v5041
    %5152 = vmatpush.bf16.msra.mxu0 %v5039
    %5153 = vmatpush.bf16.msra.mxu0 %v5037
    %5154 = vmatpush.bf16.msra.mxu0 %v5035
    %5155 = vmatpush.bf16.msra.mxu0 %v5033
    %5156 = vmatpush.bf16.msra.mxu0 %v5031
    %5157 = vmatpush.bf16.msra.mxu0 %v5029
    %5158 = vmatpush.bf16.msra.mxu0 %v5027
    %5159 = vmatmul.bf16.gmra.mxu0 %v4731
    %v5160 = vpop.f32.mrf.mxu0
    %v5161 = vadd.f32 %v5147, %v5160
    %v5162 = vpop.f32.mrf.mxu0
    %v5163 = vadd.f32 %v5149, %v5162
    %5164 = vdwg.mxu0
    %5165 = vmatpush.bf16.msra.mxu0 %v5057
    %5166 = vmatpush.bf16.msra.mxu0 %v5055
    %5167 = vmatpush.bf16.msra.mxu0 %v5053
    %5168 = vmatpush.bf16.msra.mxu0 %v5051
    %5169 = vmatpush.bf16.msra.mxu0 %v5049
    %5170 = vmatpush.bf16.msra.mxu0 %v5047
    %5171 = vmatpush.bf16.msra.mxu0 %v5045
    %5172 = vmatpush.bf16.msra.mxu0 %v5043
    %5173 = vmatmul.bf16.gmra.mxu0 %v4732
    %v5174 = vpop.f32.mrf.mxu0
    %v5175 = vadd.f32 %v5161, %v5174
    %v5176 = vpop.f32.mrf.mxu0
    %v5177 = vadd.f32 %v5163, %v5176
    %5178 = vdwg.mxu0
    %5179 = vmatpush.bf16.msra.mxu0 %v5010
    %5180 = vmatpush.bf16.msra.mxu0 %v5008
    %5181 = vmatpush.bf16.msra.mxu0 %v5006
    %5182 = vmatpush.bf16.msra.mxu0 %v5004
    %5183 = vmatpush.bf16.msra.mxu0 %v5002
    %5184 = vmatpush.bf16.msra.mxu0 %v5000
    %5185 = vmatpush.bf16.msra.mxu0 %v4998
    %5186 = vmatpush.bf16.msra.mxu0 %v4996
    %5187 = vmatmul.bf16.gmra.mxu0 %v4729
    %v5188 = vpop.f32.mrf.mxu0
    %v5189 = vadd.f32 %v4800, %v5188
    %v5190 = vpop.f32.mrf.mxu0
    %v5191 = vadd.f32 %v4800, %v5190
    %5192 = vdwg.mxu0
    %5193 = vmatpush.bf16.msra.mxu0 %v5026
    %5194 = vmatpush.bf16.msra.mxu0 %v5024
    %5195 = vmatpush.bf16.msra.mxu0 %v5022
    %5196 = vmatpush.bf16.msra.mxu0 %v5020
    %5197 = vmatpush.bf16.msra.mxu0 %v5018
    %5198 = vmatpush.bf16.msra.mxu0 %v5016
    %5199 = vmatpush.bf16.msra.mxu0 %v5014
    %5200 = vmatpush.bf16.msra.mxu0 %v5012
    %5201 = vmatmul.bf16.gmra.mxu0 %v4730
    %v5202 = vpop.f32.mrf.mxu0
    %v5203 = vadd.f32 %v5189, %v5202
    %v5204 = vpop.f32.mrf.mxu0
    %v5205 = vadd.f32 %v5191, %v5204
    %5206 = vdwg.mxu0
    %5207 = vmatpush.bf16.msra.mxu0 %v5042
    %5208 = vmatpush.bf16.msra.mxu0 %v5040
    %5209 = vmatpush.bf16.msra.mxu0 %v5038
    %5210 = vmatpush.bf16.msra.mxu0 %v5036
    %5211 = vmatpush.bf16.msra.mxu0 %v5034
    %5212 = vmatpush.bf16.msra.mxu0 %v5032
    %5213 = vmatpush.bf16.msra.mxu0 %v5030
    %5214 = vmatpush.bf16.msra.mxu0 %v5028
    %5215 = vmatmul.bf16.gmra.mxu0 %v4731
    %v5216 = vpop.f32.mrf.mxu0
    %v5217 = vadd.f32 %v5203, %v5216
    %v5218 = vpop.f32.mrf.mxu0
    %v5219 = vadd.f32 %v5205, %v5218
    %5220 = vdwg.mxu0
    %5221 = vmatpush.bf16.msra.mxu0 %v5058
    %5222 = vmatpush.bf16.msra.mxu0 %v5056
    %5223 = vmatpush.bf16.msra.mxu0 %v5054
    %5224 = vmatpush.bf16.msra.mxu0 %v5052
    %5225 = vmatpush.bf16.msra.mxu0 %v5050
    %5226 = vmatpush.bf16.msra.mxu0 %v5048
    %5227 = vmatpush.bf16.msra.mxu0 %v5046
    %5228 = vmatpush.bf16.msra.mxu0 %v5044
    %5229 = vmatmul.bf16.gmra.mxu0 %v4732
    %v5230 = vpop.f32.mrf.mxu0
    %v5231 = vadd.f32 %v5217, %v5230
    %v5232 = vpop.f32.mrf.mxu0
    %v5233 = vadd.f32 %v5219, %v5232
    %5234 = vdwg.mxu0
    %v5235 = vmax.f32 %v5175, 0.0
    %v5236 = vmax.f32 %v5231, 0.0
    %v5237 = vmax.f32 %v5177, 0.0
    %v5238 = vmax.f32 %v5233, 0.0
    %v5239 = vld [vmem:[%s6] sm:$0xff]
    %v5240 = vld [vmem:[%s6 + $0x8] sm:$0xff]
    %v5241 = vld [vmem:[%s6 + $0x10] sm:$0xff]
    %v5242 = vld [vmem:[%s6 + $0x18] sm:$0xff]
    %v5243 = vld [vmem:[%s6 + $0x20] sm:$0xff]
    %v5244 = vld [vmem:[%s6 + $0x28] sm:$0xff]
    %v5245 = vld [vmem:[%s6 + $0x30] sm:$0xff]
    %v5246 = vld [vmem:[%s6 + $0x38] sm:$0xff]
    %v5247 = vld [vmem:[%s6 + $0x40] sm:$0xff]
    %v5248 = vld [vmem:[%s6 + $0x48] sm:$0xff]
    %v5249 = vld [vmem:[%s6 + $0x50] sm:$0xff]
    %v5250 = vld [vmem:[%s6 + $0x58] sm:$0xff]
    %v5251 = vld [vmem:[%s6 + $0x60] sm:$0xff]
    %v5252 = vld [vmem:[%s6 + $0x68] sm:$0xff]
    %v5253 = vld [vmem:[%s6 + $0x70] sm:$0xff]
    %v5254 = vld [vmem:[%s6 + $0x78] sm:$0xff]
    %v5255 = vld [vmem:[%s6 + $0x80] sm:$0xff]
    %v5256 = vld [vmem:[%s6 + $0x88] sm:$0xff]
    %v5257 = vld [vmem:[%s6 + $0x90] sm:$0xff]
    %v5258 = vld [vmem:[%s6 + $0x98] sm:$0xff]
    %v5259 = vld [vmem:[%s6 + $0xa0] sm:$0xff]
    %v5260 = vld [vmem:[%s6 + $0xa8] sm:$0xff]
    %v5261 = vld [vmem:[%s6 + $0xb0] sm:$0xff]
    %v5262 = vld [vmem:[%s6 + $0xb8] sm:$0xff]
    %v5263 = vld [vmem:[%s6 + $0xc0] sm:$0xff]
    %v5264 = vld [vmem:[%s6 + $0xc8] sm:$0xff]
    %v5265 = vld [vmem:[%s6 + $0xd0] sm:$0xff]
    %v5266 = vld [vmem:[%s6 + $0xd8] sm:$0xff]
    %v5267 = vld [vmem:[%s6 + $0xe0] sm:$0xff]
    %v5268 = vld [vmem:[%s6 + $0xe8] sm:$0xff]
    %v5269 = vld [vmem:[%s6 + $0xf0] sm:$0xff]
    %v5270 = vld [vmem:[%s6 + $0xf8] sm:$0xff]
    %v5271 = vld [vmem:[%s7] sm:$0x1]
    %v5273 = vperm.slane %v5271, 0
    %5275 = vmatpush.msra.mxu0 %v5254
    %5276 = vmatpush.msra.mxu0 %v5253
    %5277 = vmatpush.msra.mxu0 %v5252
    %5278 = vmatpush.msra.mxu0 %v5251
    %5279 = vmatpush.msra.mxu0 %v5250
    %5280 = vmatpush.msra.mxu0 %v5249
    %5281 = vmatpush.msra.mxu0 %v5248
    %5282 = vmatpush.msra.mxu0 %v5247
    %5283 = vmatpush.msra.mxu0 %v5246
    %5284 = vmatpush.msra.mxu0 %v5245
    %5285 = vmatpush.msra.mxu0 %v5244
    %5286 = vmatpush.msra.mxu0 %v5243
    %5287 = vmatpush.msra.mxu0 %v5242
    %5288 = vmatpush.msra.mxu0 %v5241
    %5289 = vmatpush.msra.mxu0 %v5240
    %5290 = vmatpush.msra.mxu0 %v5239
    %5291 = vmatmul.f32.gmra.mxu0 %v5235
    %v5292 = vpop.f32.mrf.mxu0
    %v5293 = vadd.f32 %v5273, %v5292
    %5294 = vmatmul.f32.gmra.mxu0 %v5237
    %v5295 = vpop.f32.mrf.mxu0
    %v5296 = vadd.f32 %v5273, %v5295
    %5297 = vdwg.mxu0
    %5298 = vmatpush.msra.mxu0 %v5270
    %5299 = vmatpush.msra.mxu0 %v5269
    %5300 = vmatpush.msra.mxu0 %v5268
    %5301 = vmatpush.msra.mxu0 %v5267
    %5302 = vmatpush.msra.mxu0 %v5266
    %5303 = vmatpush.msra.mxu0 %v5265
    %5304 = vmatpush.msra.mxu0 %v5264
    %5305 = vmatpush.msra.mxu0 %v5263
    %5306 = vmatpush.msra.mxu0 %v5262
    %5307 = vmatpush.msra.mxu0 %v5261
    %5308 = vmatpush.msra.mxu0 %v5260
    %5309 = vmatpush.msra.mxu0 %v5259
    %5310 = vmatpush.msra.mxu0 %v5258
    %5311 = vmatpush.msra.mxu0 %v5257
    %5312 = vmatpush.msra.mxu0 %v5256
    %5313 = vmatpush.msra.mxu0 %v5255
    %5314 = vmatmul.f32.gmra.mxu0 %v5236
    %v5315 = vpop.f32.mrf.mxu0
    %v5316 = vadd.f32 %v5293, %v5315
    %5317 = vmatmul.f32.gmra.mxu0 %v5238
    %v5318 = vpop.f32.mrf.mxu0
    %v5319 = vadd.f32 %v5296, %v5318
    %5320 = vdwg.mxu0
    %v5321 = vld [vmem:[%s8] sm:$0xff]
    %v5322 = vld [vmem:[%s8 + $0x8] sm:$0xff]
    %v5323 = vld [vmem:[%s8 + $0x10] sm:$0xff]
    %v5324 = vld [vmem:[%s8 + $0x18] sm:$0xff]
    %v5325 = vld [vmem:[%s8 + $0x20] sm:$0xff]
    %v5326 = vld [vmem:[%s8 + $0x28] sm:$0xff]
    %v5327 = vld [vmem:[%s8 + $0x30] sm:$0xff]
    %v5328 = vld [vmem:[%s8 + $0x38] sm:$0xff]
    %v5329 = vld [vmem:[%s8 + $0x40] sm:$0xff]
    %v5330 = vld [vmem:[%s8 + $0x48] sm:$0xff]
    %v5331 = vld [vmem:[%s8 + $0x50] sm:$0xff]
    %v5332 = vld [vmem:[%s8 + $0x58] sm:$0xff]
    %v5333 = vld [vmem:[%s8 + $0x60] sm:$0xff]
    %v5334 = vld [vmem:[%s8 + $0x68] sm:$0xff]
    %v5335 = vld [vmem:[%s8 + $0x70] sm:$0xff]
    %v5336 = vld [vmem:[%s8 + $0x78] sm:$0xff]
    %v5337 = vld [vmem:[%s8 + $0x80] sm:$0xff]
    %v5338 = vld [vmem:[%s8 + $0x88] sm:$0xff]
    %v5339 = vld [vmem:[%s8 + $0x90] sm:$0xff]
    %v5340 = vld [vmem:[%s8 + $0x98] sm:$0xff]
    %v5341 = vld [vmem:[%s8 + $0xa0] sm:$0xff]
    %v5342 = vld [vmem:[%s8 + $0xa8] sm:$0xff]
    %v5343 = vld [vmem:[%s8 + $0xb0] sm:$0xff]
    %v5344 = vld [vmem:[%s8 + $0xb8] sm:$0xff]
    %v5345 = vld [vmem:[%s8 + $0xc0] sm:$0xff]
    %v5346 = vld [vmem:[%s8 + $0xc8] sm:$0xff]
    %v5347 = vld [vmem:[%s8 + $0xd0] sm:$0xff]
    %v5348 = vld [vmem:[%s8 + $0xd8] sm:$0xff]
    %v5349 = vld [vmem:[%s8 + $0xe0] sm:$0xff]
    %v5350 = vld [vmem:[%s8 + $0xe8] sm:$0xff]
    %v5351 = vld [vmem:[%s8 + $0xf0] sm:$0xff]
    %v5352 = vld [vmem:[%s8 + $0xf8] sm:$0xff]
    %v5353 = vld [vmem:[%s9] sm:$0x1]
    %v5355 = vperm.slane %v5353, 0
    %5357 = vmatpush.msra.mxu0 %v5336
    %5358 = vmatpush.msra.mxu0 %v5335
    %5359 = vmatpush.msra.mxu0 %v5334
    %5360 = vmatpush.msra.mxu0 %v5333
    %5361 = vmatpush.msra.mxu0 %v5332
    %5362 = vmatpush.msra.mxu0 %v5331
    %5363 = vmatpush.msra.mxu0 %v5330
    %5364 = vmatpush.msra.mxu0 %v5329
    %5365 = vmatpush.msra.mxu0 %v5328
    %5366 = vmatpush.msra.mxu0 %v5327
    %5367 = vmatpush.msra.mxu0 %v5326
    %5368 = vmatpush.msra.mxu0 %v5325
    %5369 = vmatpush.msra.mxu0 %v5324
    %5370 = vmatpush.msra.mxu0 %v5323
    %5371 = vmatpush.msra.mxu0 %v5322
    %5372 = vmatpush.msra.mxu0 %v5321
    %5373 = vmatmul.f32.gmra.mxu0 %v5235
    %v5374 = vpop.f32.mrf.mxu0
    %v5375 = vadd.f32 %v5355, %v5374
    %5376 = vmatmul.f32.gmra.mxu0 %v5237
    %v5377 = vpop.f32.mrf.mxu0
    %v5378 = vadd.f32 %v5355, %v5377
    %5379 = vdwg.mxu0
    %5380 = vmatpush.msra.mxu0 %v5352
    %5381 = vmatpush.msra.mxu0 %v5351
    %5382 = vmatpush.msra.mxu0 %v5350
    %5383 = vmatpush.msra.mxu0 %v5349
    %5384 = vmatpush.msra.mxu0 %v5348
    %5385 = vmatpush.msra.mxu0 %v5347
    %5386 = vmatpush.msra.mxu0 %v5346
    %5387 = vmatpush.msra.mxu0 %v5345
    %5388 = vmatpush.msra.mxu0 %v5344
    %5389 = vmatpush.msra.mxu0 %v5343
    %5390 = vmatpush.msra.mxu0 %v5342
    %5391 = vmatpush.msra.mxu0 %v5341
    %5392 = vmatpush.msra.mxu0 %v5340
    %5393 = vmatpush.msra.mxu0 %v5339
    %5394 = vmatpush.msra.mxu0 %v5338
    %5395 = vmatpush.msra.mxu0 %v5337
    %5396 = vmatmul.f32.gmra.mxu0 %v5236
    %v5397 = vpop.f32.mrf.mxu0
    %v5398 = vadd.f32 %v5375, %v5397
    %5399 = vmatmul.f32.gmra.mxu0 %v5238
    %v5400 = vpop.f32.mrf.mxu0
    %v5401 = vadd.f32 %v5378, %v5400
    %5402 = vdwg.mxu0
    %v5403 = vadd.f32 %v5398, 1.0
    %v5404 = vadd.f32 %v5401, 1.0
    %v5405 = vmul.f32 %v5316, %v5316
    %v5406 = vmul.f32 %v5319, %v5319
    %v5407 = vsub.f32 %v5403, %v5405
    %v5408 = vsub.f32 %v5404, %v5406
    %v5409 = vmul.f32 %v5398, 1.442695
    %v5410 = vpow.pop %v5409
    %v5411 = vmul.f32 %v5401, 1.442695
    %v5412 = vpow.pop %v5411
    %v5413 = vsub.f32 %v5407, %v5410
    %v5414 = vsub.f32 %v5408, %v5412
    %v5415 = vlaneseq
    %v5416 = vshrl.u32 %v5415, 7
    %v5417 = vadd.s32 %v5416, 8
    %s5418 = smul.u32 0, 16
    %v5419 = vstv %s5418
    %v5420 = vadd.s32 %v5416, %v5419
    %v5421 = vadd.s32 %v5417, %v5419
    %vm5422 = vcmp.lt.s32.totalorder %v5420, 2
    %vm5423 = vcmp.lt.s32.totalorder %v5421, 2
    %v5424 = vsel %vm5422, 1, 0
    %v5425 = vsel %vm5423, 1, 0
    %vm5426 = vcmp.eq.s32.totalorder %v5424, 1
    %vm5427 = vcmp.eq.s32.totalorder %v5425, 1
    %v5428 = vsel %vm5426, %v5413, 0.0
    %v5429 = vsel %vm5427, %v5414, 0.0
    %vm5430 = vcmask 64512
    %v5431 = vsel %vm5430, %v5428, 0.0
    %v5432 = vsel %vm5430, %v5429, 0.0
    %v5433 = vadd.f32 %v5431, %v5432
    %5434 = vadd.xlane.f32.xlu0 %v5433
    %v5435 = vpop.xlane.xlu0 %5434
    %v5436 = vrot.slane %v5435, 4
    %v5437 = vadd.f32 %v5435, %v5436
    %v5438 = vrot.slane %v5437, 2
    %v5439 = vadd.f32 %v5437, %v5438
    %v5440 = vrot.slane %v5439, 1
    %v5441 = vadd.f32 %v5439, %v5440
    %s5442 = vtos %v5441
    %s5443 = smul.f32 %s5442, -0.5
    %v5444 = vstv %s5443
    %vm5445 = vcmask 0
    %5446 = vst.msk [vmem:[#allocation2] sm:$0x1] %vm5445, %v5444
    %v5447 = vmul.f32 %v5398, 0.5
    %v5448 = vmul.f32 %v5401, 0.5
    %v5449 = vmul.f32 %v5447, 1.442695
    %v5450 = vpow.pop %v5449
    %v5451 = vmul.f32 %v5448, 1.442695
    %v5452 = vpow.pop %v5451
    %v5453 = vld [vmem:[%s1] sm:$0xff]
    %v5454 = vld [vmem:[%s1 + $0x8] sm:$0xff]
    %v5455 = vmul.f32 %v5450, %v5453
    %v5456 = vmul.f32 %v5452, %v5454
    %v5457 = vadd.f32 %v5316, %v5455
    %v5458 = vadd.f32 %v5319, %v5456
    %v5459 = vld [vmem:[%s10] sm:$0xff]
    %v5460 = vld [vmem:[%s10 + $0x8] sm:$0xff]
    %v5461 = vld [vmem:[%s11] sm:$0x3]
    %v5463 = vperm.slane %v5461, 0
    %v5464 = vperm.slane %v5461, 1
    %v5468 = vsel %vm5430, %v5457, 0
    %v5471 = vsel %vm5430, %v5458, 0
    %5473 = vmatpush.msra.mxu0 0.0
    %5474 = vmatpush.msra.mxu0 0.0
    %5475 = vmatpush.msra.mxu0 0.0
    %5476 = vmatpush.msra.mxu0 0.0
    %5477 = vmatpush.msra.mxu0 0.0
    %5478 = vmatpush.msra.mxu0 0.0
    %5479 = vmatpush.msra.mxu0 0.0
    %5480 = vmatpush.msra.mxu0 0.0
    %5481 = vmatpush.msra.mxu0 0.0
    %5482 = vmatpush.msra.mxu0 0.0
    %5483 = vmatpush.msra.mxu0 0.0
    %5484 = vmatpush.msra.mxu0 0.0
    %5485 = vmatpush.msra.mxu0 0.0
    %5486 = vmatpush.msra.mxu0 0.0
    %5487 = vmatpush.msra.mxu0 0.0
    %5488 = vmatpush.msra.mxu0 %v5459
    %5489 = vmatmul.f32.gmra.mxu0 %v5468
    %v5490 = vpop.f32.mrf.mxu0
    %v5491 = vadd.f32 %v5463, %v5490
    %5492 = vmatmul.f32.gmra.mxu0 %v5471
    %v5493 = vpop.f32.mrf.mxu0
    %v5494 = vadd.f32 %v5463, %v5493
    %5495 = vdwg.mxu0
    %5496 = vmatpush.msra.mxu0 0.0
    %5497 = vmatpush.msra.mxu0 0.0
    %5498 = vmatpush.msra.mxu0 0.0
    %5499 = vmatpush.msra.mxu0 0.0
    %5500 = vmatpush.msra.mxu0 0.0
    %5501 = vmatpush.msra.mxu0 0.0
    %5502 = vmatpush.msra.mxu0 0.0
    %5503 = vmatpush.msra.mxu0 0.0
    %5504 = vmatpush.msra.mxu0 0.0
    %5505 = vmatpush.msra.mxu0 0.0
    %5506 = vmatpush.msra.mxu0 0.0
    %5507 = vmatpush.msra.mxu0 0.0
    %5508 = vmatpush.msra.mxu0 0.0
    %5509 = vmatpush.msra.mxu0 0.0
    %5510 = vmatpush.msra.mxu0 0.0
    %5511 = vmatpush.msra.mxu0 %v5460
    %5512 = vmatmul.f32.gmra.mxu0 %v5468
    %v5513 = vpop.f32.mrf.mxu0
    %v5514 = vadd.f32 %v5464, %v5513
    %5515 = vmatmul.f32.gmra.mxu0 %v5471
    %v5516 = vpop.f32.mrf.mxu0
    %v5517 = vadd.f32 %v5464, %v5516
    %5518 = vdwg.mxu0
    %v5519 = vmax.f32 %v5491, 0.0
    %v5520 = vmax.f32 %v5514, 0.0
    %v5521 = vmax.f32 %v5494, 0.0
    %v5522 = vmax.f32 %v5517, 0.0
    %v5523 = vpack.c.bf16 %v5521, %v5519
    %v5524 = vpack.c.bf16 %v5522, %v5520
    %v5525 = vld [vmem:[%s12] sm:$0xff]
    %v5526 = vld [vmem:[%s12 + $0x8] sm:$0xff]
    %v5527 = vld [vmem:[%s12 + $0x10] sm:$0xff]
    %v5528 = vld [vmem:[%s12 + $0x18] sm:$0xff]
    %v5529 = vld [vmem:[%s12 + $0x20] sm:$0xff]
    %v5530 = vld [vmem:[%s12 + $0x28] sm:$0xff]
    %v5531 = vld [vmem:[%s12 + $0x30] sm:$0xff]
    %v5532 = vld [vmem:[%s12 + $0x38] sm:$0xff]
    %v5533 = vld [vmem:[%s12 + $0x40] sm:$0xff]
    %v5534 = vld [vmem:[%s12 + $0x48] sm:$0xff]
    %v5535 = vld [vmem:[%s12 + $0x50] sm:$0xff]
    %v5536 = vld [vmem:[%s12 + $0x58] sm:$0xff]
    %v5537 = vld [vmem:[%s12 + $0x60] sm:$0xff]
    %v5538 = vld [vmem:[%s12 + $0x68] sm:$0xff]
    %v5539 = vld [vmem:[%s12 + $0x70] sm:$0xff]
    %v5540 = vld [vmem:[%s12 + $0x78] sm:$0xff]
    %v5541 = vld [vmem:[%s12 + $0x80] sm:$0xff]
    %v5542 = vld [vmem:[%s12 + $0x88] sm:$0xff]
    %v5543 = vld [vmem:[%s12 + $0x90] sm:$0xff]
    %v5544 = vld [vmem:[%s12 + $0x98] sm:$0xff]
    %v5545 = vld [vmem:[%s12 + $0xa0] sm:$0xff]
    %v5546 = vld [vmem:[%s12 + $0xa8] sm:$0xff]
    %v5547 = vld [vmem:[%s12 + $0xb0] sm:$0xff]
    %v5548 = vld [vmem:[%s12 + $0xb8] sm:$0xff]
    %v5549 = vld [vmem:[%s12 + $0xc0] sm:$0xff]
    %v5550 = vld [vmem:[%s12 + $0xc8] sm:$0xff]
    %v5551 = vld [vmem:[%s12 + $0xd0] sm:$0xff]
    %v5552 = vld [vmem:[%s12 + $0xd8] sm:$0xff]
    %v5553 = vld [vmem:[%s12 + $0xe0] sm:$0xff]
    %v5554 = vld [vmem:[%s12 + $0xe8] sm:$0xff]
    %v5555 = vld [vmem:[%s12 + $0xf0] sm:$0xff]
    %v5556 = vld [vmem:[%s12 + $0xf8] sm:$0xff]
    %v5557 = vld [vmem:[%s12 + $0x100] sm:$0xff]
    %v5558 = vld [vmem:[%s12 + $0x108] sm:$0xff]
    %v5559 = vld [vmem:[%s12 + $0x110] sm:$0xff]
    %v5560 = vld [vmem:[%s12 + $0x118] sm:$0xff]
    %v5561 = vld [vmem:[%s12 + $0x120] sm:$0xff]
    %v5562 = vld [vmem:[%s12 + $0x128] sm:$0xff]
    %v5563 = vld [vmem:[%s12 + $0x130] sm:$0xff]
    %v5564 = vld [vmem:[%s12 + $0x138] sm:$0xff]
    %v5565 = vld [vmem:[%s12 + $0x140] sm:$0xff]
    %v5566 = vld [vmem:[%s12 + $0x148] sm:$0xff]
    %v5567 = vld [vmem:[%s12 + $0x150] sm:$0xff]
    %v5568 = vld [vmem:[%s12 + $0x158] sm:$0xff]
    %v5569 = vld [vmem:[%s12 + $0x160] sm:$0xff]
    %v5570 = vld [vmem:[%s12 + $0x168] sm:$0xff]
    %v5571 = vld [vmem:[%s12 + $0x170] sm:$0xff]
    %v5572 = vld [vmem:[%s12 + $0x178] sm:$0xff]
    %v5573 = vld [vmem:[%s12 + $0x180] sm:$0xff]
    %v5574 = vld [vmem:[%s12 + $0x188] sm:$0xff]
    %v5575 = vld [vmem:[%s12 + $0x190] sm:$0xff]
    %v5576 = vld [vmem:[%s12 + $0x198] sm:$0xff]
    %v5577 = vld [vmem:[%s12 + $0x1a0] sm:$0xff]
    %v5578 = vld [vmem:[%s12 + $0x1a8] sm:$0xff]
    %v5579 = vld [vmem:[%s12 + $0x1b0] sm:$0xff]
    %v5580 = vld [vmem:[%s12 + $0x1b8] sm:$0xff]
    %v5581 = vld [vmem:[%s12 + $0x1c0] sm:$0xff]
    %v5582 = vld [vmem:[%s12 + $0x1c8] sm:$0xff]
    %v5583 = vld [vmem:[%s12 + $0x1d0] sm:$0xff]
    %v5584 = vld [vmem:[%s12 + $0x1d8] sm:$0xff]
    %v5585 = vld [vmem:[%s12 + $0x1e0] sm:$0xff]
    %v5586 = vld [vmem:[%s12 + $0x1e8] sm:$0xff]
    %v5587 = vld [vmem:[%s12 + $0x1f0] sm:$0xff]
    %v5588 = vld [vmem:[%s12 + $0x1f8] sm:$0xff]
    %v5589 = vld [vmem:[%s13] sm:$0xf]
    %v5591 = vperm.slane %v5589, 0
    %v5592 = vperm.slane %v5589, 1
    %v5593 = vperm.slane %v5589, 2
    %v5594 = vperm.slane %v5589, 3
    %v5663 = vunpack.c.l.b16 %v5525
    %v5664 = vunpack.c.h.b16 %v5525
    %v5665 = vunpack.c.l.b16 %v5526
    %v5666 = vunpack.c.h.b16 %v5526
    %v5667 = vunpack.c.l.b16 %v5527
    %v5668 = vunpack.c.h.b16 %v5527
    %v5669 = vunpack.c.l.b16 %v5528
    %v5670 = vunpack.c.h.b16 %v5528
    %v5671 = vunpack.c.l.b16 %v5529
    %v5672 = vunpack.c.h.b16 %v5529
    %v5673 = vunpack.c.l.b16 %v5530
    %v5674 = vunpack.c.h.b16 %v5530
    %v5675 = vunpack.c.l.b16 %v5531
    %v5676 = vunpack.c.h.b16 %v5531
    %v5677 = vunpack.c.l.b16 %v5532
    %v5678 = vunpack.c.h.b16 %v5532
    %v5679 = vunpack.c.l.b16 %v5533
    %v5680 = vunpack.c.h.b16 %v5533
    %v5681 = vunpack.c.l.b16 %v5534
    %v5682 = vunpack.c.h.b16 %v5534
    %v5683 = vunpack.c.l.b16 %v5535
    %v5684 = vunpack.c.h.b16 %v5535
    %v5685 = vunpack.c.l.b16 %v5536
    %v5686 = vunpack.c.h.b16 %v5536
    %v5687 = vunpack.c.l.b16 %v5537
    %v5688 = vunpack.c.h.b16 %v5537
    %v5689 = vunpack.c.l.b16 %v5538
    %v5690 = vunpack.c.h.b16 %v5538
    %v5691 = vunpack.c.l.b16 %v5539
    %v5692 = vunpack.c.h.b16 %v5539
    %v5693 = vunpack.c.l.b16 %v5540
    %v5694 = vunpack.c.h.b16 %v5540
    %v5695 = vunpack.c.l.b16 %v5541
    %v5696 = vunpack.c.h.b16 %v5541
    %v5697 = vunpack.c.l.b16 %v5542
    %v5698 = vunpack.c.h.b16 %v5542
    %v5699 = vunpack.c.l.b16 %v5543
    %v5700 = vunpack.c.h.b16 %v5543
    %v5701 = vunpack.c.l.b16 %v5544
    %v5702 = vunpack.c.h.b16 %v5544
    %v5703 = vunpack.c.l.b16 %v5545
    %v5704 = vunpack.c.h.b16 %v5545
    %v5705 = vunpack.c.l.b16 %v5546
    %v5706 = vunpack.c.h.b16 %v5546
    %v5707 = vunpack.c.l.b16 %v5547
    %v5708 = vunpack.c.h.b16 %v5547
    %v5709 = vunpack.c.l.b16 %v5548
    %v5710 = vunpack.c.h.b16 %v5548
    %v5711 = vunpack.c.l.b16 %v5549
    %v5712 = vunpack.c.h.b16 %v5549
    %v5713 = vunpack.c.l.b16 %v5550
    %v5714 = vunpack.c.h.b16 %v5550
    %v5715 = vunpack.c.l.b16 %v5551
    %v5716 = vunpack.c.h.b16 %v5551
    %v5717 = vunpack.c.l.b16 %v5552
    %v5718 = vunpack.c.h.b16 %v5552
    %v5719 = vunpack.c.l.b16 %v5553
    %v5720 = vunpack.c.h.b16 %v5553
    %v5721 = vunpack.c.l.b16 %v5554
    %v5722 = vunpack.c.h.b16 %v5554
    %v5723 = vunpack.c.l.b16 %v5555
    %v5724 = vunpack.c.h.b16 %v5555
    %v5725 = vunpack.c.l.b16 %v5556
    %v5726 = vunpack.c.h.b16 %v5556
    %v5727 = vunpack.c.l.b16 %v5557
    %v5728 = vunpack.c.h.b16 %v5557
    %v5729 = vunpack.c.l.b16 %v5558
    %v5730 = vunpack.c.h.b16 %v5558
    %v5731 = vunpack.c.l.b16 %v5559
    %v5732 = vunpack.c.h.b16 %v5559
    %v5733 = vunpack.c.l.b16 %v5560
    %v5734 = vunpack.c.h.b16 %v5560
    %v5735 = vunpack.c.l.b16 %v5561
    %v5736 = vunpack.c.h.b16 %v5561
    %v5737 = vunpack.c.l.b16 %v5562
    %v5738 = vunpack.c.h.b16 %v5562
    %v5739 = vunpack.c.l.b16 %v5563
    %v5740 = vunpack.c.h.b16 %v5563
    %v5741 = vunpack.c.l.b16 %v5564
    %v5742 = vunpack.c.h.b16 %v5564
    %v5743 = vunpack.c.l.b16 %v5565
    %v5744 = vunpack.c.h.b16 %v5565
    %v5745 = vunpack.c.l.b16 %v5566
    %v5746 = vunpack.c.h.b16 %v5566
    %v5747 = vunpack.c.l.b16 %v5567
    %v5748 = vunpack.c.h.b16 %v5567
    %v5749 = vunpack.c.l.b16 %v5568
    %v5750 = vunpack.c.h.b16 %v5568
    %v5751 = vunpack.c.l.b16 %v5569
    %v5752 = vunpack.c.h.b16 %v5569
    %v5753 = vunpack.c.l.b16 %v5570
    %v5754 = vunpack.c.h.b16 %v5570
    %v5755 = vunpack.c.l.b16 %v5571
    %v5756 = vunpack.c.h.b16 %v5571
    %v5757 = vunpack.c.l.b16 %v5572
    %v5758 = vunpack.c.h.b16 %v5572
    %v5759 = vunpack.c.l.b16 %v5573
    %v5760 = vunpack.c.h.b16 %v5573
    %v5761 = vunpack.c.l.b16 %v5574
    %v5762 = vunpack.c.h.b16 %v5574
    %v5763 = vunpack.c.l.b16 %v5575
    %v5764 = vunpack.c.h.b16 %v5575
    %v5765 = vunpack.c.l.b16 %v5576
    %v5766 = vunpack.c.h.b16 %v5576
    %v5767 = vunpack.c.l.b16 %v5577
    %v5768 = vunpack.c.h.b16 %v5577
    %v5769 = vunpack.c.l.b16 %v5578
    %v5770 = vunpack.c.h.b16 %v5578
    %v5771 = vunpack.c.l.b16 %v5579
    %v5772 = vunpack.c.h.b16 %v5579
    %v5773 = vunpack.c.l.b16 %v5580
    %v5774 = vunpack.c.h.b16 %v5580
    %v5775 = vunpack.c.l.b16 %v5581
    %v5776 = vunpack.c.h.b16 %v5581
    %v5777 = vunpack.c.l.b16 %v5582
    %v5778 = vunpack.c.h.b16 %v5582
    %v5779 = vunpack.c.l.b16 %v5583
    %v5780 = vunpack.c.h.b16 %v5583
    %v5781 = vunpack.c.l.b16 %v5584
    %v5782 = vunpack.c.h.b16 %v5584
    %v5783 = vunpack.c.l.b16 %v5585
    %v5784 = vunpack.c.h.b16 %v5585
    %v5785 = vunpack.c.l.b16 %v5586
    %v5786 = vunpack.c.h.b16 %v5586
    %v5787 = vunpack.c.l.b16 %v5587
    %v5788 = vunpack.c.h.b16 %v5587
    %v5789 = vunpack.c.l.b16 %v5588
    %v5790 = vunpack.c.h.b16 %v5588
    %v5791 = vpack.c.b16 %v5667, %v5663
    %v5792 = vpack.c.b16 %v5668, %v5664
    %v5793 = vpack.c.b16 %v5669, %v5665
    %v5794 = vpack.c.b16 %v5670, %v5666
    %v5795 = vpack.c.b16 %v5675, %v5671
    %v5796 = vpack.c.b16 %v5676, %v5672
    %v5797 = vpack.c.b16 %v5677, %v5673
    %v5798 = vpack.c.b16 %v5678, %v5674
    %v5799 = vpack.c.b16 %v5683, %v5679
    %v5800 = vpack.c.b16 %v5684, %v5680
    %v5801 = vpack.c.b16 %v5685, %v5681
    %v5802 = vpack.c.b16 %v5686, %v5682
    %v5803 = vpack.c.b16 %v5691, %v5687
    %v5804 = vpack.c.b16 %v5692, %v5688
    %v5805 = vpack.c.b16 %v5693, %v5689
    %v5806 = vpack.c.b16 %v5694, %v5690
    %v5807 = vpack.c.b16 %v5699, %v5695
    %v5808 = vpack.c.b16 %v5700, %v5696
    %v5809 = vpack.c.b16 %v5701, %v5697
    %v5810 = vpack.c.b16 %v5702, %v5698
    %v5811 = vpack.c.b16 %v5707, %v5703
    %v5812 = vpack.c.b16 %v5708, %v5704
    %v5813 = vpack.c.b16 %v5709, %v5705
    %v5814 = vpack.c.b16 %v5710, %v5706
    %v5815 = vpack.c.b16 %v5715, %v5711
    %v5816 = vpack.c.b16 %v5716, %v5712
    %v5817 = vpack.c.b16 %v5717, %v5713
    %v5818 = vpack.c.b16 %v5718, %v5714
    %v5819 = vpack.c.b16 %v5723, %v5719
    %v5820 = vpack.c.b16 %v5724, %v5720
    %v5821 = vpack.c.b16 %v5725, %v5721
    %v5822 = vpack.c.b16 %v5726, %v5722
    %v5823 = vpack.c.b16 %v5731, %v5727
    %v5824 = vpack.c.b16 %v5732, %v5728
    %v5825 = vpack.c.b16 %v5733, %v5729
    %v5826 = vpack.c.b16 %v5734, %v5730
    %v5827 = vpack.c.b16 %v5739, %v5735
    %v5828 = vpack.c.b16 %v5740, %v5736
    %v5829 = vpack.c.b16 %v5741, %v5737
    %v5830 = vpack.c.b16 %v5742, %v5738
    %v5831 = vpack.c.b16 %v5747, %v5743
    %v5832 = vpack.c.b16 %v5748, %v5744
    %v5833 = vpack.c.b16 %v5749, %v5745
    %v5834 = vpack.c.b16 %v5750, %v5746
    %v5835 = vpack.c.b16 %v5755, %v5751
    %v5836 = vpack.c.b16 %v5756, %v5752
    %v5837 = vpack.c.b16 %v5757, %v5753
    %v5838 = vpack.c.b16 %v5758, %v5754
    %v5839 = vpack.c.b16 %v5763, %v5759
    %v5840 = vpack.c.b16 %v5764, %v5760
    %v5841 = vpack.c.b16 %v5765, %v5761
    %v5842 = vpack.c.b16 %v5766, %v5762
    %v5843 = vpack.c.b16 %v5771, %v5767
    %v5844 = vpack.c.b16 %v5772, %v5768
    %v5845 = vpack.c.b16 %v5773, %v5769
    %v5846 = vpack.c.b16 %v5774, %v5770
    %v5847 = vpack.c.b16 %v5779, %v5775
    %v5848 = vpack.c.b16 %v5780, %v5776
    %v5849 = vpack.c.b16 %v5781, %v5777
    %v5850 = vpack.c.b16 %v5782, %v5778
    %v5851 = vpack.c.b16 %v5787, %v5783
    %v5852 = vpack.c.b16 %v5788, %v5784
    %v5853 = vpack.c.b16 %v5789, %v5785
    %v5854 = vpack.c.b16 %v5790, %v5786
    %5919 = vmatpush.bf16.msra.mxu0 %v5819
    %5920 = vmatpush.bf16.msra.mxu0 %v5815
    %5921 = vmatpush.bf16.msra.mxu0 %v5811
    %5922 = vmatpush.bf16.msra.mxu0 %v5807
    %5923 = vmatpush.bf16.msra.mxu0 %v5803
    %5924 = vmatpush.bf16.msra.mxu0 %v5799
    %5925 = vmatpush.bf16.msra.mxu0 %v5795
    %5926 = vmatpush.bf16.msra.mxu0 %v5791
    %5927 = vmatmul.bf16.gmra.mxu0 %v5523
    %v5928 = vpop.f32.mrf.mxu0
    %v5929 = vadd.f32 %v5591, %v5928
    %v5930 = vpop.f32.mrf.mxu0
    %v5931 = vadd.f32 %v5591, %v5930
    %5932 = vdwg.mxu0
    %5933 = vmatpush.bf16.msra.mxu0 %v5851
    %5934 = vmatpush.bf16.msra.mxu0 %v5847
    %5935 = vmatpush.bf16.msra.mxu0 %v5843
    %5936 = vmatpush.bf16.msra.mxu0 %v5839
    %5937 = vmatpush.bf16.msra.mxu0 %v5835
    %5938 = vmatpush.bf16.msra.mxu0 %v5831
    %5939 = vmatpush.bf16.msra.mxu0 %v5827
    %5940 = vmatpush.bf16.msra.mxu0 %v5823
    %5941 = vmatmul.bf16.gmra.mxu0 %v5524
    %v5942 = vpop.f32.mrf.mxu0
    %v5943 = vadd.f32 %v5929, %v5942
    %v5944 = vpop.f32.mrf.mxu0
    %v5945 = vadd.f32 %v5931, %v5944
    %5946 = vdwg.mxu0
    %5947 = vmatpush.bf16.msra.mxu0 %v5820
    %5948 = vmatpush.bf16.msra.mxu0 %v5816
    %5949 = vmatpush.bf16.msra.mxu0 %v5812
    %5950 = vmatpush.bf16.msra.mxu0 %v5808
    %5951 = vmatpush.bf16.msra.mxu0 %v5804
    %5952 = vmatpush.bf16.msra.mxu0 %v5800
    %5953 = vmatpush.bf16.msra.mxu0 %v5796
    %5954 = vmatpush.bf16.msra.mxu0 %v5792
    %5955 = vmatmul.bf16.gmra.mxu0 %v5523
    %v5956 = vpop.f32.mrf.mxu0
    %v5957 = vadd.f32 %v5592, %v5956
    %v5958 = vpop.f32.mrf.mxu0
    %v5959 = vadd.f32 %v5592, %v5958
    %5960 = vdwg.mxu0
    %5961 = vmatpush.bf16.msra.mxu0 %v5852
    %5962 = vmatpush.bf16.msra.mxu0 %v5848
    %5963 = vmatpush.bf16.msra.mxu0 %v5844
    %5964 = vmatpush.bf16.msra.mxu0 %v5840
    %5965 = vmatpush.bf16.msra.mxu0 %v5836
    %5966 = vmatpush.bf16.msra.mxu0 %v5832
    %5967 = vmatpush.bf16.msra.mxu0 %v5828
    %5968 = vmatpush.bf16.msra.mxu0 %v5824
    %5969 = vmatmul.bf16.gmra.mxu0 %v5524
    %v5970 = vpop.f32.mrf.mxu0
    %v5971 = vadd.f32 %v5957, %v5970
    %v5972 = vpop.f32.mrf.mxu0
    %v5973 = vadd.f32 %v5959, %v5972
    %5974 = vdwg.mxu0
    %5975 = vmatpush.bf16.msra.mxu0 %v5821
    %5976 = vmatpush.bf16.msra.mxu0 %v5817
    %5977 = vmatpush.bf16.msra.mxu0 %v5813
    %5978 = vmatpush.bf16.msra.mxu0 %v5809
    %5979 = vmatpush.bf16.msra.mxu0 %v5805
    %5980 = vmatpush.bf16.msra.mxu0 %v5801
    %5981 = vmatpush.bf16.msra.mxu0 %v5797
    %5982 = vmatpush.bf16.msra.mxu0 %v5793
    %5983 = vmatmul.bf16.gmra.mxu0 %v5523
    %v5984 = vpop.f32.mrf.mxu0
    %v5985 = vadd.f32 %v5593, %v5984
    %v5986 = vpop.f32.mrf.mxu0
    %v5987 = vadd.f32 %v5593, %v5986
    %5988 = vdwg.mxu0
    %5989 = vmatpush.bf16.msra.mxu0 %v5853
    %5990 = vmatpush.bf16.msra.mxu0 %v5849
    %5991 = vmatpush.bf16.msra.mxu0 %v5845
    %5992 = vmatpush.bf16.msra.mxu0 %v5841
    %5993 = vmatpush.bf16.msra.mxu0 %v5837
    %5994 = vmatpush.bf16.msra.mxu0 %v5833
    %5995 = vmatpush.bf16.msra.mxu0 %v5829
    %5996 = vmatpush.bf16.msra.mxu0 %v5825
    %5997 = vmatmul.bf16.gmra.mxu0 %v5524
    %v5998 = vpop.f32.mrf.mxu0
    %v5999 = vadd.f32 %v5985, %v5998
    %v6000 = vpop.f32.mrf.mxu0
    %v6001 = vadd.f32 %v5987, %v6000
    %6002 = vdwg.mxu0
    %6003 = vmatpush.bf16.msra.mxu0 %v5822
    %6004 = vmatpush.bf16.msra.mxu0 %v5818
    %6005 = vmatpush.bf16.msra.mxu0 %v5814
    %6006 = vmatpush.bf16.msra.mxu0 %v5810
    %6007 = vmatpush.bf16.msra.mxu0 %v5806
    %6008 = vmatpush.bf16.msra.mxu0 %v5802
    %6009 = vmatpush.bf16.msra.mxu0 %v5798
    %6010 = vmatpush.bf16.msra.mxu0 %v5794
    %6011 = vmatmul.bf16.gmra.mxu0 %v5523
    %v6012 = vpop.f32.mrf.mxu0
    %v6013 = vadd.f32 %v5594, %v6012
    %v6014 = vpop.f32.mrf.mxu0
    %v6015 = vadd.f32 %v5594, %v6014
    %6016 = vdwg.mxu0
    %6017 = vmatpush.bf16.msra.mxu0 %v5854
    %6018 = vmatpush.bf16.msra.mxu0 %v5850
    %6019 = vmatpush.bf16.msra.mxu0 %v5846
    %6020 = vmatpush.bf16.msra.mxu0 %v5842
    %6021 = vmatpush.bf16.msra.mxu0 %v5838
    %6022 = vmatpush.bf16.msra.mxu0 %v5834
    %6023 = vmatpush.bf16.msra.mxu0 %v5830
    %6024 = vmatpush.bf16.msra.mxu0 %v5826
    %6025 = vmatmul.bf16.gmra.mxu0 %v5524
    %v6026 = vpop.f32.mrf.mxu0
    %v6027 = vadd.f32 %v6013, %v6026
    %v6028 = vpop.f32.mrf.mxu0
    %v6029 = vadd.f32 %v6015, %v6028
    %6030 = vdwg.mxu0
    %v6031 = vmax.f32 %v5943, 0.0
    %v6032 = vmax.f32 %v5971, 0.0
    %v6033 = vmax.f32 %v5999, 0.0
    %v6034 = vmax.f32 %v6027, 0.0
    %v6035 = vmax.f32 %v5945, 0.0
    %v6036 = vmax.f32 %v5973, 0.0
    %v6037 = vmax.f32 %v6001, 0.0
    %v6038 = vmax.f32 %v6029, 0.0
    %v6039 = vpack.c.bf16 %v6035, %v6031
    %v6040 = vpack.c.bf16 %v6036, %v6032
    %v6041 = vpack.c.bf16 %v6037, %v6033
    %v6042 = vpack.c.bf16 %v6038, %v6034
    %v6043 = vld [vmem:[%s14] sm:$0xff]
    %v6044 = vld [vmem:[%s14 + $0x8] sm:$0xff]
    %v6045 = vld [vmem:[%s14 + $0x10] sm:$0xff]
    %v6046 = vld [vmem:[%s14 + $0x18] sm:$0xff]
    %v6047 = vld [vmem:[%s14 + $0x20] sm:$0xff]
    %v6048 = vld [vmem:[%s14 + $0x28] sm:$0xff]
    %v6049 = vld [vmem:[%s14 + $0x30] sm:$0xff]
    %v6050 = vld [vmem:[%s14 + $0x38] sm:$0xff]
    %v6051 = vld [vmem:[%s14 + $0x40] sm:$0xff]
    %v6052 = vld [vmem:[%s14 + $0x48] sm:$0xf]
    %v6053 = vld [vmem:[%s14 + $0x4c] sm:$0xff]
    %v6054 = vld [vmem:[%s14 + $0x54] sm:$0xff]
    %v6055 = vld [vmem:[%s14 + $0x5c] sm:$0xff]
    %v6056 = vld [vmem:[%s14 + $0x64] sm:$0xff]
    %v6057 = vld [vmem:[%s14 + $0x6c] sm:$0xff]
    %v6058 = vld [vmem:[%s14 + $0x74] sm:$0xff]
    %v6059 = vld [vmem:[%s14 + $0x7c] sm:$0xff]
    %v6060 = vld [vmem:[%s14 + $0x84] sm:$0xff]
    %v6061 = vld [vmem:[%s14 + $0x8c] sm:$0xff]
    %v6062 = vld [vmem:[%s14 + $0x94] sm:$0xf]
    %v6063 = vld [vmem:[%s14 + $0x98] sm:$0xff]
    %v6064 = vld [vmem:[%s14 + $0xa0] sm:$0xff]
    %v6065 = vld [vmem:[%s14 + $0xa8] sm:$0xff]
    %v6066 = vld [vmem:[%s14 + $0xb0] sm:$0xff]
    %v6067 = vld [vmem:[%s14 + $0xb8] sm:$0xff]
    %v6068 = vld [vmem:[%s14 + $0xc0] sm:$0xff]
    %v6069 = vld [vmem:[%s14 + $0xc8] sm:$0xff]
    %v6070 = vld [vmem:[%s14 + $0xd0] sm:$0xff]
    %v6071 = vld [vmem:[%s14 + $0xd8] sm:$0xff]
    %v6072 = vld [vmem:[%s14 + $0xe0] sm:$0xf]
    %v6073 = vld [vmem:[%s14 + $0xe4] sm:$0xff]
    %v6074 = vld [vmem:[%s14 + $0xec] sm:$0xff]
    %v6075 = vld [vmem:[%s14 + $0xf4] sm:$0xff]
    %v6076 = vld [vmem:[%s14 + $0xfc] sm:$0xff]
    %v6077 = vld [vmem:[%s14 + $0x104] sm:$0xff]
    %v6078 = vld [vmem:[%s14 + $0x10c] sm:$0xff]
    %v6079 = vld [vmem:[%s14 + $0x114] sm:$0xff]
    %v6080 = vld [vmem:[%s14 + $0x11c] sm:$0xff]
    %v6081 = vld [vmem:[%s14 + $0x124] sm:$0xff]
    %v6082 = vld [vmem:[%s14 + $0x12c] sm:$0xf]
    %v6083 = vld [vmem:[%s14 + $0x130] sm:$0xff]
    %v6084 = vld [vmem:[%s14 + $0x138] sm:$0xff]
    %v6085 = vld [vmem:[%s14 + $0x140] sm:$0xff]
    %v6086 = vld [vmem:[%s14 + $0x148] sm:$0xff]
    %v6087 = vld [vmem:[%s14 + $0x150] sm:$0xff]
    %v6088 = vld [vmem:[%s14 + $0x158] sm:$0xff]
    %v6089 = vld [vmem:[%s14 + $0x160] sm:$0xff]
    %v6090 = vld [vmem:[%s14 + $0x168] sm:$0xff]
    %v6091 = vld [vmem:[%s14 + $0x170] sm:$0xff]
    %v6092 = vld [vmem:[%s14 + $0x178] sm:$0xf]
    %v6093 = vld [vmem:[%s14 + $0x17c] sm:$0xff]
    %v6094 = vld [vmem:[%s14 + $0x184] sm:$0xff]
    %v6095 = vld [vmem:[%s14 + $0x18c] sm:$0xff]
    %v6096 = vld [vmem:[%s14 + $0x194] sm:$0xff]
    %v6097 = vld [vmem:[%s14 + $0x19c] sm:$0xff]
    %v6098 = vld [vmem:[%s14 + $0x1a4] sm:$0xff]
    %v6099 = vld [vmem:[%s14 + $0x1ac] sm:$0xff]
    %v6100 = vld [vmem:[%s14 + $0x1b4] sm:$0xff]
    %v6101 = vld [vmem:[%s14 + $0x1bc] sm:$0xff]
    %v6102 = vld [vmem:[%s14 + $0x1c4] sm:$0xf]
    %v6103 = vld [vmem:[%s14 + $0x1c8] sm:$0xff]
    %v6104 = vld [vmem:[%s14 + $0x1d0] sm:$0xff]
    %v6105 = vld [vmem:[%s14 + $0x1d8] sm:$0xff]
    %v6106 = vld [vmem:[%s14 + $0x1e0] sm:$0xff]
    %v6107 = vld [vmem:[%s14 + $0x1e8] sm:$0xff]
    %v6108 = vld [vmem:[%s14 + $0x1f0] sm:$0xff]
    %v6109 = vld [vmem:[%s14 + $0x1f8] sm:$0xff]
    %v6110 = vld [vmem:[%s14 + $0x200] sm:$0xff]
    %v6111 = vld [vmem:[%s14 + $0x208] sm:$0xff]
    %v6112 = vld [vmem:[%s14 + $0x210] sm:$0xf]
    %v6113 = vld [vmem:[%s14 + $0x214] sm:$0xff]
    %v6114 = vld [vmem:[%s14 + $0x21c] sm:$0xff]
    %v6115 = vld [vmem:[%s14 + $0x224] sm:$0xff]
    %v6116 = vld [vmem:[%s14 + $0x22c] sm:$0xff]
    %v6117 = vld [vmem:[%s14 + $0x234] sm:$0xff]
    %v6118 = vld [vmem:[%s14 + $0x23c] sm:$0xff]
    %v6119 = vld [vmem:[%s14 + $0x244] sm:$0xff]
    %v6120 = vld [vmem:[%s14 + $0x24c] sm:$0xff]
    %v6121 = vld [vmem:[%s14 + $0x254] sm:$0xff]
    %v6122 = vld [vmem:[%s14 + $0x25c] sm:$0xf]
    %v6123 = vld [vmem:[%s14 + $0x260] sm:$0xff]
    %v6124 = vld [vmem:[%s14 + $0x268] sm:$0xff]
    %v6125 = vld [vmem:[%s14 + $0x270] sm:$0xff]
    %v6126 = vld [vmem:[%s14 + $0x278] sm:$0xff]
    %v6127 = vld [vmem:[%s14 + $0x280] sm:$0xff]
    %v6128 = vld [vmem:[%s14 + $0x288] sm:$0xff]
    %v6129 = vld [vmem:[%s14 + $0x290] sm:$0xff]
    %v6130 = vld [vmem:[%s14 + $0x298] sm:$0xff]
    %v6131 = vld [vmem:[%s14 + $0x2a0] sm:$0xff]
    %v6132 = vld [vmem:[%s14 + $0x2a8] sm:$0xf]
    %v6133 = vld [vmem:[%s14 + $0x2ac] sm:$0xff]
    %v6134 = vld [vmem:[%s14 + $0x2b4] sm:$0xff]
    %v6135 = vld [vmem:[%s14 + $0x2bc] sm:$0xff]
    %v6136 = vld [vmem:[%s14 + $0x2c4] sm:$0xff]
    %v6137 = vld [vmem:[%s14 + $0x2cc] sm:$0xff]
    %v6138 = vld [vmem:[%s14 + $0x2d4] sm:$0xff]
    %v6139 = vld [vmem:[%s14 + $0x2dc] sm:$0xff]
    %v6140 = vld [vmem:[%s14 + $0x2e4] sm:$0xff]
    %v6141 = vld [vmem:[%s14 + $0x2ec] sm:$0xff]
    %v6142 = vld [vmem:[%s14 + $0x2f4] sm:$0xf]
    %v6143 = vld [vmem:[%s14 + $0x2f8] sm:$0xff]
    %v6144 = vld [vmem:[%s14 + $0x300] sm:$0xff]
    %v6145 = vld [vmem:[%s14 + $0x308] sm:$0xff]
    %v6146 = vld [vmem:[%s14 + $0x310] sm:$0xff]
    %v6147 = vld [vmem:[%s14 + $0x318] sm:$0xff]
    %v6148 = vld [vmem:[%s14 + $0x320] sm:$0xff]
    %v6149 = vld [vmem:[%s14 + $0x328] sm:$0xff]
    %v6150 = vld [vmem:[%s14 + $0x330] sm:$0xff]
    %v6151 = vld [vmem:[%s14 + $0x338] sm:$0xff]
    %v6152 = vld [vmem:[%s14 + $0x340] sm:$0xf]
    %v6153 = vld [vmem:[%s14 + $0x344] sm:$0xff]
    %v6154 = vld [vmem:[%s14 + $0x34c] sm:$0xff]
    %v6155 = vld [vmem:[%s14 + $0x354] sm:$0xff]
    %v6156 = vld [vmem:[%s14 + $0x35c] sm:$0xff]
    %v6157 = vld [vmem:[%s14 + $0x364] sm:$0xff]
    %v6158 = vld [vmem:[%s14 + $0x36c] sm:$0xff]
    %v6159 = vld [vmem:[%s14 + $0x374] sm:$0xff]
    %v6160 = vld [vmem:[%s14 + $0x37c] sm:$0xff]
    %v6161 = vld [vmem:[%s14 + $0x384] sm:$0xff]
    %v6162 = vld [vmem:[%s14 + $0x38c] sm:$0xf]
    %v6163 = vld [vmem:[%s14 + $0x390] sm:$0xff]
    %v6164 = vld [vmem:[%s14 + $0x398] sm:$0xff]
    %v6165 = vld [vmem:[%s14 + $0x3a0] sm:$0xff]
    %v6166 = vld [vmem:[%s14 + $0x3a8] sm:$0xff]
    %v6167 = vld [vmem:[%s14 + $0x3b0] sm:$0xff]
    %v6168 = vld [vmem:[%s14 + $0x3b8] sm:$0xff]
    %v6169 = vld [vmem:[%s14 + $0x3c0] sm:$0xff]
    %v6170 = vld [vmem:[%s14 + $0x3c8] sm:$0xff]
    %v6171 = vld [vmem:[%s14 + $0x3d0] sm:$0xff]
    %v6172 = vld [vmem:[%s14 + $0x3d8] sm:$0xf]
    %v6173 = vld [vmem:[%s14 + $0x3dc] sm:$0xff]
    %v6174 = vld [vmem:[%s14 + $0x3e4] sm:$0xff]
    %v6175 = vld [vmem:[%s14 + $0x3ec] sm:$0xff]
    %v6176 = vld [vmem:[%s14 + $0x3f4] sm:$0xff]
    %v6177 = vld [vmem:[%s14 + $0x3fc] sm:$0xff]
    %v6178 = vld [vmem:[%s14 + $0x404] sm:$0xff]
    %v6179 = vld [vmem:[%s14 + $0x40c] sm:$0xff]
    %v6180 = vld [vmem:[%s14 + $0x414] sm:$0xff]
    %v6181 = vld [vmem:[%s14 + $0x41c] sm:$0xff]
    %v6182 = vld [vmem:[%s14 + $0x424] sm:$0xf]
    %v6183 = vld [vmem:[%s14 + $0x428] sm:$0xff]
    %v6184 = vld [vmem:[%s14 + $0x430] sm:$0xff]
    %v6185 = vld [vmem:[%s14 + $0x438] sm:$0xff]
    %v6186 = vld [vmem:[%s14 + $0x440] sm:$0xff]
    %v6187 = vld [vmem:[%s14 + $0x448] sm:$0xff]
    %v6188 = vld [vmem:[%s14 + $0x450] sm:$0xff]
    %v6189 = vld [vmem:[%s14 + $0x458] sm:$0xff]
    %v6190 = vld [vmem:[%s14 + $0x460] sm:$0xff]
    %v6191 = vld [vmem:[%s14 + $0x468] sm:$0xff]
    %v6192 = vld [vmem:[%s14 + $0x470] sm:$0xf]
    %v6193 = vld [vmem:[%s14 + $0x474] sm:$0xff]
    %v6194 = vld [vmem:[%s14 + $0x47c] sm:$0xff]
    %v6195 = vld [vmem:[%s14 + $0x484] sm:$0xff]
    %v6196 = vld [vmem:[%s14 + $0x48c] sm:$0xff]
    %v6197 = vld [vmem:[%s14 + $0x494] sm:$0xff]
    %v6198 = vld [vmem:[%s14 + $0x49c] sm:$0xff]
    %v6199 = vld [vmem:[%s14 + $0x4a4] sm:$0xff]
    %v6200 = vld [vmem:[%s14 + $0x4ac] sm:$0xff]
    %v6201 = vld [vmem:[%s14 + $0x4b4] sm:$0xff]
    %v6202 = vld [vmem:[%s14 + $0x4bc] sm:$0xf]
    %v6203 = vld [vmem:[%s14 + $0x4c0] sm:$0xff]
    %v6204 = vld [vmem:[%s14 + $0x4c8] sm:$0xff]
    %v6205 = vld [vmem:[%s14 + $0x4d0] sm:$0xff]
    %v6206 = vld [vmem:[%s14 + $0x4d8] sm:$0xff]
    %v6207 = vld [vmem:[%s14 + $0x4e0] sm:$0xff]
    %v6208 = vld [vmem:[%s14 + $0x4e8] sm:$0xff]
    %v6209 = vld [vmem:[%s14 + $0x4f0] sm:$0xff]
    %v6210 = vld [vmem:[%s14 + $0x4f8] sm:$0xff]
    %v6211 = vld [vmem:[%s14 + $0x500] sm:$0xff]
    %v6212 = vld [vmem:[%s14 + $0x508] sm:$0xf]
    %v6213 = vld [vmem:[%s14 + $0x50c] sm:$0xff]
    %v6214 = vld [vmem:[%s14 + $0x514] sm:$0xff]
    %v6215 = vld [vmem:[%s14 + $0x51c] sm:$0xff]
    %v6216 = vld [vmem:[%s14 + $0x524] sm:$0xff]
    %v6217 = vld [vmem:[%s14 + $0x52c] sm:$0xff]
    %v6218 = vld [vmem:[%s14 + $0x534] sm:$0xff]
    %v6219 = vld [vmem:[%s14 + $0x53c] sm:$0xff]
    %v6220 = vld [vmem:[%s14 + $0x544] sm:$0xff]
    %v6221 = vld [vmem:[%s14 + $0x54c] sm:$0xff]
    %v6222 = vld [vmem:[%s14 + $0x554] sm:$0xf]
    %v6223 = vld [vmem:[%s14 + $0x558] sm:$0xff]
    %v6224 = vld [vmem:[%s14 + $0x560] sm:$0xff]
    %v6225 = vld [vmem:[%s14 + $0x568] sm:$0xff]
    %v6226 = vld [vmem:[%s14 + $0x570] sm:$0xff]
    %v6227 = vld [vmem:[%s14 + $0x578] sm:$0xff]
    %v6228 = vld [vmem:[%s14 + $0x580] sm:$0xff]
    %v6229 = vld [vmem:[%s14 + $0x588] sm:$0xff]
    %v6230 = vld [vmem:[%s14 + $0x590] sm:$0xff]
    %v6231 = vld [vmem:[%s14 + $0x598] sm:$0xff]
    %v6232 = vld [vmem:[%s14 + $0x5a0] sm:$0xf]
    %v6233 = vld [vmem:[%s14 + $0x5a4] sm:$0xff]
    %v6234 = vld [vmem:[%s14 + $0x5ac] sm:$0xff]
    %v6235 = vld [vmem:[%s14 + $0x5b4] sm:$0xff]
    %v6236 = vld [vmem:[%s14 + $0x5bc] sm:$0xff]
    %v6237 = vld [vmem:[%s14 + $0x5c4] sm:$0xff]
    %v6238 = vld [vmem:[%s14 + $0x5cc] sm:$0xff]
    %v6239 = vld [vmem:[%s14 + $0x5d4] sm:$0xff]
    %v6240 = vld [vmem:[%s14 + $0x5dc] sm:$0xff]
    %v6241 = vld [vmem:[%s14 + $0x5e4] sm:$0xff]
    %v6242 = vld [vmem:[%s14 + $0x5ec] sm:$0xf]
    %v6243 = vld [vmem:[%s14 + $0x5f0] sm:$0xff]
    %v6244 = vld [vmem:[%s14 + $0x5f8] sm:$0xff]
    %v6245 = vld [vmem:[%s14 + $0x600] sm:$0xff]
    %v6246 = vld [vmem:[%s14 + $0x608] sm:$0xff]
    %v6247 = vld [vmem:[%s14 + $0x610] sm:$0xff]
    %v6248 = vld [vmem:[%s14 + $0x618] sm:$0xff]
    %v6249 = vld [vmem:[%s14 + $0x620] sm:$0xff]
    %v6250 = vld [vmem:[%s14 + $0x628] sm:$0xff]
    %v6251 = vld [vmem:[%s14 + $0x630] sm:$0xff]
    %v6252 = vld [vmem:[%s14 + $0x638] sm:$0xf]
    %v6253 = vld [vmem:[%s14 + $0x63c] sm:$0xff]
    %v6254 = vld [vmem:[%s14 + $0x644] sm:$0xff]
    %v6255 = vld [vmem:[%s14 + $0x64c] sm:$0xff]
    %v6256 = vld [vmem:[%s14 + $0x654] sm:$0xff]
    %v6257 = vld [vmem:[%s14 + $0x65c] sm:$0xff]
    %v6258 = vld [vmem:[%s14 + $0x664] sm:$0xff]
    %v6259 = vld [vmem:[%s14 + $0x66c] sm:$0xff]
    %v6260 = vld [vmem:[%s14 + $0x674] sm:$0xff]
    %v6261 = vld [vmem:[%s14 + $0x67c] sm:$0xff]
    %v6262 = vld [vmem:[%s14 + $0x684] sm:$0xf]
    %v6263 = vld [vmem:[%s14 + $0x688] sm:$0xff]
    %v6264 = vld [vmem:[%s14 + $0x690] sm:$0xff]
    %v6265 = vld [vmem:[%s14 + $0x698] sm:$0xff]
    %v6266 = vld [vmem:[%s14 + $0x6a0] sm:$0xff]
    %v6267 = vld [vmem:[%s14 + $0x6a8] sm:$0xff]
    %v6268 = vld [vmem:[%s14 + $0x6b0] sm:$0xff]
    %v6269 = vld [vmem:[%s14 + $0x6b8] sm:$0xff]
    %v6270 = vld [vmem:[%s14 + $0x6c0] sm:$0xff]
    %v6271 = vld [vmem:[%s14 + $0x6c8] sm:$0xff]
    %v6272 = vld [vmem:[%s14 + $0x6d0] sm:$0xf]
    %v6273 = vld [vmem:[%s14 + $0x6d4] sm:$0xff]
    %v6274 = vld [vmem:[%s14 + $0x6dc] sm:$0xff]
    %v6275 = vld [vmem:[%s14 + $0x6e4] sm:$0xff]
    %v6276 = vld [vmem:[%s14 + $0x6ec] sm:$0xff]
    %v6277 = vld [vmem:[%s14 + $0x6f4] sm:$0xff]
    %v6278 = vld [vmem:[%s14 + $0x6fc] sm:$0xff]
    %v6279 = vld [vmem:[%s14 + $0x704] sm:$0xff]
    %v6280 = vld [vmem:[%s14 + $0x70c] sm:$0xff]
    %v6281 = vld [vmem:[%s14 + $0x714] sm:$0xff]
    %v6282 = vld [vmem:[%s14 + $0x71c] sm:$0xf]
    %v6283 = vld [vmem:[%s14 + $0x720] sm:$0xff]
    %v6284 = vld [vmem:[%s14 + $0x728] sm:$0xff]
    %v6285 = vld [vmem:[%s14 + $0x730] sm:$0xff]
    %v6286 = vld [vmem:[%s14 + $0x738] sm:$0xff]
    %v6287 = vld [vmem:[%s14 + $0x740] sm:$0xff]
    %v6288 = vld [vmem:[%s14 + $0x748] sm:$0xff]
    %v6289 = vld [vmem:[%s14 + $0x750] sm:$0xff]
    %v6290 = vld [vmem:[%s14 + $0x758] sm:$0xff]
    %v6291 = vld [vmem:[%s14 + $0x760] sm:$0xff]
    %v6292 = vld [vmem:[%s14 + $0x768] sm:$0xf]
    %v6293 = vld [vmem:[%s14 + $0x76c] sm:$0xff]
    %v6294 = vld [vmem:[%s14 + $0x774] sm:$0xff]
    %v6295 = vld [vmem:[%s14 + $0x77c] sm:$0xff]
    %v6296 = vld [vmem:[%s14 + $0x784] sm:$0xff]
    %v6297 = vld [vmem:[%s14 + $0x78c] sm:$0xff]
    %v6298 = vld [vmem:[%s14 + $0x794] sm:$0xff]
    %v6299 = vld [vmem:[%s14 + $0x79c] sm:$0xff]
    %v6300 = vld [vmem:[%s14 + $0x7a4] sm:$0xff]
    %v6301 = vld [vmem:[%s14 + $0x7ac] sm:$0xff]
    %v6302 = vld [vmem:[%s14 + $0x7b4] sm:$0xf]
    %v6303 = vld [vmem:[%s14 + $0x7b8] sm:$0xff]
    %v6304 = vld [vmem:[%s14 + $0x7c0] sm:$0xff]
    %v6305 = vld [vmem:[%s14 + $0x7c8] sm:$0xff]
    %v6306 = vld [vmem:[%s14 + $0x7d0] sm:$0xff]
    %v6307 = vld [vmem:[%s14 + $0x7d8] sm:$0xff]
    %v6308 = vld [vmem:[%s14 + $0x7e0] sm:$0xff]
    %v6309 = vld [vmem:[%s14 + $0x7e8] sm:$0xff]
    %v6310 = vld [vmem:[%s14 + $0x7f0] sm:$0xff]
    %v6311 = vld [vmem:[%s14 + $0x7f8] sm:$0xff]
    %v6312 = vld [vmem:[%s14 + $0x800] sm:$0xf]
    %v6313 = vld [vmem:[%s14 + $0x804] sm:$0xff]
    %v6314 = vld [vmem:[%s14 + $0x80c] sm:$0xff]
    %v6315 = vld [vmem:[%s14 + $0x814] sm:$0xff]
    %v6316 = vld [vmem:[%s14 + $0x81c] sm:$0xff]
    %v6317 = vld [vmem:[%s14 + $0x824] sm:$0xff]
    %v6318 = vld [vmem:[%s14 + $0x82c] sm:$0xff]
    %v6319 = vld [vmem:[%s14 + $0x834] sm:$0xff]
    %v6320 = vld [vmem:[%s14 + $0x83c] sm:$0xff]
    %v6321 = vld [vmem:[%s14 + $0x844] sm:$0xff]
    %v6322 = vld [vmem:[%s14 + $0x84c] sm:$0xf]
    %v6323 = vld [vmem:[%s14 + $0x850] sm:$0xff]
    %v6324 = vld [vmem:[%s14 + $0x858] sm:$0xff]
    %v6325 = vld [vmem:[%s14 + $0x860] sm:$0xff]
    %v6326 = vld [vmem:[%s14 + $0x868] sm:$0xff]
    %v6327 = vld [vmem:[%s14 + $0x870] sm:$0xff]
    %v6328 = vld [vmem:[%s14 + $0x878] sm:$0xff]
    %v6329 = vld [vmem:[%s14 + $0x880] sm:$0xff]
    %v6330 = vld [vmem:[%s14 + $0x888] sm:$0xff]
    %v6331 = vld [vmem:[%s14 + $0x890] sm:$0xff]
    %v6332 = vld [vmem:[%s14 + $0x898] sm:$0xf]
    %v6333 = vld [vmem:[%s14 + $0x89c] sm:$0xff]
    %v6334 = vld [vmem:[%s14 + $0x8a4] sm:$0xff]
    %v6335 = vld [vmem:[%s14 + $0x8ac] sm:$0xff]
    %v6336 = vld [vmem:[%s14 + $0x8b4] sm:$0xff]
    %v6337 = vld [vmem:[%s14 + $0x8bc] sm:$0xff]
    %v6338 = vld [vmem:[%s14 + $0x8c4] sm:$0xff]
    %v6339 = vld [vmem:[%s14 + $0x8cc] sm:$0xff]
    %v6340 = vld [vmem:[%s14 + $0x8d4] sm:$0xff]
    %v6341 = vld [vmem:[%s14 + $0x8dc] sm:$0xff]
    %v6342 = vld [vmem:[%s14 + $0x8e4] sm:$0xf]
    %v6343 = vld [vmem:[%s14 + $0x8e8] sm:$0xff]
    %v6344 = vld [vmem:[%s14 + $0x8f0] sm:$0xff]
    %v6345 = vld [vmem:[%s14 + $0x8f8] sm:$0xff]
    %v6346 = vld [vmem:[%s14 + $0x900] sm:$0xff]
    %v6347 = vld [vmem:[%s14 + $0x908] sm:$0xff]
    %v6348 = vld [vmem:[%s14 + $0x910] sm:$0xff]
    %v6349 = vld [vmem:[%s14 + $0x918] sm:$0xff]
    %v6350 = vld [vmem:[%s14 + $0x920] sm:$0xff]
    %v6351 = vld [vmem:[%s14 + $0x928] sm:$0xff]
    %v6352 = vld [vmem:[%s14 + $0x930] sm:$0xf]
    %v6353 = vld [vmem:[%s14 + $0x934] sm:$0xff]
    %v6354 = vld [vmem:[%s14 + $0x93c] sm:$0xff]
    %v6355 = vld [vmem:[%s14 + $0x944] sm:$0xff]
    %v6356 = vld [vmem:[%s14 + $0x94c] sm:$0xff]
    %v6357 = vld [vmem:[%s14 + $0x954] sm:$0xff]
    %v6358 = vld [vmem:[%s14 + $0x95c] sm:$0xff]
    %v6359 = vld [vmem:[%s14 + $0x964] sm:$0xff]
    %v6360 = vld [vmem:[%s14 + $0x96c] sm:$0xff]
    %v6361 = vld [vmem:[%s14 + $0x974] sm:$0xff]
    %v6362 = vld [vmem:[%s14 + $0x97c] sm:$0xf]
    %v6363 = vld [vmem:[%s14 + $0x980] sm:$0xff]
    %v6364 = vld [vmem:[%s14 + $0x988] sm:$0xff]
    %v6365 = vld [vmem:[%s14 + $0x990] sm:$0xff]
    %v6366 = vld [vmem:[%s14 + $0x998] sm:$0xff]
    %v6367 = vld [vmem:[%s14 + $0x9a0] sm:$0xff]
    %v6368 = vld [vmem:[%s14 + $0x9a8] sm:$0xff]
    %v6369 = vld [vmem:[%s14 + $0x9b0] sm:$0xff]
    %v6370 = vld [vmem:[%s14 + $0x9b8] sm:$0xff]
    %v6371 = vld [vmem:[%s14 + $0x9c0] sm:$0xff]
    %v6372 = vld [vmem:[%s14 + $0x9c8] sm:$0xf]
    %v6373 = vld [vmem:[%s14 + $0x9cc] sm:$0xff]
    %v6374 = vld [vmem:[%s14 + $0x9d4] sm:$0xff]
    %v6375 = vld [vmem:[%s14 + $0x9dc] sm:$0xff]
    %v6376 = vld [vmem:[%s14 + $0x9e4] sm:$0xff]
    %v6377 = vld [vmem:[%s14 + $0x9ec] sm:$0xff]
    %v6378 = vld [vmem:[%s14 + $0x9f4] sm:$0xff]
    %v6379 = vld [vmem:[%s14 + $0x9fc] sm:$0xff]
    %v6380 = vld [vmem:[%s14 + $0xa04] sm:$0xff]
    %v6381 = vld [vmem:[%s14 + $0xa0c] sm:$0xff]
    %v6382 = vld [vmem:[%s14 + $0xa14] sm:$0xf]
    %v6383 = vld [vmem:[%s14 + $0xa18] sm:$0xff]
    %v6384 = vld [vmem:[%s14 + $0xa20] sm:$0xff]
    %v6385 = vld [vmem:[%s14 + $0xa28] sm:$0xff]
    %v6386 = vld [vmem:[%s14 + $0xa30] sm:$0xff]
    %v6387 = vld [vmem:[%s14 + $0xa38] sm:$0xff]
    %v6388 = vld [vmem:[%s14 + $0xa40] sm:$0xff]
    %v6389 = vld [vmem:[%s14 + $0xa48] sm:$0xff]
    %v6390 = vld [vmem:[%s14 + $0xa50] sm:$0xff]
    %v6391 = vld [vmem:[%s14 + $0xa58] sm:$0xff]
    %v6392 = vld [vmem:[%s14 + $0xa60] sm:$0xf]
    %v6393 = vld [vmem:[%s14 + $0xa64] sm:$0xff]
    %v6394 = vld [vmem:[%s14 + $0xa6c] sm:$0xff]
    %v6395 = vld [vmem:[%s14 + $0xa74] sm:$0xff]
    %v6396 = vld [vmem:[%s14 + $0xa7c] sm:$0xff]
    %v6397 = vld [vmem:[%s14 + $0xa84] sm:$0xff]
    %v6398 = vld [vmem:[%s14 + $0xa8c] sm:$0xff]
    %v6399 = vld [vmem:[%s14 + $0xa94] sm:$0xff]
    %v6400 = vld [vmem:[%s14 + $0xa9c] sm:$0xff]
    %v6401 = vld [vmem:[%s14 + $0xaa4] sm:$0xff]
    %v6402 = vld [vmem:[%s14 + $0xaac] sm:$0xf]
    %v6403 = vld [vmem:[%s14 + $0xab0] sm:$0xff]
    %v6404 = vld [vmem:[%s14 + $0xab8] sm:$0xff]
    %v6405 = vld [vmem:[%s14 + $0xac0] sm:$0xff]
    %v6406 = vld [vmem:[%s14 + $0xac8] sm:$0xff]
    %v6407 = vld [vmem:[%s14 + $0xad0] sm:$0xff]
    %v6408 = vld [vmem:[%s14 + $0xad8] sm:$0xff]
    %v6409 = vld [vmem:[%s14 + $0xae0] sm:$0xff]
    %v6410 = vld [vmem:[%s14 + $0xae8] sm:$0xff]
    %v6411 = vld [vmem:[%s14 + $0xaf0] sm:$0xff]
    %v6412 = vld [vmem:[%s14 + $0xaf8] sm:$0xf]
    %v6413 = vld [vmem:[%s14 + $0xafc] sm:$0xff]
    %v6414 = vld [vmem:[%s14 + $0xb04] sm:$0xff]
    %v6415 = vld [vmem:[%s14 + $0xb0c] sm:$0xff]
    %v6416 = vld [vmem:[%s14 + $0xb14] sm:$0xff]
    %v6417 = vld [vmem:[%s14 + $0xb1c] sm:$0xff]
    %v6418 = vld [vmem:[%s14 + $0xb24] sm:$0xff]
    %v6419 = vld [vmem:[%s14 + $0xb2c] sm:$0xff]
    %v6420 = vld [vmem:[%s14 + $0xb34] sm:$0xff]
    %v6421 = vld [vmem:[%s14 + $0xb3c] sm:$0xff]
    %v6422 = vld [vmem:[%s14 + $0xb44] sm:$0xf]
    %v6423 = vld [vmem:[%s14 + $0xb48] sm:$0xff]
    %v6424 = vld [vmem:[%s14 + $0xb50] sm:$0xff]
    %v6425 = vld [vmem:[%s14 + $0xb58] sm:$0xff]
    %v6426 = vld [vmem:[%s14 + $0xb60] sm:$0xff]
    %v6427 = vld [vmem:[%s14 + $0xb68] sm:$0xff]
    %v6428 = vld [vmem:[%s14 + $0xb70] sm:$0xff]
    %v6429 = vld [vmem:[%s14 + $0xb78] sm:$0xff]
    %v6430 = vld [vmem:[%s14 + $0xb80] sm:$0xff]
    %v6431 = vld [vmem:[%s14 + $0xb88] sm:$0xff]
    %v6432 = vld [vmem:[%s14 + $0xb90] sm:$0xf]
    %v6433 = vld [vmem:[%s14 + $0xb94] sm:$0xff]
    %v6434 = vld [vmem:[%s14 + $0xb9c] sm:$0xff]
    %v6435 = vld [vmem:[%s14 + $0xba4] sm:$0xff]
    %v6436 = vld [vmem:[%s14 + $0xbac] sm:$0xff]
    %v6437 = vld [vmem:[%s14 + $0xbb4] sm:$0xff]
    %v6438 = vld [vmem:[%s14 + $0xbbc] sm:$0xff]
    %v6439 = vld [vmem:[%s14 + $0xbc4] sm:$0xff]
    %v6440 = vld [vmem:[%s14 + $0xbcc] sm:$0xff]
    %v6441 = vld [vmem:[%s14 + $0xbd4] sm:$0xff]
    %v6442 = vld [vmem:[%s14 + $0xbdc] sm:$0xf]
    %v6443 = vld [vmem:[%s14 + $0xbe0] sm:$0xff]
    %v6444 = vld [vmem:[%s14 + $0xbe8] sm:$0xff]
    %v6445 = vld [vmem:[%s14 + $0xbf0] sm:$0xff]
    %v6446 = vld [vmem:[%s14 + $0xbf8] sm:$0xff]
    %v6447 = vld [vmem:[%s14 + $0xc00] sm:$0xff]
    %v6448 = vld [vmem:[%s14 + $0xc08] sm:$0xff]
    %v6449 = vld [vmem:[%s14 + $0xc10] sm:$0xff]
    %v6450 = vld [vmem:[%s14 + $0xc18] sm:$0xff]
    %v6451 = vld [vmem:[%s14 + $0xc20] sm:$0xff]
    %v6452 = vld [vmem:[%s14 + $0xc28] sm:$0xf]
    %v6453 = vld [vmem:[%s14 + $0xc2c] sm:$0xff]
    %v6454 = vld [vmem:[%s14 + $0xc34] sm:$0xff]
    %v6455 = vld [vmem:[%s14 + $0xc3c] sm:$0xff]
    %v6456 = vld [vmem:[%s14 + $0xc44] sm:$0xff]
    %v6457 = vld [vmem:[%s14 + $0xc4c] sm:$0xff]
    %v6458 = vld [vmem:[%s14 + $0xc54] sm:$0xff]
    %v6459 = vld [vmem:[%s14 + $0xc5c] sm:$0xff]
    %v6460 = vld [vmem:[%s14 + $0xc64] sm:$0xff]
    %v6461 = vld [vmem:[%s14 + $0xc6c] sm:$0xff]
    %v6462 = vld [vmem:[%s14 + $0xc74] sm:$0xf]
    %v6463 = vld [vmem:[%s14 + $0xc78] sm:$0xff]
    %v6464 = vld [vmem:[%s14 + $0xc80] sm:$0xff]
    %v6465 = vld [vmem:[%s14 + $0xc88] sm:$0xff]
    %v6466 = vld [vmem:[%s14 + $0xc90] sm:$0xff]
    %v6467 = vld [vmem:[%s14 + $0xc98] sm:$0xff]
    %v6468 = vld [vmem:[%s14 + $0xca0] sm:$0xff]
    %v6469 = vld [vmem:[%s14 + $0xca8] sm:$0xff]
    %v6470 = vld [vmem:[%s14 + $0xcb0] sm:$0xff]
    %v6471 = vld [vmem:[%s14 + $0xcb8] sm:$0xff]
    %v6472 = vld [vmem:[%s14 + $0xcc0] sm:$0xf]
    %v6473 = vld [vmem:[%s14 + $0xcc4] sm:$0xff]
    %v6474 = vld [vmem:[%s14 + $0xccc] sm:$0xff]
    %v6475 = vld [vmem:[%s14 + $0xcd4] sm:$0xff]
    %v6476 = vld [vmem:[%s14 + $0xcdc] sm:$0xff]
    %v6477 = vld [vmem:[%s14 + $0xce4] sm:$0xff]
    %v6478 = vld [vmem:[%s14 + $0xcec] sm:$0xff]
    %v6479 = vld [vmem:[%s14 + $0xcf4] sm:$0xff]
    %v6480 = vld [vmem:[%s14 + $0xcfc] sm:$0xff]
    %v6481 = vld [vmem:[%s14 + $0xd04] sm:$0xff]
    %v6482 = vld [vmem:[%s14 + $0xd0c] sm:$0xf]
    %v6483 = vld [vmem:[%s14 + $0xd10] sm:$0xff]
    %v6484 = vld [vmem:[%s14 + $0xd18] sm:$0xff]
    %v6485 = vld [vmem:[%s14 + $0xd20] sm:$0xff]
    %v6486 = vld [vmem:[%s14 + $0xd28] sm:$0xff]
    %v6487 = vld [vmem:[%s14 + $0xd30] sm:$0xff]
    %v6488 = vld [vmem:[%s14 + $0xd38] sm:$0xff]
    %v6489 = vld [vmem:[%s14 + $0xd40] sm:$0xff]
    %v6490 = vld [vmem:[%s14 + $0xd48] sm:$0xff]
    %v6491 = vld [vmem:[%s14 + $0xd50] sm:$0xff]
    %v6492 = vld [vmem:[%s14 + $0xd58] sm:$0xf]
    %v6493 = vld [vmem:[%s14 + $0xd5c] sm:$0xff]
    %v6494 = vld [vmem:[%s14 + $0xd64] sm:$0xff]
    %v6495 = vld [vmem:[%s14 + $0xd6c] sm:$0xff]
    %v6496 = vld [vmem:[%s14 + $0xd74] sm:$0xff]
    %v6497 = vld [vmem:[%s14 + $0xd7c] sm:$0xff]
    %v6498 = vld [vmem:[%s14 + $0xd84] sm:$0xff]
    %v6499 = vld [vmem:[%s14 + $0xd8c] sm:$0xff]
    %v6500 = vld [vmem:[%s14 + $0xd94] sm:$0xff]
    %v6501 = vld [vmem:[%s14 + $0xd9c] sm:$0xff]
    %v6502 = vld [vmem:[%s14 + $0xda4] sm:$0xf]
    %v6503 = vld [vmem:[%s14 + $0xda8] sm:$0xff]
    %v6504 = vld [vmem:[%s14 + $0xdb0] sm:$0xff]
    %v6505 = vld [vmem:[%s14 + $0xdb8] sm:$0xff]
    %v6506 = vld [vmem:[%s14 + $0xdc0] sm:$0xff]
    %v6507 = vld [vmem:[%s14 + $0xdc8] sm:$0xff]
    %v6508 = vld [vmem:[%s14 + $0xdd0] sm:$0xff]
    %v6509 = vld [vmem:[%s14 + $0xdd8] sm:$0xff]
    %v6510 = vld [vmem:[%s14 + $0xde0] sm:$0xff]
    %v6511 = vld [vmem:[%s14 + $0xde8] sm:$0xff]
    %v6512 = vld [vmem:[%s14 + $0xdf0] sm:$0xf]
    %v6513 = vld [vmem:[%s14 + $0xdf4] sm:$0xff]
    %v6514 = vld [vmem:[%s14 + $0xdfc] sm:$0xff]
    %v6515 = vld [vmem:[%s14 + $0xe04] sm:$0xff]
    %v6516 = vld [vmem:[%s14 + $0xe0c] sm:$0xff]
    %v6517 = vld [vmem:[%s14 + $0xe14] sm:$0xff]
    %v6518 = vld [vmem:[%s14 + $0xe1c] sm:$0xff]
    %v6519 = vld [vmem:[%s14 + $0xe24] sm:$0xff]
    %v6520 = vld [vmem:[%s14 + $0xe2c] sm:$0xff]
    %v6521 = vld [vmem:[%s14 + $0xe34] sm:$0xff]
    %v6522 = vld [vmem:[%s14 + $0xe3c] sm:$0xf]
    %v6523 = vld [vmem:[%s14 + $0xe40] sm:$0xff]
    %v6524 = vld [vmem:[%s14 + $0xe48] sm:$0xff]
    %v6525 = vld [vmem:[%s14 + $0xe50] sm:$0xff]
    %v6526 = vld [vmem:[%s14 + $0xe58] sm:$0xff]
    %v6527 = vld [vmem:[%s14 + $0xe60] sm:$0xff]
    %v6528 = vld [vmem:[%s14 + $0xe68] sm:$0xff]
    %v6529 = vld [vmem:[%s14 + $0xe70] sm:$0xff]
    %v6530 = vld [vmem:[%s14 + $0xe78] sm:$0xff]
    %v6531 = vld [vmem:[%s14 + $0xe80] sm:$0xff]
    %v6532 = vld [vmem:[%s14 + $0xe88] sm:$0xf]
    %v6533 = vld [vmem:[%s14 + $0xe8c] sm:$0xff]
    %v6534 = vld [vmem:[%s14 + $0xe94] sm:$0xff]
    %v6535 = vld [vmem:[%s14 + $0xe9c] sm:$0xff]
    %v6536 = vld [vmem:[%s14 + $0xea4] sm:$0xff]
    %v6537 = vld [vmem:[%s14 + $0xeac] sm:$0xff]
    %v6538 = vld [vmem:[%s14 + $0xeb4] sm:$0xff]
    %v6539 = vld [vmem:[%s14 + $0xebc] sm:$0xff]
    %v6540 = vld [vmem:[%s14 + $0xec4] sm:$0xff]
    %v6541 = vld [vmem:[%s14 + $0xecc] sm:$0xff]
    %v6542 = vld [vmem:[%s14 + $0xed4] sm:$0xf]
    %v6543 = vld [vmem:[%s14 + $0xed8] sm:$0xff]
    %v6544 = vld [vmem:[%s14 + $0xee0] sm:$0xff]
    %v6545 = vld [vmem:[%s14 + $0xee8] sm:$0xff]
    %v6546 = vld [vmem:[%s14 + $0xef0] sm:$0xff]
    %v6547 = vld [vmem:[%s14 + $0xef8] sm:$0xff]
    %v6548 = vld [vmem:[%s14 + $0xf00] sm:$0xff]
    %v6549 = vld [vmem:[%s14 + $0xf08] sm:$0xff]
    %v6550 = vld [vmem:[%s14 + $0xf10] sm:$0xff]
    %v6551 = vld [vmem:[%s14 + $0xf18] sm:$0xff]
    %v6552 = vld [vmem:[%s14 + $0xf20] sm:$0xf]
    %v6553 = vld [vmem:[%s14 + $0xf24] sm:$0xff]
    %v6554 = vld [vmem:[%s14 + $0xf2c] sm:$0xff]
    %v6555 = vld [vmem:[%s14 + $0xf34] sm:$0xff]
    %v6556 = vld [vmem:[%s14 + $0xf3c] sm:$0xff]
    %v6557 = vld [vmem:[%s14 + $0xf44] sm:$0xff]
    %v6558 = vld [vmem:[%s14 + $0xf4c] sm:$0xff]
    %v6559 = vld [vmem:[%s14 + $0xf54] sm:$0xff]
    %v6560 = vld [vmem:[%s14 + $0xf5c] sm:$0xff]
    %v6561 = vld [vmem:[%s14 + $0xf64] sm:$0xff]
    %v6562 = vld [vmem:[%s14 + $0xf6c] sm:$0xf]
    %v6563 = vld [vmem:[%s14 + $0xf70] sm:$0xff]
    %v6564 = vld [vmem:[%s14 + $0xf78] sm:$0xff]
    %v6565 = vld [vmem:[%s14 + $0xf80] sm:$0xff]
    %v6566 = vld [vmem:[%s14 + $0xf88] sm:$0xff]
    %v6567 = vld [vmem:[%s14 + $0xf90] sm:$0xff]
    %v6568 = vld [vmem:[%s14 + $0xf98] sm:$0xff]
    %v6569 = vld [vmem:[%s14 + $0xfa0] sm:$0xff]
    %v6570 = vld [vmem:[%s14 + $0xfa8] sm:$0xff]
    %v6571 = vld [vmem:[%s14 + $0xfb0] sm:$0xff]
    %v6572 = vld [vmem:[%s14 + $0xfb8] sm:$0xf]
    %v6573 = vld [vmem:[%s14 + $0xfbc] sm:$0xff]
    %v6574 = vld [vmem:[%s14 + $0xfc4] sm:$0xff]
    %v6575 = vld [vmem:[%s14 + $0xfcc] sm:$0xff]
    %v6576 = vld [vmem:[%s14 + $0xfd4] sm:$0xff]
    %v6577 = vld [vmem:[%s14 + $0xfdc] sm:$0xff]
    %v6578 = vld [vmem:[%s14 + $0xfe4] sm:$0xff]
    %v6579 = vld [vmem:[%s14 + $0xfec] sm:$0xff]
    %v6580 = vld [vmem:[%s14 + $0xff4] sm:$0xff]
    %v6581 = vld [vmem:[%s14 + $0xffc] sm:$0xff]
    %v6582 = vld [vmem:[%s14 + $0x1004] sm:$0xf]
    %v6583 = vld [vmem:[%s14 + $0x1008] sm:$0xff]
    %v6584 = vld [vmem:[%s14 + $0x1010] sm:$0xff]
    %v6585 = vld [vmem:[%s14 + $0x1018] sm:$0xff]
    %v6586 = vld [vmem:[%s14 + $0x1020] sm:$0xff]
    %v6587 = vld [vmem:[%s14 + $0x1028] sm:$0xff]
    %v6588 = vld [vmem:[%s14 + $0x1030] sm:$0xff]
    %v6589 = vld [vmem:[%s14 + $0x1038] sm:$0xff]
    %v6590 = vld [vmem:[%s14 + $0x1040] sm:$0xff]
    %v6591 = vld [vmem:[%s14 + $0x1048] sm:$0xff]
    %v6592 = vld [vmem:[%s14 + $0x1050] sm:$0xf]
    %v6593 = vld [vmem:[%s14 + $0x1054] sm:$0xff]
    %v6594 = vld [vmem:[%s14 + $0x105c] sm:$0xff]
    %v6595 = vld [vmem:[%s14 + $0x1064] sm:$0xff]
    %v6596 = vld [vmem:[%s14 + $0x106c] sm:$0xff]
    %v6597 = vld [vmem:[%s14 + $0x1074] sm:$0xff]
    %v6598 = vld [vmem:[%s14 + $0x107c] sm:$0xff]
    %v6599 = vld [vmem:[%s14 + $0x1084] sm:$0xff]
    %v6600 = vld [vmem:[%s14 + $0x108c] sm:$0xff]
    %v6601 = vld [vmem:[%s14 + $0x1094] sm:$0xff]
    %v6602 = vld [vmem:[%s14 + $0x109c] sm:$0xf]
    %v6603 = vld [vmem:[%s14 + $0x10a0] sm:$0xff]
    %v6604 = vld [vmem:[%s14 + $0x10a8] sm:$0xff]
    %v6605 = vld [vmem:[%s14 + $0x10b0] sm:$0xff]
    %v6606 = vld [vmem:[%s14 + $0x10b8] sm:$0xff]
    %v6607 = vld [vmem:[%s14 + $0x10c0] sm:$0xff]
    %v6608 = vld [vmem:[%s14 + $0x10c8] sm:$0xff]
    %v6609 = vld [vmem:[%s14 + $0x10d0] sm:$0xff]
    %v6610 = vld [vmem:[%s14 + $0x10d8] sm:$0xff]
    %v6611 = vld [vmem:[%s14 + $0x10e0] sm:$0xff]
    %v6612 = vld [vmem:[%s14 + $0x10e8] sm:$0xf]
    %v6613 = vld [vmem:[%s14 + $0x10ec] sm:$0xff]
    %v6614 = vld [vmem:[%s14 + $0x10f4] sm:$0xff]
    %v6615 = vld [vmem:[%s14 + $0x10fc] sm:$0xff]
    %v6616 = vld [vmem:[%s14 + $0x1104] sm:$0xff]
    %v6617 = vld [vmem:[%s14 + $0x110c] sm:$0xff]
    %v6618 = vld [vmem:[%s14 + $0x1114] sm:$0xff]
    %v6619 = vld [vmem:[%s14 + $0x111c] sm:$0xff]
    %v6620 = vld [vmem:[%s14 + $0x1124] sm:$0xff]
    %v6621 = vld [vmem:[%s14 + $0x112c] sm:$0xff]
    %v6622 = vld [vmem:[%s14 + $0x1134] sm:$0xf]
    %v6623 = vld [vmem:[%s14 + $0x1138] sm:$0xff]
    %v6624 = vld [vmem:[%s14 + $0x1140] sm:$0xff]
    %v6625 = vld [vmem:[%s14 + $0x1148] sm:$0xff]
    %v6626 = vld [vmem:[%s14 + $0x1150] sm:$0xff]
    %v6627 = vld [vmem:[%s14 + $0x1158] sm:$0xff]
    %v6628 = vld [vmem:[%s14 + $0x1160] sm:$0xff]
    %v6629 = vld [vmem:[%s14 + $0x1168] sm:$0xff]
    %v6630 = vld [vmem:[%s14 + $0x1170] sm:$0xff]
    %v6631 = vld [vmem:[%s14 + $0x1178] sm:$0xff]
    %v6632 = vld [vmem:[%s14 + $0x1180] sm:$0xf]
    %v6633 = vld [vmem:[%s14 + $0x1184] sm:$0xff]
    %v6634 = vld [vmem:[%s14 + $0x118c] sm:$0xff]
    %v6635 = vld [vmem:[%s14 + $0x1194] sm:$0xff]
    %v6636 = vld [vmem:[%s14 + $0x119c] sm:$0xff]
    %v6637 = vld [vmem:[%s14 + $0x11a4] sm:$0xff]
    %v6638 = vld [vmem:[%s14 + $0x11ac] sm:$0xff]
    %v6639 = vld [vmem:[%s14 + $0x11b4] sm:$0xff]
    %v6640 = vld [vmem:[%s14 + $0x11bc] sm:$0xff]
    %v6641 = vld [vmem:[%s14 + $0x11c4] sm:$0xff]
    %v6642 = vld [vmem:[%s14 + $0x11cc] sm:$0xf]
    %v6643 = vld [vmem:[%s14 + $0x11d0] sm:$0xff]
    %v6644 = vld [vmem:[%s14 + $0x11d8] sm:$0xff]
    %v6645 = vld [vmem:[%s14 + $0x11e0] sm:$0xff]
    %v6646 = vld [vmem:[%s14 + $0x11e8] sm:$0xff]
    %v6647 = vld [vmem:[%s14 + $0x11f0] sm:$0xff]
    %v6648 = vld [vmem:[%s14 + $0x11f8] sm:$0xff]
    %v6649 = vld [vmem:[%s14 + $0x1200] sm:$0xff]
    %v6650 = vld [vmem:[%s14 + $0x1208] sm:$0xff]
    %v6651 = vld [vmem:[%s14 + $0x1210] sm:$0xff]
    %v6652 = vld [vmem:[%s14 + $0x1218] sm:$0xf]
    %v6653 = vld [vmem:[%s14 + $0x121c] sm:$0xff]
    %v6654 = vld [vmem:[%s14 + $0x1224] sm:$0xff]
    %v6655 = vld [vmem:[%s14 + $0x122c] sm:$0xff]
    %v6656 = vld [vmem:[%s14 + $0x1234] sm:$0xff]
    %v6657 = vld [vmem:[%s14 + $0x123c] sm:$0xff]
    %v6658 = vld [vmem:[%s14 + $0x1244] sm:$0xff]
    %v6659 = vld [vmem:[%s14 + $0x124c] sm:$0xff]
    %v6660 = vld [vmem:[%s14 + $0x1254] sm:$0xff]
    %v6661 = vld [vmem:[%s14 + $0x125c] sm:$0xff]
    %v6662 = vld [vmem:[%s14 + $0x1264] sm:$0xf]
    %v6663 = vld [vmem:[%s14 + $0x1268] sm:$0xff]
    %v6664 = vld [vmem:[%s14 + $0x1270] sm:$0xff]
    %v6665 = vld [vmem:[%s14 + $0x1278] sm:$0xff]
    %v6666 = vld [vmem:[%s14 + $0x1280] sm:$0xff]
    %v6667 = vld [vmem:[%s14 + $0x1288] sm:$0xff]
    %v6668 = vld [vmem:[%s14 + $0x1290] sm:$0xff]
    %v6669 = vld [vmem:[%s14 + $0x1298] sm:$0xff]
    %v6670 = vld [vmem:[%s14 + $0x12a0] sm:$0xff]
    %v6671 = vld [vmem:[%s14 + $0x12a8] sm:$0xff]
    %v6672 = vld [vmem:[%s14 + $0x12b0] sm:$0xf]
    %v6673 = vld [vmem:[%s14 + $0x12b4] sm:$0xff]
    %v6674 = vld [vmem:[%s14 + $0x12bc] sm:$0xff]
    %v6675 = vld [vmem:[%s14 + $0x12c4] sm:$0xff]
    %v6676 = vld [vmem:[%s14 + $0x12cc] sm:$0xff]
    %v6677 = vld [vmem:[%s14 + $0x12d4] sm:$0xff]
    %v6678 = vld [vmem:[%s14 + $0x12dc] sm:$0xff]
    %v6679 = vld [vmem:[%s14 + $0x12e4] sm:$0xff]
    %v6680 = vld [vmem:[%s14 + $0x12ec] sm:$0xff]
    %v6681 = vld [vmem:[%s14 + $0x12f4] sm:$0xff]
    %v6682 = vld [vmem:[%s14 + $0x12fc] sm:$0xf]
    %v6683 = vld [vmem:[%s15] sm:$0xff]
    %v6684 = vld [vmem:[%s15 + $0x8] sm:$0xff]
    %v6685 = vld [vmem:[%s15 + $0x10] sm:$0x7]
    %v6689 = vperm.slane %v6683, 0
    %v6690 = vperm.slane %v6683, 1
    %v6691 = vperm.slane %v6683, 2
    %v6692 = vperm.slane %v6683, 3
    %v6693 = vperm.slane %v6683, 4
    %v6694 = vperm.slane %v6683, 5
    %v6695 = vperm.slane %v6683, 6
    %v6696 = vperm.slane %v6683, 7
    %v6697 = vperm.slane %v6684, 0
    %v6698 = vperm.slane %v6684, 1
    %v6699 = vperm.slane %v6684, 2
    %v6700 = vperm.slane %v6684, 3
    %v6701 = vperm.slane %v6684, 4
    %v6702 = vperm.slane %v6684, 5
    %v6703 = vperm.slane %v6684, 6
    %v6704 = vperm.slane %v6684, 7
    %v6705 = vperm.slane %v6685, 0
    %v6706 = vperm.slane %v6685, 1
    %v6707 = vperm.slane %v6685, 2
    %v7367 = vunpack.c.l.b16 %v6043
    %v7368 = vunpack.c.h.b16 %v6043
    %v7369 = vunpack.c.l.b16 %v6044
    %v7370 = vunpack.c.h.b16 %v6044
    %v7371 = vunpack.c.l.b16 %v6045
    %v7372 = vunpack.c.h.b16 %v6045
    %v7373 = vunpack.c.l.b16 %v6046
    %v7374 = vunpack.c.h.b16 %v6046
    %v7375 = vunpack.c.l.b16 %v6047
    %v7376 = vunpack.c.h.b16 %v6047
    %v7377 = vunpack.c.l.b16 %v6048
    %v7378 = vunpack.c.h.b16 %v6048
    %v7379 = vunpack.c.l.b16 %v6049
    %v7380 = vunpack.c.h.b16 %v6049
    %v7381 = vunpack.c.l.b16 %v6050
    %v7382 = vunpack.c.h.b16 %v6050
    %v7383 = vunpack.c.l.b16 %v6051
    %v7384 = vunpack.c.h.b16 %v6051
    %v7385 = vunpack.c.l.b16 %v6052
    %v7386 = vunpack.c.l.b16 %v6053
    %v7387 = vunpack.c.h.b16 %v6053
    %v7388 = vunpack.c.l.b16 %v6054
    %v7389 = vunpack.c.h.b16 %v6054
    %v7390 = vunpack.c.l.b16 %v6055
    %v7391 = vunpack.c.h.b16 %v6055
    %v7392 = vunpack.c.l.b16 %v6056
    %v7393 = vunpack.c.h.b16 %v6056
    %v7394 = vunpack.c.l.b16 %v6057
    %v7395 = vunpack.c.h.b16 %v6057
    %v7396 = vunpack.c.l.b16 %v6058
    %v7397 = vunpack.c.h.b16 %v6058
    %v7398 = vunpack.c.l.b16 %v6059
    %v7399 = vunpack.c.h.b16 %v6059
    %v7400 = vunpack.c.l.b16 %v6060
    %v7401 = vunpack.c.h.b16 %v6060
    %v7402 = vunpack.c.l.b16 %v6061
    %v7403 = vunpack.c.h.b16 %v6061
    %v7404 = vunpack.c.l.b16 %v6062
    %v7405 = vunpack.c.l.b16 %v6063
    %v7406 = vunpack.c.h.b16 %v6063
    %v7407 = vunpack.c.l.b16 %v6064
    %v7408 = vunpack.c.h.b16 %v6064
    %v7409 = vunpack.c.l.b16 %v6065
    %v7410 = vunpack.c.h.b16 %v6065
    %v7411 = vunpack.c.l.b16 %v6066
    %v7412 = vunpack.c.h.b16 %v6066
    %v7413 = vunpack.c.l.b16 %v6067
    %v7414 = vunpack.c.h.b16 %v6067
    %v7415 = vunpack.c.l.b16 %v6068
    %v7416 = vunpack.c.h.b16 %v6068
    %v7417 = vunpack.c.l.b16 %v6069
    %v7418 = vunpack.c.h.b16 %v6069
    %v7419 = vunpack.c.l.b16 %v6070
    %v7420 = vunpack.c.h.b16 %v6070
    %v7421 = vunpack.c.l.b16 %v6071
    %v7422 = vunpack.c.h.b16 %v6071
    %v7423 = vunpack.c.l.b16 %v6072
    %v7424 = vunpack.c.l.b16 %v6073
    %v7425 = vunpack.c.h.b16 %v6073
    %v7426 = vunpack.c.l.b16 %v6074
    %v7427 = vunpack.c.h.b16 %v6074
    %v7428 = vunpack.c.l.b16 %v6075
    %v7429 = vunpack.c.h.b16 %v6075
    %v7430 = vunpack.c.l.b16 %v6076
    %v7431 = vunpack.c.h.b16 %v6076
    %v7432 = vunpack.c.l.b16 %v6077
    %v7433 = vunpack.c.h.b16 %v6077
    %v7434 = vunpack.c.l.b16 %v6078
    %v7435 = vunpack.c.h.b16 %v6078
    %v7436 = vunpack.c.l.b16 %v6079
    %v7437 = vunpack.c.h.b16 %v6079
    %v7438 = vunpack.c.l.b16 %v6080
    %v7439 = vunpack.c.h.b16 %v6080
    %v7440 = vunpack.c.l.b16 %v6081
    %v7441 = vunpack.c.h.b16 %v6081
    %v7442 = vunpack.c.l.b16 %v6082
    %v7443 = vunpack.c.l.b16 %v6083
    %v7444 = vunpack.c.h.b16 %v6083
    %v7445 = vunpack.c.l.b16 %v6084
    %v7446 = vunpack.c.h.b16 %v6084
    %v7447 = vunpack.c.l.b16 %v6085
    %v7448 = vunpack.c.h.b16 %v6085
    %v7449 = vunpack.c.l.b16 %v6086
    %v7450 = vunpack.c.h.b16 %v6086
    %v7451 = vunpack.c.l.b16 %v6087
    %v7452 = vunpack.c.h.b16 %v6087
    %v7453 = vunpack.c.l.b16 %v6088
    %v7454 = vunpack.c.h.b16 %v6088
    %v7455 = vunpack.c.l.b16 %v6089
    %v7456 = vunpack.c.h.b16 %v6089
    %v7457 = vunpack.c.l.b16 %v6090
    %v7458 = vunpack.c.h.b16 %v6090
    %v7459 = vunpack.c.l.b16 %v6091
    %v7460 = vunpack.c.h.b16 %v6091
    %v7461 = vunpack.c.l.b16 %v6092
    %v7462 = vunpack.c.l.b16 %v6093
    %v7463 = vunpack.c.h.b16 %v6093
    %v7464 = vunpack.c.l.b16 %v6094
    %v7465 = vunpack.c.h.b16 %v6094
    %v7466 = vunpack.c.l.b16 %v6095
    %v7467 = vunpack.c.h.b16 %v6095
    %v7468 = vunpack.c.l.b16 %v6096
    %v7469 = vunpack.c.h.b16 %v6096
    %v7470 = vunpack.c.l.b16 %v6097
    %v7471 = vunpack.c.h.b16 %v6097
    %v7472 = vunpack.c.l.b16 %v6098
    %v7473 = vunpack.c.h.b16 %v6098
    %v7474 = vunpack.c.l.b16 %v6099
    %v7475 = vunpack.c.h.b16 %v6099
    %v7476 = vunpack.c.l.b16 %v6100
    %v7477 = vunpack.c.h.b16 %v6100
    %v7478 = vunpack.c.l.b16 %v6101
    %v7479 = vunpack.c.h.b16 %v6101
    %v7480 = vunpack.c.l.b16 %v6102
    %v7481 = vunpack.c.l.b16 %v6103
    %v7482 = vunpack.c.h.b16 %v6103
    %v7483 = vunpack.c.l.b16 %v6104
    %v7484 = vunpack.c.h.b16 %v6104
    %v7485 = vunpack.c.l.b16 %v6105
    %v7486 = vunpack.c.h.b16 %v6105
    %v7487 = vunpack.c.l.b16 %v6106
    %v7488 = vunpack.c.h.b16 %v6106
    %v7489 = vunpack.c.l.b16 %v6107
    %v7490 = vunpack.c.h.b16 %v6107
    %v7491 = vunpack.c.l.b16 %v6108
    %v7492 = vunpack.c.h.b16 %v6108
    %v7493 = vunpack.c.l.b16 %v6109
    %v7494 = vunpack.c.h.b16 %v6109
    %v7495 = vunpack.c.l.b16 %v6110
    %v7496 = vunpack.c.h.b16 %v6110
    %v7497 = vunpack.c.l.b16 %v6111
    %v7498 = vunpack.c.h.b16 %v6111
    %v7499 = vunpack.c.l.b16 %v6112
    %v7500 = vunpack.c.l.b16 %v6113
    %v7501 = vunpack.c.h.b16 %v6113
    %v7502 = vunpack.c.l.b16 %v6114
    %v7503 = vunpack.c.h.b16 %v6114
    %v7504 = vunpack.c.l.b16 %v6115
    %v7505 = vunpack.c.h.b16 %v6115
    %v7506 = vunpack.c.l.b16 %v6116
    %v7507 = vunpack.c.h.b16 %v6116
    %v7508 = vunpack.c.l.b16 %v6117
    %v7509 = vunpack.c.h.b16 %v6117
    %v7510 = vunpack.c.l.b16 %v6118
    %v7511 = vunpack.c.h.b16 %v6118
    %v7512 = vunpack.c.l.b16 %v6119
    %v7513 = vunpack.c.h.b16 %v6119
    %v7514 = vunpack.c.l.b16 %v6120
    %v7515 = vunpack.c.h.b16 %v6120
    %v7516 = vunpack.c.l.b16 %v6121
    %v7517 = vunpack.c.h.b16 %v6121
    %v7518 = vunpack.c.l.b16 %v6122
    %v7519 = vunpack.c.l.b16 %v6123
    %v7520 = vunpack.c.h.b16 %v6123
    %v7521 = vunpack.c.l.b16 %v6124
    %v7522 = vunpack.c.h.b16 %v6124
    %v7523 = vunpack.c.l.b16 %v6125
    %v7524 = vunpack.c.h.b16 %v6125
    %v7525 = vunpack.c.l.b16 %v6126
    %v7526 = vunpack.c.h.b16 %v6126
    %v7527 = vunpack.c.l.b16 %v6127
    %v7528 = vunpack.c.h.b16 %v6127
    %v7529 = vunpack.c.l.b16 %v6128
    %v7530 = vunpack.c.h.b16 %v6128
    %v7531 = vunpack.c.l.b16 %v6129
    %v7532 = vunpack.c.h.b16 %v6129
    %v7533 = vunpack.c.l.b16 %v6130
    %v7534 = vunpack.c.h.b16 %v6130
    %v7535 = vunpack.c.l.b16 %v6131
    %v7536 = vunpack.c.h.b16 %v6131
    %v7537 = vunpack.c.l.b16 %v6132
    %v7538 = vunpack.c.l.b16 %v6133
    %v7539 = vunpack.c.h.b16 %v6133
    %v7540 = vunpack.c.l.b16 %v6134
    %v7541 = vunpack.c.h.b16 %v6134
    %v7542 = vunpack.c.l.b16 %v6135
    %v7543 = vunpack.c.h.b16 %v6135
    %v7544 = vunpack.c.l.b16 %v6136
    %v7545 = vunpack.c.h.b16 %v6136
    %v7546 = vunpack.c.l.b16 %v6137
    %v7547 = vunpack.c.h.b16 %v6137
    %v7548 = vunpack.c.l.b16 %v6138
    %v7549 = vunpack.c.h.b16 %v6138
    %v7550 = vunpack.c.l.b16 %v6139
    %v7551 = vunpack.c.h.b16 %v6139
    %v7552 = vunpack.c.l.b16 %v6140
    %v7553 = vunpack.c.h.b16 %v6140
    %v7554 = vunpack.c.l.b16 %v6141
    %v7555 = vunpack.c.h.b16 %v6141
    %v7556 = vunpack.c.l.b16 %v6142
    %v7557 = vunpack.c.l.b16 %v6143
    %v7558 = vunpack.c.h.b16 %v6143
    %v7559 = vunpack.c.l.b16 %v6144
    %v7560 = vunpack.c.h.b16 %v6144
    %v7561 = vunpack.c.l.b16 %v6145
    %v7562 = vunpack.c.h.b16 %v6145
    %v7563 = vunpack.c.l.b16 %v6146
    %v7564 = vunpack.c.h.b16 %v6146
    %v7565 = vunpack.c.l.b16 %v6147
    %v7566 = vunpack.c.h.b16 %v6147
    %v7567 = vunpack.c.l.b16 %v6148
    %v7568 = vunpack.c.h.b16 %v6148
    %v7569 = vunpack.c.l.b16 %v6149
    %v7570 = vunpack.c.h.b16 %v6149
    %v7571 = vunpack.c.l.b16 %v6150
    %v7572 = vunpack.c.h.b16 %v6150
    %v7573 = vunpack.c.l.b16 %v6151
    %v7574 = vunpack.c.h.b16 %v6151
    %v7575 = vunpack.c.l.b16 %v6152
    %v7576 = vunpack.c.l.b16 %v6153
    %v7577 = vunpack.c.h.b16 %v6153
    %v7578 = vunpack.c.l.b16 %v6154
    %v7579 = vunpack.c.h.b16 %v6154
    %v7580 = vunpack.c.l.b16 %v6155
    %v7581 = vunpack.c.h.b16 %v6155
    %v7582 = vunpack.c.l.b16 %v6156
    %v7583 = vunpack.c.h.b16 %v6156
    %v7584 = vunpack.c.l.b16 %v6157
    %v7585 = vunpack.c.h.b16 %v6157
    %v7586 = vunpack.c.l.b16 %v6158
    %v7587 = vunpack.c.h.b16 %v6158
    %v7588 = vunpack.c.l.b16 %v6159
    %v7589 = vunpack.c.h.b16 %v6159
    %v7590 = vunpack.c.l.b16 %v6160
    %v7591 = vunpack.c.h.b16 %v6160
    %v7592 = vunpack.c.l.b16 %v6161
    %v7593 = vunpack.c.h.b16 %v6161
    %v7594 = vunpack.c.l.b16 %v6162
    %v7595 = vunpack.c.l.b16 %v6163
    %v7596 = vunpack.c.h.b16 %v6163
    %v7597 = vunpack.c.l.b16 %v6164
    %v7598 = vunpack.c.h.b16 %v6164
    %v7599 = vunpack.c.l.b16 %v6165
    %v7600 = vunpack.c.h.b16 %v6165
    %v7601 = vunpack.c.l.b16 %v6166
    %v7602 = vunpack.c.h.b16 %v6166
    %v7603 = vunpack.c.l.b16 %v6167
    %v7604 = vunpack.c.h.b16 %v6167
    %v7605 = vunpack.c.l.b16 %v6168
    %v7606 = vunpack.c.h.b16 %v6168
    %v7607 = vunpack.c.l.b16 %v6169
    %v7608 = vunpack.c.h.b16 %v6169
    %v7609 = vunpack.c.l.b16 %v6170
    %v7610 = vunpack.c.h.b16 %v6170
    %v7611 = vunpack.c.l.b16 %v6171
    %v7612 = vunpack.c.h.b16 %v6171
    %v7613 = vunpack.c.l.b16 %v6172
    %v7614 = vunpack.c.l.b16 %v6173
    %v7615 = vunpack.c.h.b16 %v6173
    %v7616 = vunpack.c.l.b16 %v6174
    %v7617 = vunpack.c.h.b16 %v6174
    %v7618 = vunpack.c.l.b16 %v6175
    %v7619 = vunpack.c.h.b16 %v6175
    %v7620 = vunpack.c.l.b16 %v6176
    %v7621 = vunpack.c.h.b16 %v6176
    %v7622 = vunpack.c.l.b16 %v6177
    %v7623 = vunpack.c.h.b16 %v6177
    %v7624 = vunpack.c.l.b16 %v6178
    %v7625 = vunpack.c.h.b16 %v6178
    %v7626 = vunpack.c.l.b16 %v6179
    %v7627 = vunpack.c.h.b16 %v6179
    %v7628 = vunpack.c.l.b16 %v6180
    %v7629 = vunpack.c.h.b16 %v6180
    %v7630 = vunpack.c.l.b16 %v6181
    %v7631 = vunpack.c.h.b16 %v6181
    %v7632 = vunpack.c.l.b16 %v6182
    %v7633 = vunpack.c.l.b16 %v6183
    %v7634 = vunpack.c.h.b16 %v6183
    %v7635 = vunpack.c.l.b16 %v6184
    %v7636 = vunpack.c.h.b16 %v6184
    %v7637 = vunpack.c.l.b16 %v6185
    %v7638 = vunpack.c.h.b16 %v6185
    %v7639 = vunpack.c.l.b16 %v6186
    %v7640 = vunpack.c.h.b16 %v6186
    %v7641 = vunpack.c.l.b16 %v6187
    %v7642 = vunpack.c.h.b16 %v6187
    %v7643 = vunpack.c.l.b16 %v6188
    %v7644 = vunpack.c.h.b16 %v6188
    %v7645 = vunpack.c.l.b16 %v6189
    %v7646 = vunpack.c.h.b16 %v6189
    %v7647 = vunpack.c.l.b16 %v6190
    %v7648 = vunpack.c.h.b16 %v6190
    %v7649 = vunpack.c.l.b16 %v6191
    %v7650 = vunpack.c.h.b16 %v6191
    %v7651 = vunpack.c.l.b16 %v6192
    %v7652 = vunpack.c.l.b16 %v6193
    %v7653 = vunpack.c.h.b16 %v6193
    %v7654 = vunpack.c.l.b16 %v6194
    %v7655 = vunpack.c.h.b16 %v6194
    %v7656 = vunpack.c.l.b16 %v6195
    %v7657 = vunpack.c.h.b16 %v6195
    %v7658 = vunpack.c.l.b16 %v6196
    %v7659 = vunpack.c.h.b16 %v6196
    %v7660 = vunpack.c.l.b16 %v6197
    %v7661 = vunpack.c.h.b16 %v6197
    %v7662 = vunpack.c.l.b16 %v6198
    %v7663 = vunpack.c.h.b16 %v6198
    %v7664 = vunpack.c.l.b16 %v6199
    %v7665 = vunpack.c.h.b16 %v6199
    %v7666 = vunpack.c.l.b16 %v6200
    %v7667 = vunpack.c.h.b16 %v6200
    %v7668 = vunpack.c.l.b16 %v6201
    %v7669 = vunpack.c.h.b16 %v6201
    %v7670 = vunpack.c.l.b16 %v6202
    %v7671 = vunpack.c.l.b16 %v6203
    %v7672 = vunpack.c.h.b16 %v6203
    %v7673 = vunpack.c.l.b16 %v6204
    %v7674 = vunpack.c.h.b16 %v6204
    %v7675 = vunpack.c.l.b16 %v6205
    %v7676 = vunpack.c.h.b16 %v6205
    %v7677 = vunpack.c.l.b16 %v6206
    %v7678 = vunpack.c.h.b16 %v6206
    %v7679 = vunpack.c.l.b16 %v6207
    %v7680 = vunpack.c.h.b16 %v6207
    %v7681 = vunpack.c.l.b16 %v6208
    %v7682 = vunpack.c.h.b16 %v6208
    %v7683 = vunpack.c.l.b16 %v6209
    %v7684 = vunpack.c.h.b16 %v6209
    %v7685 = vunpack.c.l.b16 %v6210
    %v7686 = vunpack.c.h.b16 %v6210
    %v7687 = vunpack.c.l.b16 %v6211
    %v7688 = vunpack.c.h.b16 %v6211
    %v7689 = vunpack.c.l.b16 %v6212
    %v7690 = vunpack.c.l.b16 %v6213
    %v7691 = vunpack.c.h.b16 %v6213
    %v7692 = vunpack.c.l.b16 %v6214
    %v7693 = vunpack.c.h.b16 %v6214
    %v7694 = vunpack.c.l.b16 %v6215
    %v7695 = vunpack.c.h.b16 %v6215
    %v7696 = vunpack.c.l.b16 %v6216
    %v7697 = vunpack.c.h.b16 %v6216
    %v7698 = vunpack.c.l.b16 %v6217
    %v7699 = vunpack.c.h.b16 %v6217
    %v7700 = vunpack.c.l.b16 %v6218
    %v7701 = vunpack.c.h.b16 %v6218
    %v7702 = vunpack.c.l.b16 %v6219
    %v7703 = vunpack.c.h.b16 %v6219
    %v7704 = vunpack.c.l.b16 %v6220
    %v7705 = vunpack.c.h.b16 %v6220
    %v7706 = vunpack.c.l.b16 %v6221
    %v7707 = vunpack.c.h.b16 %v6221
    %v7708 = vunpack.c.l.b16 %v6222
    %v7709 = vunpack.c.l.b16 %v6223
    %v7710 = vunpack.c.h.b16 %v6223
    %v7711 = vunpack.c.l.b16 %v6224
    %v7712 = vunpack.c.h.b16 %v6224
    %v7713 = vunpack.c.l.b16 %v6225
    %v7714 = vunpack.c.h.b16 %v6225
    %v7715 = vunpack.c.l.b16 %v6226
    %v7716 = vunpack.c.h.b16 %v6226
    %v7717 = vunpack.c.l.b16 %v6227
    %v7718 = vunpack.c.h.b16 %v6227
    %v7719 = vunpack.c.l.b16 %v6228
    %v7720 = vunpack.c.h.b16 %v6228
    %v7721 = vunpack.c.l.b16 %v6229
    %v7722 = vunpack.c.h.b16 %v6229
    %v7723 = vunpack.c.l.b16 %v6230
    %v7724 = vunpack.c.h.b16 %v6230
    %v7725 = vunpack.c.l.b16 %v6231
    %v7726 = vunpack.c.h.b16 %v6231
    %v7727 = vunpack.c.l.b16 %v6232
    %v7728 = vunpack.c.l.b16 %v6233
    %v7729 = vunpack.c.h.b16 %v6233
    %v7730 = vunpack.c.l.b16 %v6234
    %v7731 = vunpack.c.h.b16 %v6234
    %v7732 = vunpack.c.l.b16 %v6235
    %v7733 = vunpack.c.h.b16 %v6235
    %v7734 = vunpack.c.l.b16 %v6236
    %v7735 = vunpack.c.h.b16 %v6236
    %v7736 = vunpack.c.l.b16 %v6237
    %v7737 = vunpack.c.h.b16 %v6237
    %v7738 = vunpack.c.l.b16 %v6238
    %v7739 = vunpack.c.h.b16 %v6238
    %v7740 = vunpack.c.l.b16 %v6239
    %v7741 = vunpack.c.h.b16 %v6239
    %v7742 = vunpack.c.l.b16 %v6240
    %v7743 = vunpack.c.h.b16 %v6240
    %v7744 = vunpack.c.l.b16 %v6241
    %v7745 = vunpack.c.h.b16 %v6241
    %v7746 = vunpack.c.l.b16 %v6242
    %v7747 = vunpack.c.l.b16 %v6243
    %v7748 = vunpack.c.h.b16 %v6243
    %v7749 = vunpack.c.l.b16 %v6244
    %v7750 = vunpack.c.h.b16 %v6244
    %v7751 = vunpack.c.l.b16 %v6245
    %v7752 = vunpack.c.h.b16 %v6245
    %v7753 = vunpack.c.l.b16 %v6246
    %v7754 = vunpack.c.h.b16 %v6246
    %v7755 = vunpack.c.l.b16 %v6247
    %v7756 = vunpack.c.h.b16 %v6247
    %v7757 = vunpack.c.l.b16 %v6248
    %v7758 = vunpack.c.h.b16 %v6248
    %v7759 = vunpack.c.l.b16 %v6249
    %v7760 = vunpack.c.h.b16 %v6249
    %v7761 = vunpack.c.l.b16 %v6250
    %v7762 = vunpack.c.h.b16 %v6250
    %v7763 = vunpack.c.l.b16 %v6251
    %v7764 = vunpack.c.h.b16 %v6251
    %v7765 = vunpack.c.l.b16 %v6252
    %v7766 = vunpack.c.l.b16 %v6253
    %v7767 = vunpack.c.h.b16 %v6253
    %v7768 = vunpack.c.l.b16 %v6254
    %v7769 = vunpack.c.h.b16 %v6254
    %v7770 = vunpack.c.l.b16 %v6255
    %v7771 = vunpack.c.h.b16 %v6255
    %v7772 = vunpack.c.l.b16 %v6256
    %v7773 = vunpack.c.h.b16 %v6256
    %v7774 = vunpack.c.l.b16 %v6257
    %v7775 = vunpack.c.h.b16 %v6257
    %v7776 = vunpack.c.l.b16 %v6258
    %v7777 = vunpack.c.h.b16 %v6258
    %v7778 = vunpack.c.l.b16 %v6259
    %v7779 = vunpack.c.h.b16 %v6259
    %v7780 = vunpack.c.l.b16 %v6260
    %v7781 = vunpack.c.h.b16 %v6260
    %v7782 = vunpack.c.l.b16 %v6261
    %v7783 = vunpack.c.h.b16 %v6261
    %v7784 = vunpack.c.l.b16 %v6262
    %v7785 = vunpack.c.l.b16 %v6263
    %v7786 = vunpack.c.h.b16 %v6263
    %v7787 = vunpack.c.l.b16 %v6264
    %v7788 = vunpack.c.h.b16 %v6264
    %v7789 = vunpack.c.l.b16 %v6265
    %v7790 = vunpack.c.h.b16 %v6265
    %v7791 = vunpack.c.l.b16 %v6266
    %v7792 = vunpack.c.h.b16 %v6266
    %v7793 = vunpack.c.l.b16 %v6267
    %v7794 = vunpack.c.h.b16 %v6267
    %v7795 = vunpack.c.l.b16 %v6268
    %v7796 = vunpack.c.h.b16 %v6268
    %v7797 = vunpack.c.l.b16 %v6269
    %v7798 = vunpack.c.h.b16 %v6269
    %v7799 = vunpack.c.l.b16 %v6270
    %v7800 = vunpack.c.h.b16 %v6270
    %v7801 = vunpack.c.l.b16 %v6271
    %v7802 = vunpack.c.h.b16 %v6271
    %v7803 = vunpack.c.l.b16 %v6272
    %v7804 = vunpack.c.l.b16 %v6273
    %v7805 = vunpack.c.h.b16 %v6273
    %v7806 = vunpack.c.l.b16 %v6274
    %v7807 = vunpack.c.h.b16 %v6274
    %v7808 = vunpack.c.l.b16 %v6275
    %v7809 = vunpack.c.h.b16 %v6275
    %v7810 = vunpack.c.l.b16 %v6276
    %v7811 = vunpack.c.h.b16 %v6276
    %v7812 = vunpack.c.l.b16 %v6277
    %v7813 = vunpack.c.h.b16 %v6277
    %v7814 = vunpack.c.l.b16 %v6278
    %v7815 = vunpack.c.h.b16 %v6278
    %v7816 = vunpack.c.l.b16 %v6279
    %v7817 = vunpack.c.h.b16 %v6279
    %v7818 = vunpack.c.l.b16 %v6280
    %v7819 = vunpack.c.h.b16 %v6280
    %v7820 = vunpack.c.l.b16 %v6281
    %v7821 = vunpack.c.h.b16 %v6281
    %v7822 = vunpack.c.l.b16 %v6282
    %v7823 = vunpack.c.l.b16 %v6283
    %v7824 = vunpack.c.h.b16 %v6283
    %v7825 = vunpack.c.l.b16 %v6284
    %v7826 = vunpack.c.h.b16 %v6284
    %v7827 = vunpack.c.l.b16 %v6285
    %v7828 = vunpack.c.h.b16 %v6285
    %v7829 = vunpack.c.l.b16 %v6286
    %v7830 = vunpack.c.h.b16 %v6286
    %v7831 = vunpack.c.l.b16 %v6287
    %v7832 = vunpack.c.h.b16 %v6287
    %v7833 = vunpack.c.l.b16 %v6288
    %v7834 = vunpack.c.h.b16 %v6288
    %v7835 = vunpack.c.l.b16 %v6289
    %v7836 = vunpack.c.h.b16 %v6289
    %v7837 = vunpack.c.l.b16 %v6290
    %v7838 = vunpack.c.h.b16 %v6290
    %v7839 = vunpack.c.l.b16 %v6291
    %v7840 = vunpack.c.h.b16 %v6291
    %v7841 = vunpack.c.l.b16 %v6292
    %v7842 = vunpack.c.l.b16 %v6293
    %v7843 = vunpack.c.h.b16 %v6293
    %v7844 = vunpack.c.l.b16 %v6294
    %v7845 = vunpack.c.h.b16 %v6294
    %v7846 = vunpack.c.l.b16 %v6295
    %v7847 = vunpack.c.h.b16 %v6295
    %v7848 = vunpack.c.l.b16 %v6296
    %v7849 = vunpack.c.h.b16 %v6296
    %v7850 = vunpack.c.l.b16 %v6297
    %v7851 = vunpack.c.h.b16 %v6297
    %v7852 = vunpack.c.l.b16 %v6298
    %v7853 = vunpack.c.h.b16 %v6298
    %v7854 = vunpack.c.l.b16 %v6299
    %v7855 = vunpack.c.h.b16 %v6299
    %v7856 = vunpack.c.l.b16 %v6300
    %v7857 = vunpack.c.h.b16 %v6300
    %v7858 = vunpack.c.l.b16 %v6301
    %v7859 = vunpack.c.h.b16 %v6301
    %v7860 = vunpack.c.l.b16 %v6302
    %v7861 = vunpack.c.l.b16 %v6303
    %v7862 = vunpack.c.h.b16 %v6303
    %v7863 = vunpack.c.l.b16 %v6304
    %v7864 = vunpack.c.h.b16 %v6304
    %v7865 = vunpack.c.l.b16 %v6305
    %v7866 = vunpack.c.h.b16 %v6305
    %v7867 = vunpack.c.l.b16 %v6306
    %v7868 = vunpack.c.h.b16 %v6306
    %v7869 = vunpack.c.l.b16 %v6307
    %v7870 = vunpack.c.h.b16 %v6307
    %v7871 = vunpack.c.l.b16 %v6308
    %v7872 = vunpack.c.h.b16 %v6308
    %v7873 = vunpack.c.l.b16 %v6309
    %v7874 = vunpack.c.h.b16 %v6309
    %v7875 = vunpack.c.l.b16 %v6310
    %v7876 = vunpack.c.h.b16 %v6310
    %v7877 = vunpack.c.l.b16 %v6311
    %v7878 = vunpack.c.h.b16 %v6311
    %v7879 = vunpack.c.l.b16 %v6312
    %v7880 = vunpack.c.l.b16 %v6313
    %v7881 = vunpack.c.h.b16 %v6313
    %v7882 = vunpack.c.l.b16 %v6314
    %v7883 = vunpack.c.h.b16 %v6314
    %v7884 = vunpack.c.l.b16 %v6315
    %v7885 = vunpack.c.h.b16 %v6315
    %v7886 = vunpack.c.l.b16 %v6316
    %v7887 = vunpack.c.h.b16 %v6316
    %v7888 = vunpack.c.l.b16 %v6317
    %v7889 = vunpack.c.h.b16 %v6317
    %v7890 = vunpack.c.l.b16 %v6318
    %v7891 = vunpack.c.h.b16 %v6318
    %v7892 = vunpack.c.l.b16 %v6319
    %v7893 = vunpack.c.h.b16 %v6319
    %v7894 = vunpack.c.l.b16 %v6320
    %v7895 = vunpack.c.h.b16 %v6320
    %v7896 = vunpack.c.l.b16 %v6321
    %v7897 = vunpack.c.h.b16 %v6321
    %v7898 = vunpack.c.l.b16 %v6322
    %v7899 = vunpack.c.l.b16 %v6323
    %v7900 = vunpack.c.h.b16 %v6323
    %v7901 = vunpack.c.l.b16 %v6324
    %v7902 = vunpack.c.h.b16 %v6324
    %v7903 = vunpack.c.l.b16 %v6325
    %v7904 = vunpack.c.h.b16 %v6325
    %v7905 = vunpack.c.l.b16 %v6326
    %v7906 = vunpack.c.h.b16 %v6326
    %v7907 = vunpack.c.l.b16 %v6327
    %v7908 = vunpack.c.h.b16 %v6327
    %v7909 = vunpack.c.l.b16 %v6328
    %v7910 = vunpack.c.h.b16 %v6328
    %v7911 = vunpack.c.l.b16 %v6329
    %v7912 = vunpack.c.h.b16 %v6329
    %v7913 = vunpack.c.l.b16 %v6330
    %v7914 = vunpack.c.h.b16 %v6330
    %v7915 = vunpack.c.l.b16 %v6331
    %v7916 = vunpack.c.h.b16 %v6331
    %v7917 = vunpack.c.l.b16 %v6332
    %v7918 = vunpack.c.l.b16 %v6333
    %v7919 = vunpack.c.h.b16 %v6333
    %v7920 = vunpack.c.l.b16 %v6334
    %v7921 = vunpack.c.h.b16 %v6334
    %v7922 = vunpack.c.l.b16 %v6335
    %v7923 = vunpack.c.h.b16 %v6335
    %v7924 = vunpack.c.l.b16 %v6336
    %v7925 = vunpack.c.h.b16 %v6336
    %v7926 = vunpack.c.l.b16 %v6337
    %v7927 = vunpack.c.h.b16 %v6337
    %v7928 = vunpack.c.l.b16 %v6338
    %v7929 = vunpack.c.h.b16 %v6338
    %v7930 = vunpack.c.l.b16 %v6339
    %v7931 = vunpack.c.h.b16 %v6339
    %v7932 = vunpack.c.l.b16 %v6340
    %v7933 = vunpack.c.h.b16 %v6340
    %v7934 = vunpack.c.l.b16 %v6341
    %v7935 = vunpack.c.h.b16 %v6341
    %v7936 = vunpack.c.l.b16 %v6342
    %v7937 = vunpack.c.l.b16 %v6343
    %v7938 = vunpack.c.h.b16 %v6343
    %v7939 = vunpack.c.l.b16 %v6344
    %v7940 = vunpack.c.h.b16 %v6344
    %v7941 = vunpack.c.l.b16 %v6345
    %v7942 = vunpack.c.h.b16 %v6345
    %v7943 = vunpack.c.l.b16 %v6346
    %v7944 = vunpack.c.h.b16 %v6346
    %v7945 = vunpack.c.l.b16 %v6347
    %v7946 = vunpack.c.h.b16 %v6347
    %v7947 = vunpack.c.l.b16 %v6348
    %v7948 = vunpack.c.h.b16 %v6348
    %v7949 = vunpack.c.l.b16 %v6349
    %v7950 = vunpack.c.h.b16 %v6349
    %v7951 = vunpack.c.l.b16 %v6350
    %v7952 = vunpack.c.h.b16 %v6350
    %v7953 = vunpack.c.l.b16 %v6351
    %v7954 = vunpack.c.h.b16 %v6351
    %v7955 = vunpack.c.l.b16 %v6352
    %v7956 = vunpack.c.l.b16 %v6353
    %v7957 = vunpack.c.h.b16 %v6353
    %v7958 = vunpack.c.l.b16 %v6354
    %v7959 = vunpack.c.h.b16 %v6354
    %v7960 = vunpack.c.l.b16 %v6355
    %v7961 = vunpack.c.h.b16 %v6355
    %v7962 = vunpack.c.l.b16 %v6356
    %v7963 = vunpack.c.h.b16 %v6356
    %v7964 = vunpack.c.l.b16 %v6357
    %v7965 = vunpack.c.h.b16 %v6357
    %v7966 = vunpack.c.l.b16 %v6358
    %v7967 = vunpack.c.h.b16 %v6358
    %v7968 = vunpack.c.l.b16 %v6359
    %v7969 = vunpack.c.h.b16 %v6359
    %v7970 = vunpack.c.l.b16 %v6360
    %v7971 = vunpack.c.h.b16 %v6360
    %v7972 = vunpack.c.l.b16 %v6361
    %v7973 = vunpack.c.h.b16 %v6361
    %v7974 = vunpack.c.l.b16 %v6362
    %v7975 = vunpack.c.l.b16 %v6363
    %v7976 = vunpack.c.h.b16 %v6363
    %v7977 = vunpack.c.l.b16 %v6364
    %v7978 = vunpack.c.h.b16 %v6364
    %v7979 = vunpack.c.l.b16 %v6365
    %v7980 = vunpack.c.h.b16 %v6365
    %v7981 = vunpack.c.l.b16 %v6366
    %v7982 = vunpack.c.h.b16 %v6366
    %v7983 = vunpack.c.l.b16 %v6367
    %v7984 = vunpack.c.h.b16 %v6367
    %v7985 = vunpack.c.l.b16 %v6368
    %v7986 = vunpack.c.h.b16 %v6368
    %v7987 = vunpack.c.l.b16 %v6369
    %v7988 = vunpack.c.h.b16 %v6369
    %v7989 = vunpack.c.l.b16 %v6370
    %v7990 = vunpack.c.h.b16 %v6370
    %v7991 = vunpack.c.l.b16 %v6371
    %v7992 = vunpack.c.h.b16 %v6371
    %v7993 = vunpack.c.l.b16 %v6372
    %v7994 = vunpack.c.l.b16 %v6373
    %v7995 = vunpack.c.h.b16 %v6373
    %v7996 = vunpack.c.l.b16 %v6374
    %v7997 = vunpack.c.h.b16 %v6374
    %v7998 = vunpack.c.l.b16 %v6375
    %v7999 = vunpack.c.h.b16 %v6375
    %v8000 = vunpack.c.l.b16 %v6376
    %v8001 = vunpack.c.h.b16 %v6376
    %v8002 = vunpack.c.l.b16 %v6377
    %v8003 = vunpack.c.h.b16 %v6377
    %v8004 = vunpack.c.l.b16 %v6378
    %v8005 = vunpack.c.h.b16 %v6378
    %v8006 = vunpack.c.l.b16 %v6379
    %v8007 = vunpack.c.h.b16 %v6379
    %v8008 = vunpack.c.l.b16 %v6380
    %v8009 = vunpack.c.h.b16 %v6380
    %v8010 = vunpack.c.l.b16 %v6381
    %v8011 = vunpack.c.h.b16 %v6381
    %v8012 = vunpack.c.l.b16 %v6382
    %v8013 = vunpack.c.l.b16 %v6383
    %v8014 = vunpack.c.h.b16 %v6383
    %v8015 = vunpack.c.l.b16 %v6384
    %v8016 = vunpack.c.h.b16 %v6384
    %v8017 = vunpack.c.l.b16 %v6385
    %v8018 = vunpack.c.h.b16 %v6385
    %v8019 = vunpack.c.l.b16 %v6386
    %v8020 = vunpack.c.h.b16 %v6386
    %v8021 = vunpack.c.l.b16 %v6387
    %v8022 = vunpack.c.h.b16 %v6387
    %v8023 = vunpack.c.l.b16 %v6388
    %v8024 = vunpack.c.h.b16 %v6388
    %v8025 = vunpack.c.l.b16 %v6389
    %v8026 = vunpack.c.h.b16 %v6389
    %v8027 = vunpack.c.l.b16 %v6390
    %v8028 = vunpack.c.h.b16 %v6390
    %v8029 = vunpack.c.l.b16 %v6391
    %v8030 = vunpack.c.h.b16 %v6391
    %v8031 = vunpack.c.l.b16 %v6392
    %v8032 = vunpack.c.l.b16 %v6393
    %v8033 = vunpack.c.h.b16 %v6393
    %v8034 = vunpack.c.l.b16 %v6394
    %v8035 = vunpack.c.h.b16 %v6394
    %v8036 = vunpack.c.l.b16 %v6395
    %v8037 = vunpack.c.h.b16 %v6395
    %v8038 = vunpack.c.l.b16 %v6396
    %v8039 = vunpack.c.h.b16 %v6396
    %v8040 = vunpack.c.l.b16 %v6397
    %v8041 = vunpack.c.h.b16 %v6397
    %v8042 = vunpack.c.l.b16 %v6398
    %v8043 = vunpack.c.h.b16 %v6398
    %v8044 = vunpack.c.l.b16 %v6399
    %v8045 = vunpack.c.h.b16 %v6399
    %v8046 = vunpack.c.l.b16 %v6400
    %v8047 = vunpack.c.h.b16 %v6400
    %v8048 = vunpack.c.l.b16 %v6401
    %v8049 = vunpack.c.h.b16 %v6401
    %v8050 = vunpack.c.l.b16 %v6402
    %v8051 = vunpack.c.l.b16 %v6403
    %v8052 = vunpack.c.h.b16 %v6403
    %v8053 = vunpack.c.l.b16 %v6404
    %v8054 = vunpack.c.h.b16 %v6404
    %v8055 = vunpack.c.l.b16 %v6405
    %v8056 = vunpack.c.h.b16 %v6405
    %v8057 = vunpack.c.l.b16 %v6406
    %v8058 = vunpack.c.h.b16 %v6406
    %v8059 = vunpack.c.l.b16 %v6407
    %v8060 = vunpack.c.h.b16 %v6407
    %v8061 = vunpack.c.l.b16 %v6408
    %v8062 = vunpack.c.h.b16 %v6408
    %v8063 = vunpack.c.l.b16 %v6409
    %v8064 = vunpack.c.h.b16 %v6409
    %v8065 = vunpack.c.l.b16 %v6410
    %v8066 = vunpack.c.h.b16 %v6410
    %v8067 = vunpack.c.l.b16 %v6411
    %v8068 = vunpack.c.h.b16 %v6411
    %v8069 = vunpack.c.l.b16 %v6412
    %v8070 = vunpack.c.l.b16 %v6413
    %v8071 = vunpack.c.h.b16 %v6413
    %v8072 = vunpack.c.l.b16 %v6414
    %v8073 = vunpack.c.h.b16 %v6414
    %v8074 = vunpack.c.l.b16 %v6415
    %v8075 = vunpack.c.h.b16 %v6415
    %v8076 = vunpack.c.l.b16 %v6416
    %v8077 = vunpack.c.h.b16 %v6416
    %v8078 = vunpack.c.l.b16 %v6417
    %v8079 = vunpack.c.h.b16 %v6417
    %v8080 = vunpack.c.l.b16 %v6418
    %v8081 = vunpack.c.h.b16 %v6418
    %v8082 = vunpack.c.l.b16 %v6419
    %v8083 = vunpack.c.h.b16 %v6419
    %v8084 = vunpack.c.l.b16 %v6420
    %v8085 = vunpack.c.h.b16 %v6420
    %v8086 = vunpack.c.l.b16 %v6421
    %v8087 = vunpack.c.h.b16 %v6421
    %v8088 = vunpack.c.l.b16 %v6422
    %v8089 = vunpack.c.l.b16 %v6423
    %v8090 = vunpack.c.h.b16 %v6423
    %v8091 = vunpack.c.l.b16 %v6424
    %v8092 = vunpack.c.h.b16 %v6424
    %v8093 = vunpack.c.l.b16 %v6425
    %v8094 = vunpack.c.h.b16 %v6425
    %v8095 = vunpack.c.l.b16 %v6426
    %v8096 = vunpack.c.h.b16 %v6426
    %v8097 = vunpack.c.l.b16 %v6427
    %v8098 = vunpack.c.h.b16 %v6427
    %v8099 = vunpack.c.l.b16 %v6428
    %v8100 = vunpack.c.h.b16 %v6428
    %v8101 = vunpack.c.l.b16 %v6429
    %v8102 = vunpack.c.h.b16 %v6429
    %v8103 = vunpack.c.l.b16 %v6430
    %v8104 = vunpack.c.h.b16 %v6430
    %v8105 = vunpack.c.l.b16 %v6431
    %v8106 = vunpack.c.h.b16 %v6431
    %v8107 = vunpack.c.l.b16 %v6432
    %v8108 = vunpack.c.l.b16 %v6433
    %v8109 = vunpack.c.h.b16 %v6433
    %v8110 = vunpack.c.l.b16 %v6434
    %v8111 = vunpack.c.h.b16 %v6434
    %v8112 = vunpack.c.l.b16 %v6435
    %v8113 = vunpack.c.h.b16 %v6435
    %v8114 = vunpack.c.l.b16 %v6436
    %v8115 = vunpack.c.h.b16 %v6436
    %v8116 = vunpack.c.l.b16 %v6437
    %v8117 = vunpack.c.h.b16 %v6437
    %v8118 = vunpack.c.l.b16 %v6438
    %v8119 = vunpack.c.h.b16 %v6438
    %v8120 = vunpack.c.l.b16 %v6439
    %v8121 = vunpack.c.h.b16 %v6439
    %v8122 = vunpack.c.l.b16 %v6440
    %v8123 = vunpack.c.h.b16 %v6440
    %v8124 = vunpack.c.l.b16 %v6441
    %v8125 = vunpack.c.h.b16 %v6441
    %v8126 = vunpack.c.l.b16 %v6442
    %v8127 = vunpack.c.l.b16 %v6443
    %v8128 = vunpack.c.h.b16 %v6443
    %v8129 = vunpack.c.l.b16 %v6444
    %v8130 = vunpack.c.h.b16 %v6444
    %v8131 = vunpack.c.l.b16 %v6445
    %v8132 = vunpack.c.h.b16 %v6445
    %v8133 = vunpack.c.l.b16 %v6446
    %v8134 = vunpack.c.h.b16 %v6446
    %v8135 = vunpack.c.l.b16 %v6447
    %v8136 = vunpack.c.h.b16 %v6447
    %v8137 = vunpack.c.l.b16 %v6448
    %v8138 = vunpack.c.h.b16 %v6448
    %v8139 = vunpack.c.l.b16 %v6449
    %v8140 = vunpack.c.h.b16 %v6449
    %v8141 = vunpack.c.l.b16 %v6450
    %v8142 = vunpack.c.h.b16 %v6450
    %v8143 = vunpack.c.l.b16 %v6451
    %v8144 = vunpack.c.h.b16 %v6451
    %v8145 = vunpack.c.l.b16 %v6452
    %v8146 = vunpack.c.l.b16 %v6453
    %v8147 = vunpack.c.h.b16 %v6453
    %v8148 = vunpack.c.l.b16 %v6454
    %v8149 = vunpack.c.h.b16 %v6454
    %v8150 = vunpack.c.l.b16 %v6455
    %v8151 = vunpack.c.h.b16 %v6455
    %v8152 = vunpack.c.l.b16 %v6456
    %v8153 = vunpack.c.h.b16 %v6456
    %v8154 = vunpack.c.l.b16 %v6457
    %v8155 = vunpack.c.h.b16 %v6457
    %v8156 = vunpack.c.l.b16 %v6458
    %v8157 = vunpack.c.h.b16 %v6458
    %v8158 = vunpack.c.l.b16 %v6459
    %v8159 = vunpack.c.h.b16 %v6459
    %v8160 = vunpack.c.l.b16 %v6460
    %v8161 = vunpack.c.h.b16 %v6460
    %v8162 = vunpack.c.l.b16 %v6461
    %v8163 = vunpack.c.h.b16 %v6461
    %v8164 = vunpack.c.l.b16 %v6462
    %v8165 = vunpack.c.l.b16 %v6463
    %v8166 = vunpack.c.h.b16 %v6463
    %v8167 = vunpack.c.l.b16 %v6464
    %v8168 = vunpack.c.h.b16 %v6464
    %v8169 = vunpack.c.l.b16 %v6465
    %v8170 = vunpack.c.h.b16 %v6465
    %v8171 = vunpack.c.l.b16 %v6466
    %v8172 = vunpack.c.h.b16 %v6466
    %v8173 = vunpack.c.l.b16 %v6467
    %v8174 = vunpack.c.h.b16 %v6467
    %v8175 = vunpack.c.l.b16 %v6468
    %v8176 = vunpack.c.h.b16 %v6468
    %v8177 = vunpack.c.l.b16 %v6469
    %v8178 = vunpack.c.h.b16 %v6469
    %v8179 = vunpack.c.l.b16 %v6470
    %v8180 = vunpack.c.h.b16 %v6470
    %v8181 = vunpack.c.l.b16 %v6471
    %v8182 = vunpack.c.h.b16 %v6471
    %v8183 = vunpack.c.l.b16 %v6472
    %v8184 = vunpack.c.l.b16 %v6473
    %v8185 = vunpack.c.h.b16 %v6473
    %v8186 = vunpack.c.l.b16 %v6474
    %v8187 = vunpack.c.h.b16 %v6474
    %v8188 = vunpack.c.l.b16 %v6475
    %v8189 = vunpack.c.h.b16 %v6475
    %v8190 = vunpack.c.l.b16 %v6476
    %v8191 = vunpack.c.h.b16 %v6476
    %v8192 = vunpack.c.l.b16 %v6477
    %v8193 = vunpack.c.h.b16 %v6477
    %v8194 = vunpack.c.l.b16 %v6478
    %v8195 = vunpack.c.h.b16 %v6478
    %v8196 = vunpack.c.l.b16 %v6479
    %v8197 = vunpack.c.h.b16 %v6479
    %v8198 = vunpack.c.l.b16 %v6480
    %v8199 = vunpack.c.h.b16 %v6480
    %v8200 = vunpack.c.l.b16 %v6481
    %v8201 = vunpack.c.h.b16 %v6481
    %v8202 = vunpack.c.l.b16 %v6482
    %v8203 = vunpack.c.l.b16 %v6483
    %v8204 = vunpack.c.h.b16 %v6483
    %v8205 = vunpack.c.l.b16 %v6484
    %v8206 = vunpack.c.h.b16 %v6484
    %v8207 = vunpack.c.l.b16 %v6485
    %v8208 = vunpack.c.h.b16 %v6485
    %v8209 = vunpack.c.l.b16 %v6486
    %v8210 = vunpack.c.h.b16 %v6486
    %v8211 = vunpack.c.l.b16 %v6487
    %v8212 = vunpack.c.h.b16 %v6487
    %v8213 = vunpack.c.l.b16 %v6488
    %v8214 = vunpack.c.h.b16 %v6488
    %v8215 = vunpack.c.l.b16 %v6489
    %v8216 = vunpack.c.h.b16 %v6489
    %v8217 = vunpack.c.l.b16 %v6490
    %v8218 = vunpack.c.h.b16 %v6490
    %v8219 = vunpack.c.l.b16 %v6491
    %v8220 = vunpack.c.h.b16 %v6491
    %v8221 = vunpack.c.l.b16 %v6492
    %v8222 = vunpack.c.l.b16 %v6493
    %v8223 = vunpack.c.h.b16 %v6493
    %v8224 = vunpack.c.l.b16 %v6494
    %v8225 = vunpack.c.h.b16 %v6494
    %v8226 = vunpack.c.l.b16 %v6495
    %v8227 = vunpack.c.h.b16 %v6495
    %v8228 = vunpack.c.l.b16 %v6496
    %v8229 = vunpack.c.h.b16 %v6496
    %v8230 = vunpack.c.l.b16 %v6497
    %v8231 = vunpack.c.h.b16 %v6497
    %v8232 = vunpack.c.l.b16 %v6498
    %v8233 = vunpack.c.h.b16 %v6498
    %v8234 = vunpack.c.l.b16 %v6499
    %v8235 = vunpack.c.h.b16 %v6499
    %v8236 = vunpack.c.l.b16 %v6500
    %v8237 = vunpack.c.h.b16 %v6500
    %v8238 = vunpack.c.l.b16 %v6501
    %v8239 = vunpack.c.h.b16 %v6501
    %v8240 = vunpack.c.l.b16 %v6502
    %v8241 = vunpack.c.l.b16 %v6503
    %v8242 = vunpack.c.h.b16 %v6503
    %v8243 = vunpack.c.l.b16 %v6504
    %v8244 = vunpack.c.h.b16 %v6504
    %v8245 = vunpack.c.l.b16 %v6505
    %v8246 = vunpack.c.h.b16 %v6505
    %v8247 = vunpack.c.l.b16 %v6506
    %v8248 = vunpack.c.h.b16 %v6506
    %v8249 = vunpack.c.l.b16 %v6507
    %v8250 = vunpack.c.h.b16 %v6507
    %v8251 = vunpack.c.l.b16 %v6508
    %v8252 = vunpack.c.h.b16 %v6508
    %v8253 = vunpack.c.l.b16 %v6509
    %v8254 = vunpack.c.h.b16 %v6509
    %v8255 = vunpack.c.l.b16 %v6510
    %v8256 = vunpack.c.h.b16 %v6510
    %v8257 = vunpack.c.l.b16 %v6511
    %v8258 = vunpack.c.h.b16 %v6511
    %v8259 = vunpack.c.l.b16 %v6512
    %v8260 = vunpack.c.l.b16 %v6513
    %v8261 = vunpack.c.h.b16 %v6513
    %v8262 = vunpack.c.l.b16 %v6514
    %v8263 = vunpack.c.h.b16 %v6514
    %v8264 = vunpack.c.l.b16 %v6515
    %v8265 = vunpack.c.h.b16 %v6515
    %v8266 = vunpack.c.l.b16 %v6516
    %v8267 = vunpack.c.h.b16 %v6516
    %v8268 = vunpack.c.l.b16 %v6517
    %v8269 = vunpack.c.h.b16 %v6517
    %v8270 = vunpack.c.l.b16 %v6518
    %v8271 = vunpack.c.h.b16 %v6518
    %v8272 = vunpack.c.l.b16 %v6519
    %v8273 = vunpack.c.h.b16 %v6519
    %v8274 = vunpack.c.l.b16 %v6520
    %v8275 = vunpack.c.h.b16 %v6520
    %v8276 = vunpack.c.l.b16 %v6521
    %v8277 = vunpack.c.h.b16 %v6521
    %v8278 = vunpack.c.l.b16 %v6522
    %v8279 = vunpack.c.l.b16 %v6523
    %v8280 = vunpack.c.h.b16 %v6523
    %v8281 = vunpack.c.l.b16 %v6524
    %v8282 = vunpack.c.h.b16 %v6524
    %v8283 = vunpack.c.l.b16 %v6525
    %v8284 = vunpack.c.h.b16 %v6525
    %v8285 = vunpack.c.l.b16 %v6526
    %v8286 = vunpack.c.h.b16 %v6526
    %v8287 = vunpack.c.l.b16 %v6527
    %v8288 = vunpack.c.h.b16 %v6527
    %v8289 = vunpack.c.l.b16 %v6528
    %v8290 = vunpack.c.h.b16 %v6528
    %v8291 = vunpack.c.l.b16 %v6529
    %v8292 = vunpack.c.h.b16 %v6529
    %v8293 = vunpack.c.l.b16 %v6530
    %v8294 = vunpack.c.h.b16 %v6530
    %v8295 = vunpack.c.l.b16 %v6531
    %v8296 = vunpack.c.h.b16 %v6531
    %v8297 = vunpack.c.l.b16 %v6532
    %v8298 = vunpack.c.l.b16 %v6533
    %v8299 = vunpack.c.h.b16 %v6533
    %v8300 = vunpack.c.l.b16 %v6534
    %v8301 = vunpack.c.h.b16 %v6534
    %v8302 = vunpack.c.l.b16 %v6535
    %v8303 = vunpack.c.h.b16 %v6535
    %v8304 = vunpack.c.l.b16 %v6536
    %v8305 = vunpack.c.h.b16 %v6536
    %v8306 = vunpack.c.l.b16 %v6537
    %v8307 = vunpack.c.h.b16 %v6537
    %v8308 = vunpack.c.l.b16 %v6538
    %v8309 = vunpack.c.h.b16 %v6538
    %v8310 = vunpack.c.l.b16 %v6539
    %v8311 = vunpack.c.h.b16 %v6539
    %v8312 = vunpack.c.l.b16 %v6540
    %v8313 = vunpack.c.h.b16 %v6540
    %v8314 = vunpack.c.l.b16 %v6541
    %v8315 = vunpack.c.h.b16 %v6541
    %v8316 = vunpack.c.l.b16 %v6542
    %v8317 = vunpack.c.l.b16 %v6543
    %v8318 = vunpack.c.h.b16 %v6543
    %v8319 = vunpack.c.l.b16 %v6544
    %v8320 = vunpack.c.h.b16 %v6544
    %v8321 = vunpack.c.l.b16 %v6545
    %v8322 = vunpack.c.h.b16 %v6545
    %v8323 = vunpack.c.l.b16 %v6546
    %v8324 = vunpack.c.h.b16 %v6546
    %v8325 = vunpack.c.l.b16 %v6547
    %v8326 = vunpack.c.h.b16 %v6547
    %v8327 = vunpack.c.l.b16 %v6548
    %v8328 = vunpack.c.h.b16 %v6548
    %v8329 = vunpack.c.l.b16 %v6549
    %v8330 = vunpack.c.h.b16 %v6549
    %v8331 = vunpack.c.l.b16 %v6550
    %v8332 = vunpack.c.h.b16 %v6550
    %v8333 = vunpack.c.l.b16 %v6551
    %v8334 = vunpack.c.h.b16 %v6551
    %v8335 = vunpack.c.l.b16 %v6552
    %v8336 = vunpack.c.l.b16 %v6553
    %v8337 = vunpack.c.h.b16 %v6553
    %v8338 = vunpack.c.l.b16 %v6554
    %v8339 = vunpack.c.h.b16 %v6554
    %v8340 = vunpack.c.l.b16 %v6555
    %v8341 = vunpack.c.h.b16 %v6555
    %v8342 = vunpack.c.l.b16 %v6556
    %v8343 = vunpack.c.h.b16 %v6556
    %v8344 = vunpack.c.l.b16 %v6557
    %v8345 = vunpack.c.h.b16 %v6557
    %v8346 = vunpack.c.l.b16 %v6558
    %v8347 = vunpack.c.h.b16 %v6558
    %v8348 = vunpack.c.l.b16 %v6559
    %v8349 = vunpack.c.h.b16 %v6559
    %v8350 = vunpack.c.l.b16 %v6560
    %v8351 = vunpack.c.h.b16 %v6560
    %v8352 = vunpack.c.l.b16 %v6561
    %v8353 = vunpack.c.h.b16 %v6561
    %v8354 = vunpack.c.l.b16 %v6562
    %v8355 = vunpack.c.l.b16 %v6563
    %v8356 = vunpack.c.h.b16 %v6563
    %v8357 = vunpack.c.l.b16 %v6564
    %v8358 = vunpack.c.h.b16 %v6564
    %v8359 = vunpack.c.l.b16 %v6565
    %v8360 = vunpack.c.h.b16 %v6565
    %v8361 = vunpack.c.l.b16 %v6566
    %v8362 = vunpack.c.h.b16 %v6566
    %v8363 = vunpack.c.l.b16 %v6567
    %v8364 = vunpack.c.h.b16 %v6567
    %v8365 = vunpack.c.l.b16 %v6568
    %v8366 = vunpack.c.h.b16 %v6568
    %v8367 = vunpack.c.l.b16 %v6569
    %v8368 = vunpack.c.h.b16 %v6569
    %v8369 = vunpack.c.l.b16 %v6570
    %v8370 = vunpack.c.h.b16 %v6570
    %v8371 = vunpack.c.l.b16 %v6571
    %v8372 = vunpack.c.h.b16 %v6571
    %v8373 = vunpack.c.l.b16 %v6572
    %v8374 = vunpack.c.l.b16 %v6573
    %v8375 = vunpack.c.h.b16 %v6573
    %v8376 = vunpack.c.l.b16 %v6574
    %v8377 = vunpack.c.h.b16 %v6574
    %v8378 = vunpack.c.l.b16 %v6575
    %v8379 = vunpack.c.h.b16 %v6575
    %v8380 = vunpack.c.l.b16 %v6576
    %v8381 = vunpack.c.h.b16 %v6576
    %v8382 = vunpack.c.l.b16 %v6577
    %v8383 = vunpack.c.h.b16 %v6577
    %v8384 = vunpack.c.l.b16 %v6578
    %v8385 = vunpack.c.h.b16 %v6578
    %v8386 = vunpack.c.l.b16 %v6579
    %v8387 = vunpack.c.h.b16 %v6579
    %v8388 = vunpack.c.l.b16 %v6580
    %v8389 = vunpack.c.h.b16 %v6580
    %v8390 = vunpack.c.l.b16 %v6581
    %v8391 = vunpack.c.h.b16 %v6581
    %v8392 = vunpack.c.l.b16 %v6582
    %v8393 = vunpack.c.l.b16 %v6583
    %v8394 = vunpack.c.h.b16 %v6583
    %v8395 = vunpack.c.l.b16 %v6584
    %v8396 = vunpack.c.h.b16 %v6584
    %v8397 = vunpack.c.l.b16 %v6585
    %v8398 = vunpack.c.h.b16 %v6585
    %v8399 = vunpack.c.l.b16 %v6586
    %v8400 = vunpack.c.h.b16 %v6586
    %v8401 = vunpack.c.l.b16 %v6587
    %v8402 = vunpack.c.h.b16 %v6587
    %v8403 = vunpack.c.l.b16 %v6588
    %v8404 = vunpack.c.h.b16 %v6588
    %v8405 = vunpack.c.l.b16 %v6589
    %v8406 = vunpack.c.h.b16 %v6589
    %v8407 = vunpack.c.l.b16 %v6590
    %v8408 = vunpack.c.h.b16 %v6590
    %v8409 = vunpack.c.l.b16 %v6591
    %v8410 = vunpack.c.h.b16 %v6591
    %v8411 = vunpack.c.l.b16 %v6592
    %v8412 = vunpack.c.l.b16 %v6593
    %v8413 = vunpack.c.h.b16 %v6593
    %v8414 = vunpack.c.l.b16 %v6594
    %v8415 = vunpack.c.h.b16 %v6594
    %v8416 = vunpack.c.l.b16 %v6595
    %v8417 = vunpack.c.h.b16 %v6595
    %v8418 = vunpack.c.l.b16 %v6596
    %v8419 = vunpack.c.h.b16 %v6596
    %v8420 = vunpack.c.l.b16 %v6597
    %v8421 = vunpack.c.h.b16 %v6597
    %v8422 = vunpack.c.l.b16 %v6598
    %v8423 = vunpack.c.h.b16 %v6598
    %v8424 = vunpack.c.l.b16 %v6599
    %v8425 = vunpack.c.h.b16 %v6599
    %v8426 = vunpack.c.l.b16 %v6600
    %v8427 = vunpack.c.h.b16 %v6600
    %v8428 = vunpack.c.l.b16 %v6601
    %v8429 = vunpack.c.h.b16 %v6601
    %v8430 = vunpack.c.l.b16 %v6602
    %v8431 = vunpack.c.l.b16 %v6603
    %v8432 = vunpack.c.h.b16 %v6603
    %v8433 = vunpack.c.l.b16 %v6604
    %v8434 = vunpack.c.h.b16 %v6604
    %v8435 = vunpack.c.l.b16 %v6605
    %v8436 = vunpack.c.h.b16 %v6605
    %v8437 = vunpack.c.l.b16 %v6606
    %v8438 = vunpack.c.h.b16 %v6606
    %v8439 = vunpack.c.l.b16 %v6607
    %v8440 = vunpack.c.h.b16 %v6607
    %v8441 = vunpack.c.l.b16 %v6608
    %v8442 = vunpack.c.h.b16 %v6608
    %v8443 = vunpack.c.l.b16 %v6609
    %v8444 = vunpack.c.h.b16 %v6609
    %v8445 = vunpack.c.l.b16 %v6610
    %v8446 = vunpack.c.h.b16 %v6610
    %v8447 = vunpack.c.l.b16 %v6611
    %v8448 = vunpack.c.h.b16 %v6611
    %v8449 = vunpack.c.l.b16 %v6612
    %v8450 = vunpack.c.l.b16 %v6613
    %v8451 = vunpack.c.h.b16 %v6613
    %v8452 = vunpack.c.l.b16 %v6614
    %v8453 = vunpack.c.h.b16 %v6614
    %v8454 = vunpack.c.l.b16 %v6615
    %v8455 = vunpack.c.h.b16 %v6615
    %v8456 = vunpack.c.l.b16 %v6616
    %v8457 = vunpack.c.h.b16 %v6616
    %v8458 = vunpack.c.l.b16 %v6617
    %v8459 = vunpack.c.h.b16 %v6617
    %v8460 = vunpack.c.l.b16 %v6618
    %v8461 = vunpack.c.h.b16 %v6618
    %v8462 = vunpack.c.l.b16 %v6619
    %v8463 = vunpack.c.h.b16 %v6619
    %v8464 = vunpack.c.l.b16 %v6620
    %v8465 = vunpack.c.h.b16 %v6620
    %v8466 = vunpack.c.l.b16 %v6621
    %v8467 = vunpack.c.h.b16 %v6621
    %v8468 = vunpack.c.l.b16 %v6622
    %v8469 = vunpack.c.l.b16 %v6623
    %v8470 = vunpack.c.h.b16 %v6623
    %v8471 = vunpack.c.l.b16 %v6624
    %v8472 = vunpack.c.h.b16 %v6624
    %v8473 = vunpack.c.l.b16 %v6625
    %v8474 = vunpack.c.h.b16 %v6625
    %v8475 = vunpack.c.l.b16 %v6626
    %v8476 = vunpack.c.h.b16 %v6626
    %v8477 = vunpack.c.l.b16 %v6627
    %v8478 = vunpack.c.h.b16 %v6627
    %v8479 = vunpack.c.l.b16 %v6628
    %v8480 = vunpack.c.h.b16 %v6628
    %v8481 = vunpack.c.l.b16 %v6629
    %v8482 = vunpack.c.h.b16 %v6629
    %v8483 = vunpack.c.l.b16 %v6630
    %v8484 = vunpack.c.h.b16 %v6630
    %v8485 = vunpack.c.l.b16 %v6631
    %v8486 = vunpack.c.h.b16 %v6631
    %v8487 = vunpack.c.l.b16 %v6632
    %v8488 = vunpack.c.l.b16 %v6633
    %v8489 = vunpack.c.h.b16 %v6633
    %v8490 = vunpack.c.l.b16 %v6634
    %v8491 = vunpack.c.h.b16 %v6634
    %v8492 = vunpack.c.l.b16 %v6635
    %v8493 = vunpack.c.h.b16 %v6635
    %v8494 = vunpack.c.l.b16 %v6636
    %v8495 = vunpack.c.h.b16 %v6636
    %v8496 = vunpack.c.l.b16 %v6637
    %v8497 = vunpack.c.h.b16 %v6637
    %v8498 = vunpack.c.l.b16 %v6638
    %v8499 = vunpack.c.h.b16 %v6638
    %v8500 = vunpack.c.l.b16 %v6639
    %v8501 = vunpack.c.h.b16 %v6639
    %v8502 = vunpack.c.l.b16 %v6640
    %v8503 = vunpack.c.h.b16 %v6640
    %v8504 = vunpack.c.l.b16 %v6641
    %v8505 = vunpack.c.h.b16 %v6641
    %v8506 = vunpack.c.l.b16 %v6642
    %v8507 = vunpack.c.l.b16 %v6643
    %v8508 = vunpack.c.h.b16 %v6643
    %v8509 = vunpack.c.l.b16 %v6644
    %v8510 = vunpack.c.h.b16 %v6644
    %v8511 = vunpack.c.l.b16 %v6645
    %v8512 = vunpack.c.h.b16 %v6645
    %v8513 = vunpack.c.l.b16 %v6646
    %v8514 = vunpack.c.h.b16 %v6646
    %v8515 = vunpack.c.l.b16 %v6647
    %v8516 = vunpack.c.h.b16 %v6647
    %v8517 = vunpack.c.l.b16 %v6648
    %v8518 = vunpack.c.h.b16 %v6648
    %v8519 = vunpack.c.l.b16 %v6649
    %v8520 = vunpack.c.h.b16 %v6649
    %v8521 = vunpack.c.l.b16 %v6650
    %v8522 = vunpack.c.h.b16 %v6650
    %v8523 = vunpack.c.l.b16 %v6651
    %v8524 = vunpack.c.h.b16 %v6651
    %v8525 = vunpack.c.l.b16 %v6652
    %v8526 = vunpack.c.l.b16 %v6653
    %v8527 = vunpack.c.h.b16 %v6653
    %v8528 = vunpack.c.l.b16 %v6654
    %v8529 = vunpack.c.h.b16 %v6654
    %v8530 = vunpack.c.l.b16 %v6655
    %v8531 = vunpack.c.h.b16 %v6655
    %v8532 = vunpack.c.l.b16 %v6656
    %v8533 = vunpack.c.h.b16 %v6656
    %v8534 = vunpack.c.l.b16 %v6657
    %v8535 = vunpack.c.h.b16 %v6657
    %v8536 = vunpack.c.l.b16 %v6658
    %v8537 = vunpack.c.h.b16 %v6658
    %v8538 = vunpack.c.l.b16 %v6659
    %v8539 = vunpack.c.h.b16 %v6659
    %v8540 = vunpack.c.l.b16 %v6660
    %v8541 = vunpack.c.h.b16 %v6660
    %v8542 = vunpack.c.l.b16 %v6661
    %v8543 = vunpack.c.h.b16 %v6661
    %v8544 = vunpack.c.l.b16 %v6662
    %v8545 = vunpack.c.l.b16 %v6663
    %v8546 = vunpack.c.h.b16 %v6663
    %v8547 = vunpack.c.l.b16 %v6664
    %v8548 = vunpack.c.h.b16 %v6664
    %v8549 = vunpack.c.l.b16 %v6665
    %v8550 = vunpack.c.h.b16 %v6665
    %v8551 = vunpack.c.l.b16 %v6666
    %v8552 = vunpack.c.h.b16 %v6666
    %v8553 = vunpack.c.l.b16 %v6667
    %v8554 = vunpack.c.h.b16 %v6667
    %v8555 = vunpack.c.l.b16 %v6668
    %v8556 = vunpack.c.h.b16 %v6668
    %v8557 = vunpack.c.l.b16 %v6669
    %v8558 = vunpack.c.h.b16 %v6669
    %v8559 = vunpack.c.l.b16 %v6670
    %v8560 = vunpack.c.h.b16 %v6670
    %v8561 = vunpack.c.l.b16 %v6671
    %v8562 = vunpack.c.h.b16 %v6671
    %v8563 = vunpack.c.l.b16 %v6672
    %v8564 = vunpack.c.l.b16 %v6673
    %v8565 = vunpack.c.h.b16 %v6673
    %v8566 = vunpack.c.l.b16 %v6674
    %v8567 = vunpack.c.h.b16 %v6674
    %v8568 = vunpack.c.l.b16 %v6675
    %v8569 = vunpack.c.h.b16 %v6675
    %v8570 = vunpack.c.l.b16 %v6676
    %v8571 = vunpack.c.h.b16 %v6676
    %v8572 = vunpack.c.l.b16 %v6677
    %v8573 = vunpack.c.h.b16 %v6677
    %v8574 = vunpack.c.l.b16 %v6678
    %v8575 = vunpack.c.h.b16 %v6678
    %v8576 = vunpack.c.l.b16 %v6679
    %v8577 = vunpack.c.h.b16 %v6679
    %v8578 = vunpack.c.l.b16 %v6680
    %v8579 = vunpack.c.h.b16 %v6680
    %v8580 = vunpack.c.l.b16 %v6681
    %v8581 = vunpack.c.h.b16 %v6681
    %v8582 = vunpack.c.l.b16 %v6682
    %v8583 = vpack.c.b16 %v7386, %v7367
    %v8584 = vpack.c.b16 %v7387, %v7368
    %v8585 = vpack.c.b16 %v7388, %v7369
    %v8586 = vpack.c.b16 %v7389, %v7370
    %v8587 = vpack.c.b16 %v7390, %v7371
    %v8588 = vpack.c.b16 %v7391, %v7372
    %v8589 = vpack.c.b16 %v7392, %v7373
    %v8590 = vpack.c.b16 %v7393, %v7374
    %v8591 = vpack.c.b16 %v7394, %v7375
    %v8592 = vpack.c.b16 %v7395, %v7376
    %v8593 = vpack.c.b16 %v7396, %v7377
    %v8594 = vpack.c.b16 %v7397, %v7378
    %v8595 = vpack.c.b16 %v7398, %v7379
    %v8596 = vpack.c.b16 %v7399, %v7380
    %v8597 = vpack.c.b16 %v7400, %v7381
    %v8598 = vpack.c.b16 %v7401, %v7382
    %v8599 = vpack.c.b16 %v7402, %v7383
    %v8600 = vpack.c.b16 %v7403, %v7384
    %v8601 = vpack.c.b16 %v7404, %v7385
    %v8602 = vpack.c.b16 %v7424, %v7405
    %v8603 = vpack.c.b16 %v7425, %v7406
    %v8604 = vpack.c.b16 %v7426, %v7407
    %v8605 = vpack.c.b16 %v7427, %v7408
    %v8606 = vpack.c.b16 %v7428, %v7409
    %v8607 = vpack.c.b16 %v7429, %v7410
    %v8608 = vpack.c.b16 %v7430, %v7411
    %v8609 = vpack.c.b16 %v7431, %v7412
    %v8610 = vpack.c.b16 %v7432, %v7413
    %v8611 = vpack.c.b16 %v7433, %v7414
    %v8612 = vpack.c.b16 %v7434, %v7415
    %v8613 = vpack.c.b16 %v7435, %v7416
    %v8614 = vpack.c.b16 %v7436, %v7417
    %v8615 = vpack.c.b16 %v7437, %v7418
    %v8616 = vpack.c.b16 %v7438, %v7419
    %v8617 = vpack.c.b16 %v7439, %v7420
    %v8618 = vpack.c.b16 %v7440, %v7421
    %v8619 = vpack.c.b16 %v7441, %v7422
    %v8620 = vpack.c.b16 %v7442, %v7423
    %v8621 = vpack.c.b16 %v7462, %v7443
    %v8622 = vpack.c.b16 %v7463, %v7444
    %v8623 = vpack.c.b16 %v7464, %v7445
    %v8624 = vpack.c.b16 %v7465, %v7446
    %v8625 = vpack.c.b16 %v7466, %v7447
    %v8626 = vpack.c.b16 %v7467, %v7448
    %v8627 = vpack.c.b16 %v7468, %v7449
    %v8628 = vpack.c.b16 %v7469, %v7450
    %v8629 = vpack.c.b16 %v7470, %v7451
    %v8630 = vpack.c.b16 %v7471, %v7452
    %v8631 = vpack.c.b16 %v7472, %v7453
    %v8632 = vpack.c.b16 %v7473, %v7454
    %v8633 = vpack.c.b16 %v7474, %v7455
    %v8634 = vpack.c.b16 %v7475, %v7456
    %v8635 = vpack.c.b16 %v7476, %v7457
    %v8636 = vpack.c.b16 %v7477, %v7458
    %v8637 = vpack.c.b16 %v7478, %v7459
    %v8638 = vpack.c.b16 %v7479, %v7460
    %v8639 = vpack.c.b16 %v7480, %v7461
    %v8640 = vpack.c.b16 %v7500, %v7481
    %v8641 = vpack.c.b16 %v7501, %v7482
    %v8642 = vpack.c.b16 %v7502, %v7483
    %v8643 = vpack.c.b16 %v7503, %v7484
    %v8644 = vpack.c.b16 %v7504, %v7485
    %v8645 = vpack.c.b16 %v7505, %v7486
    %v8646 = vpack.c.b16 %v7506, %v7487
    %v8647 = vpack.c.b16 %v7507, %v7488
    %v8648 = vpack.c.b16 %v7508, %v7489
    %v8649 = vpack.c.b16 %v7509, %v7490
    %v8650 = vpack.c.b16 %v7510, %v7491
    %v8651 = vpack.c.b16 %v7511, %v7492
    %v8652 = vpack.c.b16 %v7512, %v7493
    %v8653 = vpack.c.b16 %v7513, %v7494
    %v8654 = vpack.c.b16 %v7514, %v7495
    %v8655 = vpack.c.b16 %v7515, %v7496
    %v8656 = vpack.c.b16 %v7516, %v7497
    %v8657 = vpack.c.b16 %v7517, %v7498
    %v8658 = vpack.c.b16 %v7518, %v7499
    %v8659 = vpack.c.b16 %v7538, %v7519
    %v8660 = vpack.c.b16 %v7539, %v7520
    %v8661 = vpack.c.b16 %v7540, %v7521
    %v8662 = vpack.c.b16 %v7541, %v7522
    %v8663 = vpack.c.b16 %v7542, %v7523
    %v8664 = vpack.c.b16 %v7543, %v7524
    %v8665 = vpack.c.b16 %v7544, %v7525
    %v8666 = vpack.c.b16 %v7545, %v7526
    %v8667 = vpack.c.b16 %v7546, %v7527
    %v8668 = vpack.c.b16 %v7547, %v7528
    %v8669 = vpack.c.b16 %v7548, %v7529
    %v8670 = vpack.c.b16 %v7549, %v7530
    %v8671 = vpack.c.b16 %v7550, %v7531
    %v8672 = vpack.c.b16 %v7551, %v7532
    %v8673 = vpack.c.b16 %v7552, %v7533
    %v8674 = vpack.c.b16 %v7553, %v7534
    %v8675 = vpack.c.b16 %v7554, %v7535
    %v8676 = vpack.c.b16 %v7555, %v7536
    %v8677 = vpack.c.b16 %v7556, %v7537
    %v8678 = vpack.c.b16 %v7576, %v7557
    %v8679 = vpack.c.b16 %v7577, %v7558
    %v8680 = vpack.c.b16 %v7578, %v7559
    %v8681 = vpack.c.b16 %v7579, %v7560
    %v8682 = vpack.c.b16 %v7580, %v7561
    %v8683 = vpack.c.b16 %v7581, %v7562
    %v8684 = vpack.c.b16 %v7582, %v7563
    %v8685 = vpack.c.b16 %v7583, %v7564
    %v8686 = vpack.c.b16 %v7584, %v7565
    %v8687 = vpack.c.b16 %v7585, %v7566
    %v8688 = vpack.c.b16 %v7586, %v7567
    %v8689 = vpack.c.b16 %v7587, %v7568
    %v8690 = vpack.c.b16 %v7588, %v7569
    %v8691 = vpack.c.b16 %v7589, %v7570
    %v8692 = vpack.c.b16 %v7590, %v7571
    %v8693 = vpack.c.b16 %v7591, %v7572
    %v8694 = vpack.c.b16 %v7592, %v7573
    %v8695 = vpack.c.b16 %v7593, %v7574
    %v8696 = vpack.c.b16 %v7594, %v7575
    %v8697 = vpack.c.b16 %v7614, %v7595
    %v8698 = vpack.c.b16 %v7615, %v7596
    %v8699 = vpack.c.b16 %v7616, %v7597
    %v8700 = vpack.c.b16 %v7617, %v7598
    %v8701 = vpack.c.b16 %v7618, %v7599
    %v8702 = vpack.c.b16 %v7619, %v7600
    %v8703 = vpack.c.b16 %v7620, %v7601
    %v8704 = vpack.c.b16 %v7621, %v7602
    %v8705 = vpack.c.b16 %v7622, %v7603
    %v8706 = vpack.c.b16 %v7623, %v7604
    %v8707 = vpack.c.b16 %v7624, %v7605
    %v8708 = vpack.c.b16 %v7625, %v7606
    %v8709 = vpack.c.b16 %v7626, %v7607
    %v8710 = vpack.c.b16 %v7627, %v7608
    %v8711 = vpack.c.b16 %v7628, %v7609
    %v8712 = vpack.c.b16 %v7629, %v7610
    %v8713 = vpack.c.b16 %v7630, %v7611
    %v8714 = vpack.c.b16 %v7631, %v7612
    %v8715 = vpack.c.b16 %v7632, %v7613
    %v8716 = vpack.c.b16 %v7652, %v7633
    %v8717 = vpack.c.b16 %v7653, %v7634
    %v8718 = vpack.c.b16 %v7654, %v7635
    %v8719 = vpack.c.b16 %v7655, %v7636
    %v8720 = vpack.c.b16 %v7656, %v7637
    %v8721 = vpack.c.b16 %v7657, %v7638
    %v8722 = vpack.c.b16 %v7658, %v7639
    %v8723 = vpack.c.b16 %v7659, %v7640
    %v8724 = vpack.c.b16 %v7660, %v7641
    %v8725 = vpack.c.b16 %v7661, %v7642
    %v8726 = vpack.c.b16 %v7662, %v7643
    %v8727 = vpack.c.b16 %v7663, %v7644
    %v8728 = vpack.c.b16 %v7664, %v7645
    %v8729 = vpack.c.b16 %v7665, %v7646
    %v8730 = vpack.c.b16 %v7666, %v7647
    %v8731 = vpack.c.b16 %v7667, %v7648
    %v8732 = vpack.c.b16 %v7668, %v7649
    %v8733 = vpack.c.b16 %v7669, %v7650
    %v8734 = vpack.c.b16 %v7670, %v7651
    %v8735 = vpack.c.b16 %v7690, %v7671
    %v8736 = vpack.c.b16 %v7691, %v7672
    %v8737 = vpack.c.b16 %v7692, %v7673
    %v8738 = vpack.c.b16 %v7693, %v7674
    %v8739 = vpack.c.b16 %v7694, %v7675
    %v8740 = vpack.c.b16 %v7695, %v7676
    %v8741 = vpack.c.b16 %v7696, %v7677
    %v8742 = vpack.c.b16 %v7697, %v7678
    %v8743 = vpack.c.b16 %v7698, %v7679
    %v8744 = vpack.c.b16 %v7699, %v7680
    %v8745 = vpack.c.b16 %v7700, %v7681
    %v8746 = vpack.c.b16 %v7701, %v7682
    %v8747 = vpack.c.b16 %v7702, %v7683
    %v8748 = vpack.c.b16 %v7703, %v7684
    %v8749 = vpack.c.b16 %v7704, %v7685
    %v8750 = vpack.c.b16 %v7705, %v7686
    %v8751 = vpack.c.b16 %v7706, %v7687
    %v8752 = vpack.c.b16 %v7707, %v7688
    %v8753 = vpack.c.b16 %v7708, %v7689
    %v8754 = vpack.c.b16 %v7728, %v7709
    %v8755 = vpack.c.b16 %v7729, %v7710
    %v8756 = vpack.c.b16 %v7730, %v7711
    %v8757 = vpack.c.b16 %v7731, %v7712
    %v8758 = vpack.c.b16 %v7732, %v7713
    %v8759 = vpack.c.b16 %v7733, %v7714
    %v8760 = vpack.c.b16 %v7734, %v7715
    %v8761 = vpack.c.b16 %v7735, %v7716
    %v8762 = vpack.c.b16 %v7736, %v7717
    %v8763 = vpack.c.b16 %v7737, %v7718
    %v8764 = vpack.c.b16 %v7738, %v7719
    %v8765 = vpack.c.b16 %v7739, %v7720
    %v8766 = vpack.c.b16 %v7740, %v7721
    %v8767 = vpack.c.b16 %v7741, %v7722
    %v8768 = vpack.c.b16 %v7742, %v7723
    %v8769 = vpack.c.b16 %v7743, %v7724
    %v8770 = vpack.c.b16 %v7744, %v7725
    %v8771 = vpack.c.b16 %v7745, %v7726
    %v8772 = vpack.c.b16 %v7746, %v7727
    %v8773 = vpack.c.b16 %v7766, %v7747
    %v8774 = vpack.c.b16 %v7767, %v7748
    %v8775 = vpack.c.b16 %v7768, %v7749
    %v8776 = vpack.c.b16 %v7769, %v7750
    %v8777 = vpack.c.b16 %v7770, %v7751
    %v8778 = vpack.c.b16 %v7771, %v7752
    %v8779 = vpack.c.b16 %v7772, %v7753
    %v8780 = vpack.c.b16 %v7773, %v7754
    %v8781 = vpack.c.b16 %v7774, %v7755
    %v8782 = vpack.c.b16 %v7775, %v7756
    %v8783 = vpack.c.b16 %v7776, %v7757
    %v8784 = vpack.c.b16 %v7777, %v7758
    %v8785 = vpack.c.b16 %v7778, %v7759
    %v8786 = vpack.c.b16 %v7779, %v7760
    %v8787 = vpack.c.b16 %v7780, %v7761
    %v8788 = vpack.c.b16 %v7781, %v7762
    %v8789 = vpack.c.b16 %v7782, %v7763
    %v8790 = vpack.c.b16 %v7783, %v7764
    %v8791 = vpack.c.b16 %v7784, %v7765
    %v8792 = vpack.c.b16 %v7804, %v7785
    %v8793 = vpack.c.b16 %v7805, %v7786
    %v8794 = vpack.c.b16 %v7806, %v7787
    %v8795 = vpack.c.b16 %v7807, %v7788
    %v8796 = vpack.c.b16 %v7808, %v7789
    %v8797 = vpack.c.b16 %v7809, %v7790
    %v8798 = vpack.c.b16 %v7810, %v7791
    %v8799 = vpack.c.b16 %v7811, %v7792
    %v8800 = vpack.c.b16 %v7812, %v7793
    %v8801 = vpack.c.b16 %v7813, %v7794
    %v8802 = vpack.c.b16 %v7814, %v7795
    %v8803 = vpack.c.b16 %v7815, %v7796
    %v8804 = vpack.c.b16 %v7816, %v7797
    %v8805 = vpack.c.b16 %v7817, %v7798
    %v8806 = vpack.c.b16 %v7818, %v7799
    %v8807 = vpack.c.b16 %v7819, %v7800
    %v8808 = vpack.c.b16 %v7820, %v7801
    %v8809 = vpack.c.b16 %v7821, %v7802
    %v8810 = vpack.c.b16 %v7822, %v7803
    %v8811 = vpack.c.b16 %v7842, %v7823
    %v8812 = vpack.c.b16 %v7843, %v7824
    %v8813 = vpack.c.b16 %v7844, %v7825
    %v8814 = vpack.c.b16 %v7845, %v7826
    %v8815 = vpack.c.b16 %v7846, %v7827
    %v8816 = vpack.c.b16 %v7847, %v7828
    %v8817 = vpack.c.b16 %v7848, %v7829
    %v8818 = vpack.c.b16 %v7849, %v7830
    %v8819 = vpack.c.b16 %v7850, %v7831
    %v8820 = vpack.c.b16 %v7851, %v7832
    %v8821 = vpack.c.b16 %v7852, %v7833
    %v8822 = vpack.c.b16 %v7853, %v7834
    %v8823 = vpack.c.b16 %v7854, %v7835
    %v8824 = vpack.c.b16 %v7855, %v7836
    %v8825 = vpack.c.b16 %v7856, %v7837
    %v8826 = vpack.c.b16 %v7857, %v7838
    %v8827 = vpack.c.b16 %v7858, %v7839
    %v8828 = vpack.c.b16 %v7859, %v7840
    %v8829 = vpack.c.b16 %v7860, %v7841
    %v8830 = vpack.c.b16 %v7880, %v7861
    %v8831 = vpack.c.b16 %v7881, %v7862
    %v8832 = vpack.c.b16 %v7882, %v7863
    %v8833 = vpack.c.b16 %v7883, %v7864
    %v8834 = vpack.c.b16 %v7884, %v7865
    %v8835 = vpack.c.b16 %v7885, %v7866
    %v8836 = vpack.c.b16 %v7886, %v7867
    %v8837 = vpack.c.b16 %v7887, %v7868
    %v8838 = vpack.c.b16 %v7888, %v7869
    %v8839 = vpack.c.b16 %v7889, %v7870
    %v8840 = vpack.c.b16 %v7890, %v7871
    %v8841 = vpack.c.b16 %v7891, %v7872
    %v8842 = vpack.c.b16 %v7892, %v7873
    %v8843 = vpack.c.b16 %v7893, %v7874
    %v8844 = vpack.c.b16 %v7894, %v7875
    %v8845 = vpack.c.b16 %v7895, %v7876
    %v8846 = vpack.c.b16 %v7896, %v7877
    %v8847 = vpack.c.b16 %v7897, %v7878
    %v8848 = vpack.c.b16 %v7898, %v7879
    %v8849 = vpack.c.b16 %v7918, %v7899
    %v8850 = vpack.c.b16 %v7919, %v7900
    %v8851 = vpack.c.b16 %v7920, %v7901
    %v8852 = vpack.c.b16 %v7921, %v7902
    %v8853 = vpack.c.b16 %v7922, %v7903
    %v8854 = vpack.c.b16 %v7923, %v7904
    %v8855 = vpack.c.b16 %v7924, %v7905
    %v8856 = vpack.c.b16 %v7925, %v7906
    %v8857 = vpack.c.b16 %v7926, %v7907
    %v8858 = vpack.c.b16 %v7927, %v7908
    %v8859 = vpack.c.b16 %v7928, %v7909
    %v8860 = vpack.c.b16 %v7929, %v7910
    %v8861 = vpack.c.b16 %v7930, %v7911
    %v8862 = vpack.c.b16 %v7931, %v7912
    %v8863 = vpack.c.b16 %v7932, %v7913
    %v8864 = vpack.c.b16 %v7933, %v7914
    %v8865 = vpack.c.b16 %v7934, %v7915
    %v8866 = vpack.c.b16 %v7935, %v7916
    %v8867 = vpack.c.b16 %v7936, %v7917
    %v8868 = vpack.c.b16 %v7956, %v7937
    %v8869 = vpack.c.b16 %v7957, %v7938
    %v8870 = vpack.c.b16 %v7958, %v7939
    %v8871 = vpack.c.b16 %v7959, %v7940
    %v8872 = vpack.c.b16 %v7960, %v7941
    %v8873 = vpack.c.b16 %v7961, %v7942
    %v8874 = vpack.c.b16 %v7962, %v7943
    %v8875 = vpack.c.b16 %v7963, %v7944
    %v8876 = vpack.c.b16 %v7964, %v7945
    %v8877 = vpack.c.b16 %v7965, %v7946
    %v8878 = vpack.c.b16 %v7966, %v7947
    %v8879 = vpack.c.b16 %v7967, %v7948
    %v8880 = vpack.c.b16 %v7968, %v7949
    %v8881 = vpack.c.b16 %v7969, %v7950
    %v8882 = vpack.c.b16 %v7970, %v7951
    %v8883 = vpack.c.b16 %v7971, %v7952
    %v8884 = vpack.c.b16 %v7972, %v7953
    %v8885 = vpack.c.b16 %v7973, %v7954
    %v8886 = vpack.c.b16 %v7974, %v7955
    %v8887 = vpack.c.b16 %v7994, %v7975
    %v8888 = vpack.c.b16 %v7995, %v7976
    %v8889 = vpack.c.b16 %v7996, %v7977
    %v8890 = vpack.c.b16 %v7997, %v7978
    %v8891 = vpack.c.b16 %v7998, %v7979
    %v8892 = vpack.c.b16 %v7999, %v7980
    %v8893 = vpack.c.b16 %v8000, %v7981
    %v8894 = vpack.c.b16 %v8001, %v7982
    %v8895 = vpack.c.b16 %v8002, %v7983
    %v8896 = vpack.c.b16 %v8003, %v7984
    %v8897 = vpack.c.b16 %v8004, %v7985
    %v8898 = vpack.c.b16 %v8005, %v7986
    %v8899 = vpack.c.b16 %v8006, %v7987
    %v8900 = vpack.c.b16 %v8007, %v7988
    %v8901 = vpack.c.b16 %v8008, %v7989
    %v8902 = vpack.c.b16 %v8009, %v7990
    %v8903 = vpack.c.b16 %v8010, %v7991
    %v8904 = vpack.c.b16 %v8011, %v7992
    %v8905 = vpack.c.b16 %v8012, %v7993
    %v8906 = vpack.c.b16 %v8032, %v8013
    %v8907 = vpack.c.b16 %v8033, %v8014
    %v8908 = vpack.c.b16 %v8034, %v8015
    %v8909 = vpack.c.b16 %v8035, %v8016
    %v8910 = vpack.c.b16 %v8036, %v8017
    %v8911 = vpack.c.b16 %v8037, %v8018
    %v8912 = vpack.c.b16 %v8038, %v8019
    %v8913 = vpack.c.b16 %v8039, %v8020
    %v8914 = vpack.c.b16 %v8040, %v8021
    %v8915 = vpack.c.b16 %v8041, %v8022
    %v8916 = vpack.c.b16 %v8042, %v8023
    %v8917 = vpack.c.b16 %v8043, %v8024
    %v8918 = vpack.c.b16 %v8044, %v8025
    %v8919 = vpack.c.b16 %v8045, %v8026
    %v8920 = vpack.c.b16 %v8046, %v8027
    %v8921 = vpack.c.b16 %v8047, %v8028
    %v8922 = vpack.c.b16 %v8048, %v8029
    %v8923 = vpack.c.b16 %v8049, %v8030
    %v8924 = vpack.c.b16 %v8050, %v8031
    %v8925 = vpack.c.b16 %v8070, %v8051
    %v8926 = vpack.c.b16 %v8071, %v8052
    %v8927 = vpack.c.b16 %v8072, %v8053
    %v8928 = vpack.c.b16 %v8073, %v8054
    %v8929 = vpack.c.b16 %v8074, %v8055
    %v8930 = vpack.c.b16 %v8075, %v8056
    %v8931 = vpack.c.b16 %v8076, %v8057
    %v8932 = vpack.c.b16 %v8077, %v8058
    %v8933 = vpack.c.b16 %v8078, %v8059
    %v8934 = vpack.c.b16 %v8079, %v8060
    %v8935 = vpack.c.b16 %v8080, %v8061
    %v8936 = vpack.c.b16 %v8081, %v8062
    %v8937 = vpack.c.b16 %v8082, %v8063
    %v8938 = vpack.c.b16 %v8083, %v8064
    %v8939 = vpack.c.b16 %v8084, %v8065
    %v8940 = vpack.c.b16 %v8085, %v8066
    %v8941 = vpack.c.b16 %v8086, %v8067
    %v8942 = vpack.c.b16 %v8087, %v8068
    %v8943 = vpack.c.b16 %v8088, %v8069
    %v8944 = vpack.c.b16 %v8108, %v8089
    %v8945 = vpack.c.b16 %v8109, %v8090
    %v8946 = vpack.c.b16 %v8110, %v8091
    %v8947 = vpack.c.b16 %v8111, %v8092
    %v8948 = vpack.c.b16 %v8112, %v8093
    %v8949 = vpack.c.b16 %v8113, %v8094
    %v8950 = vpack.c.b16 %v8114, %v8095
    %v8951 = vpack.c.b16 %v8115, %v8096
    %v8952 = vpack.c.b16 %v8116, %v8097
    %v8953 = vpack.c.b16 %v8117, %v8098
    %v8954 = vpack.c.b16 %v8118, %v8099
    %v8955 = vpack.c.b16 %v8119, %v8100
    %v8956 = vpack.c.b16 %v8120, %v8101
    %v8957 = vpack.c.b16 %v8121, %v8102
    %v8958 = vpack.c.b16 %v8122, %v8103
    %v8959 = vpack.c.b16 %v8123, %v8104
    %v8960 = vpack.c.b16 %v8124, %v8105
    %v8961 = vpack.c.b16 %v8125, %v8106
    %v8962 = vpack.c.b16 %v8126, %v8107
    %v8963 = vpack.c.b16 %v8146, %v8127
    %v8964 = vpack.c.b16 %v8147, %v8128
    %v8965 = vpack.c.b16 %v8148, %v8129
    %v8966 = vpack.c.b16 %v8149, %v8130
    %v8967 = vpack.c.b16 %v8150, %v8131
    %v8968 = vpack.c.b16 %v8151, %v8132
    %v8969 = vpack.c.b16 %v8152, %v8133
    %v8970 = vpack.c.b16 %v8153, %v8134
    %v8971 = vpack.c.b16 %v8154, %v8135
    %v8972 = vpack.c.b16 %v8155, %v8136
    %v8973 = vpack.c.b16 %v8156, %v8137
    %v8974 = vpack.c.b16 %v8157, %v8138
    %v8975 = vpack.c.b16 %v8158, %v8139
    %v8976 = vpack.c.b16 %v8159, %v8140
    %v8977 = vpack.c.b16 %v8160, %v8141
    %v8978 = vpack.c.b16 %v8161, %v8142
    %v8979 = vpack.c.b16 %v8162, %v8143
    %v8980 = vpack.c.b16 %v8163, %v8144
    %v8981 = vpack.c.b16 %v8164, %v8145
    %v8982 = vpack.c.b16 %v8184, %v8165
    %v8983 = vpack.c.b16 %v8185, %v8166
    %v8984 = vpack.c.b16 %v8186, %v8167
    %v8985 = vpack.c.b16 %v8187, %v8168
    %v8986 = vpack.c.b16 %v8188, %v8169
    %v8987 = vpack.c.b16 %v8189, %v8170
    %v8988 = vpack.c.b16 %v8190, %v8171
    %v8989 = vpack.c.b16 %v8191, %v8172
    %v8990 = vpack.c.b16 %v8192, %v8173
    %v8991 = vpack.c.b16 %v8193, %v8174
    %v8992 = vpack.c.b16 %v8194, %v8175
    %v8993 = vpack.c.b16 %v8195, %v8176
    %v8994 = vpack.c.b16 %v8196, %v8177
    %v8995 = vpack.c.b16 %v8197, %v8178
    %v8996 = vpack.c.b16 %v8198, %v8179
    %v8997 = vpack.c.b16 %v8199, %v8180
    %v8998 = vpack.c.b16 %v8200, %v8181
    %v8999 = vpack.c.b16 %v8201, %v8182
    %v9000 = vpack.c.b16 %v8202, %v8183
    %v9001 = vpack.c.b16 %v8222, %v8203
    %v9002 = vpack.c.b16 %v8223, %v8204
    %v9003 = vpack.c.b16 %v8224, %v8205
    %v9004 = vpack.c.b16 %v8225, %v8206
    %v9005 = vpack.c.b16 %v8226, %v8207
    %v9006 = vpack.c.b16 %v8227, %v8208
    %v9007 = vpack.c.b16 %v8228, %v8209
    %v9008 = vpack.c.b16 %v8229, %v8210
    %v9009 = vpack.c.b16 %v8230, %v8211
    %v9010 = vpack.c.b16 %v8231, %v8212
    %v9011 = vpack.c.b16 %v8232, %v8213
    %v9012 = vpack.c.b16 %v8233, %v8214
    %v9013 = vpack.c.b16 %v8234, %v8215
    %v9014 = vpack.c.b16 %v8235, %v8216
    %v9015 = vpack.c.b16 %v8236, %v8217
    %v9016 = vpack.c.b16 %v8237, %v8218
    %v9017 = vpack.c.b16 %v8238, %v8219
    %v9018 = vpack.c.b16 %v8239, %v8220
    %v9019 = vpack.c.b16 %v8240, %v8221
    %v9020 = vpack.c.b16 %v8260, %v8241
    %v9021 = vpack.c.b16 %v8261, %v8242
    %v9022 = vpack.c.b16 %v8262, %v8243
    %v9023 = vpack.c.b16 %v8263, %v8244
    %v9024 = vpack.c.b16 %v8264, %v8245
    %v9025 = vpack.c.b16 %v8265, %v8246
    %v9026 = vpack.c.b16 %v8266, %v8247
    %v9027 = vpack.c.b16 %v8267, %v8248
    %v9028 = vpack.c.b16 %v8268, %v8249
    %v9029 = vpack.c.b16 %v8269, %v8250
    %v9030 = vpack.c.b16 %v8270, %v8251
    %v9031 = vpack.c.b16 %v8271, %v8252
    %v9032 = vpack.c.b16 %v8272, %v8253
    %v9033 = vpack.c.b16 %v8273, %v8254
    %v9034 = vpack.c.b16 %v8274, %v8255
    %v9035 = vpack.c.b16 %v8275, %v8256
    %v9036 = vpack.c.b16 %v8276, %v8257
    %v9037 = vpack.c.b16 %v8277, %v8258
    %v9038 = vpack.c.b16 %v8278, %v8259
    %v9039 = vpack.c.b16 %v8298, %v8279
    %v9040 = vpack.c.b16 %v8299, %v8280
    %v9041 = vpack.c.b16 %v8300, %v8281
    %v9042 = vpack.c.b16 %v8301, %v8282
    %v9043 = vpack.c.b16 %v8302, %v8283
    %v9044 = vpack.c.b16 %v8303, %v8284
    %v9045 = vpack.c.b16 %v8304, %v8285
    %v9046 = vpack.c.b16 %v8305, %v8286
    %v9047 = vpack.c.b16 %v8306, %v8287
    %v9048 = vpack.c.b16 %v8307, %v8288
    %v9049 = vpack.c.b16 %v8308, %v8289
    %v9050 = vpack.c.b16 %v8309, %v8290
    %v9051 = vpack.c.b16 %v8310, %v8291
    %v9052 = vpack.c.b16 %v8311, %v8292
    %v9053 = vpack.c.b16 %v8312, %v8293
    %v9054 = vpack.c.b16 %v8313, %v8294
    %v9055 = vpack.c.b16 %v8314, %v8295
    %v9056 = vpack.c.b16 %v8315, %v8296
    %v9057 = vpack.c.b16 %v8316, %v8297
    %v9058 = vpack.c.b16 %v8336, %v8317
    %v9059 = vpack.c.b16 %v8337, %v8318
    %v9060 = vpack.c.b16 %v8338, %v8319
    %v9061 = vpack.c.b16 %v8339, %v8320
    %v9062 = vpack.c.b16 %v8340, %v8321
    %v9063 = vpack.c.b16 %v8341, %v8322
    %v9064 = vpack.c.b16 %v8342, %v8323
    %v9065 = vpack.c.b16 %v8343, %v8324
    %v9066 = vpack.c.b16 %v8344, %v8325
    %v9067 = vpack.c.b16 %v8345, %v8326
    %v9068 = vpack.c.b16 %v8346, %v8327
    %v9069 = vpack.c.b16 %v8347, %v8328
    %v9070 = vpack.c.b16 %v8348, %v8329
    %v9071 = vpack.c.b16 %v8349, %v8330
    %v9072 = vpack.c.b16 %v8350, %v8331
    %v9073 = vpack.c.b16 %v8351, %v8332
    %v9074 = vpack.c.b16 %v8352, %v8333
    %v9075 = vpack.c.b16 %v8353, %v8334
    %v9076 = vpack.c.b16 %v8354, %v8335
    %v9077 = vpack.c.b16 %v8374, %v8355
    %v9078 = vpack.c.b16 %v8375, %v8356
    %v9079 = vpack.c.b16 %v8376, %v8357
    %v9080 = vpack.c.b16 %v8377, %v8358
    %v9081 = vpack.c.b16 %v8378, %v8359
    %v9082 = vpack.c.b16 %v8379, %v8360
    %v9083 = vpack.c.b16 %v8380, %v8361
    %v9084 = vpack.c.b16 %v8381, %v8362
    %v9085 = vpack.c.b16 %v8382, %v8363
    %v9086 = vpack.c.b16 %v8383, %v8364
    %v9087 = vpack.c.b16 %v8384, %v8365
    %v9088 = vpack.c.b16 %v8385, %v8366
    %v9089 = vpack.c.b16 %v8386, %v8367
    %v9090 = vpack.c.b16 %v8387, %v8368
    %v9091 = vpack.c.b16 %v8388, %v8369
    %v9092 = vpack.c.b16 %v8389, %v8370
    %v9093 = vpack.c.b16 %v8390, %v8371
    %v9094 = vpack.c.b16 %v8391, %v8372
    %v9095 = vpack.c.b16 %v8392, %v8373
    %v9096 = vpack.c.b16 %v8412, %v8393
    %v9097 = vpack.c.b16 %v8413, %v8394
    %v9098 = vpack.c.b16 %v8414, %v8395
    %v9099 = vpack.c.b16 %v8415, %v8396
    %v9100 = vpack.c.b16 %v8416, %v8397
    %v9101 = vpack.c.b16 %v8417, %v8398
    %v9102 = vpack.c.b16 %v8418, %v8399
    %v9103 = vpack.c.b16 %v8419, %v8400
    %v9104 = vpack.c.b16 %v8420, %v8401
    %v9105 = vpack.c.b16 %v8421, %v8402
    %v9106 = vpack.c.b16 %v8422, %v8403
    %v9107 = vpack.c.b16 %v8423, %v8404
    %v9108 = vpack.c.b16 %v8424, %v8405
    %v9109 = vpack.c.b16 %v8425, %v8406
    %v9110 = vpack.c.b16 %v8426, %v8407
    %v9111 = vpack.c.b16 %v8427, %v8408
    %v9112 = vpack.c.b16 %v8428, %v8409
    %v9113 = vpack.c.b16 %v8429, %v8410
    %v9114 = vpack.c.b16 %v8430, %v8411
    %v9115 = vpack.c.b16 %v8450, %v8431
    %v9116 = vpack.c.b16 %v8451, %v8432
    %v9117 = vpack.c.b16 %v8452, %v8433
    %v9118 = vpack.c.b16 %v8453, %v8434
    %v9119 = vpack.c.b16 %v8454, %v8435
    %v9120 = vpack.c.b16 %v8455, %v8436
    %v9121 = vpack.c.b16 %v8456, %v8437
    %v9122 = vpack.c.b16 %v8457, %v8438
    %v9123 = vpack.c.b16 %v8458, %v8439
    %v9124 = vpack.c.b16 %v8459, %v8440
    %v9125 = vpack.c.b16 %v8460, %v8441
    %v9126 = vpack.c.b16 %v8461, %v8442
    %v9127 = vpack.c.b16 %v8462, %v8443
    %v9128 = vpack.c.b16 %v8463, %v8444
    %v9129 = vpack.c.b16 %v8464, %v8445
    %v9130 = vpack.c.b16 %v8465, %v8446
    %v9131 = vpack.c.b16 %v8466, %v8447
    %v9132 = vpack.c.b16 %v8467, %v8448
    %v9133 = vpack.c.b16 %v8468, %v8449
    %v9134 = vpack.c.b16 %v8488, %v8469
    %v9135 = vpack.c.b16 %v8489, %v8470
    %v9136 = vpack.c.b16 %v8490, %v8471
    %v9137 = vpack.c.b16 %v8491, %v8472
    %v9138 = vpack.c.b16 %v8492, %v8473
    %v9139 = vpack.c.b16 %v8493, %v8474
    %v9140 = vpack.c.b16 %v8494, %v8475
    %v9141 = vpack.c.b16 %v8495, %v8476
    %v9142 = vpack.c.b16 %v8496, %v8477
    %v9143 = vpack.c.b16 %v8497, %v8478
    %v9144 = vpack.c.b16 %v8498, %v8479
    %v9145 = vpack.c.b16 %v8499, %v8480
    %v9146 = vpack.c.b16 %v8500, %v8481
    %v9147 = vpack.c.b16 %v8501, %v8482
    %v9148 = vpack.c.b16 %v8502, %v8483
    %v9149 = vpack.c.b16 %v8503, %v8484
    %v9150 = vpack.c.b16 %v8504, %v8485
    %v9151 = vpack.c.b16 %v8505, %v8486
    %v9152 = vpack.c.b16 %v8506, %v8487
    %v9153 = vpack.c.b16 %v8526, %v8507
    %v9154 = vpack.c.b16 %v8527, %v8508
    %v9155 = vpack.c.b16 %v8528, %v8509
    %v9156 = vpack.c.b16 %v8529, %v8510
    %v9157 = vpack.c.b16 %v8530, %v8511
    %v9158 = vpack.c.b16 %v8531, %v8512
    %v9159 = vpack.c.b16 %v8532, %v8513
    %v9160 = vpack.c.b16 %v8533, %v8514
    %v9161 = vpack.c.b16 %v8534, %v8515
    %v9162 = vpack.c.b16 %v8535, %v8516
    %v9163 = vpack.c.b16 %v8536, %v8517
    %v9164 = vpack.c.b16 %v8537, %v8518
    %v9165 = vpack.c.b16 %v8538, %v8519
    %v9166 = vpack.c.b16 %v8539, %v8520
    %v9167 = vpack.c.b16 %v8540, %v8521
    %v9168 = vpack.c.b16 %v8541, %v8522
    %v9169 = vpack.c.b16 %v8542, %v8523
    %v9170 = vpack.c.b16 %v8543, %v8524
    %v9171 = vpack.c.b16 %v8544, %v8525
    %v9172 = vpack.c.b16 %v8564, %v8545
    %v9173 = vpack.c.b16 %v8565, %v8546
    %v9174 = vpack.c.b16 %v8566, %v8547
    %v9175 = vpack.c.b16 %v8567, %v8548
    %v9176 = vpack.c.b16 %v8568, %v8549
    %v9177 = vpack.c.b16 %v8569, %v8550
    %v9178 = vpack.c.b16 %v8570, %v8551
    %v9179 = vpack.c.b16 %v8571, %v8552
    %v9180 = vpack.c.b16 %v8572, %v8553
    %v9181 = vpack.c.b16 %v8573, %v8554
    %v9182 = vpack.c.b16 %v8574, %v8555
    %v9183 = vpack.c.b16 %v8575, %v8556
    %v9184 = vpack.c.b16 %v8576, %v8557
    %v9185 = vpack.c.b16 %v8577, %v8558
    %v9186 = vpack.c.b16 %v8578, %v8559
    %v9187 = vpack.c.b16 %v8579, %v8560
    %v9188 = vpack.c.b16 %v8580, %v8561
    %v9189 = vpack.c.b16 %v8581, %v8562
    %v9190 = vpack.c.b16 %v8582, %v8563
    %9799 = vmatpush.bf16.msra.mxu0 %v8716
    %9800 = vmatpush.bf16.msra.mxu0 %v8697
    %9801 = vmatpush.bf16.msra.mxu0 %v8678
    %9802 = vmatpush.bf16.msra.mxu0 %v8659
    %9803 = vmatpush.bf16.msra.mxu0 %v8640
    %9804 = vmatpush.bf16.msra.mxu0 %v8621
    %9805 = vmatpush.bf16.msra.mxu0 %v8602
    %9806 = vmatpush.bf16.msra.mxu0 %v8583
    %9807 = vmatmul.bf16.gmra.mxu0 %v6039
    %v9808 = vpop.f32.mrf.mxu0
    %v9809 = vadd.f32 %v6689, %v9808
    %v9810 = vpop.f32.mrf.mxu0
    %v9811 = vadd.f32 %v6689, %v9810
    %9812 = vdwg.mxu0
    %9813 = vmatpush.bf16.msra.mxu0 %v8868
    %9814 = vmatpush.bf16.msra.mxu0 %v8849
    %9815 = vmatpush.bf16.msra.mxu0 %v8830
    %9816 = vmatpush.bf16.msra.mxu0 %v8811
    %9817 = vmatpush.bf16.msra.mxu0 %v8792
    %9818 = vmatpush.bf16.msra.mxu0 %v8773
    %9819 = vmatpush.bf16.msra.mxu0 %v8754
    %9820 = vmatpush.bf16.msra.mxu0 %v8735
    %9821 = vmatmul.bf16.gmra.mxu0 %v6040
    %v9822 = vpop.f32.mrf.mxu0
    %v9823 = vadd.f32 %v9809, %v9822
    %v9824 = vpop.f32.mrf.mxu0
    %v9825 = vadd.f32 %v9811, %v9824
    %9826 = vdwg.mxu0
    %9827 = vmatpush.bf16.msra.mxu0 %v9020
    %9828 = vmatpush.bf16.msra.mxu0 %v9001
    %9829 = vmatpush.bf16.msra.mxu0 %v8982
    %9830 = vmatpush.bf16.msra.mxu0 %v8963
    %9831 = vmatpush.bf16.msra.mxu0 %v8944
    %9832 = vmatpush.bf16.msra.mxu0 %v8925
    %9833 = vmatpush.bf16.msra.mxu0 %v8906
    %9834 = vmatpush.bf16.msra.mxu0 %v8887
    %9835 = vmatmul.bf16.gmra.mxu0 %v6041
    %v9836 = vpop.f32.mrf.mxu0
    %v9837 = vadd.f32 %v9823, %v9836
    %v9838 = vpop.f32.mrf.mxu0
    %v9839 = vadd.f32 %v9825, %v9838
    %9840 = vdwg.mxu0
    %9841 = vmatpush.bf16.msra.mxu0 %v9172
    %9842 = vmatpush.bf16.msra.mxu0 %v9153
    %9843 = vmatpush.bf16.msra.mxu0 %v9134
    %9844 = vmatpush.bf16.msra.mxu0 %v9115
    %9845 = vmatpush.bf16.msra.mxu0 %v9096
    %9846 = vmatpush.bf16.msra.mxu0 %v9077
    %9847 = vmatpush.bf16.msra.mxu0 %v9058
    %9848 = vmatpush.bf16.msra.mxu0 %v9039
    %9849 = vmatmul.bf16.gmra.mxu0 %v6042
    %v9850 = vpop.f32.mrf.mxu0
    %v9851 = vadd.f32 %v9837, %v9850
    %v9852 = vpop.f32.mrf.mxu0
    %v9853 = vadd.f32 %v9839, %v9852
    %9854 = vdwg.mxu0
    %9855 = vmatpush.bf16.msra.mxu0 %v8717
    %9856 = vmatpush.bf16.msra.mxu0 %v8698
    %9857 = vmatpush.bf16.msra.mxu0 %v8679
    %9858 = vmatpush.bf16.msra.mxu0 %v8660
    %9859 = vmatpush.bf16.msra.mxu0 %v8641
    %9860 = vmatpush.bf16.msra.mxu0 %v8622
    %9861 = vmatpush.bf16.msra.mxu0 %v8603
    %9862 = vmatpush.bf16.msra.mxu0 %v8584
    %9863 = vmatmul.bf16.gmra.mxu0 %v6039
    %v9864 = vpop.f32.mrf.mxu0
    %v9865 = vadd.f32 %v6690, %v9864
    %v9866 = vpop.f32.mrf.mxu0
    %v9867 = vadd.f32 %v6690, %v9866
    %9868 = vdwg.mxu0
    %9869 = vmatpush.bf16.msra.mxu0 %v8869
    %9870 = vmatpush.bf16.msra.mxu0 %v8850
    %9871 = vmatpush.bf16.msra.mxu0 %v8831
    %9872 = vmatpush.bf16.msra.mxu0 %v8812
    %9873 = vmatpush.bf16.msra.mxu0 %v8793
    %9874 = vmatpush.bf16.msra.mxu0 %v8774
    %9875 = vmatpush.bf16.msra.mxu0 %v8755
    %9876 = vmatpush.bf16.msra.mxu0 %v8736
    %9877 = vmatmul.bf16.gmra.mxu0 %v6040
    %v9878 = vpop.f32.mrf.mxu0
    %v9879 = vadd.f32 %v9865, %v9878
    %v9880 = vpop.f32.mrf.mxu0
    %v9881 = vadd.f32 %v9867, %v9880
    %9882 = vdwg.mxu0
    %9883 = vmatpush.bf16.msra.mxu0 %v9021
    %9884 = vmatpush.bf16.msra.mxu0 %v9002
    %9885 = vmatpush.bf16.msra.mxu0 %v8983
    %9886 = vmatpush.bf16.msra.mxu0 %v8964
    %9887 = vmatpush.bf16.msra.mxu0 %v8945
    %9888 = vmatpush.bf16.msra.mxu0 %v8926
    %9889 = vmatpush.bf16.msra.mxu0 %v8907
    %9890 = vmatpush.bf16.msra.mxu0 %v8888
    %9891 = vmatmul.bf16.gmra.mxu0 %v6041
    %v9892 = vpop.f32.mrf.mxu0
    %v9893 = vadd.f32 %v9879, %v9892
    %v9894 = vpop.f32.mrf.mxu0
    %v9895 = vadd.f32 %v9881, %v9894
    %9896 = vdwg.mxu0
    %9897 = vmatpush.bf16.msra.mxu0 %v9173
    %9898 = vmatpush.bf16.msra.mxu0 %v9154
    %9899 = vmatpush.bf16.msra.mxu0 %v9135
    %9900 = vmatpush.bf16.msra.mxu0 %v9116
    %9901 = vmatpush.bf16.msra.mxu0 %v9097
    %9902 = vmatpush.bf16.msra.mxu0 %v9078
    %9903 = vmatpush.bf16.msra.mxu0 %v9059
    %9904 = vmatpush.bf16.msra.mxu0 %v9040
    %9905 = vmatmul.bf16.gmra.mxu0 %v6042
    %v9906 = vpop.f32.mrf.mxu0
    %v9907 = vadd.f32 %v9893, %v9906
    %v9908 = vpop.f32.mrf.mxu0
    %v9909 = vadd.f32 %v9895, %v9908
    %9910 = vdwg.mxu0
    %9911 = vmatpush.bf16.msra.mxu0 %v8718
    %9912 = vmatpush.bf16.msra.mxu0 %v8699
    %9913 = vmatpush.bf16.msra.mxu0 %v8680
    %9914 = vmatpush.bf16.msra.mxu0 %v8661
    %9915 = vmatpush.bf16.msra.mxu0 %v8642
    %9916 = vmatpush.bf16.msra.mxu0 %v8623
    %9917 = vmatpush.bf16.msra.mxu0 %v8604
    %9918 = vmatpush.bf16.msra.mxu0 %v8585
    %9919 = vmatmul.bf16.gmra.mxu0 %v6039
    %v9920 = vpop.f32.mrf.mxu0
    %v9921 = vadd.f32 %v6691, %v9920
    %v9922 = vpop.f32.mrf.mxu0
    %v9923 = vadd.f32 %v6691, %v9922
    %9924 = vdwg.mxu0
    %9925 = vmatpush.bf16.msra.mxu0 %v8870
    %9926 = vmatpush.bf16.msra.mxu0 %v8851
    %9927 = vmatpush.bf16.msra.mxu0 %v8832
    %9928 = vmatpush.bf16.msra.mxu0 %v8813
    %9929 = vmatpush.bf16.msra.mxu0 %v8794
    %9930 = vmatpush.bf16.msra.mxu0 %v8775
    %9931 = vmatpush.bf16.msra.mxu0 %v8756
    %9932 = vmatpush.bf16.msra.mxu0 %v8737
    %9933 = vmatmul.bf16.gmra.mxu0 %v6040
    %v9934 = vpop.f32.mrf.mxu0
    %v9935 = vadd.f32 %v9921, %v9934
    %v9936 = vpop.f32.mrf.mxu0
    %v9937 = vadd.f32 %v9923, %v9936
    %9938 = vdwg.mxu0
    %9939 = vmatpush.bf16.msra.mxu0 %v9022
    %9940 = vmatpush.bf16.msra.mxu0 %v9003
    %9941 = vmatpush.bf16.msra.mxu0 %v8984
    %9942 = vmatpush.bf16.msra.mxu0 %v8965
    %9943 = vmatpush.bf16.msra.mxu0 %v8946
    %9944 = vmatpush.bf16.msra.mxu0 %v8927
    %9945 = vmatpush.bf16.msra.mxu0 %v8908
    %9946 = vmatpush.bf16.msra.mxu0 %v8889
    %9947 = vmatmul.bf16.gmra.mxu0 %v6041
    %v9948 = vpop.f32.mrf.mxu0
    %v9949 = vadd.f32 %v9935, %v9948
    %v9950 = vpop.f32.mrf.mxu0
    %v9951 = vadd.f32 %v9937, %v9950
    %9952 = vdwg.mxu0
    %9953 = vmatpush.bf16.msra.mxu0 %v9174
    %9954 = vmatpush.bf16.msra.mxu0 %v9155
    %9955 = vmatpush.bf16.msra.mxu0 %v9136
    %9956 = vmatpush.bf16.msra.mxu0 %v9117
    %9957 = vmatpush.bf16.msra.mxu0 %v9098
    %9958 = vmatpush.bf16.msra.mxu0 %v9079
    %9959 = vmatpush.bf16.msra.mxu0 %v9060
    %9960 = vmatpush.bf16.msra.mxu0 %v9041
    %9961 = vmatmul.bf16.gmra.mxu0 %v6042
    %v9962 = vpop.f32.mrf.mxu0
    %v9963 = vadd.f32 %v9949, %v9962
    %v9964 = vpop.f32.mrf.mxu0
    %v9965 = vadd.f32 %v9951, %v9964
    %9966 = vdwg.mxu0
    %9967 = vmatpush.bf16.msra.mxu0 %v8719
    %9968 = vmatpush.bf16.msra.mxu0 %v8700
    %9969 = vmatpush.bf16.msra.mxu0 %v8681
    %9970 = vmatpush.bf16.msra.mxu0 %v8662
    %9971 = vmatpush.bf16.msra.mxu0 %v8643
    %9972 = vmatpush.bf16.msra.mxu0 %v8624
    %9973 = vmatpush.bf16.msra.mxu0 %v8605
    %9974 = vmatpush.bf16.msra.mxu0 %v8586
    %9975 = vmatmul.bf16.gmra.mxu0 %v6039
    %v9976 = vpop.f32.mrf.mxu0
    %v9977 = vadd.f32 %v6692, %v9976
    %v9978 = vpop.f32.mrf.mxu0
    %v9979 = vadd.f32 %v6692, %v9978
    %9980 = vdwg.mxu0
    %9981 = vmatpush.bf16.msra.mxu0 %v8871
    %9982 = vmatpush.bf16.msra.mxu0 %v8852
    %9983 = vmatpush.bf16.msra.mxu0 %v8833
    %9984 = vmatpush.bf16.msra.mxu0 %v8814
    %9985 = vmatpush.bf16.msra.mxu0 %v8795
    %9986 = vmatpush.bf16.msra.mxu0 %v8776
    %9987 = vmatpush.bf16.msra.mxu0 %v8757
    %9988 = vmatpush.bf16.msra.mxu0 %v8738
    %9989 = vmatmul.bf16.gmra.mxu0 %v6040
    %v9990 = vpop.f32.mrf.mxu0
    %v9991 = vadd.f32 %v9977, %v9990
    %v9992 = vpop.f32.mrf.mxu0
    %v9993 = vadd.f32 %v9979, %v9992
    %9994 = vdwg.mxu0
    %9995 = vmatpush.bf16.msra.mxu0 %v9023
    %9996 = vmatpush.bf16.msra.mxu0 %v9004
    %9997 = vmatpush.bf16.msra.mxu0 %v8985
    %9998 = vmatpush.bf16.msra.mxu0 %v8966
    %9999 = vmatpush.bf16.msra.mxu0 %v8947
    %10000 = vmatpush.bf16.msra.mxu0 %v8928
    %10001 = vmatpush.bf16.msra.mxu0 %v8909
    %10002 = vmatpush.bf16.msra.mxu0 %v8890
    %10003 = vmatmul.bf16.gmra.mxu0 %v6041
    %v10004 = vpop.f32.mrf.mxu0
    %v10005 = vadd.f32 %v9991, %v10004
    %v10006 = vpop.f32.mrf.mxu0
    %v10007 = vadd.f32 %v9993, %v10006
    %10008 = vdwg.mxu0
    %10009 = vmatpush.bf16.msra.mxu0 %v9175
    %10010 = vmatpush.bf16.msra.mxu0 %v9156
    %10011 = vmatpush.bf16.msra.mxu0 %v9137
    %10012 = vmatpush.bf16.msra.mxu0 %v9118
    %10013 = vmatpush.bf16.msra.mxu0 %v9099
    %10014 = vmatpush.bf16.msra.mxu0 %v9080
    %10015 = vmatpush.bf16.msra.mxu0 %v9061
    %10016 = vmatpush.bf16.msra.mxu0 %v9042
    %10017 = vmatmul.bf16.gmra.mxu0 %v6042
    %v10018 = vpop.f32.mrf.mxu0
    %v10019 = vadd.f32 %v10005, %v10018
    %v10020 = vpop.f32.mrf.mxu0
    %v10021 = vadd.f32 %v10007, %v10020
    %10022 = vdwg.mxu0
    %10023 = vmatpush.bf16.msra.mxu0 %v8720
    %10024 = vmatpush.bf16.msra.mxu0 %v8701
    %10025 = vmatpush.bf16.msra.mxu0 %v8682
    %10026 = vmatpush.bf16.msra.mxu0 %v8663
    %10027 = vmatpush.bf16.msra.mxu0 %v8644
    %10028 = vmatpush.bf16.msra.mxu0 %v8625
    %10029 = vmatpush.bf16.msra.mxu0 %v8606
    %10030 = vmatpush.bf16.msra.mxu0 %v8587
    %10031 = vmatmul.bf16.gmra.mxu0 %v6039
    %v10032 = vpop.f32.mrf.mxu0
    %v10033 = vadd.f32 %v6693, %v10032
    %v10034 = vpop.f32.mrf.mxu0
    %v10035 = vadd.f32 %v6693, %v10034
    %10036 = vdwg.mxu0
    %10037 = vmatpush.bf16.msra.mxu0 %v8872
    %10038 = vmatpush.bf16.msra.mxu0 %v8853
    %10039 = vmatpush.bf16.msra.mxu0 %v8834
    %10040 = vmatpush.bf16.msra.mxu0 %v8815
    %10041 = vmatpush.bf16.msra.mxu0 %v8796
    %10042 = vmatpush.bf16.msra.mxu0 %v8777
    %10043 = vmatpush.bf16.msra.mxu0 %v8758
    %10044 = vmatpush.bf16.msra.mxu0 %v8739
    %10045 = vmatmul.bf16.gmra.mxu0 %v6040
    %v10046 = vpop.f32.mrf.mxu0
    %v10047 = vadd.f32 %v10033, %v10046
    %v10048 = vpop.f32.mrf.mxu0
    %v10049 = vadd.f32 %v10035, %v10048
    %10050 = vdwg.mxu0
    %10051 = vmatpush.bf16.msra.mxu0 %v9024
    %10052 = vmatpush.bf16.msra.mxu0 %v9005
    %10053 = vmatpush.bf16.msra.mxu0 %v8986
    %10054 = vmatpush.bf16.msra.mxu0 %v8967
    %10055 = vmatpush.bf16.msra.mxu0 %v8948
    %10056 = vmatpush.bf16.msra.mxu0 %v8929
    %10057 = vmatpush.bf16.msra.mxu0 %v8910
    %10058 = vmatpush.bf16.msra.mxu0 %v8891
    %10059 = vmatmul.bf16.gmra.mxu0 %v6041
    %v10060 = vpop.f32.mrf.mxu0
    %v10061 = vadd.f32 %v10047, %v10060
    %v10062 = vpop.f32.mrf.mxu0
    %v10063 = vadd.f32 %v10049, %v10062
    %10064 = vdwg.mxu0
    %10065 = vmatpush.bf16.msra.mxu0 %v9176
    %10066 = vmatpush.bf16.msra.mxu0 %v9157
    %10067 = vmatpush.bf16.msra.mxu0 %v9138
    %10068 = vmatpush.bf16.msra.mxu0 %v9119
    %10069 = vmatpush.bf16.msra.mxu0 %v9100
    %10070 = vmatpush.bf16.msra.mxu0 %v9081
    %10071 = vmatpush.bf16.msra.mxu0 %v9062
    %10072 = vmatpush.bf16.msra.mxu0 %v9043
    %10073 = vmatmul.bf16.gmra.mxu0 %v6042
    %v10074 = vpop.f32.mrf.mxu0
    %v10075 = vadd.f32 %v10061, %v10074
    %v10076 = vpop.f32.mrf.mxu0
    %v10077 = vadd.f32 %v10063, %v10076
    %10078 = vdwg.mxu0
    %10079 = vmatpush.bf16.msra.mxu0 %v8721
    %10080 = vmatpush.bf16.msra.mxu0 %v8702
    %10081 = vmatpush.bf16.msra.mxu0 %v8683
    %10082 = vmatpush.bf16.msra.mxu0 %v8664
    %10083 = vmatpush.bf16.msra.mxu0 %v8645
    %10084 = vmatpush.bf16.msra.mxu0 %v8626
    %10085 = vmatpush.bf16.msra.mxu0 %v8607
    %10086 = vmatpush.bf16.msra.mxu0 %v8588
    %10087 = vmatmul.bf16.gmra.mxu0 %v6039
    %v10088 = vpop.f32.mrf.mxu0
    %v10089 = vadd.f32 %v6694, %v10088
    %v10090 = vpop.f32.mrf.mxu0
    %v10091 = vadd.f32 %v6694, %v10090
    %10092 = vdwg.mxu0
    %10093 = vmatpush.bf16.msra.mxu0 %v8873
    %10094 = vmatpush.bf16.msra.mxu0 %v8854
    %10095 = vmatpush.bf16.msra.mxu0 %v8835
    %10096 = vmatpush.bf16.msra.mxu0 %v8816
    %10097 = vmatpush.bf16.msra.mxu0 %v8797
    %10098 = vmatpush.bf16.msra.mxu0 %v8778
    %10099 = vmatpush.bf16.msra.mxu0 %v8759
    %10100 = vmatpush.bf16.msra.mxu0 %v8740
    %10101 = vmatmul.bf16.gmra.mxu0 %v6040
    %v10102 = vpop.f32.mrf.mxu0
    %v10103 = vadd.f32 %v10089, %v10102
    %v10104 = vpop.f32.mrf.mxu0
    %v10105 = vadd.f32 %v10091, %v10104
    %10106 = vdwg.mxu0
    %10107 = vmatpush.bf16.msra.mxu0 %v9025
    %10108 = vmatpush.bf16.msra.mxu0 %v9006
    %10109 = vmatpush.bf16.msra.mxu0 %v8987
    %10110 = vmatpush.bf16.msra.mxu0 %v8968
    %10111 = vmatpush.bf16.msra.mxu0 %v8949
    %10112 = vmatpush.bf16.msra.mxu0 %v8930
    %10113 = vmatpush.bf16.msra.mxu0 %v8911
    %10114 = vmatpush.bf16.msra.mxu0 %v8892
    %10115 = vmatmul.bf16.gmra.mxu0 %v6041
    %v10116 = vpop.f32.mrf.mxu0
    %v10117 = vadd.f32 %v10103, %v10116
    %v10118 = vpop.f32.mrf.mxu0
    %v10119 = vadd.f32 %v10105, %v10118
    %10120 = vdwg.mxu0
    %10121 = vmatpush.bf16.msra.mxu0 %v9177
    %10122 = vmatpush.bf16.msra.mxu0 %v9158
    %10123 = vmatpush.bf16.msra.mxu0 %v9139
    %10124 = vmatpush.bf16.msra.mxu0 %v9120
    %10125 = vmatpush.bf16.msra.mxu0 %v9101
    %10126 = vmatpush.bf16.msra.mxu0 %v9082
    %10127 = vmatpush.bf16.msra.mxu0 %v9063
    %10128 = vmatpush.bf16.msra.mxu0 %v9044
    %10129 = vmatmul.bf16.gmra.mxu0 %v6042
    %v10130 = vpop.f32.mrf.mxu0
    %v10131 = vadd.f32 %v10117, %v10130
    %v10132 = vpop.f32.mrf.mxu0
    %v10133 = vadd.f32 %v10119, %v10132
    %10134 = vdwg.mxu0
    %10135 = vmatpush.bf16.msra.mxu0 %v8722
    %10136 = vmatpush.bf16.msra.mxu0 %v8703
    %10137 = vmatpush.bf16.msra.mxu0 %v8684
    %10138 = vmatpush.bf16.msra.mxu0 %v8665
    %10139 = vmatpush.bf16.msra.mxu0 %v8646
    %10140 = vmatpush.bf16.msra.mxu0 %v8627
    %10141 = vmatpush.bf16.msra.mxu0 %v8608
    %10142 = vmatpush.bf16.msra.mxu0 %v8589
    %10143 = vmatmul.bf16.gmra.mxu0 %v6039
    %v10144 = vpop.f32.mrf.mxu0
    %v10145 = vadd.f32 %v6695, %v10144
    %v10146 = vpop.f32.mrf.mxu0
    %v10147 = vadd.f32 %v6695, %v10146
    %10148 = vdwg.mxu0
    %10149 = vmatpush.bf16.msra.mxu0 %v8874
    %10150 = vmatpush.bf16.msra.mxu0 %v8855
    %10151 = vmatpush.bf16.msra.mxu0 %v8836
    %10152 = vmatpush.bf16.msra.mxu0 %v8817
    %10153 = vmatpush.bf16.msra.mxu0 %v8798
    %10154 = vmatpush.bf16.msra.mxu0 %v8779
    %10155 = vmatpush.bf16.msra.mxu0 %v8760
    %10156 = vmatpush.bf16.msra.mxu0 %v8741
    %10157 = vmatmul.bf16.gmra.mxu0 %v6040
    %v10158 = vpop.f32.mrf.mxu0
    %v10159 = vadd.f32 %v10145, %v10158
    %v10160 = vpop.f32.mrf.mxu0
    %v10161 = vadd.f32 %v10147, %v10160
    %10162 = vdwg.mxu0
    %10163 = vmatpush.bf16.msra.mxu0 %v9026
    %10164 = vmatpush.bf16.msra.mxu0 %v9007
    %10165 = vmatpush.bf16.msra.mxu0 %v8988
    %10166 = vmatpush.bf16.msra.mxu0 %v8969
    %10167 = vmatpush.bf16.msra.mxu0 %v8950
    %10168 = vmatpush.bf16.msra.mxu0 %v8931
    %10169 = vmatpush.bf16.msra.mxu0 %v8912
    %10170 = vmatpush.bf16.msra.mxu0 %v8893
    %10171 = vmatmul.bf16.gmra.mxu0 %v6041
    %v10172 = vpop.f32.mrf.mxu0
    %v10173 = vadd.f32 %v10159, %v10172
    %v10174 = vpop.f32.mrf.mxu0
    %v10175 = vadd.f32 %v10161, %v10174
    %10176 = vdwg.mxu0
    %10177 = vmatpush.bf16.msra.mxu0 %v9178
    %10178 = vmatpush.bf16.msra.mxu0 %v9159
    %10179 = vmatpush.bf16.msra.mxu0 %v9140
    %10180 = vmatpush.bf16.msra.mxu0 %v9121
    %10181 = vmatpush.bf16.msra.mxu0 %v9102
    %10182 = vmatpush.bf16.msra.mxu0 %v9083
    %10183 = vmatpush.bf16.msra.mxu0 %v9064
    %10184 = vmatpush.bf16.msra.mxu0 %v9045
    %10185 = vmatmul.bf16.gmra.mxu0 %v6042
    %v10186 = vpop.f32.mrf.mxu0
    %v10187 = vadd.f32 %v10173, %v10186
    %v10188 = vpop.f32.mrf.mxu0
    %v10189 = vadd.f32 %v10175, %v10188
    %10190 = vdwg.mxu0
    %10191 = vmatpush.bf16.msra.mxu0 %v8723
    %10192 = vmatpush.bf16.msra.mxu0 %v8704
    %10193 = vmatpush.bf16.msra.mxu0 %v8685
    %10194 = vmatpush.bf16.msra.mxu0 %v8666
    %10195 = vmatpush.bf16.msra.mxu0 %v8647
    %10196 = vmatpush.bf16.msra.mxu0 %v8628
    %10197 = vmatpush.bf16.msra.mxu0 %v8609
    %10198 = vmatpush.bf16.msra.mxu0 %v8590
    %10199 = vmatmul.bf16.gmra.mxu0 %v6039
    %v10200 = vpop.f32.mrf.mxu0
    %v10201 = vadd.f32 %v6696, %v10200
    %v10202 = vpop.f32.mrf.mxu0
    %v10203 = vadd.f32 %v6696, %v10202
    %10204 = vdwg.mxu0
    %10205 = vmatpush.bf16.msra.mxu0 %v8875
    %10206 = vmatpush.bf16.msra.mxu0 %v8856
    %10207 = vmatpush.bf16.msra.mxu0 %v8837
    %10208 = vmatpush.bf16.msra.mxu0 %v8818
    %10209 = vmatpush.bf16.msra.mxu0 %v8799
    %10210 = vmatpush.bf16.msra.mxu0 %v8780
    %10211 = vmatpush.bf16.msra.mxu0 %v8761
    %10212 = vmatpush.bf16.msra.mxu0 %v8742
    %10213 = vmatmul.bf16.gmra.mxu0 %v6040
    %v10214 = vpop.f32.mrf.mxu0
    %v10215 = vadd.f32 %v10201, %v10214
    %v10216 = vpop.f32.mrf.mxu0
    %v10217 = vadd.f32 %v10203, %v10216
    %10218 = vdwg.mxu0
    %10219 = vmatpush.bf16.msra.mxu0 %v9027
    %10220 = vmatpush.bf16.msra.mxu0 %v9008
    %10221 = vmatpush.bf16.msra.mxu0 %v8989
    %10222 = vmatpush.bf16.msra.mxu0 %v8970
    %10223 = vmatpush.bf16.msra.mxu0 %v8951
    %10224 = vmatpush.bf16.msra.mxu0 %v8932
    %10225 = vmatpush.bf16.msra.mxu0 %v8913
    %10226 = vmatpush.bf16.msra.mxu0 %v8894
    %10227 = vmatmul.bf16.gmra.mxu0 %v6041
    %v10228 = vpop.f32.mrf.mxu0
    %v10229 = vadd.f32 %v10215, %v10228
    %v10230 = vpop.f32.mrf.mxu0
    %v10231 = vadd.f32 %v10217, %v10230
    %10232 = vdwg.mxu0
    %10233 = vmatpush.bf16.msra.mxu0 %v9179
    %10234 = vmatpush.bf16.msra.mxu0 %v9160
    %10235 = vmatpush.bf16.msra.mxu0 %v9141
    %10236 = vmatpush.bf16.msra.mxu0 %v9122
    %10237 = vmatpush.bf16.msra.mxu0 %v9103
    %10238 = vmatpush.bf16.msra.mxu0 %v9084
    %10239 = vmatpush.bf16.msra.mxu0 %v9065
    %10240 = vmatpush.bf16.msra.mxu0 %v9046
    %10241 = vmatmul.bf16.gmra.mxu0 %v6042
    %v10242 = vpop.f32.mrf.mxu0
    %v10243 = vadd.f32 %v10229, %v10242
    %v10244 = vpop.f32.mrf.mxu0
    %v10245 = vadd.f32 %v10231, %v10244
    %10246 = vdwg.mxu0
    %10247 = vmatpush.bf16.msra.mxu0 %v8724
    %10248 = vmatpush.bf16.msra.mxu0 %v8705
    %10249 = vmatpush.bf16.msra.mxu0 %v8686
    %10250 = vmatpush.bf16.msra.mxu0 %v8667
    %10251 = vmatpush.bf16.msra.mxu0 %v8648
    %10252 = vmatpush.bf16.msra.mxu0 %v8629
    %10253 = vmatpush.bf16.msra.mxu0 %v8610
    %10254 = vmatpush.bf16.msra.mxu0 %v8591
    %10255 = vmatmul.bf16.gmra.mxu0 %v6039
    %v10256 = vpop.f32.mrf.mxu0
    %v10257 = vadd.f32 %v6697, %v10256
    %v10258 = vpop.f32.mrf.mxu0
    %v10259 = vadd.f32 %v6697, %v10258
    %10260 = vdwg.mxu0
    %10261 = vmatpush.bf16.msra.mxu0 %v8876
    %10262 = vmatpush.bf16.msra.mxu0 %v8857
    %10263 = vmatpush.bf16.msra.mxu0 %v8838
    %10264 = vmatpush.bf16.msra.mxu0 %v8819
    %10265 = vmatpush.bf16.msra.mxu0 %v8800
    %10266 = vmatpush.bf16.msra.mxu0 %v8781
    %10267 = vmatpush.bf16.msra.mxu0 %v8762
    %10268 = vmatpush.bf16.msra.mxu0 %v8743
    %10269 = vmatmul.bf16.gmra.mxu0 %v6040
    %v10270 = vpop.f32.mrf.mxu0
    %v10271 = vadd.f32 %v10257, %v10270
    %v10272 = vpop.f32.mrf.mxu0
    %v10273 = vadd.f32 %v10259, %v10272
    %10274 = vdwg.mxu0
    %10275 = vmatpush.bf16.msra.mxu0 %v9028
    %10276 = vmatpush.bf16.msra.mxu0 %v9009
    %10277 = vmatpush.bf16.msra.mxu0 %v8990
    %10278 = vmatpush.bf16.msra.mxu0 %v8971
    %10279 = vmatpush.bf16.msra.mxu0 %v8952
    %10280 = vmatpush.bf16.msra.mxu0 %v8933
    %10281 = vmatpush.bf16.msra.mxu0 %v8914
    %10282 = vmatpush.bf16.msra.mxu0 %v8895
    %10283 = vmatmul.bf16.gmra.mxu0 %v6041
    %v10284 = vpop.f32.mrf.mxu0
    %v10285 = vadd.f32 %v10271, %v10284
    %v10286 = vpop.f32.mrf.mxu0
    %v10287 = vadd.f32 %v10273, %v10286
    %10288 = vdwg.mxu0
    %10289 = vmatpush.bf16.msra.mxu0 %v9180
    %10290 = vmatpush.bf16.msra.mxu0 %v9161
    %10291 = vmatpush.bf16.msra.mxu0 %v9142
    %10292 = vmatpush.bf16.msra.mxu0 %v9123
    %10293 = vmatpush.bf16.msra.mxu0 %v9104
    %10294 = vmatpush.bf16.msra.mxu0 %v9085
    %10295 = vmatpush.bf16.msra.mxu0 %v9066
    %10296 = vmatpush.bf16.msra.mxu0 %v9047
    %10297 = vmatmul.bf16.gmra.mxu0 %v6042
    %v10298 = vpop.f32.mrf.mxu0
    %v10299 = vadd.f32 %v10285, %v10298
    %v10300 = vpop.f32.mrf.mxu0
    %v10301 = vadd.f32 %v10287, %v10300
    %10302 = vdwg.mxu0
    %10303 = vmatpush.bf16.msra.mxu0 %v8725
    %10304 = vmatpush.bf16.msra.mxu0 %v8706
    %10305 = vmatpush.bf16.msra.mxu0 %v8687
    %10306 = vmatpush.bf16.msra.mxu0 %v8668
    %10307 = vmatpush.bf16.msra.mxu0 %v8649
    %10308 = vmatpush.bf16.msra.mxu0 %v8630
    %10309 = vmatpush.bf16.msra.mxu0 %v8611
    %10310 = vmatpush.bf16.msra.mxu0 %v8592
    %10311 = vmatmul.bf16.gmra.mxu0 %v6039
    %v10312 = vpop.f32.mrf.mxu0
    %v10313 = vadd.f32 %v6698, %v10312
    %v10314 = vpop.f32.mrf.mxu0
    %v10315 = vadd.f32 %v6698, %v10314
    %10316 = vdwg.mxu0
    %10317 = vmatpush.bf16.msra.mxu0 %v8877
    %10318 = vmatpush.bf16.msra.mxu0 %v8858
    %10319 = vmatpush.bf16.msra.mxu0 %v8839
    %10320 = vmatpush.bf16.msra.mxu0 %v8820
    %10321 = vmatpush.bf16.msra.mxu0 %v8801
    %10322 = vmatpush.bf16.msra.mxu0 %v8782
    %10323 = vmatpush.bf16.msra.mxu0 %v8763
    %10324 = vmatpush.bf16.msra.mxu0 %v8744
    %10325 = vmatmul.bf16.gmra.mxu0 %v6040
    %v10326 = vpop.f32.mrf.mxu0
    %v10327 = vadd.f32 %v10313, %v10326
    %v10328 = vpop.f32.mrf.mxu0
    %v10329 = vadd.f32 %v10315, %v10328
    %10330 = vdwg.mxu0
    %10331 = vmatpush.bf16.msra.mxu0 %v9029
    %10332 = vmatpush.bf16.msra.mxu0 %v9010
    %10333 = vmatpush.bf16.msra.mxu0 %v8991
    %10334 = vmatpush.bf16.msra.mxu0 %v8972
    %10335 = vmatpush.bf16.msra.mxu0 %v8953
    %10336 = vmatpush.bf16.msra.mxu0 %v8934
    %10337 = vmatpush.bf16.msra.mxu0 %v8915
    %10338 = vmatpush.bf16.msra.mxu0 %v8896
    %10339 = vmatmul.bf16.gmra.mxu0 %v6041
    %v10340 = vpop.f32.mrf.mxu0
    %v10341 = vadd.f32 %v10327, %v10340
    %v10342 = vpop.f32.mrf.mxu0
    %v10343 = vadd.f32 %v10329, %v10342
    %10344 = vdwg.mxu0
    %10345 = vmatpush.bf16.msra.mxu0 %v9181
    %10346 = vmatpush.bf16.msra.mxu0 %v9162
    %10347 = vmatpush.bf16.msra.mxu0 %v9143
    %10348 = vmatpush.bf16.msra.mxu0 %v9124
    %10349 = vmatpush.bf16.msra.mxu0 %v9105
    %10350 = vmatpush.bf16.msra.mxu0 %v9086
    %10351 = vmatpush.bf16.msra.mxu0 %v9067
    %10352 = vmatpush.bf16.msra.mxu0 %v9048
    %10353 = vmatmul.bf16.gmra.mxu0 %v6042
    %v10354 = vpop.f32.mrf.mxu0
    %v10355 = vadd.f32 %v10341, %v10354
    %v10356 = vpop.f32.mrf.mxu0
    %v10357 = vadd.f32 %v10343, %v10356
    %10358 = vdwg.mxu0
    %10359 = vmatpush.bf16.msra.mxu0 %v8726
    %10360 = vmatpush.bf16.msra.mxu0 %v8707
    %10361 = vmatpush.bf16.msra.mxu0 %v8688
    %10362 = vmatpush.bf16.msra.mxu0 %v8669
    %10363 = vmatpush.bf16.msra.mxu0 %v8650
    %10364 = vmatpush.bf16.msra.mxu0 %v8631
    %10365 = vmatpush.bf16.msra.mxu0 %v8612
    %10366 = vmatpush.bf16.msra.mxu0 %v8593
    %10367 = vmatmul.bf16.gmra.mxu0 %v6039
    %v10368 = vpop.f32.mrf.mxu0
    %v10369 = vadd.f32 %v6699, %v10368
    %v10370 = vpop.f32.mrf.mxu0
    %v10371 = vadd.f32 %v6699, %v10370
    %10372 = vdwg.mxu0
    %10373 = vmatpush.bf16.msra.mxu0 %v8878
    %10374 = vmatpush.bf16.msra.mxu0 %v8859
    %10375 = vmatpush.bf16.msra.mxu0 %v8840
    %10376 = vmatpush.bf16.msra.mxu0 %v8821
    %10377 = vmatpush.bf16.msra.mxu0 %v8802
    %10378 = vmatpush.bf16.msra.mxu0 %v8783
    %10379 = vmatpush.bf16.msra.mxu0 %v8764
    %10380 = vmatpush.bf16.msra.mxu0 %v8745
    %10381 = vmatmul.bf16.gmra.mxu0 %v6040
    %v10382 = vpop.f32.mrf.mxu0
    %v10383 = vadd.f32 %v10369, %v10382
    %v10384 = vpop.f32.mrf.mxu0
    %v10385 = vadd.f32 %v10371, %v10384
    %10386 = vdwg.mxu0
    %10387 = vmatpush.bf16.msra.mxu0 %v9030
    %10388 = vmatpush.bf16.msra.mxu0 %v9011
    %10389 = vmatpush.bf16.msra.mxu0 %v8992
    %10390 = vmatpush.bf16.msra.mxu0 %v8973
    %10391 = vmatpush.bf16.msra.mxu0 %v8954
    %10392 = vmatpush.bf16.msra.mxu0 %v8935
    %10393 = vmatpush.bf16.msra.mxu0 %v8916
    %10394 = vmatpush.bf16.msra.mxu0 %v8897
    %10395 = vmatmul.bf16.gmra.mxu0 %v6041
    %v10396 = vpop.f32.mrf.mxu0
    %v10397 = vadd.f32 %v10383, %v10396
    %v10398 = vpop.f32.mrf.mxu0
    %v10399 = vadd.f32 %v10385, %v10398
    %10400 = vdwg.mxu0
    %10401 = vmatpush.bf16.msra.mxu0 %v9182
    %10402 = vmatpush.bf16.msra.mxu0 %v9163
    %10403 = vmatpush.bf16.msra.mxu0 %v9144
    %10404 = vmatpush.bf16.msra.mxu0 %v9125
    %10405 = vmatpush.bf16.msra.mxu0 %v9106
    %10406 = vmatpush.bf16.msra.mxu0 %v9087
    %10407 = vmatpush.bf16.msra.mxu0 %v9068
    %10408 = vmatpush.bf16.msra.mxu0 %v9049
    %10409 = vmatmul.bf16.gmra.mxu0 %v6042
    %v10410 = vpop.f32.mrf.mxu0
    %v10411 = vadd.f32 %v10397, %v10410
    %v10412 = vpop.f32.mrf.mxu0
    %v10413 = vadd.f32 %v10399, %v10412
    %10414 = vdwg.mxu0
    %10415 = vmatpush.bf16.msra.mxu0 %v8727
    %10416 = vmatpush.bf16.msra.mxu0 %v8708
    %10417 = vmatpush.bf16.msra.mxu0 %v8689
    %10418 = vmatpush.bf16.msra.mxu0 %v8670
    %10419 = vmatpush.bf16.msra.mxu0 %v8651
    %10420 = vmatpush.bf16.msra.mxu0 %v8632
    %10421 = vmatpush.bf16.msra.mxu0 %v8613
    %10422 = vmatpush.bf16.msra.mxu0 %v8594
    %10423 = vmatmul.bf16.gmra.mxu0 %v6039
    %v10424 = vpop.f32.mrf.mxu0
    %v10425 = vadd.f32 %v6700, %v10424
    %v10426 = vpop.f32.mrf.mxu0
    %v10427 = vadd.f32 %v6700, %v10426
    %10428 = vdwg.mxu0
    %10429 = vmatpush.bf16.msra.mxu0 %v8879
    %10430 = vmatpush.bf16.msra.mxu0 %v8860
    %10431 = vmatpush.bf16.msra.mxu0 %v8841
    %10432 = vmatpush.bf16.msra.mxu0 %v8822
    %10433 = vmatpush.bf16.msra.mxu0 %v8803
    %10434 = vmatpush.bf16.msra.mxu0 %v8784
    %10435 = vmatpush.bf16.msra.mxu0 %v8765
    %10436 = vmatpush.bf16.msra.mxu0 %v8746
    %10437 = vmatmul.bf16.gmra.mxu0 %v6040
    %v10438 = vpop.f32.mrf.mxu0
    %v10439 = vadd.f32 %v10425, %v10438
    %v10440 = vpop.f32.mrf.mxu0
    %v10441 = vadd.f32 %v10427, %v10440
    %10442 = vdwg.mxu0
    %10443 = vmatpush.bf16.msra.mxu0 %v9031
    %10444 = vmatpush.bf16.msra.mxu0 %v9012
    %10445 = vmatpush.bf16.msra.mxu0 %v8993
    %10446 = vmatpush.bf16.msra.mxu0 %v8974
    %10447 = vmatpush.bf16.msra.mxu0 %v8955
    %10448 = vmatpush.bf16.msra.mxu0 %v8936
    %10449 = vmatpush.bf16.msra.mxu0 %v8917
    %10450 = vmatpush.bf16.msra.mxu0 %v8898
    %10451 = vmatmul.bf16.gmra.mxu0 %v6041
    %v10452 = vpop.f32.mrf.mxu0
    %v10453 = vadd.f32 %v10439, %v10452
    %v10454 = vpop.f32.mrf.mxu0
    %v10455 = vadd.f32 %v10441, %v10454
    %10456 = vdwg.mxu0
    %10457 = vmatpush.bf16.msra.mxu0 %v9183
    %10458 = vmatpush.bf16.msra.mxu0 %v9164
    %10459 = vmatpush.bf16.msra.mxu0 %v9145
    %10460 = vmatpush.bf16.msra.mxu0 %v9126
    %10461 = vmatpush.bf16.msra.mxu0 %v9107
    %10462 = vmatpush.bf16.msra.mxu0 %v9088
    %10463 = vmatpush.bf16.msra.mxu0 %v9069
    %10464 = vmatpush.bf16.msra.mxu0 %v9050
    %10465 = vmatmul.bf16.gmra.mxu0 %v6042
    %v10466 = vpop.f32.mrf.mxu0
    %v10467 = vadd.f32 %v10453, %v10466
    %v10468 = vpop.f32.mrf.mxu0
    %v10469 = vadd.f32 %v10455, %v10468
    %10470 = vdwg.mxu0
    %10471 = vmatpush.bf16.msra.mxu0 %v8728
    %10472 = vmatpush.bf16.msra.mxu0 %v8709
    %10473 = vmatpush.bf16.msra.mxu0 %v8690
    %10474 = vmatpush.bf16.msra.mxu0 %v8671
    %10475 = vmatpush.bf16.msra.mxu0 %v8652
    %10476 = vmatpush.bf16.msra.mxu0 %v8633
    %10477 = vmatpush.bf16.msra.mxu0 %v8614
    %10478 = vmatpush.bf16.msra.mxu0 %v8595
    %10479 = vmatmul.bf16.gmra.mxu0 %v6039
    %v10480 = vpop.f32.mrf.mxu0
    %v10481 = vadd.f32 %v6701, %v10480
    %v10482 = vpop.f32.mrf.mxu0
    %v10483 = vadd.f32 %v6701, %v10482
    %10484 = vdwg.mxu0
    %10485 = vmatpush.bf16.msra.mxu0 %v8880
    %10486 = vmatpush.bf16.msra.mxu0 %v8861
    %10487 = vmatpush.bf16.msra.mxu0 %v8842
    %10488 = vmatpush.bf16.msra.mxu0 %v8823
    %10489 = vmatpush.bf16.msra.mxu0 %v8804
    %10490 = vmatpush.bf16.msra.mxu0 %v8785
    %10491 = vmatpush.bf16.msra.mxu0 %v8766
    %10492 = vmatpush.bf16.msra.mxu0 %v8747
    %10493 = vmatmul.bf16.gmra.mxu0 %v6040
    %v10494 = vpop.f32.mrf.mxu0
    %v10495 = vadd.f32 %v10481, %v10494
    %v10496 = vpop.f32.mrf.mxu0
    %v10497 = vadd.f32 %v10483, %v10496
    %10498 = vdwg.mxu0
    %10499 = vmatpush.bf16.msra.mxu0 %v9032
    %10500 = vmatpush.bf16.msra.mxu0 %v9013
    %10501 = vmatpush.bf16.msra.mxu0 %v8994
    %10502 = vmatpush.bf16.msra.mxu0 %v8975
    %10503 = vmatpush.bf16.msra.mxu0 %v8956
    %10504 = vmatpush.bf16.msra.mxu0 %v8937
    %10505 = vmatpush.bf16.msra.mxu0 %v8918
    %10506 = vmatpush.bf16.msra.mxu0 %v8899
    %10507 = vmatmul.bf16.gmra.mxu0 %v6041
    %v10508 = vpop.f32.mrf.mxu0
    %v10509 = vadd.f32 %v10495, %v10508
    %v10510 = vpop.f32.mrf.mxu0
    %v10511 = vadd.f32 %v10497, %v10510
    %10512 = vdwg.mxu0
    %10513 = vmatpush.bf16.msra.mxu0 %v9184
    %10514 = vmatpush.bf16.msra.mxu0 %v9165
    %10515 = vmatpush.bf16.msra.mxu0 %v9146
    %10516 = vmatpush.bf16.msra.mxu0 %v9127
    %10517 = vmatpush.bf16.msra.mxu0 %v9108
    %10518 = vmatpush.bf16.msra.mxu0 %v9089
    %10519 = vmatpush.bf16.msra.mxu0 %v9070
    %10520 = vmatpush.bf16.msra.mxu0 %v9051
    %10521 = vmatmul.bf16.gmra.mxu0 %v6042
    %v10522 = vpop.f32.mrf.mxu0
    %v10523 = vadd.f32 %v10509, %v10522
    %v10524 = vpop.f32.mrf.mxu0
    %v10525 = vadd.f32 %v10511, %v10524
    %10526 = vdwg.mxu0
    %10527 = vmatpush.bf16.msra.mxu0 %v8729
    %10528 = vmatpush.bf16.msra.mxu0 %v8710
    %10529 = vmatpush.bf16.msra.mxu0 %v8691
    %10530 = vmatpush.bf16.msra.mxu0 %v8672
    %10531 = vmatpush.bf16.msra.mxu0 %v8653
    %10532 = vmatpush.bf16.msra.mxu0 %v8634
    %10533 = vmatpush.bf16.msra.mxu0 %v8615
    %10534 = vmatpush.bf16.msra.mxu0 %v8596
    %10535 = vmatmul.bf16.gmra.mxu0 %v6039
    %v10536 = vpop.f32.mrf.mxu0
    %v10537 = vadd.f32 %v6702, %v10536
    %v10538 = vpop.f32.mrf.mxu0
    %v10539 = vadd.f32 %v6702, %v10538
    %10540 = vdwg.mxu0
    %10541 = vmatpush.bf16.msra.mxu0 %v8881
    %10542 = vmatpush.bf16.msra.mxu0 %v8862
    %10543 = vmatpush.bf16.msra.mxu0 %v8843
    %10544 = vmatpush.bf16.msra.mxu0 %v8824
    %10545 = vmatpush.bf16.msra.mxu0 %v8805
    %10546 = vmatpush.bf16.msra.mxu0 %v8786
    %10547 = vmatpush.bf16.msra.mxu0 %v8767
    %10548 = vmatpush.bf16.msra.mxu0 %v8748
    %10549 = vmatmul.bf16.gmra.mxu0 %v6040
    %v10550 = vpop.f32.mrf.mxu0
    %v10551 = vadd.f32 %v10537, %v10550
    %v10552 = vpop.f32.mrf.mxu0
    %v10553 = vadd.f32 %v10539, %v10552
    %10554 = vdwg.mxu0
    %10555 = vmatpush.bf16.msra.mxu0 %v9033
    %10556 = vmatpush.bf16.msra.mxu0 %v9014
    %10557 = vmatpush.bf16.msra.mxu0 %v8995
    %10558 = vmatpush.bf16.msra.mxu0 %v8976
    %10559 = vmatpush.bf16.msra.mxu0 %v8957
    %10560 = vmatpush.bf16.msra.mxu0 %v8938
    %10561 = vmatpush.bf16.msra.mxu0 %v8919
    %10562 = vmatpush.bf16.msra.mxu0 %v8900
    %10563 = vmatmul.bf16.gmra.mxu0 %v6041
    %v10564 = vpop.f32.mrf.mxu0
    %v10565 = vadd.f32 %v10551, %v10564
    %v10566 = vpop.f32.mrf.mxu0
    %v10567 = vadd.f32 %v10553, %v10566
    %10568 = vdwg.mxu0
    %10569 = vmatpush.bf16.msra.mxu0 %v9185
    %10570 = vmatpush.bf16.msra.mxu0 %v9166
    %10571 = vmatpush.bf16.msra.mxu0 %v9147
    %10572 = vmatpush.bf16.msra.mxu0 %v9128
    %10573 = vmatpush.bf16.msra.mxu0 %v9109
    %10574 = vmatpush.bf16.msra.mxu0 %v9090
    %10575 = vmatpush.bf16.msra.mxu0 %v9071
    %10576 = vmatpush.bf16.msra.mxu0 %v9052
    %10577 = vmatmul.bf16.gmra.mxu0 %v6042
    %v10578 = vpop.f32.mrf.mxu0
    %v10579 = vadd.f32 %v10565, %v10578
    %v10580 = vpop.f32.mrf.mxu0
    %v10581 = vadd.f32 %v10567, %v10580
    %10582 = vdwg.mxu0
    %10583 = vmatpush.bf16.msra.mxu0 %v8730
    %10584 = vmatpush.bf16.msra.mxu0 %v8711
    %10585 = vmatpush.bf16.msra.mxu0 %v8692
    %10586 = vmatpush.bf16.msra.mxu0 %v8673
    %10587 = vmatpush.bf16.msra.mxu0 %v8654
    %10588 = vmatpush.bf16.msra.mxu0 %v8635
    %10589 = vmatpush.bf16.msra.mxu0 %v8616
    %10590 = vmatpush.bf16.msra.mxu0 %v8597
    %10591 = vmatmul.bf16.gmra.mxu0 %v6039
    %v10592 = vpop.f32.mrf.mxu0
    %v10593 = vadd.f32 %v6703, %v10592
    %v10594 = vpop.f32.mrf.mxu0
    %v10595 = vadd.f32 %v6703, %v10594
    %10596 = vdwg.mxu0
    %10597 = vmatpush.bf16.msra.mxu0 %v8882
    %10598 = vmatpush.bf16.msra.mxu0 %v8863
    %10599 = vmatpush.bf16.msra.mxu0 %v8844
    %10600 = vmatpush.bf16.msra.mxu0 %v8825
    %10601 = vmatpush.bf16.msra.mxu0 %v8806
    %10602 = vmatpush.bf16.msra.mxu0 %v8787
    %10603 = vmatpush.bf16.msra.mxu0 %v8768
    %10604 = vmatpush.bf16.msra.mxu0 %v8749
    %10605 = vmatmul.bf16.gmra.mxu0 %v6040
    %v10606 = vpop.f32.mrf.mxu0
    %v10607 = vadd.f32 %v10593, %v10606
    %v10608 = vpop.f32.mrf.mxu0
    %v10609 = vadd.f32 %v10595, %v10608
    %10610 = vdwg.mxu0
    %10611 = vmatpush.bf16.msra.mxu0 %v9034
    %10612 = vmatpush.bf16.msra.mxu0 %v9015
    %10613 = vmatpush.bf16.msra.mxu0 %v8996
    %10614 = vmatpush.bf16.msra.mxu0 %v8977
    %10615 = vmatpush.bf16.msra.mxu0 %v8958
    %10616 = vmatpush.bf16.msra.mxu0 %v8939
    %10617 = vmatpush.bf16.msra.mxu0 %v8920
    %10618 = vmatpush.bf16.msra.mxu0 %v8901
    %10619 = vmatmul.bf16.gmra.mxu0 %v6041
    %v10620 = vpop.f32.mrf.mxu0
    %v10621 = vadd.f32 %v10607, %v10620
    %v10622 = vpop.f32.mrf.mxu0
    %v10623 = vadd.f32 %v10609, %v10622
    %10624 = vdwg.mxu0
    %10625 = vmatpush.bf16.msra.mxu0 %v9186
    %10626 = vmatpush.bf16.msra.mxu0 %v9167
    %10627 = vmatpush.bf16.msra.mxu0 %v9148
    %10628 = vmatpush.bf16.msra.mxu0 %v9129
    %10629 = vmatpush.bf16.msra.mxu0 %v9110
    %10630 = vmatpush.bf16.msra.mxu0 %v9091
    %10631 = vmatpush.bf16.msra.mxu0 %v9072
    %10632 = vmatpush.bf16.msra.mxu0 %v9053
    %10633 = vmatmul.bf16.gmra.mxu0 %v6042
    %v10634 = vpop.f32.mrf.mxu0
    %v10635 = vadd.f32 %v10621, %v10634
    %v10636 = vpop.f32.mrf.mxu0
    %v10637 = vadd.f32 %v10623, %v10636
    %10638 = vdwg.mxu0
    %10639 = vmatpush.bf16.msra.mxu0 %v8731
    %10640 = vmatpush.bf16.msra.mxu0 %v8712
    %10641 = vmatpush.bf16.msra.mxu0 %v8693
    %10642 = vmatpush.bf16.msra.mxu0 %v8674
    %10643 = vmatpush.bf16.msra.mxu0 %v8655
    %10644 = vmatpush.bf16.msra.mxu0 %v8636
    %10645 = vmatpush.bf16.msra.mxu0 %v8617
    %10646 = vmatpush.bf16.msra.mxu0 %v8598
    %10647 = vmatmul.bf16.gmra.mxu0 %v6039
    %v10648 = vpop.f32.mrf.mxu0
    %v10649 = vadd.f32 %v6704, %v10648
    %v10650 = vpop.f32.mrf.mxu0
    %v10651 = vadd.f32 %v6704, %v10650
    %10652 = vdwg.mxu0
    %10653 = vmatpush.bf16.msra.mxu0 %v8883
    %10654 = vmatpush.bf16.msra.mxu0 %v8864
    %10655 = vmatpush.bf16.msra.mxu0 %v8845
    %10656 = vmatpush.bf16.msra.mxu0 %v8826
    %10657 = vmatpush.bf16.msra.mxu0 %v8807
    %10658 = vmatpush.bf16.msra.mxu0 %v8788
    %10659 = vmatpush.bf16.msra.mxu0 %v8769
    %10660 = vmatpush.bf16.msra.mxu0 %v8750
    %10661 = vmatmul.bf16.gmra.mxu0 %v6040
    %v10662 = vpop.f32.mrf.mxu0
    %v10663 = vadd.f32 %v10649, %v10662
    %v10664 = vpop.f32.mrf.mxu0
    %v10665 = vadd.f32 %v10651, %v10664
    %10666 = vdwg.mxu0
    %10667 = vmatpush.bf16.msra.mxu0 %v9035
    %10668 = vmatpush.bf16.msra.mxu0 %v9016
    %10669 = vmatpush.bf16.msra.mxu0 %v8997
    %10670 = vmatpush.bf16.msra.mxu0 %v8978
    %10671 = vmatpush.bf16.msra.mxu0 %v8959
    %10672 = vmatpush.bf16.msra.mxu0 %v8940
    %10673 = vmatpush.bf16.msra.mxu0 %v8921
    %10674 = vmatpush.bf16.msra.mxu0 %v8902
    %10675 = vmatmul.bf16.gmra.mxu0 %v6041
    %v10676 = vpop.f32.mrf.mxu0
    %v10677 = vadd.f32 %v10663, %v10676
    %v10678 = vpop.f32.mrf.mxu0
    %v10679 = vadd.f32 %v10665, %v10678
    %10680 = vdwg.mxu0
    %10681 = vmatpush.bf16.msra.mxu0 %v9187
    %10682 = vmatpush.bf16.msra.mxu0 %v9168
    %10683 = vmatpush.bf16.msra.mxu0 %v9149
    %10684 = vmatpush.bf16.msra.mxu0 %v9130
    %10685 = vmatpush.bf16.msra.mxu0 %v9111
    %10686 = vmatpush.bf16.msra.mxu0 %v9092
    %10687 = vmatpush.bf16.msra.mxu0 %v9073
    %10688 = vmatpush.bf16.msra.mxu0 %v9054
    %10689 = vmatmul.bf16.gmra.mxu0 %v6042
    %v10690 = vpop.f32.mrf.mxu0
    %v10691 = vadd.f32 %v10677, %v10690
    %v10692 = vpop.f32.mrf.mxu0
    %v10693 = vadd.f32 %v10679, %v10692
    %10694 = vdwg.mxu0
    %10695 = vmatpush.bf16.msra.mxu0 %v8732
    %10696 = vmatpush.bf16.msra.mxu0 %v8713
    %10697 = vmatpush.bf16.msra.mxu0 %v8694
    %10698 = vmatpush.bf16.msra.mxu0 %v8675
    %10699 = vmatpush.bf16.msra.mxu0 %v8656
    %10700 = vmatpush.bf16.msra.mxu0 %v8637
    %10701 = vmatpush.bf16.msra.mxu0 %v8618
    %10702 = vmatpush.bf16.msra.mxu0 %v8599
    %10703 = vmatmul.bf16.gmra.mxu0 %v6039
    %v10704 = vpop.f32.mrf.mxu0
    %v10705 = vadd.f32 %v6705, %v10704
    %v10706 = vpop.f32.mrf.mxu0
    %v10707 = vadd.f32 %v6705, %v10706
    %10708 = vdwg.mxu0
    %10709 = vmatpush.bf16.msra.mxu0 %v8884
    %10710 = vmatpush.bf16.msra.mxu0 %v8865
    %10711 = vmatpush.bf16.msra.mxu0 %v8846
    %10712 = vmatpush.bf16.msra.mxu0 %v8827
    %10713 = vmatpush.bf16.msra.mxu0 %v8808
    %10714 = vmatpush.bf16.msra.mxu0 %v8789
    %10715 = vmatpush.bf16.msra.mxu0 %v8770
    %10716 = vmatpush.bf16.msra.mxu0 %v8751
    %10717 = vmatmul.bf16.gmra.mxu0 %v6040
    %v10718 = vpop.f32.mrf.mxu0
    %v10719 = vadd.f32 %v10705, %v10718
    %v10720 = vpop.f32.mrf.mxu0
    %v10721 = vadd.f32 %v10707, %v10720
    %10722 = vdwg.mxu0
    %10723 = vmatpush.bf16.msra.mxu0 %v9036
    %10724 = vmatpush.bf16.msra.mxu0 %v9017
    %10725 = vmatpush.bf16.msra.mxu0 %v8998
    %10726 = vmatpush.bf16.msra.mxu0 %v8979
    %10727 = vmatpush.bf16.msra.mxu0 %v8960
    %10728 = vmatpush.bf16.msra.mxu0 %v8941
    %10729 = vmatpush.bf16.msra.mxu0 %v8922
    %10730 = vmatpush.bf16.msra.mxu0 %v8903
    %10731 = vmatmul.bf16.gmra.mxu0 %v6041
    %v10732 = vpop.f32.mrf.mxu0
    %v10733 = vadd.f32 %v10719, %v10732
    %v10734 = vpop.f32.mrf.mxu0
    %v10735 = vadd.f32 %v10721, %v10734
    %10736 = vdwg.mxu0
    %10737 = vmatpush.bf16.msra.mxu0 %v9188
    %10738 = vmatpush.bf16.msra.mxu0 %v9169
    %10739 = vmatpush.bf16.msra.mxu0 %v9150
    %10740 = vmatpush.bf16.msra.mxu0 %v9131
    %10741 = vmatpush.bf16.msra.mxu0 %v9112
    %10742 = vmatpush.bf16.msra.mxu0 %v9093
    %10743 = vmatpush.bf16.msra.mxu0 %v9074
    %10744 = vmatpush.bf16.msra.mxu0 %v9055
    %10745 = vmatmul.bf16.gmra.mxu0 %v6042
    %v10746 = vpop.f32.mrf.mxu0
    %v10747 = vadd.f32 %v10733, %v10746
    %v10748 = vpop.f32.mrf.mxu0
    %v10749 = vadd.f32 %v10735, %v10748
    %10750 = vdwg.mxu0
    %10751 = vmatpush.bf16.msra.mxu0 %v8733
    %10752 = vmatpush.bf16.msra.mxu0 %v8714
    %10753 = vmatpush.bf16.msra.mxu0 %v8695
    %10754 = vmatpush.bf16.msra.mxu0 %v8676
    %10755 = vmatpush.bf16.msra.mxu0 %v8657
    %10756 = vmatpush.bf16.msra.mxu0 %v8638
    %10757 = vmatpush.bf16.msra.mxu0 %v8619
    %10758 = vmatpush.bf16.msra.mxu0 %v8600
    %10759 = vmatmul.bf16.gmra.mxu0 %v6039
    %v10760 = vpop.f32.mrf.mxu0
    %v10761 = vadd.f32 %v6706, %v10760
    %v10762 = vpop.f32.mrf.mxu0
    %v10763 = vadd.f32 %v6706, %v10762
    %10764 = vdwg.mxu0
    %10765 = vmatpush.bf16.msra.mxu0 %v8885
    %10766 = vmatpush.bf16.msra.mxu0 %v8866
    %10767 = vmatpush.bf16.msra.mxu0 %v8847
    %10768 = vmatpush.bf16.msra.mxu0 %v8828
    %10769 = vmatpush.bf16.msra.mxu0 %v8809
    %10770 = vmatpush.bf16.msra.mxu0 %v8790
    %10771 = vmatpush.bf16.msra.mxu0 %v8771
    %10772 = vmatpush.bf16.msra.mxu0 %v8752
    %10773 = vmatmul.bf16.gmra.mxu0 %v6040
    %v10774 = vpop.f32.mrf.mxu0
    %v10775 = vadd.f32 %v10761, %v10774
    %v10776 = vpop.f32.mrf.mxu0
    %v10777 = vadd.f32 %v10763, %v10776
    %10778 = vdwg.mxu0
    %10779 = vmatpush.bf16.msra.mxu0 %v9037
    %10780 = vmatpush.bf16.msra.mxu0 %v9018
    %10781 = vmatpush.bf16.msra.mxu0 %v8999
    %10782 = vmatpush.bf16.msra.mxu0 %v8980
    %10783 = vmatpush.bf16.msra.mxu0 %v8961
    %10784 = vmatpush.bf16.msra.mxu0 %v8942
    %10785 = vmatpush.bf16.msra.mxu0 %v8923
    %10786 = vmatpush.bf16.msra.mxu0 %v8904
    %10787 = vmatmul.bf16.gmra.mxu0 %v6041
    %v10788 = vpop.f32.mrf.mxu0
    %v10789 = vadd.f32 %v10775, %v10788
    %v10790 = vpop.f32.mrf.mxu0
    %v10791 = vadd.f32 %v10777, %v10790
    %10792 = vdwg.mxu0
    %10793 = vmatpush.bf16.msra.mxu0 %v9189
    %10794 = vmatpush.bf16.msra.mxu0 %v9170
    %10795 = vmatpush.bf16.msra.mxu0 %v9151
    %10796 = vmatpush.bf16.msra.mxu0 %v9132
    %10797 = vmatpush.bf16.msra.mxu0 %v9113
    %10798 = vmatpush.bf16.msra.mxu0 %v9094
    %10799 = vmatpush.bf16.msra.mxu0 %v9075
    %10800 = vmatpush.bf16.msra.mxu0 %v9056
    %10801 = vmatmul.bf16.gmra.mxu0 %v6042
    %v10802 = vpop.f32.mrf.mxu0
    %v10803 = vadd.f32 %v10789, %v10802
    %v10804 = vpop.f32.mrf.mxu0
    %v10805 = vadd.f32 %v10791, %v10804
    %10806 = vdwg.mxu0
    %10807 = vmatpush.bf16.msra.mxu0 %v8734
    %10808 = vmatpush.bf16.msra.mxu0 %v8715
    %10809 = vmatpush.bf16.msra.mxu0 %v8696
    %10810 = vmatpush.bf16.msra.mxu0 %v8677
    %10811 = vmatpush.bf16.msra.mxu0 %v8658
    %10812 = vmatpush.bf16.msra.mxu0 %v8639
    %10813 = vmatpush.bf16.msra.mxu0 %v8620
    %10814 = vmatpush.bf16.msra.mxu0 %v8601
    %10815 = vmatmul.bf16.gmra.mxu0 %v6039
    %v10816 = vpop.f32.mrf.mxu0
    %v10817 = vadd.f32 %v6707, %v10816
    %v10818 = vpop.f32.mrf.mxu0
    %v10819 = vadd.f32 %v6707, %v10818
    %10820 = vdwg.mxu0
    %10821 = vmatpush.bf16.msra.mxu0 %v8886
    %10822 = vmatpush.bf16.msra.mxu0 %v8867
    %10823 = vmatpush.bf16.msra.mxu0 %v8848
    %10824 = vmatpush.bf16.msra.mxu0 %v8829
    %10825 = vmatpush.bf16.msra.mxu0 %v8810
    %10826 = vmatpush.bf16.msra.mxu0 %v8791
    %10827 = vmatpush.bf16.msra.mxu0 %v8772
    %10828 = vmatpush.bf16.msra.mxu0 %v8753
    %10829 = vmatmul.bf16.gmra.mxu0 %v6040
    %v10830 = vpop.f32.mrf.mxu0
    %v10831 = vadd.f32 %v10817, %v10830
    %v10832 = vpop.f32.mrf.mxu0
    %v10833 = vadd.f32 %v10819, %v10832
    %10834 = vdwg.mxu0
    %10835 = vmatpush.bf16.msra.mxu0 %v9038
    %10836 = vmatpush.bf16.msra.mxu0 %v9019
    %10837 = vmatpush.bf16.msra.mxu0 %v9000
    %10838 = vmatpush.bf16.msra.mxu0 %v8981
    %10839 = vmatpush.bf16.msra.mxu0 %v8962
    %10840 = vmatpush.bf16.msra.mxu0 %v8943
    %10841 = vmatpush.bf16.msra.mxu0 %v8924
    %10842 = vmatpush.bf16.msra.mxu0 %v8905
    %10843 = vmatmul.bf16.gmra.mxu0 %v6041
    %v10844 = vpop.f32.mrf.mxu0
    %v10845 = vadd.f32 %v10831, %v10844
    %v10846 = vpop.f32.mrf.mxu0
    %v10847 = vadd.f32 %v10833, %v10846
    %10848 = vdwg.mxu0
    %10849 = vmatpush.bf16.msra.mxu0 %v9190
    %10850 = vmatpush.bf16.msra.mxu0 %v9171
    %10851 = vmatpush.bf16.msra.mxu0 %v9152
    %10852 = vmatpush.bf16.msra.mxu0 %v9133
    %10853 = vmatpush.bf16.msra.mxu0 %v9114
    %10854 = vmatpush.bf16.msra.mxu0 %v9095
    %10855 = vmatpush.bf16.msra.mxu0 %v9076
    %10856 = vmatpush.bf16.msra.mxu0 %v9057
    %10857 = vmatmul.bf16.gmra.mxu0 %v6042
    %v10858 = vpop.f32.mrf.mxu0
    %v10859 = vadd.f32 %v10845, %v10858
    %v10860 = vpop.f32.mrf.mxu0
    %v10861 = vadd.f32 %v10847, %v10860
    %10862 = vdwg.mxu0
    %v10863 = vpack.c.bf16 %v9907, %v9851
    %v10864 = vpack.c.bf16 %v10019, %v9963
    %v10865 = vpack.c.bf16 %v10131, %v10075
    %v10866 = vpack.c.bf16 %v10243, %v10187
    %v10867 = vpack.c.bf16 %v10355, %v10299
    %v10868 = vpack.c.bf16 %v10467, %v10411
    %v10869 = vpack.c.bf16 %v10579, %v10523
    %v10870 = vpack.c.bf16 %v10691, %v10635
    %v10871 = vpack.c.bf16 %v10803, %v10747
    %v10872 = vpack.c.bf16 %v10859, %v10859
    %v10873 = vpack.c.bf16 %v9909, %v9853
    %v10874 = vpack.c.bf16 %v10021, %v9965
    %v10875 = vpack.c.bf16 %v10133, %v10077
    %v10876 = vpack.c.bf16 %v10245, %v10189
    %v10877 = vpack.c.bf16 %v10357, %v10301
    %v10878 = vpack.c.bf16 %v10469, %v10413
    %v10879 = vpack.c.bf16 %v10581, %v10525
    %v10880 = vpack.c.bf16 %v10693, %v10637
    %v10881 = vpack.c.bf16 %v10805, %v10749
    %v10882 = vpack.c.bf16 %v10861, %v10861
    %v10883 = vxor.u32 %v10863, 2147516416
    %v10884 = vxor.u32 %v10864, 2147516416
    %v10885 = vxor.u32 %v10865, 2147516416
    %v10886 = vxor.u32 %v10866, 2147516416
    %v10887 = vxor.u32 %v10867, 2147516416
    %v10888 = vxor.u32 %v10868, 2147516416
    %v10889 = vxor.u32 %v10869, 2147516416
    %v10890 = vxor.u32 %v10870, 2147516416
    %v10891 = vxor.u32 %v10871, 2147516416
    %v10892 = vxor.u32 %v10872, 2147516416
    %v10893 = vxor.u32 %v10873, 2147516416
    %v10894 = vxor.u32 %v10874, 2147516416
    %v10895 = vxor.u32 %v10875, 2147516416
    %v10896 = vxor.u32 %v10876, 2147516416
    %v10897 = vxor.u32 %v10877, 2147516416
    %v10898 = vxor.u32 %v10878, 2147516416
    %v10899 = vxor.u32 %v10879, 2147516416
    %v10900 = vxor.u32 %v10880, 2147516416
    %v10901 = vxor.u32 %v10881, 2147516416
    %v10902 = vxor.u32 %v10882, 2147516416
    %v10903 = vunpack.c.l.bf16 %v10883
    %v10904 = vunpack.c.h.bf16 %v10883
    %v10905 = vunpack.c.l.bf16 %v10884
    %v10906 = vunpack.c.h.bf16 %v10884
    %v10907 = vunpack.c.l.bf16 %v10885
    %v10908 = vunpack.c.h.bf16 %v10885
    %v10909 = vunpack.c.l.bf16 %v10886
    %v10910 = vunpack.c.h.bf16 %v10886
    %v10911 = vunpack.c.l.bf16 %v10887
    %v10912 = vunpack.c.h.bf16 %v10887
    %v10913 = vunpack.c.l.bf16 %v10888
    %v10914 = vunpack.c.h.bf16 %v10888
    %v10915 = vunpack.c.l.bf16 %v10889
    %v10916 = vunpack.c.h.bf16 %v10889
    %v10917 = vunpack.c.l.bf16 %v10890
    %v10918 = vunpack.c.h.bf16 %v10890
    %v10919 = vunpack.c.l.bf16 %v10891
    %v10920 = vunpack.c.h.bf16 %v10891
    %v10921 = vunpack.c.l.bf16 %v10892
    %v10922 = vunpack.c.l.bf16 %v10893
    %v10923 = vunpack.c.h.bf16 %v10893
    %v10924 = vunpack.c.l.bf16 %v10894
    %v10925 = vunpack.c.h.bf16 %v10894
    %v10926 = vunpack.c.l.bf16 %v10895
    %v10927 = vunpack.c.h.bf16 %v10895
    %v10928 = vunpack.c.l.bf16 %v10896
    %v10929 = vunpack.c.h.bf16 %v10896
    %v10930 = vunpack.c.l.bf16 %v10897
    %v10931 = vunpack.c.h.bf16 %v10897
    %v10932 = vunpack.c.l.bf16 %v10898
    %v10933 = vunpack.c.h.bf16 %v10898
    %v10934 = vunpack.c.l.bf16 %v10899
    %v10935 = vunpack.c.h.bf16 %v10899
    %v10936 = vunpack.c.l.bf16 %v10900
    %v10937 = vunpack.c.h.bf16 %v10900
    %v10938 = vunpack.c.l.bf16 %v10901
    %v10939 = vunpack.c.h.bf16 %v10901
    %v10940 = vunpack.c.l.bf16 %v10902
    %v10941 = vmul.f32 %v10903, 1.442695
    %v10942 = vpow.pop %v10941
    %v10943 = vmul.f32 %v10904, 1.442695
    %v10944 = vpow.pop %v10943
    %v10945 = vmul.f32 %v10905, 1.442695
    %v10946 = vpow.pop %v10945
    %v10947 = vmul.f32 %v10906, 1.442695
    %v10948 = vpow.pop %v10947
    %v10949 = vmul.f32 %v10907, 1.442695
    %v10950 = vpow.pop %v10949
    %v10951 = vmul.f32 %v10908, 1.442695
    %v10952 = vpow.pop %v10951
    %v10953 = vmul.f32 %v10909, 1.442695
    %v10954 = vpow.pop %v10953
    %v10955 = vmul.f32 %v10910, 1.442695
    %v10956 = vpow.pop %v10955
    %v10957 = vmul.f32 %v10911, 1.442695
    %v10958 = vpow.pop %v10957
    %v10959 = vmul.f32 %v10912, 1.442695
    %v10960 = vpow.pop %v10959
    %v10961 = vmul.f32 %v10913, 1.442695
    %v10962 = vpow.pop %v10961
    %v10963 = vmul.f32 %v10914, 1.442695
    %v10964 = vpow.pop %v10963
    %v10965 = vmul.f32 %v10915, 1.442695
    %v10966 = vpow.pop %v10965
    %v10967 = vmul.f32 %v10916, 1.442695
    %v10968 = vpow.pop %v10967
    %v10969 = vmul.f32 %v10917, 1.442695
    %v10970 = vpow.pop %v10969
    %v10971 = vmul.f32 %v10918, 1.442695
    %v10972 = vpow.pop %v10971
    %v10973 = vmul.f32 %v10919, 1.442695
    %v10974 = vpow.pop %v10973
    %v10975 = vmul.f32 %v10920, 1.442695
    %v10976 = vpow.pop %v10975
    %v10977 = vmul.f32 %v10921, 1.442695
    %v10978 = vpow.pop %v10977
    %v10979 = vmul.f32 %v10922, 1.442695
    %v10980 = vpow.pop %v10979
    %v10981 = vmul.f32 %v10923, 1.442695
    %v10982 = vpow.pop %v10981
    %v10983 = vmul.f32 %v10924, 1.442695
    %v10984 = vpow.pop %v10983
    %v10985 = vmul.f32 %v10925, 1.442695
    %v10986 = vpow.pop %v10985
    %v10987 = vmul.f32 %v10926, 1.442695
    %v10988 = vpow.pop %v10987
    %v10989 = vmul.f32 %v10927, 1.442695
    %v10990 = vpow.pop %v10989
    %v10991 = vmul.f32 %v10928, 1.442695
    %v10992 = vpow.pop %v10991
    %v10993 = vmul.f32 %v10929, 1.442695
    %v10994 = vpow.pop %v10993
    %v10995 = vmul.f32 %v10930, 1.442695
    %v10996 = vpow.pop %v10995
    %v10997 = vmul.f32 %v10931, 1.442695
    %v10998 = vpow.pop %v10997
    %v10999 = vmul.f32 %v10932, 1.442695
    %v11000 = vpow.pop %v10999
    %v11001 = vmul.f32 %v10933, 1.442695
    %v11002 = vpow.pop %v11001
    %v11003 = vmul.f32 %v10934, 1.442695
    %v11004 = vpow.pop %v11003
    %v11005 = vmul.f32 %v10935, 1.442695
    %v11006 = vpow.pop %v11005
    %v11007 = vmul.f32 %v10936, 1.442695
    %v11008 = vpow.pop %v11007
    %v11009 = vmul.f32 %v10937, 1.442695
    %v11010 = vpow.pop %v11009
    %v11011 = vmul.f32 %v10938, 1.442695
    %v11012 = vpow.pop %v11011
    %v11013 = vmul.f32 %v10939, 1.442695
    %v11014 = vpow.pop %v11013
    %v11015 = vmul.f32 %v10940, 1.442695
    %v11016 = vpow.pop %v11015
    %v11017 = vpack.c.bf16 %v10944, %v10942
    %v11018 = vpack.c.bf16 %v10948, %v10946
    %v11019 = vpack.c.bf16 %v10952, %v10950
    %v11020 = vpack.c.bf16 %v10956, %v10954
    %v11021 = vpack.c.bf16 %v10960, %v10958
    %v11022 = vpack.c.bf16 %v10964, %v10962
    %v11023 = vpack.c.bf16 %v10968, %v10966
    %v11024 = vpack.c.bf16 %v10972, %v10970
    %v11025 = vpack.c.bf16 %v10976, %v10974
    %v11026 = vpack.c.bf16 %v10978, %v10978
    %v11027 = vpack.c.bf16 %v10982, %v10980
    %v11028 = vpack.c.bf16 %v10986, %v10984
    %v11029 = vpack.c.bf16 %v10990, %v10988
    %v11030 = vpack.c.bf16 %v10994, %v10992
    %v11031 = vpack.c.bf16 %v10998, %v10996
    %v11032 = vpack.c.bf16 %v11002, %v11000
    %v11033 = vpack.c.bf16 %v11006, %v11004
    %v11034 = vpack.c.bf16 %v11010, %v11008
    %v11035 = vpack.c.bf16 %v11014, %v11012
    %v11036 = vpack.c.bf16 %v11016, %v11016
    %v11037 = vunpack.c.l.bf16 %v11017
    %v11038 = vunpack.c.h.bf16 %v11017
    %v11039 = vunpack.c.l.bf16 %v11018
    %v11040 = vunpack.c.h.bf16 %v11018
    %v11041 = vunpack.c.l.bf16 %v11019
    %v11042 = vunpack.c.h.bf16 %v11019
    %v11043 = vunpack.c.l.bf16 %v11020
    %v11044 = vunpack.c.h.bf16 %v11020
    %v11045 = vunpack.c.l.bf16 %v11021
    %v11046 = vunpack.c.h.bf16 %v11021
    %v11047 = vunpack.c.l.bf16 %v11022
    %v11048 = vunpack.c.h.bf16 %v11022
    %v11049 = vunpack.c.l.bf16 %v11023
    %v11050 = vunpack.c.h.bf16 %v11023
    %v11051 = vunpack.c.l.bf16 %v11024
    %v11052 = vunpack.c.h.bf16 %v11024
    %v11053 = vunpack.c.l.bf16 %v11025
    %v11054 = vunpack.c.h.bf16 %v11025
    %v11055 = vunpack.c.l.bf16 %v11026
    %v11056 = vunpack.c.l.bf16 %v11027
    %v11057 = vunpack.c.h.bf16 %v11027
    %v11058 = vunpack.c.l.bf16 %v11028
    %v11059 = vunpack.c.h.bf16 %v11028
    %v11060 = vunpack.c.l.bf16 %v11029
    %v11061 = vunpack.c.h.bf16 %v11029
    %v11062 = vunpack.c.l.bf16 %v11030
    %v11063 = vunpack.c.h.bf16 %v11030
    %v11064 = vunpack.c.l.bf16 %v11031
    %v11065 = vunpack.c.h.bf16 %v11031
    %v11066 = vunpack.c.l.bf16 %v11032
    %v11067 = vunpack.c.h.bf16 %v11032
    %v11068 = vunpack.c.l.bf16 %v11033
    %v11069 = vunpack.c.h.bf16 %v11033
    %v11070 = vunpack.c.l.bf16 %v11034
    %v11071 = vunpack.c.h.bf16 %v11034
    %v11072 = vunpack.c.l.bf16 %v11035
    %v11073 = vunpack.c.h.bf16 %v11035
    %v11074 = vunpack.c.l.bf16 %v11036
    %v11075 = vadd.f32 %v11037, 1.0
    %v11076 = vadd.f32 %v11038, 1.0
    %v11077 = vadd.f32 %v11039, 1.0
    %v11078 = vadd.f32 %v11040, 1.0
    %v11079 = vadd.f32 %v11041, 1.0
    %v11080 = vadd.f32 %v11042, 1.0
    %v11081 = vadd.f32 %v11043, 1.0
    %v11082 = vadd.f32 %v11044, 1.0
    %v11083 = vadd.f32 %v11045, 1.0
    %v11084 = vadd.f32 %v11046, 1.0
    %v11085 = vadd.f32 %v11047, 1.0
    %v11086 = vadd.f32 %v11048, 1.0
    %v11087 = vadd.f32 %v11049, 1.0
    %v11088 = vadd.f32 %v11050, 1.0
    %v11089 = vadd.f32 %v11051, 1.0
    %v11090 = vadd.f32 %v11052, 1.0
    %v11091 = vadd.f32 %v11053, 1.0
    %v11092 = vadd.f32 %v11054, 1.0
    %v11093 = vadd.f32 %v11055, 1.0
    %v11094 = vadd.f32 %v11056, 1.0
    %v11095 = vadd.f32 %v11057, 1.0
    %v11096 = vadd.f32 %v11058, 1.0
    %v11097 = vadd.f32 %v11059, 1.0
    %v11098 = vadd.f32 %v11060, 1.0
    %v11099 = vadd.f32 %v11061, 1.0
    %v11100 = vadd.f32 %v11062, 1.0
    %v11101 = vadd.f32 %v11063, 1.0
    %v11102 = vadd.f32 %v11064, 1.0
    %v11103 = vadd.f32 %v11065, 1.0
    %v11104 = vadd.f32 %v11066, 1.0
    %v11105 = vadd.f32 %v11067, 1.0
    %v11106 = vadd.f32 %v11068, 1.0
    %v11107 = vadd.f32 %v11069, 1.0
    %v11108 = vadd.f32 %v11070, 1.0
    %v11109 = vadd.f32 %v11071, 1.0
    %v11110 = vadd.f32 %v11072, 1.0
    %v11111 = vadd.f32 %v11073, 1.0
    %v11112 = vadd.f32 %v11074, 1.0
    %v11113 = vpack.c.bf16 %v11076, %v11075
    %v11114 = vpack.c.bf16 %v11078, %v11077
    %v11115 = vpack.c.bf16 %v11080, %v11079
    %v11116 = vpack.c.bf16 %v11082, %v11081
    %v11117 = vpack.c.bf16 %v11084, %v11083
    %v11118 = vpack.c.bf16 %v11086, %v11085
    %v11119 = vpack.c.bf16 %v11088, %v11087
    %v11120 = vpack.c.bf16 %v11090, %v11089
    %v11121 = vpack.c.bf16 %v11092, %v11091
    %v11122 = vpack.c.bf16 %v11093, %v11093
    %v11123 = vpack.c.bf16 %v11095, %v11094
    %v11124 = vpack.c.bf16 %v11097, %v11096
    %v11125 = vpack.c.bf16 %v11099, %v11098
    %v11126 = vpack.c.bf16 %v11101, %v11100
    %v11127 = vpack.c.bf16 %v11103, %v11102
    %v11128 = vpack.c.bf16 %v11105, %v11104
    %v11129 = vpack.c.bf16 %v11107, %v11106
    %v11130 = vpack.c.bf16 %v11109, %v11108
    %v11131 = vpack.c.bf16 %v11111, %v11110
    %v11132 = vpack.c.bf16 %v11112, %v11112
    %v11133 = vunpack.c.h.bf16 1065369472
    %v11134 = vunpack.c.l.bf16 1065369472
    %v11135 = vunpack.c.h.bf16 %v11113
    %v11136 = vunpack.c.l.bf16 %v11113
    %v11137 = vrcp.pop %v11135
    %v11138 = vmul.f32 %v11133, %v11137
    %v11139 = vrcp.pop %v11136
    %v11140 = vmul.f32 %v11134, %v11139
    %v11141 = vpack.c.bf16 %v11138, %v11140
    %v11142 = vunpack.c.h.bf16 %v11114
    %v11143 = vunpack.c.l.bf16 %v11114
    %v11144 = vrcp.pop %v11142
    %v11145 = vmul.f32 %v11133, %v11144
    %v11146 = vrcp.pop %v11143
    %v11147 = vmul.f32 %v11134, %v11146
    %v11148 = vpack.c.bf16 %v11145, %v11147
    %v11149 = vunpack.c.h.bf16 %v11115
    %v11150 = vunpack.c.l.bf16 %v11115
    %v11151 = vrcp.pop %v11149
    %v11152 = vmul.f32 %v11133, %v11151
    %v11153 = vrcp.pop %v11150
    %v11154 = vmul.f32 %v11134, %v11153
    %v11155 = vpack.c.bf16 %v11152, %v11154
    %v11156 = vunpack.c.h.bf16 %v11116
    %v11157 = vunpack.c.l.bf16 %v11116
    %v11158 = vrcp.pop %v11156
    %v11159 = vmul.f32 %v11133, %v11158
    %v11160 = vrcp.pop %v11157
    %v11161 = vmul.f32 %v11134, %v11160
    %v11162 = vpack.c.bf16 %v11159, %v11161
    %v11163 = vunpack.c.h.bf16 %v11117
    %v11164 = vunpack.c.l.bf16 %v11117
    %v11165 = vrcp.pop %v11163
    %v11166 = vmul.f32 %v11133, %v11165
    %v11167 = vrcp.pop %v11164
    %v11168 = vmul.f32 %v11134, %v11167
    %v11169 = vpack.c.bf16 %v11166, %v11168
    %v11170 = vunpack.c.h.bf16 %v11118
    %v11171 = vunpack.c.l.bf16 %v11118
    %v11172 = vrcp.pop %v11170
    %v11173 = vmul.f32 %v11133, %v11172
    %v11174 = vrcp.pop %v11171
    %v11175 = vmul.f32 %v11134, %v11174
    %v11176 = vpack.c.bf16 %v11173, %v11175
    %v11177 = vunpack.c.h.bf16 %v11119
    %v11178 = vunpack.c.l.bf16 %v11119
    %v11179 = vrcp.pop %v11177
    %v11180 = vmul.f32 %v11133, %v11179
    %v11181 = vrcp.pop %v11178
    %v11182 = vmul.f32 %v11134, %v11181
    %v11183 = vpack.c.bf16 %v11180, %v11182
    %v11184 = vunpack.c.h.bf16 %v11120
    %v11185 = vunpack.c.l.bf16 %v11120
    %v11186 = vrcp.pop %v11184
    %v11187 = vmul.f32 %v11133, %v11186
    %v11188 = vrcp.pop %v11185
    %v11189 = vmul.f32 %v11134, %v11188
    %v11190 = vpack.c.bf16 %v11187, %v11189
    %v11191 = vunpack.c.h.bf16 %v11121
    %v11192 = vunpack.c.l.bf16 %v11121
    %v11193 = vrcp.pop %v11191
    %v11194 = vmul.f32 %v11133, %v11193
    %v11195 = vrcp.pop %v11192
    %v11196 = vmul.f32 %v11134, %v11195
    %v11197 = vpack.c.bf16 %v11194, %v11196
    %v11198 = vunpack.c.h.bf16 %v11122
    %v11199 = vunpack.c.l.bf16 %v11122
    %v11200 = vrcp.pop %v11198
    %v11201 = vmul.f32 %v11133, %v11200
    %v11202 = vrcp.pop %v11199
    %v11203 = vmul.f32 %v11134, %v11202
    %v11204 = vpack.c.bf16 %v11201, %v11203
    %v11205 = vunpack.c.h.bf16 %v11123
    %v11206 = vunpack.c.l.bf16 %v11123
    %v11207 = vrcp.pop %v11205
    %v11208 = vmul.f32 %v11133, %v11207
    %v11209 = vrcp.pop %v11206
    %v11210 = vmul.f32 %v11134, %v11209
    %v11211 = vpack.c.bf16 %v11208, %v11210
    %v11212 = vunpack.c.h.bf16 %v11124
    %v11213 = vunpack.c.l.bf16 %v11124
    %v11214 = vrcp.pop %v11212
    %v11215 = vmul.f32 %v11133, %v11214
    %v11216 = vrcp.pop %v11213
    %v11217 = vmul.f32 %v11134, %v11216
    %v11218 = vpack.c.bf16 %v11215, %v11217
    %v11219 = vunpack.c.h.bf16 %v11125
    %v11220 = vunpack.c.l.bf16 %v11125
    %v11221 = vrcp.pop %v11219
    %v11222 = vmul.f32 %v11133, %v11221
    %v11223 = vrcp.pop %v11220
    %v11224 = vmul.f32 %v11134, %v11223
    %v11225 = vpack.c.bf16 %v11222, %v11224
    %v11226 = vunpack.c.h.bf16 %v11126
    %v11227 = vunpack.c.l.bf16 %v11126
    %v11228 = vrcp.pop %v11226
    %v11229 = vmul.f32 %v11133, %v11228
    %v11230 = vrcp.pop %v11227
    %v11231 = vmul.f32 %v11134, %v11230
    %v11232 = vpack.c.bf16 %v11229, %v11231
    %v11233 = vunpack.c.h.bf16 %v11127
    %v11234 = vunpack.c.l.bf16 %v11127
    %v11235 = vrcp.pop %v11233
    %v11236 = vmul.f32 %v11133, %v11235
    %v11237 = vrcp.pop %v11234
    %v11238 = vmul.f32 %v11134, %v11237
    %v11239 = vpack.c.bf16 %v11236, %v11238
    %v11240 = vunpack.c.h.bf16 %v11128
    %v11241 = vunpack.c.l.bf16 %v11128
    %v11242 = vrcp.pop %v11240
    %v11243 = vmul.f32 %v11133, %v11242
    %v11244 = vrcp.pop %v11241
    %v11245 = vmul.f32 %v11134, %v11244
    %v11246 = vpack.c.bf16 %v11243, %v11245
    %v11247 = vunpack.c.h.bf16 %v11129
    %v11248 = vunpack.c.l.bf16 %v11129
    %v11249 = vrcp.pop %v11247
    %v11250 = vmul.f32 %v11133, %v11249
    %v11251 = vrcp.pop %v11248
    %v11252 = vmul.f32 %v11134, %v11251
    %v11253 = vpack.c.bf16 %v11250, %v11252
    %v11254 = vunpack.c.h.bf16 %v11130
    %v11255 = vunpack.c.l.bf16 %v11130
    %v11256 = vrcp.pop %v11254
    %v11257 = vmul.f32 %v11133, %v11256
    %v11258 = vrcp.pop %v11255
    %v11259 = vmul.f32 %v11134, %v11258
    %v11260 = vpack.c.bf16 %v11257, %v11259
    %v11261 = vunpack.c.h.bf16 %v11131
    %v11262 = vunpack.c.l.bf16 %v11131
    %v11263 = vrcp.pop %v11261
    %v11264 = vmul.f32 %v11133, %v11263
    %v11265 = vrcp.pop %v11262
    %v11266 = vmul.f32 %v11134, %v11265
    %v11267 = vpack.c.bf16 %v11264, %v11266
    %v11268 = vunpack.c.h.bf16 %v11132
    %v11269 = vunpack.c.l.bf16 %v11132
    %v11270 = vrcp.pop %v11268
    %v11271 = vmul.f32 %v11133, %v11270
    %v11272 = vrcp.pop %v11269
    %v11273 = vmul.f32 %v11134, %v11272
    %v11274 = vpack.c.bf16 %v11271, %v11273
    %v11275 = vunpack.c.l.bf16 %v11141
    %v11276 = vunpack.c.h.bf16 %v11141
    %v11277 = vunpack.c.l.bf16 %v11148
    %v11278 = vunpack.c.h.bf16 %v11148
    %v11279 = vunpack.c.l.bf16 %v11155
    %v11280 = vunpack.c.h.bf16 %v11155
    %v11281 = vunpack.c.l.bf16 %v11162
    %v11282 = vunpack.c.h.bf16 %v11162
    %v11283 = vunpack.c.l.bf16 %v11169
    %v11284 = vunpack.c.h.bf16 %v11169
    %v11285 = vunpack.c.l.bf16 %v11176
    %v11286 = vunpack.c.h.bf16 %v11176
    %v11287 = vunpack.c.l.bf16 %v11183
    %v11288 = vunpack.c.h.bf16 %v11183
    %v11289 = vunpack.c.l.bf16 %v11190
    %v11290 = vunpack.c.h.bf16 %v11190
    %v11291 = vunpack.c.l.bf16 %v11197
    %v11292 = vunpack.c.h.bf16 %v11197
    %v11293 = vunpack.c.l.bf16 %v11204
    %v11294 = vunpack.c.l.bf16 %v11211
    %v11295 = vunpack.c.h.bf16 %v11211
    %v11296 = vunpack.c.l.bf16 %v11218
    %v11297 = vunpack.c.h.bf16 %v11218
    %v11298 = vunpack.c.l.bf16 %v11225
    %v11299 = vunpack.c.h.bf16 %v11225
    %v11300 = vunpack.c.l.bf16 %v11232
    %v11301 = vunpack.c.h.bf16 %v11232
    %v11302 = vunpack.c.l.bf16 %v11239
    %v11303 = vunpack.c.h.bf16 %v11239
    %v11304 = vunpack.c.l.bf16 %v11246
    %v11305 = vunpack.c.h.bf16 %v11246
    %v11306 = vunpack.c.l.bf16 %v11253
    %v11307 = vunpack.c.h.bf16 %v11253
    %v11308 = vunpack.c.l.bf16 %v11260
    %v11309 = vunpack.c.h.bf16 %v11260
    %v11310 = vunpack.c.l.bf16 %v11267
    %v11311 = vunpack.c.h.bf16 %v11267
    %v11312 = vunpack.c.l.bf16 %v11274
    %11313 = vst [vmem:[%s16] sm:$0xff] %v11275
    %11314 = vst [vmem:[%s16 + $0x8] sm:$0xff] %v11276
    %11315 = vst [vmem:[%s16 + $0x10] sm:$0xff] %v11277
    %11316 = vst [vmem:[%s16 + $0x18] sm:$0xff] %v11278
    %11317 = vst [vmem:[%s16 + $0x20] sm:$0xff] %v11279
    %11318 = vst [vmem:[%s16 + $0x28] sm:$0xff] %v11280
    %11319 = vst [vmem:[%s16 + $0x30] sm:$0xff] %v11281
    %11320 = vst [vmem:[%s16 + $0x38] sm:$0xff] %v11282
    %11321 = vst [vmem:[%s16 + $0x40] sm:$0xff] %v11283
    %11322 = vst [vmem:[%s16 + $0x48] sm:$0xff] %v11284
    %11323 = vst [vmem:[%s16 + $0x50] sm:$0xff] %v11285
    %11324 = vst [vmem:[%s16 + $0x58] sm:$0xff] %v11286
    %11325 = vst [vmem:[%s16 + $0x60] sm:$0xff] %v11287
    %11326 = vst [vmem:[%s16 + $0x68] sm:$0xff] %v11288
    %11327 = vst [vmem:[%s16 + $0x70] sm:$0xff] %v11289
    %11328 = vst [vmem:[%s16 + $0x78] sm:$0xff] %v11290
    %11329 = vst [vmem:[%s16 + $0x80] sm:$0xff] %v11291
    %11330 = vst [vmem:[%s16 + $0x88] sm:$0xff] %v11292
    %11331 = vst.msk [vmem:[%s16 + $0x90] sm:$0xff] %vm3653, %v11293
    %11332 = vst [vmem:[%s16 + $0x98] sm:$0xff] %v11294
    %11333 = vst [vmem:[%s16 + $0xa0] sm:$0xff] %v11295
    %11334 = vst [vmem:[%s16 + $0xa8] sm:$0xff] %v11296
    %11335 = vst [vmem:[%s16 + $0xb0] sm:$0xff] %v11297
    %11336 = vst [vmem:[%s16 + $0xb8] sm:$0xff] %v11298
    %11337 = vst [vmem:[%s16 + $0xc0] sm:$0xff] %v11299
    %11338 = vst [vmem:[%s16 + $0xc8] sm:$0xff] %v11300
    %11339 = vst [vmem:[%s16 + $0xd0] sm:$0xff] %v11301
    %11340 = vst [vmem:[%s16 + $0xd8] sm:$0xff] %v11302
    %11341 = vst [vmem:[%s16 + $0xe0] sm:$0xff] %v11303
    %11342 = vst [vmem:[%s16 + $0xe8] sm:$0xff] %v11304
    %11343 = vst [vmem:[%s16 + $0xf0] sm:$0xff] %v11305
    %11344 = vst [vmem:[%s16 + $0xf8] sm:$0xff] %v11306
    %11345 = vst [vmem:[%s16 + $0x100] sm:$0xff] %v11307
    %11346 = vst [vmem:[%s16 + $0x108] sm:$0xff] %v11308
    %11347 = vst [vmem:[%s16 + $0x110] sm:$0xff] %v11309
    %11348 = vst [vmem:[%s16 + $0x118] sm:$0xff] %v11310
    %11349 = vst [vmem:[%s16 + $0x120] sm:$0xff] %v11311
    %11350 = vst.msk [vmem:[%s16 + $0x128] sm:$0xff] %vm3653, %v11312
    // Predicated region
    $region66: #{vae_forward.1} parent=1 // pred_check
      _
    $region67: #{vae_forward.1} parent=1 // pred_check_branch
      %11352 = sbr.rel (0) target = $region69
    $region68: #{vae_forward.1} parent=1 // pred_region
      _
    $region69: #{vae_forward.1} parent=1 // pred_fallthru
      _
    // Predicated region
    $region70: #{vae_forward.1} parent=1 // pred_check
      _
    $region71: #{vae_forward.1} parent=1 // pred_check_branch
      %11354 = sbr.rel (0) target = $region73
    $region72: #{vae_forward.1} parent=1 // pred_region
      %11356 = vsyncadd [#allocation3], 0
      %s11358 = sshll.u32 [#allocation2], 4
      %s11359 = int_to_ptr.vmem [resolvable:$true] %s11358
      %s11360 = sshll.u32 %s17, 4
      %s11361 = int_to_ptr.hbm [resolvable:$true] %s11360
      %11363 = dma.vmem_to_hbm [thread:$0]  %s11359, 16, %s11361, [#allocation3]
    $region73: #{vae_forward.1} parent=1 // pred_fallthru
      _
    // Predicated region
    $region74: #{vae_forward.1} parent=1 // pred_check
      _
    $region75: #{vae_forward.1} parent=1 // pred_check_branch
      %11365 = sbr.rel (0) target = $region77
    $region76: #{vae_forward.1} parent=1 // pred_region
      _
    $region77: #{vae_forward.1} parent=1 // pred_fallthru
      _
    // Predicated region
    $region78: #{vae_forward.1} parent=1 // pred_check
      _
    $region79: #{vae_forward.1} parent=1 // pred_check_branch
      %11367 = sbr.rel (0) target = $region81
    $region80: #{vae_forward.1} parent=1 // pred_region
      %11369 = dma.done [#allocation3], 16
    $region81: #{vae_forward.1} parent=1 // pred_fallthru
      _
    %11370 = vsyncpa [#allocation3], 1

</llo_original>
